<compile_context>
chip_gen: v6e
topology: v6e:2x2x1
jax: 0.10.0
libtpu: 0.0.40
codegen_flags: <defaults>
</compile_context>

<pallas_src>
import jax
import jax.numpy as jnp
from jax.experimental import pallas as pl
from jax.experimental.pallas import tpu as pltpu

GRID_SIZE = 5
SPLINE_ORDER = 3
NUM_BASIS = GRID_SIZE + SPLINE_ORDER  # 8
SLAB_WIDTH = 128                      # lane-dense packed output / param width
PARAM_ROW_ALIGN = 16                  # bf16 sublane tile


def _full_spec(shape):
    # whole-array block (equal to full array dims -> always legal on TPU)
    return pl.BlockSpec(shape, lambda: (0,) * len(shape))


# --------------------------------------------------------------------------
# In-kernel helpers (pure functions of VMEM values)
# --------------------------------------------------------------------------
def _bspline_bases(x):
    """Cox-de Boor B-spline basis with compile-time uniform knots.

    x: [R, d_in] f32 -> [R, NUM_BASIS * d_in] f32, basis-major along lanes
    (column index = basis_j * d_in + input_d).  Knot positions and reciprocal
    knot spacings are Python-float constants -> pure VPU mul/add/select work.
    # TODO(synk): if the lane-relayout concat binds on v6e/v7x, switch to
    # per-basis accumulation (8 smaller dots) instead of concat + one dot.
    """
    h = 2.0 / GRID_SIZE
    knots = [(k - SPLINE_ORDER) * h - 1.0
             for k in range(GRID_SIZE + 2 * SPLINE_ORDER + 1)]  # 12 knots
    bases = [jnp.logical_and(x >= knots[k], x < knots[k + 1]).astype(jnp.float32)
             for k in range(len(knots) - 1)]                    # 11 degree-0 bases
    for p in range(1, SPLINE_ORDER + 1):
        inv = 1.0 / (p * h)  # uniform grid -> never zero
        bases = [(x - knots[k]) * inv * bases[k]
                 + (knots[k + p + 1] - x) * inv * bases[k + 1]
                 for k in range(len(bases) - 1)]
    return jnp.concatenate(bases, axis=-1)  # [R, NUM_BASIS * d_in]


def _kan(x_f32, w_base_b16, w_spline_b16):
    """Efficient-KAN linear: silu(x) @ W_base + Bspline(x) @ W_spline.

    Elementwise math in f32; MXU operands cast to bf16, f32 accumulation.
    """
    silu = x_f32 * jax.nn.sigmoid(x_f32)
    out = jnp.dot(silu.astype(jnp.bfloat16), w_base_b16,
                  preferred_element_type=jnp.float32)
    basis = _bspline_bases(x_f32)
    out = out + jnp.dot(basis.astype(jnp.bfloat16), w_spline_b16,
                        preferred_element_type=jnp.float32)
    return out


# --------------------------------------------------------------------------
# Host-side parameter slab packing (one bf16 [K, 128] operand)
# --------------------------------------------------------------------------
_PARAM_ORDER = (
    "w1", "b1", "w2", "b2",
    "enc_wb", "enc_ws",
    "dgcn_w", "dgcn_b", "dkan_wb", "dkan_ws",
    "e1_wb", "e1_ws", "e2_wb", "e2_ws",
    "g1_wb", "g1_ws", "g2_wb", "g2_ws",
)


def _param_matrices(params):
    return {
        "w1": params["enc_gcn1"][0], "b1": params["enc_gcn1"][1],
        "w2": params["enc_gcn2"][0], "b2": params["enc_gcn2"][1],
        "enc_wb": params["enc_kan"][0]["w_base"],
        "enc_ws": params["enc_kan"][0]["w_spline"],
        "dgcn_w": params["dec_feat_gcn"][0], "dgcn_b": params["dec_feat_gcn"][1],
        "dkan_wb": params["dec_feat_kan"][0]["w_base"],
        "dkan_ws": params["dec_feat_kan"][0]["w_spline"],
        "e1_wb": params["edge_kan"][0]["w_base"],
        "e1_ws": params["edge_kan"][0]["w_spline"],
        "e2_wb": params["edge_kan"][1]["w_base"],
        "e2_ws": params["edge_kan"][1]["w_spline"],
        "g1_wb": params["deg_kan1"][0]["w_base"],
        "g1_ws": params["deg_kan1"][0]["w_spline"],
        "g2_wb": params["deg_kan2"][0]["w_base"],
        "g2_ws": params["deg_kan2"][0]["w_spline"],
    }


def _pack_params(params):
    """Pack all weight/bias matrices into one bf16 [K, 128] slab.

    Returns (slab, layout) where layout[name] = (row_start, d_in, d_out) with
    row_start a multiple of 16 (bf16 sublane tile) -> static in-kernel slices.
    """
    mats = _param_matrices(params)
    layout = {}
    pieces = []
    row = 0
    for name in _PARAM_ORDER:
        m = mats[name]
        d_in, d_out = m.shape
        assert d_out <= SLAB_WIDTH
        r_pad = -(-d_in // PARAM_ROW_ALIGN) * PARAM_ROW_ALIGN
        blk = jnp.zeros((r_pad, SLAB_WIDTH), jnp.bfloat16)
        blk = blk.at[:d_in, :d_out].set(m.astype(jnp.bfloat16))
        pieces.append(blk)
        layout[name] = (row, d_in, d_out)
        row += r_pad
    slab = jnp.concatenate(pieces, axis=0)
    return slab, layout


# --------------------------------------------------------------------------
# Single fused forward kernel (closure over static layout / dims)
# --------------------------------------------------------------------------
def _make_kernel(layout, n, f, latent, r):
    def kernel(a_ref, x_ref, eidx_ref, p_ref, o_ref):
        def w(name):
            r0, d_in, d_out = layout[name]
            return p_ref[r0:r0 + d_in, 0:d_out]          # static bf16 slice

        a_hat = a_ref[...]                               # bf16 [N, N]
        x = x_ref[...]                                   # bf16 [N, F]

        def relu(v):
            return jnp.maximum(v, 0.0)

        def gcn(feat, w_name, b_name):
            # X @ W first (contract small feature dim), then A_hat @ (XW) + b.
            xw = jnp.dot(feat.astype(jnp.bfloat16), w(w_name),
                         preferred_element_type=jnp.float32)
            agg = jnp.dot(a_hat, xw.astype(jnp.bfloat16),
                          preferred_element_type=jnp.float32)
            return agg + w(b_name).astype(jnp.float32)

        # --- encoder (dropout == identity in eval mode) ---
        h1 = relu(gcn(x, "w1", "b1"))
        h2 = relu(gcn(h1, "w2", "b2"))
        z = _kan(h2, w("enc_wb"), w("enc_ws"))           # [N, L] f32

        # --- feature decoder ---
        hf = relu(gcn(z, "dgcn_w", "dgcn_b"))
        recon_x = _kan(hf, w("dkan_wb"), w("dkan_ws"))   # [N, F] f32

        # --- edge decoder: in-kernel one-hot gather (MXU) + KAN + sigmoid ---
        idx = eidx_ref[...]                              # [R, 2] int32
        node_iota = jax.lax.broadcasted_iota(jnp.int32, (r, n), 1)
        src_oh = (node_iota == idx[:, 0:1]).astype(jnp.bfloat16)
        dst_oh = (node_iota == idx[:, 1:2]).astype(jnp.bfloat16)
        z_b = z.astype(jnp.bfloat16)
        src_z = jnp.dot(src_oh, z_b, preferred_element_type=jnp.float32)
        dst_z = jnp.dot(dst_oh, z_b, preferred_element_type=jnp.float32)
        edge_feat = src_z * dst_z
        e_h = _kan(edge_feat, w("e1_wb"), w("e1_ws"))
        edge_prob = jax.nn.sigmoid(
            _kan(e_h, w("e2_wb"), w("e2_ws")))           # [R, 1] f32

        # --- degree decoder ---
        dh = relu(_kan(z, w("g1_wb"), w("g1_ws")))
        deg = relu(_kan(dh, w("g2_wb"), w("g2_ws")))     # [N, 1] f32

        # --- pack outputs: zero init, then static column-range sub-stores ---
        o_ref[...] = jnp.zeros_like(o_ref)
        o_ref[0:n, 0:f] = recon_x
        o_ref[0:n, f:f + latent] = z
        o_ref[0:n, f + latent:f + latent + 1] = deg
        o_ref[:, f + latent + 1:f + latent + 2] = edge_prob

    return kernel


# --------------------------------------------------------------------------
# Parameter init (deterministic) and model glue
# --------------------------------------------------------------------------
def init_gcn(key, d_in, d_out):
    w = jax.random.normal(key, (d_in, d_out), jnp.float32) / jnp.sqrt(d_in)
    b = jnp.zeros((1, d_out), jnp.float32)
    return (w, b)


def init_kan_layer(key, d_in, d_out):
    k1, k2 = jax.random.split(key)
    w_base = jax.random.normal(k1, (d_in, d_out), jnp.float32) / jnp.sqrt(d_in)
    # basis-major spline weight layout: row index = basis_j * d_in + input_d
    w_spline = (jax.random.normal(k2, (NUM_BASIS * d_in, d_out), jnp.float32)
                * 0.1 / jnp.sqrt(d_in))
    return dict(w_base=w_base, w_spline=w_spline)


def init_tgae(key, num_features, hidden_dim, latent_dim):
    ks = jax.random.split(key, 9)
    return dict(
        enc_gcn1=init_gcn(ks[0], num_features, hidden_dim),
        enc_gcn2=init_gcn(ks[1], hidden_dim, hidden_dim),
        enc_kan=[init_kan_layer(ks[2], hidden_dim, latent_dim)],
        dec_feat_gcn=init_gcn(ks[3], latent_dim, hidden_dim),
        dec_feat_kan=[init_kan_layer(ks[4], hidden_dim, num_features)],
        edge_kan=[init_kan_layer(ks[5], latent_dim, hidden_dim),
                  init_kan_layer(ks[6], hidden_dim, 1)],
        deg_kan1=[init_kan_layer(ks[7], latent_dim, hidden_dim)],
        deg_kan2=[init_kan_layer(ks[8], hidden_dim, 1)],
        log_sigma_feature=jnp.zeros((1,), jnp.float32),
        log_sigma_edge=jnp.zeros((1,), jnp.float32),
        log_sigma_degree=jnp.zeros((1,), jnp.float32),
    )


def normalized_adjacency(edge_index, num_nodes):
    src, dst = edge_index[0], edge_index[1]
    a = jnp.zeros((num_nodes, num_nodes), jnp.float32).at[dst, src].add(1.0)
    # add self loops only where missing (add_remaining_self_loops semantics)
    diag = jnp.diagonal(a)
    a = a + jnp.diag(jnp.where(diag > 0, 0.0, 1.0))
    deg = a.sum(axis=1)
    d_inv_sqrt = jnp.where(deg > 0, 1.0 / jnp.sqrt(deg), 0.0)
    return a * d_inv_sqrt[:, None] * d_inv_sqrt[None, :]


def tgae_forward(params, x, edge_index, edge_index_for_edge_prediction):
    n, f = x.shape
    hidden = params["enc_gcn1"][0].shape[1]
    latent = params["enc_kan"][0]["w_base"].shape[1]
    e = edge_index_for_edge_prediction.shape[1]
    r = max(n, e)
    assert f + latent + 2 <= SLAB_WIDTH

    a_hat = normalized_adjacency(edge_index, n).astype(jnp.bfloat16)
    x_b = x.astype(jnp.bfloat16)

    # edge indices for the edge decoder, padded to R rows (pad rows gather
    # node 0 and are sliced away by the wrapper)
    eidx = jnp.zeros((r, 2), jnp.int32)
    eidx = eidx.at[:e, 0].set(edge_index_for_edge_prediction[0].astype(jnp.int32))
    eidx = eidx.at[:e, 1].set(edge_index_for_edge_prediction[1].astype(jnp.int32))

    p_slab, layout = _pack_params(params)
    kernel = _make_kernel(layout, n, f, latent, r)

    # rough cost hints so XLA schedules host-side prep around the kernel
    flops = 2 * (n * f * hidden + 3 * n * n * hidden + n * hidden * hidden
                 + n * hidden * latent + n * NUM_BASIS * hidden * latent
                 + n * latent * hidden + n * hidden * f
                 + n * NUM_BASIS * hidden * f
                 + 2 * r * n * latent
                 + r * latent * hidden + r * NUM_BASIS * latent * hidden
                 + r * hidden + r * NUM_BASIS * hidden
                 + n * latent * hidden + n * NUM_BASIS * latent * hidden
                 + n * hidden + n * NUM_BASIS * hidden)
    bytes_accessed = (a_hat.size * 2 + x_b.size * 2 + eidx.size * 4
                      + p_slab.size * 2 + r * SLAB_WIDTH * 4)
    cost = pl.CostEstimate(flops=int(flops),
                           transcendentals=int(8 * (n + r) * hidden),
                           bytes_accessed=int(bytes_accessed))

    slab = pl.pallas_call(
        kernel,
        out_shape=jax.ShapeDtypeStruct((r, SLAB_WIDTH), jnp.float32),
        in_specs=[_full_spec(a_hat.shape), _full_spec(x_b.shape),
                  _full_spec(eidx.shape), _full_spec(p_slab.shape)],
        out_specs=_full_spec((r, SLAB_WIDTH)),
        cost_estimate=cost,
        compiler_params=pltpu.CompilerParams(vmem_limit_bytes=32 * 1024 * 1024),
    )(a_hat, x_b, eidx, p_slab)

    reconstructed_x = slab[:n, :f]
    z = slab[:n, f:f + latent]
    predicted_degrees = slab[:n, f + latent]
    edge_probabilities = slab[:e, f + latent + 1]
    return reconstructed_x, edge_probabilities, predicted_degrees, z


# --------------------------------------------------------------------------
if __name__ == "__main__":
    NUM_NODES = 16
    NUM_FEATURES = 8
    HIDDEN_DIM = 16
    LATENT_DIM = 8

    key = jax.random.PRNGKey(0)
    k_param, k_x = jax.random.split(key)

    params = init_tgae(k_param, NUM_FEATURES, HIDDEN_DIM, LATENT_DIM)
    x = jax.random.normal(k_x, (NUM_NODES, NUM_FEATURES), jnp.float32)

    # ring graph, both directions (deterministic)
    src = jnp.arange(NUM_NODES, dtype=jnp.int32)
    dst = (src + 1) % NUM_NODES
    edge_index = jnp.concatenate(
        [jnp.stack([src, dst]), jnp.stack([dst, src])], axis=1)  # [2, 32]

    # edges to score with the edge decoder
    pred_src = jnp.arange(10, dtype=jnp.int32)
    pred_dst = (pred_src + 5) % NUM_NODES
    edge_index_pred = jnp.stack([pred_src, pred_dst])  # [2, 10]

    fwd = jax.jit(tgae_forward)
    recon_x, edge_probs, degrees, z = fwd(params, x, edge_index, edge_index_pred)
    jax.block_until_ready((recon_x, edge_probs, degrees, z))

    assert recon_x.shape == (NUM_NODES, NUM_FEATURES)
    assert edge_probs.shape == (10,)
    assert degrees.shape == (NUM_NODES,)
    assert z.shape == (NUM_NODES, LATENT_DIM)
    assert bool(jnp.all(jnp.isfinite(recon_x)))
    assert bool(jnp.all(jnp.isfinite(z)))
    assert bool(jnp.all((edge_probs >= 0.0) & (edge_probs <= 1.0)))
    assert bool(jnp.all(degrees >= 0.0))
    print("KERNEL_OK")
</pallas_src>

<mosaic_0001>
module attributes {stable_mosaic.version = 11 : i64} {
  func.func private @main(%arg0: i32) attributes {dimension_semantics = [#tpu.dimension_semantics<core_parallel>], iteration_bounds = array<i64: 2>, tpu.core_type = #tpu.core_type<sc_scalar_subcore>, window_params = []} {
    return
  }
}

module attributes {stable_mosaic.version = 11 : i64} {
  func.func private @main(%arg0: i32) attributes {dimension_semantics = [#tpu.dimension_semantics<core_parallel>], iteration_bounds = array<i64: 2>, tpu.core_type = #tpu.core_type<sc_scalar_subcore>, window_params = []} {
    return
  }
}

module attributes {stable_mosaic.version = 11 : i64} {
  func.func @kernel(%arg0: memref<16x16xbf16, #tpu.memory_space<vmem>>, %arg1: memref<16x8xbf16, #tpu.memory_space<vmem>>, %arg2: memref<16x2xi32, #tpu.memory_space<vmem>>, %arg3: memref<832x128xbf16, #tpu.memory_space<vmem>>, %arg4: memref<16x128xf32, #tpu.memory_space<vmem>>) attributes {dimension_semantics = [], scalar_prefetch = 0 : i64, scratch_operands = 0 : i64, tpu.core_type = #tpu.core_type<tc>} {
    %c0 = arith.constant 0 : index
    %c0_0 = arith.constant 0 : index
    %0 = vector.load %arg0[%c0, %c0_0] : memref<16x16xbf16, #tpu.memory_space<vmem>>, vector<16x16xbf16>
    %c0_1 = arith.constant 0 : index
    %c0_2 = arith.constant 0 : index
    %1 = vector.load %arg1[%c0_1, %c0_2] : memref<16x8xbf16, #tpu.memory_space<vmem>>, vector<16x8xbf16>
    %c0_3 = arith.constant 0 : index
    %c0_4 = arith.constant 0 : index
    %2 = vector.load %arg3[%c0_3, %c0_4] : memref<832x128xbf16, #tpu.memory_space<vmem>>, vector<8x16xbf16>
    %cst = arith.constant dense<0.000000e+00> : vector<16x16xf32>
    %3 = tpu.matmul %1, %2, %cst {dimension_numbers = #tpu.dot_dimension_numbers<[1], [0], [0], [1], [0, 0, 1, 1], [], []>} : vector<16x8xbf16>, vector<8x16xbf16>, vector<16x16xf32> -> vector<16x16xf32>
    %4 = arith.truncf %3 : vector<16x16xf32> to vector<16x16xbf16>
    %cst_5 = arith.constant dense<0.000000e+00> : vector<16x16xf32>
    %5 = tpu.matmul %0, %4, %cst_5 {dimension_numbers = #tpu.dot_dimension_numbers<[1], [0], [0], [1], [0, 0, 1, 1], [], []>} : vector<16x16xbf16>, vector<16x16xbf16>, vector<16x16xf32> -> vector<16x16xf32>
    %c16 = arith.constant 16 : index
    %c0_6 = arith.constant 0 : index
    %6 = vector.load %arg3[%c16, %c0_6] : memref<832x128xbf16, #tpu.memory_space<vmem>>, vector<1x16xbf16>
    %7 = arith.extf %6 : vector<1x16xbf16> to vector<1x16xf32>
    %8 = vector.broadcast %7 : vector<1x16xf32> to vector<16x16xf32>
    %9 = arith.addf %5, %8 : vector<16x16xf32>
    %cst_7 = arith.constant 0.000000e+00 : f32
    %10 = vector.broadcast %cst_7 : f32 to vector<16x16xf32>
    %11 = arith.maximumf %9, %10 : vector<16x16xf32>
    %12 = arith.truncf %11 : vector<16x16xf32> to vector<16x16xbf16>
    %c32 = arith.constant 32 : index
    %c0_8 = arith.constant 0 : index
    %13 = vector.load %arg3[%c32, %c0_8] : memref<832x128xbf16, #tpu.memory_space<vmem>>, vector<16x16xbf16>
    %cst_9 = arith.constant dense<0.000000e+00> : vector<16x16xf32>
    %14 = tpu.matmul %12, %13, %cst_9 {dimension_numbers = #tpu.dot_dimension_numbers<[1], [0], [0], [1], [0, 0, 1, 1], [], []>} : vector<16x16xbf16>, vector<16x16xbf16>, vector<16x16xf32> -> vector<16x16xf32>
    %15 = arith.truncf %14 : vector<16x16xf32> to vector<16x16xbf16>
    %cst_10 = arith.constant dense<0.000000e+00> : vector<16x16xf32>
    %16 = tpu.matmul %0, %15, %cst_10 {dimension_numbers = #tpu.dot_dimension_numbers<[1], [0], [0], [1], [0, 0, 1, 1], [], []>} : vector<16x16xbf16>, vector<16x16xbf16>, vector<16x16xf32> -> vector<16x16xf32>
    %c48 = arith.constant 48 : index
    %c0_11 = arith.constant 0 : index
    %17 = vector.load %arg3[%c48, %c0_11] : memref<832x128xbf16, #tpu.memory_space<vmem>>, vector<1x16xbf16>
    %18 = arith.extf %17 : vector<1x16xbf16> to vector<1x16xf32>
    %19 = vector.broadcast %18 : vector<1x16xf32> to vector<16x16xf32>
    %20 = arith.addf %16, %19 : vector<16x16xf32>
    %cst_12 = arith.constant 0.000000e+00 : f32
    %21 = vector.broadcast %cst_12 : f32 to vector<16x16xf32>
    %22 = arith.maximumf %20, %21 : vector<16x16xf32>
    %c64 = arith.constant 64 : index
    %c0_13 = arith.constant 0 : index
    %23 = vector.load %arg3[%c64, %c0_13] : memref<832x128xbf16, #tpu.memory_space<vmem>>, vector<16x8xbf16>
    %c80 = arith.constant 80 : index
    %c0_14 = arith.constant 0 : index
    %24 = vector.load %arg3[%c80, %c0_14] : memref<832x128xbf16, #tpu.memory_space<vmem>>, vector<128x8xbf16>
    %25 = arith.negf %22 : vector<16x16xf32>
    %26 = math.exp %25 : vector<16x16xf32>
    %cst_15 = arith.constant 1.000000e+00 : f32
    %27 = vector.broadcast %cst_15 : f32 to vector<16x16xf32>
    %28 = arith.addf %27, %26 : vector<16x16xf32>
    %29 = arith.divf %27, %28 : vector<16x16xf32>
    %30 = arith.mulf %22, %29 : vector<16x16xf32>
    %31 = arith.truncf %30 : vector<16x16xf32> to vector<16x16xbf16>
    %cst_16 = arith.constant dense<0.000000e+00> : vector<16x8xf32>
    %32 = tpu.matmul %31, %23, %cst_16 {dimension_numbers = #tpu.dot_dimension_numbers<[1], [0], [0], [1], [0, 0, 1, 1], [], []>} : vector<16x16xbf16>, vector<16x8xbf16>, vector<16x8xf32> -> vector<16x8xf32>
    %cst_17 = arith.constant -2.200000e+00 : f32
    %33 = vector.broadcast %cst_17 : f32 to vector<16x16xf32>
    %34 = arith.cmpf oge, %22, %33 : vector<16x16xf32>
    %cst_18 = arith.constant -1.800000e+00 : f32
    %35 = vector.broadcast %cst_18 : f32 to vector<16x16xf32>
    %36 = arith.cmpf olt, %22, %35 : vector<16x16xf32>
    %37 = arith.andi %34, %36 : vector<16x16xi1>
    %38 = arith.extui %37 : vector<16x16xi1> to vector<16x16xi32>
    %39 = arith.sitofp %38 : vector<16x16xi32> to vector<16x16xf32>
    %cst_19 = arith.constant -1.800000e+00 : f32
    %40 = vector.broadcast %cst_19 : f32 to vector<16x16xf32>
    %41 = arith.cmpf oge, %22, %40 : vector<16x16xf32>
    %cst_20 = arith.constant -1.400000e+00 : f32
    %42 = vector.broadcast %cst_20 : f32 to vector<16x16xf32>
    %43 = arith.cmpf olt, %22, %42 : vector<16x16xf32>
    %44 = arith.andi %41, %43 : vector<16x16xi1>
    %45 = arith.extui %44 : vector<16x16xi1> to vector<16x16xi32>
    %46 = arith.sitofp %45 : vector<16x16xi32> to vector<16x16xf32>
    %cst_21 = arith.constant -1.400000e+00 : f32
    %47 = vector.broadcast %cst_21 : f32 to vector<16x16xf32>
    %48 = arith.cmpf oge, %22, %47 : vector<16x16xf32>
    %cst_22 = arith.constant -1.000000e+00 : f32
    %49 = vector.broadcast %cst_22 : f32 to vector<16x16xf32>
    %50 = arith.cmpf olt, %22, %49 : vector<16x16xf32>
    %51 = arith.andi %48, %50 : vector<16x16xi1>
    %52 = arith.extui %51 : vector<16x16xi1> to vector<16x16xi32>
    %53 = arith.sitofp %52 : vector<16x16xi32> to vector<16x16xf32>
    %cst_23 = arith.constant -1.000000e+00 : f32
    %54 = vector.broadcast %cst_23 : f32 to vector<16x16xf32>
    %55 = arith.cmpf oge, %22, %54 : vector<16x16xf32>
    %cst_24 = arith.constant -6.000000e-01 : f32
    %56 = vector.broadcast %cst_24 : f32 to vector<16x16xf32>
    %57 = arith.cmpf olt, %22, %56 : vector<16x16xf32>
    %58 = arith.andi %55, %57 : vector<16x16xi1>
    %59 = arith.extui %58 : vector<16x16xi1> to vector<16x16xi32>
    %60 = arith.sitofp %59 : vector<16x16xi32> to vector<16x16xf32>
    %cst_25 = arith.constant -6.000000e-01 : f32
    %61 = vector.broadcast %cst_25 : f32 to vector<16x16xf32>
    %62 = arith.cmpf oge, %22, %61 : vector<16x16xf32>
    %cst_26 = arith.constant -2.000000e-01 : f32
    %63 = vector.broadcast %cst_26 : f32 to vector<16x16xf32>
    %64 = arith.cmpf olt, %22, %63 : vector<16x16xf32>
    %65 = arith.andi %62, %64 : vector<16x16xi1>
    %66 = arith.extui %65 : vector<16x16xi1> to vector<16x16xi32>
    %67 = arith.sitofp %66 : vector<16x16xi32> to vector<16x16xf32>
    %cst_27 = arith.constant -2.000000e-01 : f32
    %68 = vector.broadcast %cst_27 : f32 to vector<16x16xf32>
    %69 = arith.cmpf oge, %22, %68 : vector<16x16xf32>
    %cst_28 = arith.constant 2.000000e-01 : f32
    %70 = vector.broadcast %cst_28 : f32 to vector<16x16xf32>
    %71 = arith.cmpf olt, %22, %70 : vector<16x16xf32>
    %72 = arith.andi %69, %71 : vector<16x16xi1>
    %73 = arith.extui %72 : vector<16x16xi1> to vector<16x16xi32>
    %74 = arith.sitofp %73 : vector<16x16xi32> to vector<16x16xf32>
    %cst_29 = arith.constant 2.000000e-01 : f32
    %75 = vector.broadcast %cst_29 : f32 to vector<16x16xf32>
    %76 = arith.cmpf oge, %22, %75 : vector<16x16xf32>
    %cst_30 = arith.constant 6.000000e-01 : f32
    %77 = vector.broadcast %cst_30 : f32 to vector<16x16xf32>
    %78 = arith.cmpf olt, %22, %77 : vector<16x16xf32>
    %79 = arith.andi %76, %78 : vector<16x16xi1>
    %80 = arith.extui %79 : vector<16x16xi1> to vector<16x16xi32>
    %81 = arith.sitofp %80 : vector<16x16xi32> to vector<16x16xf32>
    %cst_31 = arith.constant 6.000000e-01 : f32
    %82 = vector.broadcast %cst_31 : f32 to vector<16x16xf32>
    %83 = arith.cmpf oge, %22, %82 : vector<16x16xf32>
    %cst_32 = arith.constant 1.000000e+00 : f32
    %84 = vector.broadcast %cst_32 : f32 to vector<16x16xf32>
    %85 = arith.cmpf olt, %22, %84 : vector<16x16xf32>
    %86 = arith.andi %83, %85 : vector<16x16xi1>
    %87 = arith.extui %86 : vector<16x16xi1> to vector<16x16xi32>
    %88 = arith.sitofp %87 : vector<16x16xi32> to vector<16x16xf32>
    %cst_33 = arith.constant 1.000000e+00 : f32
    %89 = vector.broadcast %cst_33 : f32 to vector<16x16xf32>
    %90 = arith.cmpf oge, %22, %89 : vector<16x16xf32>
    %cst_34 = arith.constant 1.400000e+00 : f32
    %91 = vector.broadcast %cst_34 : f32 to vector<16x16xf32>
    %92 = arith.cmpf olt, %22, %91 : vector<16x16xf32>
    %93 = arith.andi %90, %92 : vector<16x16xi1>
    %94 = arith.extui %93 : vector<16x16xi1> to vector<16x16xi32>
    %95 = arith.sitofp %94 : vector<16x16xi32> to vector<16x16xf32>
    %cst_35 = arith.constant 1.400000e+00 : f32
    %96 = vector.broadcast %cst_35 : f32 to vector<16x16xf32>
    %97 = arith.cmpf oge, %22, %96 : vector<16x16xf32>
    %cst_36 = arith.constant 1.800000e+00 : f32
    %98 = vector.broadcast %cst_36 : f32 to vector<16x16xf32>
    %99 = arith.cmpf olt, %22, %98 : vector<16x16xf32>
    %100 = arith.andi %97, %99 : vector<16x16xi1>
    %101 = arith.extui %100 : vector<16x16xi1> to vector<16x16xi32>
    %102 = arith.sitofp %101 : vector<16x16xi32> to vector<16x16xf32>
    %cst_37 = arith.constant 1.800000e+00 : f32
    %103 = vector.broadcast %cst_37 : f32 to vector<16x16xf32>
    %104 = arith.cmpf oge, %22, %103 : vector<16x16xf32>
    %cst_38 = arith.constant 2.200000e+00 : f32
    %105 = vector.broadcast %cst_38 : f32 to vector<16x16xf32>
    %106 = arith.cmpf olt, %22, %105 : vector<16x16xf32>
    %107 = arith.andi %104, %106 : vector<16x16xi1>
    %108 = arith.extui %107 : vector<16x16xi1> to vector<16x16xi32>
    %109 = arith.sitofp %108 : vector<16x16xi32> to vector<16x16xf32>
    %cst_39 = arith.constant -2.200000e+00 : f32
    %110 = vector.broadcast %cst_39 : f32 to vector<16x16xf32>
    %111 = arith.subf %22, %110 : vector<16x16xf32>
    %cst_40 = arith.constant 2.500000e+00 : f32
    %112 = vector.broadcast %cst_40 : f32 to vector<16x16xf32>
    %113 = arith.mulf %111, %112 : vector<16x16xf32>
    %114 = arith.mulf %113, %39 : vector<16x16xf32>
    %cst_41 = arith.constant -1.400000e+00 : f32
    %115 = vector.broadcast %cst_41 : f32 to vector<16x16xf32>
    %116 = arith.subf %115, %22 : vector<16x16xf32>
    %cst_42 = arith.constant 2.500000e+00 : f32
    %117 = vector.broadcast %cst_42 : f32 to vector<16x16xf32>
    %118 = arith.mulf %116, %117 : vector<16x16xf32>
    %119 = arith.mulf %118, %46 : vector<16x16xf32>
    %120 = arith.addf %114, %119 : vector<16x16xf32>
    %cst_43 = arith.constant -1.800000e+00 : f32
    %121 = vector.broadcast %cst_43 : f32 to vector<16x16xf32>
    %122 = arith.subf %22, %121 : vector<16x16xf32>
    %cst_44 = arith.constant 2.500000e+00 : f32
    %123 = vector.broadcast %cst_44 : f32 to vector<16x16xf32>
    %124 = arith.mulf %122, %123 : vector<16x16xf32>
    %125 = arith.mulf %124, %46 : vector<16x16xf32>
    %cst_45 = arith.constant -1.000000e+00 : f32
    %126 = vector.broadcast %cst_45 : f32 to vector<16x16xf32>
    %127 = arith.subf %126, %22 : vector<16x16xf32>
    %cst_46 = arith.constant 2.500000e+00 : f32
    %128 = vector.broadcast %cst_46 : f32 to vector<16x16xf32>
    %129 = arith.mulf %127, %128 : vector<16x16xf32>
    %130 = arith.mulf %129, %53 : vector<16x16xf32>
    %131 = arith.addf %125, %130 : vector<16x16xf32>
    %cst_47 = arith.constant -1.400000e+00 : f32
    %132 = vector.broadcast %cst_47 : f32 to vector<16x16xf32>
    %133 = arith.subf %22, %132 : vector<16x16xf32>
    %cst_48 = arith.constant 2.500000e+00 : f32
    %134 = vector.broadcast %cst_48 : f32 to vector<16x16xf32>
    %135 = arith.mulf %133, %134 : vector<16x16xf32>
    %136 = arith.mulf %135, %53 : vector<16x16xf32>
    %cst_49 = arith.constant -6.000000e-01 : f32
    %137 = vector.broadcast %cst_49 : f32 to vector<16x16xf32>
    %138 = arith.subf %137, %22 : vector<16x16xf32>
    %cst_50 = arith.constant 2.500000e+00 : f32
    %139 = vector.broadcast %cst_50 : f32 to vector<16x16xf32>
    %140 = arith.mulf %138, %139 : vector<16x16xf32>
    %141 = arith.mulf %140, %60 : vector<16x16xf32>
    %142 = arith.addf %136, %141 : vector<16x16xf32>
    %cst_51 = arith.constant -1.000000e+00 : f32
    %143 = vector.broadcast %cst_51 : f32 to vector<16x16xf32>
    %144 = arith.subf %22, %143 : vector<16x16xf32>
    %cst_52 = arith.constant 2.500000e+00 : f32
    %145 = vector.broadcast %cst_52 : f32 to vector<16x16xf32>
    %146 = arith.mulf %144, %145 : vector<16x16xf32>
    %147 = arith.mulf %146, %60 : vector<16x16xf32>
    %cst_53 = arith.constant -2.000000e-01 : f32
    %148 = vector.broadcast %cst_53 : f32 to vector<16x16xf32>
    %149 = arith.subf %148, %22 : vector<16x16xf32>
    %cst_54 = arith.constant 2.500000e+00 : f32
    %150 = vector.broadcast %cst_54 : f32 to vector<16x16xf32>
    %151 = arith.mulf %149, %150 : vector<16x16xf32>
    %152 = arith.mulf %151, %67 : vector<16x16xf32>
    %153 = arith.addf %147, %152 : vector<16x16xf32>
    %cst_55 = arith.constant -6.000000e-01 : f32
    %154 = vector.broadcast %cst_55 : f32 to vector<16x16xf32>
    %155 = arith.subf %22, %154 : vector<16x16xf32>
    %cst_56 = arith.constant 2.500000e+00 : f32
    %156 = vector.broadcast %cst_56 : f32 to vector<16x16xf32>
    %157 = arith.mulf %155, %156 : vector<16x16xf32>
    %158 = arith.mulf %157, %67 : vector<16x16xf32>
    %cst_57 = arith.constant 2.000000e-01 : f32
    %159 = vector.broadcast %cst_57 : f32 to vector<16x16xf32>
    %160 = arith.subf %159, %22 : vector<16x16xf32>
    %cst_58 = arith.constant 2.500000e+00 : f32
    %161 = vector.broadcast %cst_58 : f32 to vector<16x16xf32>
    %162 = arith.mulf %160, %161 : vector<16x16xf32>
    %163 = arith.mulf %162, %74 : vector<16x16xf32>
    %164 = arith.addf %158, %163 : vector<16x16xf32>
    %cst_59 = arith.constant -2.000000e-01 : f32
    %165 = vector.broadcast %cst_59 : f32 to vector<16x16xf32>
    %166 = arith.subf %22, %165 : vector<16x16xf32>
    %cst_60 = arith.constant 2.500000e+00 : f32
    %167 = vector.broadcast %cst_60 : f32 to vector<16x16xf32>
    %168 = arith.mulf %166, %167 : vector<16x16xf32>
    %169 = arith.mulf %168, %74 : vector<16x16xf32>
    %cst_61 = arith.constant 6.000000e-01 : f32
    %170 = vector.broadcast %cst_61 : f32 to vector<16x16xf32>
    %171 = arith.subf %170, %22 : vector<16x16xf32>
    %cst_62 = arith.constant 2.500000e+00 : f32
    %172 = vector.broadcast %cst_62 : f32 to vector<16x16xf32>
    %173 = arith.mulf %171, %172 : vector<16x16xf32>
    %174 = arith.mulf %173, %81 : vector<16x16xf32>
    %175 = arith.addf %169, %174 : vector<16x16xf32>
    %cst_63 = arith.constant 2.000000e-01 : f32
    %176 = vector.broadcast %cst_63 : f32 to vector<16x16xf32>
    %177 = arith.subf %22, %176 : vector<16x16xf32>
    %cst_64 = arith.constant 2.500000e+00 : f32
    %178 = vector.broadcast %cst_64 : f32 to vector<16x16xf32>
    %179 = arith.mulf %177, %178 : vector<16x16xf32>
    %180 = arith.mulf %179, %81 : vector<16x16xf32>
    %cst_65 = arith.constant 1.000000e+00 : f32
    %181 = vector.broadcast %cst_65 : f32 to vector<16x16xf32>
    %182 = arith.subf %181, %22 : vector<16x16xf32>
    %cst_66 = arith.constant 2.500000e+00 : f32
    %183 = vector.broadcast %cst_66 : f32 to vector<16x16xf32>
    %184 = arith.mulf %182, %183 : vector<16x16xf32>
    %185 = arith.mulf %184, %88 : vector<16x16xf32>
    %186 = arith.addf %180, %185 : vector<16x16xf32>
    %cst_67 = arith.constant 6.000000e-01 : f32
    %187 = vector.broadcast %cst_67 : f32 to vector<16x16xf32>
    %188 = arith.subf %22, %187 : vector<16x16xf32>
    %cst_68 = arith.constant 2.500000e+00 : f32
    %189 = vector.broadcast %cst_68 : f32 to vector<16x16xf32>
    %190 = arith.mulf %188, %189 : vector<16x16xf32>
    %191 = arith.mulf %190, %88 : vector<16x16xf32>
    %cst_69 = arith.constant 1.400000e+00 : f32
    %192 = vector.broadcast %cst_69 : f32 to vector<16x16xf32>
    %193 = arith.subf %192, %22 : vector<16x16xf32>
    %cst_70 = arith.constant 2.500000e+00 : f32
    %194 = vector.broadcast %cst_70 : f32 to vector<16x16xf32>
    %195 = arith.mulf %193, %194 : vector<16x16xf32>
    %196 = arith.mulf %195, %95 : vector<16x16xf32>
    %197 = arith.addf %191, %196 : vector<16x16xf32>
    %cst_71 = arith.constant 1.000000e+00 : f32
    %198 = vector.broadcast %cst_71 : f32 to vector<16x16xf32>
    %199 = arith.subf %22, %198 : vector<16x16xf32>
    %cst_72 = arith.constant 2.500000e+00 : f32
    %200 = vector.broadcast %cst_72 : f32 to vector<16x16xf32>
    %201 = arith.mulf %199, %200 : vector<16x16xf32>
    %202 = arith.mulf %201, %95 : vector<16x16xf32>
    %cst_73 = arith.constant 1.800000e+00 : f32
    %203 = vector.broadcast %cst_73 : f32 to vector<16x16xf32>
    %204 = arith.subf %203, %22 : vector<16x16xf32>
    %cst_74 = arith.constant 2.500000e+00 : f32
    %205 = vector.broadcast %cst_74 : f32 to vector<16x16xf32>
    %206 = arith.mulf %204, %205 : vector<16x16xf32>
    %207 = arith.mulf %206, %102 : vector<16x16xf32>
    %208 = arith.addf %202, %207 : vector<16x16xf32>
    %cst_75 = arith.constant 1.400000e+00 : f32
    %209 = vector.broadcast %cst_75 : f32 to vector<16x16xf32>
    %210 = arith.subf %22, %209 : vector<16x16xf32>
    %cst_76 = arith.constant 2.500000e+00 : f32
    %211 = vector.broadcast %cst_76 : f32 to vector<16x16xf32>
    %212 = arith.mulf %210, %211 : vector<16x16xf32>
    %213 = arith.mulf %212, %102 : vector<16x16xf32>
    %cst_77 = arith.constant 2.200000e+00 : f32
    %214 = vector.broadcast %cst_77 : f32 to vector<16x16xf32>
    %215 = arith.subf %214, %22 : vector<16x16xf32>
    %cst_78 = arith.constant 2.500000e+00 : f32
    %216 = vector.broadcast %cst_78 : f32 to vector<16x16xf32>
    %217 = arith.mulf %215, %216 : vector<16x16xf32>
    %218 = arith.mulf %217, %109 : vector<16x16xf32>
    %219 = arith.addf %213, %218 : vector<16x16xf32>
    %cst_79 = arith.constant -2.200000e+00 : f32
    %220 = vector.broadcast %cst_79 : f32 to vector<16x16xf32>
    %221 = arith.subf %22, %220 : vector<16x16xf32>
    %cst_80 = arith.constant 1.250000e+00 : f32
    %222 = vector.broadcast %cst_80 : f32 to vector<16x16xf32>
    %223 = arith.mulf %221, %222 : vector<16x16xf32>
    %224 = arith.mulf %223, %120 : vector<16x16xf32>
    %cst_81 = arith.constant -1.000000e+00 : f32
    %225 = vector.broadcast %cst_81 : f32 to vector<16x16xf32>
    %226 = arith.subf %225, %22 : vector<16x16xf32>
    %cst_82 = arith.constant 1.250000e+00 : f32
    %227 = vector.broadcast %cst_82 : f32 to vector<16x16xf32>
    %228 = arith.mulf %226, %227 : vector<16x16xf32>
    %229 = arith.mulf %228, %131 : vector<16x16xf32>
    %230 = arith.addf %224, %229 : vector<16x16xf32>
    %cst_83 = arith.constant -1.800000e+00 : f32
    %231 = vector.broadcast %cst_83 : f32 to vector<16x16xf32>
    %232 = arith.subf %22, %231 : vector<16x16xf32>
    %cst_84 = arith.constant 1.250000e+00 : f32
    %233 = vector.broadcast %cst_84 : f32 to vector<16x16xf32>
    %234 = arith.mulf %232, %233 : vector<16x16xf32>
    %235 = arith.mulf %234, %131 : vector<16x16xf32>
    %cst_85 = arith.constant -6.000000e-01 : f32
    %236 = vector.broadcast %cst_85 : f32 to vector<16x16xf32>
    %237 = arith.subf %236, %22 : vector<16x16xf32>
    %cst_86 = arith.constant 1.250000e+00 : f32
    %238 = vector.broadcast %cst_86 : f32 to vector<16x16xf32>
    %239 = arith.mulf %237, %238 : vector<16x16xf32>
    %240 = arith.mulf %239, %142 : vector<16x16xf32>
    %241 = arith.addf %235, %240 : vector<16x16xf32>
    %cst_87 = arith.constant -1.400000e+00 : f32
    %242 = vector.broadcast %cst_87 : f32 to vector<16x16xf32>
    %243 = arith.subf %22, %242 : vector<16x16xf32>
    %cst_88 = arith.constant 1.250000e+00 : f32
    %244 = vector.broadcast %cst_88 : f32 to vector<16x16xf32>
    %245 = arith.mulf %243, %244 : vector<16x16xf32>
    %246 = arith.mulf %245, %142 : vector<16x16xf32>
    %cst_89 = arith.constant -2.000000e-01 : f32
    %247 = vector.broadcast %cst_89 : f32 to vector<16x16xf32>
    %248 = arith.subf %247, %22 : vector<16x16xf32>
    %cst_90 = arith.constant 1.250000e+00 : f32
    %249 = vector.broadcast %cst_90 : f32 to vector<16x16xf32>
    %250 = arith.mulf %248, %249 : vector<16x16xf32>
    %251 = arith.mulf %250, %153 : vector<16x16xf32>
    %252 = arith.addf %246, %251 : vector<16x16xf32>
    %cst_91 = arith.constant -1.000000e+00 : f32
    %253 = vector.broadcast %cst_91 : f32 to vector<16x16xf32>
    %254 = arith.subf %22, %253 : vector<16x16xf32>
    %cst_92 = arith.constant 1.250000e+00 : f32
    %255 = vector.broadcast %cst_92 : f32 to vector<16x16xf32>
    %256 = arith.mulf %254, %255 : vector<16x16xf32>
    %257 = arith.mulf %256, %153 : vector<16x16xf32>
    %cst_93 = arith.constant 2.000000e-01 : f32
    %258 = vector.broadcast %cst_93 : f32 to vector<16x16xf32>
    %259 = arith.subf %258, %22 : vector<16x16xf32>
    %cst_94 = arith.constant 1.250000e+00 : f32
    %260 = vector.broadcast %cst_94 : f32 to vector<16x16xf32>
    %261 = arith.mulf %259, %260 : vector<16x16xf32>
    %262 = arith.mulf %261, %164 : vector<16x16xf32>
    %263 = arith.addf %257, %262 : vector<16x16xf32>
    %cst_95 = arith.constant -6.000000e-01 : f32
    %264 = vector.broadcast %cst_95 : f32 to vector<16x16xf32>
    %265 = arith.subf %22, %264 : vector<16x16xf32>
    %cst_96 = arith.constant 1.250000e+00 : f32
    %266 = vector.broadcast %cst_96 : f32 to vector<16x16xf32>
    %267 = arith.mulf %265, %266 : vector<16x16xf32>
    %268 = arith.mulf %267, %164 : vector<16x16xf32>
    %cst_97 = arith.constant 6.000000e-01 : f32
    %269 = vector.broadcast %cst_97 : f32 to vector<16x16xf32>
    %270 = arith.subf %269, %22 : vector<16x16xf32>
    %cst_98 = arith.constant 1.250000e+00 : f32
    %271 = vector.broadcast %cst_98 : f32 to vector<16x16xf32>
    %272 = arith.mulf %270, %271 : vector<16x16xf32>
    %273 = arith.mulf %272, %175 : vector<16x16xf32>
    %274 = arith.addf %268, %273 : vector<16x16xf32>
    %cst_99 = arith.constant -2.000000e-01 : f32
    %275 = vector.broadcast %cst_99 : f32 to vector<16x16xf32>
    %276 = arith.subf %22, %275 : vector<16x16xf32>
    %cst_100 = arith.constant 1.250000e+00 : f32
    %277 = vector.broadcast %cst_100 : f32 to vector<16x16xf32>
    %278 = arith.mulf %276, %277 : vector<16x16xf32>
    %279 = arith.mulf %278, %175 : vector<16x16xf32>
    %cst_101 = arith.constant 1.000000e+00 : f32
    %280 = vector.broadcast %cst_101 : f32 to vector<16x16xf32>
    %281 = arith.subf %280, %22 : vector<16x16xf32>
    %cst_102 = arith.constant 1.250000e+00 : f32
    %282 = vector.broadcast %cst_102 : f32 to vector<16x16xf32>
    %283 = arith.mulf %281, %282 : vector<16x16xf32>
    %284 = arith.mulf %283, %186 : vector<16x16xf32>
    %285 = arith.addf %279, %284 : vector<16x16xf32>
    %cst_103 = arith.constant 2.000000e-01 : f32
    %286 = vector.broadcast %cst_103 : f32 to vector<16x16xf32>
    %287 = arith.subf %22, %286 : vector<16x16xf32>
    %cst_104 = arith.constant 1.250000e+00 : f32
    %288 = vector.broadcast %cst_104 : f32 to vector<16x16xf32>
    %289 = arith.mulf %287, %288 : vector<16x16xf32>
    %290 = arith.mulf %289, %186 : vector<16x16xf32>
    %cst_105 = arith.constant 1.400000e+00 : f32
    %291 = vector.broadcast %cst_105 : f32 to vector<16x16xf32>
    %292 = arith.subf %291, %22 : vector<16x16xf32>
    %cst_106 = arith.constant 1.250000e+00 : f32
    %293 = vector.broadcast %cst_106 : f32 to vector<16x16xf32>
    %294 = arith.mulf %292, %293 : vector<16x16xf32>
    %295 = arith.mulf %294, %197 : vector<16x16xf32>
    %296 = arith.addf %290, %295 : vector<16x16xf32>
    %cst_107 = arith.constant 6.000000e-01 : f32
    %297 = vector.broadcast %cst_107 : f32 to vector<16x16xf32>
    %298 = arith.subf %22, %297 : vector<16x16xf32>
    %cst_108 = arith.constant 1.250000e+00 : f32
    %299 = vector.broadcast %cst_108 : f32 to vector<16x16xf32>
    %300 = arith.mulf %298, %299 : vector<16x16xf32>
    %301 = arith.mulf %300, %197 : vector<16x16xf32>
    %cst_109 = arith.constant 1.800000e+00 : f32
    %302 = vector.broadcast %cst_109 : f32 to vector<16x16xf32>
    %303 = arith.subf %302, %22 : vector<16x16xf32>
    %cst_110 = arith.constant 1.250000e+00 : f32
    %304 = vector.broadcast %cst_110 : f32 to vector<16x16xf32>
    %305 = arith.mulf %303, %304 : vector<16x16xf32>
    %306 = arith.mulf %305, %208 : vector<16x16xf32>
    %307 = arith.addf %301, %306 : vector<16x16xf32>
    %cst_111 = arith.constant 1.000000e+00 : f32
    %308 = vector.broadcast %cst_111 : f32 to vector<16x16xf32>
    %309 = arith.subf %22, %308 : vector<16x16xf32>
    %cst_112 = arith.constant 1.250000e+00 : f32
    %310 = vector.broadcast %cst_112 : f32 to vector<16x16xf32>
    %311 = arith.mulf %309, %310 : vector<16x16xf32>
    %312 = arith.mulf %311, %208 : vector<16x16xf32>
    %cst_113 = arith.constant 2.200000e+00 : f32
    %313 = vector.broadcast %cst_113 : f32 to vector<16x16xf32>
    %314 = arith.subf %313, %22 : vector<16x16xf32>
    %cst_114 = arith.constant 1.250000e+00 : f32
    %315 = vector.broadcast %cst_114 : f32 to vector<16x16xf32>
    %316 = arith.mulf %314, %315 : vector<16x16xf32>
    %317 = arith.mulf %316, %219 : vector<16x16xf32>
    %318 = arith.addf %312, %317 : vector<16x16xf32>
    %cst_115 = arith.constant -2.200000e+00 : f32
    %319 = vector.broadcast %cst_115 : f32 to vector<16x16xf32>
    %320 = arith.subf %22, %319 : vector<16x16xf32>
    %cst_116 = arith.constant 0.833333313 : f32
    %321 = vector.broadcast %cst_116 : f32 to vector<16x16xf32>
    %322 = arith.mulf %320, %321 : vector<16x16xf32>
    %323 = arith.mulf %322, %230 : vector<16x16xf32>
    %cst_117 = arith.constant -6.000000e-01 : f32
    %324 = vector.broadcast %cst_117 : f32 to vector<16x16xf32>
    %325 = arith.subf %324, %22 : vector<16x16xf32>
    %cst_118 = arith.constant 0.833333313 : f32
    %326 = vector.broadcast %cst_118 : f32 to vector<16x16xf32>
    %327 = arith.mulf %325, %326 : vector<16x16xf32>
    %328 = arith.mulf %327, %241 : vector<16x16xf32>
    %329 = arith.addf %323, %328 : vector<16x16xf32>
    %cst_119 = arith.constant -1.800000e+00 : f32
    %330 = vector.broadcast %cst_119 : f32 to vector<16x16xf32>
    %331 = arith.subf %22, %330 : vector<16x16xf32>
    %cst_120 = arith.constant 0.833333313 : f32
    %332 = vector.broadcast %cst_120 : f32 to vector<16x16xf32>
    %333 = arith.mulf %331, %332 : vector<16x16xf32>
    %334 = arith.mulf %333, %241 : vector<16x16xf32>
    %cst_121 = arith.constant -2.000000e-01 : f32
    %335 = vector.broadcast %cst_121 : f32 to vector<16x16xf32>
    %336 = arith.subf %335, %22 : vector<16x16xf32>
    %cst_122 = arith.constant 0.833333313 : f32
    %337 = vector.broadcast %cst_122 : f32 to vector<16x16xf32>
    %338 = arith.mulf %336, %337 : vector<16x16xf32>
    %339 = arith.mulf %338, %252 : vector<16x16xf32>
    %340 = arith.addf %334, %339 : vector<16x16xf32>
    %cst_123 = arith.constant -1.400000e+00 : f32
    %341 = vector.broadcast %cst_123 : f32 to vector<16x16xf32>
    %342 = arith.subf %22, %341 : vector<16x16xf32>
    %cst_124 = arith.constant 0.833333313 : f32
    %343 = vector.broadcast %cst_124 : f32 to vector<16x16xf32>
    %344 = arith.mulf %342, %343 : vector<16x16xf32>
    %345 = arith.mulf %344, %252 : vector<16x16xf32>
    %cst_125 = arith.constant 2.000000e-01 : f32
    %346 = vector.broadcast %cst_125 : f32 to vector<16x16xf32>
    %347 = arith.subf %346, %22 : vector<16x16xf32>
    %cst_126 = arith.constant 0.833333313 : f32
    %348 = vector.broadcast %cst_126 : f32 to vector<16x16xf32>
    %349 = arith.mulf %347, %348 : vector<16x16xf32>
    %350 = arith.mulf %349, %263 : vector<16x16xf32>
    %351 = arith.addf %345, %350 : vector<16x16xf32>
    %cst_127 = arith.constant -1.000000e+00 : f32
    %352 = vector.broadcast %cst_127 : f32 to vector<16x16xf32>
    %353 = arith.subf %22, %352 : vector<16x16xf32>
    %cst_128 = arith.constant 0.833333313 : f32
    %354 = vector.broadcast %cst_128 : f32 to vector<16x16xf32>
    %355 = arith.mulf %353, %354 : vector<16x16xf32>
    %356 = arith.mulf %355, %263 : vector<16x16xf32>
    %cst_129 = arith.constant 6.000000e-01 : f32
    %357 = vector.broadcast %cst_129 : f32 to vector<16x16xf32>
    %358 = arith.subf %357, %22 : vector<16x16xf32>
    %cst_130 = arith.constant 0.833333313 : f32
    %359 = vector.broadcast %cst_130 : f32 to vector<16x16xf32>
    %360 = arith.mulf %358, %359 : vector<16x16xf32>
    %361 = arith.mulf %360, %274 : vector<16x16xf32>
    %362 = arith.addf %356, %361 : vector<16x16xf32>
    %cst_131 = arith.constant -6.000000e-01 : f32
    %363 = vector.broadcast %cst_131 : f32 to vector<16x16xf32>
    %364 = arith.subf %22, %363 : vector<16x16xf32>
    %cst_132 = arith.constant 0.833333313 : f32
    %365 = vector.broadcast %cst_132 : f32 to vector<16x16xf32>
    %366 = arith.mulf %364, %365 : vector<16x16xf32>
    %367 = arith.mulf %366, %274 : vector<16x16xf32>
    %cst_133 = arith.constant 1.000000e+00 : f32
    %368 = vector.broadcast %cst_133 : f32 to vector<16x16xf32>
    %369 = arith.subf %368, %22 : vector<16x16xf32>
    %cst_134 = arith.constant 0.833333313 : f32
    %370 = vector.broadcast %cst_134 : f32 to vector<16x16xf32>
    %371 = arith.mulf %369, %370 : vector<16x16xf32>
    %372 = arith.mulf %371, %285 : vector<16x16xf32>
    %373 = arith.addf %367, %372 : vector<16x16xf32>
    %cst_135 = arith.constant -2.000000e-01 : f32
    %374 = vector.broadcast %cst_135 : f32 to vector<16x16xf32>
    %375 = arith.subf %22, %374 : vector<16x16xf32>
    %cst_136 = arith.constant 0.833333313 : f32
    %376 = vector.broadcast %cst_136 : f32 to vector<16x16xf32>
    %377 = arith.mulf %375, %376 : vector<16x16xf32>
    %378 = arith.mulf %377, %285 : vector<16x16xf32>
    %cst_137 = arith.constant 1.400000e+00 : f32
    %379 = vector.broadcast %cst_137 : f32 to vector<16x16xf32>
    %380 = arith.subf %379, %22 : vector<16x16xf32>
    %cst_138 = arith.constant 0.833333313 : f32
    %381 = vector.broadcast %cst_138 : f32 to vector<16x16xf32>
    %382 = arith.mulf %380, %381 : vector<16x16xf32>
    %383 = arith.mulf %382, %296 : vector<16x16xf32>
    %384 = arith.addf %378, %383 : vector<16x16xf32>
    %cst_139 = arith.constant 2.000000e-01 : f32
    %385 = vector.broadcast %cst_139 : f32 to vector<16x16xf32>
    %386 = arith.subf %22, %385 : vector<16x16xf32>
    %cst_140 = arith.constant 0.833333313 : f32
    %387 = vector.broadcast %cst_140 : f32 to vector<16x16xf32>
    %388 = arith.mulf %386, %387 : vector<16x16xf32>
    %389 = arith.mulf %388, %296 : vector<16x16xf32>
    %cst_141 = arith.constant 1.800000e+00 : f32
    %390 = vector.broadcast %cst_141 : f32 to vector<16x16xf32>
    %391 = arith.subf %390, %22 : vector<16x16xf32>
    %cst_142 = arith.constant 0.833333313 : f32
    %392 = vector.broadcast %cst_142 : f32 to vector<16x16xf32>
    %393 = arith.mulf %391, %392 : vector<16x16xf32>
    %394 = arith.mulf %393, %307 : vector<16x16xf32>
    %395 = arith.addf %389, %394 : vector<16x16xf32>
    %cst_143 = arith.constant 6.000000e-01 : f32
    %396 = vector.broadcast %cst_143 : f32 to vector<16x16xf32>
    %397 = arith.subf %22, %396 : vector<16x16xf32>
    %cst_144 = arith.constant 0.833333313 : f32
    %398 = vector.broadcast %cst_144 : f32 to vector<16x16xf32>
    %399 = arith.mulf %397, %398 : vector<16x16xf32>
    %400 = arith.mulf %399, %307 : vector<16x16xf32>
    %cst_145 = arith.constant 2.200000e+00 : f32
    %401 = vector.broadcast %cst_145 : f32 to vector<16x16xf32>
    %402 = arith.subf %401, %22 : vector<16x16xf32>
    %cst_146 = arith.constant 0.833333313 : f32
    %403 = vector.broadcast %cst_146 : f32 to vector<16x16xf32>
    %404 = arith.mulf %402, %403 : vector<16x16xf32>
    %405 = arith.mulf %404, %318 : vector<16x16xf32>
    %406 = arith.addf %400, %405 : vector<16x16xf32>
    %407 = tpu.concatenate %329, %340, %351, %362, %373, %384, %395, %406 in 1 : vector<16x16xf32>, vector<16x16xf32>, vector<16x16xf32>, vector<16x16xf32>, vector<16x16xf32>, vector<16x16xf32>, vector<16x16xf32>, vector<16x16xf32> -> vector<16x128xf32>
    %408 = arith.truncf %407 : vector<16x128xf32> to vector<16x128xbf16>
    %cst_147 = arith.constant dense<0.000000e+00> : vector<16x8xf32>
    %409 = tpu.matmul %408, %24, %cst_147 {dimension_numbers = #tpu.dot_dimension_numbers<[1], [0], [0], [1], [0, 0, 1, 1], [], []>} : vector<16x128xbf16>, vector<128x8xbf16>, vector<16x8xf32> -> vector<16x8xf32>
    %410 = arith.addf %32, %409 : vector<16x8xf32>
    %411 = arith.truncf %410 : vector<16x8xf32> to vector<16x8xbf16>
    %c208 = arith.constant 208 : index
    %c0_148 = arith.constant 0 : index
    %412 = vector.load %arg3[%c208, %c0_148] : memref<832x128xbf16, #tpu.memory_space<vmem>>, vector<8x16xbf16>
    %cst_149 = arith.constant dense<0.000000e+00> : vector<16x16xf32>
    %413 = tpu.matmul %411, %412, %cst_149 {dimension_numbers = #tpu.dot_dimension_numbers<[1], [0], [0], [1], [0, 0, 1, 1], [], []>} : vector<16x8xbf16>, vector<8x16xbf16>, vector<16x16xf32> -> vector<16x16xf32>
    %414 = arith.truncf %413 : vector<16x16xf32> to vector<16x16xbf16>
    %cst_150 = arith.constant dense<0.000000e+00> : vector<16x16xf32>
    %415 = tpu.matmul %0, %414, %cst_150 {dimension_numbers = #tpu.dot_dimension_numbers<[1], [0], [0], [1], [0, 0, 1, 1], [], []>} : vector<16x16xbf16>, vector<16x16xbf16>, vector<16x16xf32> -> vector<16x16xf32>
    %c224 = arith.constant 224 : index
    %c0_151 = arith.constant 0 : index
    %416 = vector.load %arg3[%c224, %c0_151] : memref<832x128xbf16, #tpu.memory_space<vmem>>, vector<1x16xbf16>
    %417 = arith.extf %416 : vector<1x16xbf16> to vector<1x16xf32>
    %418 = vector.broadcast %417 : vector<1x16xf32> to vector<16x16xf32>
    %419 = arith.addf %415, %418 : vector<16x16xf32>
    %cst_152 = arith.constant 0.000000e+00 : f32
    %420 = vector.broadcast %cst_152 : f32 to vector<16x16xf32>
    %421 = arith.maximumf %419, %420 : vector<16x16xf32>
    %c240 = arith.constant 240 : index
    %c0_153 = arith.constant 0 : index
    %422 = vector.load %arg3[%c240, %c0_153] : memref<832x128xbf16, #tpu.memory_space<vmem>>, vector<16x8xbf16>
    %c256 = arith.constant 256 : index
    %c0_154 = arith.constant 0 : index
    %423 = vector.load %arg3[%c256, %c0_154] : memref<832x128xbf16, #tpu.memory_space<vmem>>, vector<128x8xbf16>
    %424 = arith.negf %421 : vector<16x16xf32>
    %425 = math.exp %424 : vector<16x16xf32>
    %cst_155 = arith.constant 1.000000e+00 : f32
    %426 = vector.broadcast %cst_155 : f32 to vector<16x16xf32>
    %427 = arith.addf %426, %425 : vector<16x16xf32>
    %428 = arith.divf %426, %427 : vector<16x16xf32>
    %429 = arith.mulf %421, %428 : vector<16x16xf32>
    %430 = arith.truncf %429 : vector<16x16xf32> to vector<16x16xbf16>
    %cst_156 = arith.constant dense<0.000000e+00> : vector<16x8xf32>
    %431 = tpu.matmul %430, %422, %cst_156 {dimension_numbers = #tpu.dot_dimension_numbers<[1], [0], [0], [1], [0, 0, 1, 1], [], []>} : vector<16x16xbf16>, vector<16x8xbf16>, vector<16x8xf32> -> vector<16x8xf32>
    %cst_157 = arith.constant -2.200000e+00 : f32
    %432 = vector.broadcast %cst_157 : f32 to vector<16x16xf32>
    %433 = arith.cmpf oge, %421, %432 : vector<16x16xf32>
    %cst_158 = arith.constant -1.800000e+00 : f32
    %434 = vector.broadcast %cst_158 : f32 to vector<16x16xf32>
    %435 = arith.cmpf olt, %421, %434 : vector<16x16xf32>
    %436 = arith.andi %433, %435 : vector<16x16xi1>
    %437 = arith.extui %436 : vector<16x16xi1> to vector<16x16xi32>
    %438 = arith.sitofp %437 : vector<16x16xi32> to vector<16x16xf32>
    %cst_159 = arith.constant -1.800000e+00 : f32
    %439 = vector.broadcast %cst_159 : f32 to vector<16x16xf32>
    %440 = arith.cmpf oge, %421, %439 : vector<16x16xf32>
    %cst_160 = arith.constant -1.400000e+00 : f32
    %441 = vector.broadcast %cst_160 : f32 to vector<16x16xf32>
    %442 = arith.cmpf olt, %421, %441 : vector<16x16xf32>
    %443 = arith.andi %440, %442 : vector<16x16xi1>
    %444 = arith.extui %443 : vector<16x16xi1> to vector<16x16xi32>
    %445 = arith.sitofp %444 : vector<16x16xi32> to vector<16x16xf32>
    %cst_161 = arith.constant -1.400000e+00 : f32
    %446 = vector.broadcast %cst_161 : f32 to vector<16x16xf32>
    %447 = arith.cmpf oge, %421, %446 : vector<16x16xf32>
    %cst_162 = arith.constant -1.000000e+00 : f32
    %448 = vector.broadcast %cst_162 : f32 to vector<16x16xf32>
    %449 = arith.cmpf olt, %421, %448 : vector<16x16xf32>
    %450 = arith.andi %447, %449 : vector<16x16xi1>
    %451 = arith.extui %450 : vector<16x16xi1> to vector<16x16xi32>
    %452 = arith.sitofp %451 : vector<16x16xi32> to vector<16x16xf32>
    %cst_163 = arith.constant -1.000000e+00 : f32
    %453 = vector.broadcast %cst_163 : f32 to vector<16x16xf32>
    %454 = arith.cmpf oge, %421, %453 : vector<16x16xf32>
    %cst_164 = arith.constant -6.000000e-01 : f32
    %455 = vector.broadcast %cst_164 : f32 to vector<16x16xf32>
    %456 = arith.cmpf olt, %421, %455 : vector<16x16xf32>
    %457 = arith.andi %454, %456 : vector<16x16xi1>
    %458 = arith.extui %457 : vector<16x16xi1> to vector<16x16xi32>
    %459 = arith.sitofp %458 : vector<16x16xi32> to vector<16x16xf32>
    %cst_165 = arith.constant -6.000000e-01 : f32
    %460 = vector.broadcast %cst_165 : f32 to vector<16x16xf32>
    %461 = arith.cmpf oge, %421, %460 : vector<16x16xf32>
    %cst_166 = arith.constant -2.000000e-01 : f32
    %462 = vector.broadcast %cst_166 : f32 to vector<16x16xf32>
    %463 = arith.cmpf olt, %421, %462 : vector<16x16xf32>
    %464 = arith.andi %461, %463 : vector<16x16xi1>
    %465 = arith.extui %464 : vector<16x16xi1> to vector<16x16xi32>
    %466 = arith.sitofp %465 : vector<16x16xi32> to vector<16x16xf32>
    %cst_167 = arith.constant -2.000000e-01 : f32
    %467 = vector.broadcast %cst_167 : f32 to vector<16x16xf32>
    %468 = arith.cmpf oge, %421, %467 : vector<16x16xf32>
    %cst_168 = arith.constant 2.000000e-01 : f32
    %469 = vector.broadcast %cst_168 : f32 to vector<16x16xf32>
    %470 = arith.cmpf olt, %421, %469 : vector<16x16xf32>
    %471 = arith.andi %468, %470 : vector<16x16xi1>
    %472 = arith.extui %471 : vector<16x16xi1> to vector<16x16xi32>
    %473 = arith.sitofp %472 : vector<16x16xi32> to vector<16x16xf32>
    %cst_169 = arith.constant 2.000000e-01 : f32
    %474 = vector.broadcast %cst_169 : f32 to vector<16x16xf32>
    %475 = arith.cmpf oge, %421, %474 : vector<16x16xf32>
    %cst_170 = arith.constant 6.000000e-01 : f32
    %476 = vector.broadcast %cst_170 : f32 to vector<16x16xf32>
    %477 = arith.cmpf olt, %421, %476 : vector<16x16xf32>
    %478 = arith.andi %475, %477 : vector<16x16xi1>
    %479 = arith.extui %478 : vector<16x16xi1> to vector<16x16xi32>
    %480 = arith.sitofp %479 : vector<16x16xi32> to vector<16x16xf32>
    %cst_171 = arith.constant 6.000000e-01 : f32
    %481 = vector.broadcast %cst_171 : f32 to vector<16x16xf32>
    %482 = arith.cmpf oge, %421, %481 : vector<16x16xf32>
    %cst_172 = arith.constant 1.000000e+00 : f32
    %483 = vector.broadcast %cst_172 : f32 to vector<16x16xf32>
    %484 = arith.cmpf olt, %421, %483 : vector<16x16xf32>
    %485 = arith.andi %482, %484 : vector<16x16xi1>
    %486 = arith.extui %485 : vector<16x16xi1> to vector<16x16xi32>
    %487 = arith.sitofp %486 : vector<16x16xi32> to vector<16x16xf32>
    %cst_173 = arith.constant 1.000000e+00 : f32
    %488 = vector.broadcast %cst_173 : f32 to vector<16x16xf32>
    %489 = arith.cmpf oge, %421, %488 : vector<16x16xf32>
    %cst_174 = arith.constant 1.400000e+00 : f32
    %490 = vector.broadcast %cst_174 : f32 to vector<16x16xf32>
    %491 = arith.cmpf olt, %421, %490 : vector<16x16xf32>
    %492 = arith.andi %489, %491 : vector<16x16xi1>
    %493 = arith.extui %492 : vector<16x16xi1> to vector<16x16xi32>
    %494 = arith.sitofp %493 : vector<16x16xi32> to vector<16x16xf32>
    %cst_175 = arith.constant 1.400000e+00 : f32
    %495 = vector.broadcast %cst_175 : f32 to vector<16x16xf32>
    %496 = arith.cmpf oge, %421, %495 : vector<16x16xf32>
    %cst_176 = arith.constant 1.800000e+00 : f32
    %497 = vector.broadcast %cst_176 : f32 to vector<16x16xf32>
    %498 = arith.cmpf olt, %421, %497 : vector<16x16xf32>
    %499 = arith.andi %496, %498 : vector<16x16xi1>
    %500 = arith.extui %499 : vector<16x16xi1> to vector<16x16xi32>
    %501 = arith.sitofp %500 : vector<16x16xi32> to vector<16x16xf32>
    %cst_177 = arith.constant 1.800000e+00 : f32
    %502 = vector.broadcast %cst_177 : f32 to vector<16x16xf32>
    %503 = arith.cmpf oge, %421, %502 : vector<16x16xf32>
    %cst_178 = arith.constant 2.200000e+00 : f32
    %504 = vector.broadcast %cst_178 : f32 to vector<16x16xf32>
    %505 = arith.cmpf olt, %421, %504 : vector<16x16xf32>
    %506 = arith.andi %503, %505 : vector<16x16xi1>
    %507 = arith.extui %506 : vector<16x16xi1> to vector<16x16xi32>
    %508 = arith.sitofp %507 : vector<16x16xi32> to vector<16x16xf32>
    %cst_179 = arith.constant -2.200000e+00 : f32
    %509 = vector.broadcast %cst_179 : f32 to vector<16x16xf32>
    %510 = arith.subf %421, %509 : vector<16x16xf32>
    %cst_180 = arith.constant 2.500000e+00 : f32
    %511 = vector.broadcast %cst_180 : f32 to vector<16x16xf32>
    %512 = arith.mulf %510, %511 : vector<16x16xf32>
    %513 = arith.mulf %512, %438 : vector<16x16xf32>
    %cst_181 = arith.constant -1.400000e+00 : f32
    %514 = vector.broadcast %cst_181 : f32 to vector<16x16xf32>
    %515 = arith.subf %514, %421 : vector<16x16xf32>
    %cst_182 = arith.constant 2.500000e+00 : f32
    %516 = vector.broadcast %cst_182 : f32 to vector<16x16xf32>
    %517 = arith.mulf %515, %516 : vector<16x16xf32>
    %518 = arith.mulf %517, %445 : vector<16x16xf32>
    %519 = arith.addf %513, %518 : vector<16x16xf32>
    %cst_183 = arith.constant -1.800000e+00 : f32
    %520 = vector.broadcast %cst_183 : f32 to vector<16x16xf32>
    %521 = arith.subf %421, %520 : vector<16x16xf32>
    %cst_184 = arith.constant 2.500000e+00 : f32
    %522 = vector.broadcast %cst_184 : f32 to vector<16x16xf32>
    %523 = arith.mulf %521, %522 : vector<16x16xf32>
    %524 = arith.mulf %523, %445 : vector<16x16xf32>
    %cst_185 = arith.constant -1.000000e+00 : f32
    %525 = vector.broadcast %cst_185 : f32 to vector<16x16xf32>
    %526 = arith.subf %525, %421 : vector<16x16xf32>
    %cst_186 = arith.constant 2.500000e+00 : f32
    %527 = vector.broadcast %cst_186 : f32 to vector<16x16xf32>
    %528 = arith.mulf %526, %527 : vector<16x16xf32>
    %529 = arith.mulf %528, %452 : vector<16x16xf32>
    %530 = arith.addf %524, %529 : vector<16x16xf32>
    %cst_187 = arith.constant -1.400000e+00 : f32
    %531 = vector.broadcast %cst_187 : f32 to vector<16x16xf32>
    %532 = arith.subf %421, %531 : vector<16x16xf32>
    %cst_188 = arith.constant 2.500000e+00 : f32
    %533 = vector.broadcast %cst_188 : f32 to vector<16x16xf32>
    %534 = arith.mulf %532, %533 : vector<16x16xf32>
    %535 = arith.mulf %534, %452 : vector<16x16xf32>
    %cst_189 = arith.constant -6.000000e-01 : f32
    %536 = vector.broadcast %cst_189 : f32 to vector<16x16xf32>
    %537 = arith.subf %536, %421 : vector<16x16xf32>
    %cst_190 = arith.constant 2.500000e+00 : f32
    %538 = vector.broadcast %cst_190 : f32 to vector<16x16xf32>
    %539 = arith.mulf %537, %538 : vector<16x16xf32>
    %540 = arith.mulf %539, %459 : vector<16x16xf32>
    %541 = arith.addf %535, %540 : vector<16x16xf32>
    %cst_191 = arith.constant -1.000000e+00 : f32
    %542 = vector.broadcast %cst_191 : f32 to vector<16x16xf32>
    %543 = arith.subf %421, %542 : vector<16x16xf32>
    %cst_192 = arith.constant 2.500000e+00 : f32
    %544 = vector.broadcast %cst_192 : f32 to vector<16x16xf32>
    %545 = arith.mulf %543, %544 : vector<16x16xf32>
    %546 = arith.mulf %545, %459 : vector<16x16xf32>
    %cst_193 = arith.constant -2.000000e-01 : f32
    %547 = vector.broadcast %cst_193 : f32 to vector<16x16xf32>
    %548 = arith.subf %547, %421 : vector<16x16xf32>
    %cst_194 = arith.constant 2.500000e+00 : f32
    %549 = vector.broadcast %cst_194 : f32 to vector<16x16xf32>
    %550 = arith.mulf %548, %549 : vector<16x16xf32>
    %551 = arith.mulf %550, %466 : vector<16x16xf32>
    %552 = arith.addf %546, %551 : vector<16x16xf32>
    %cst_195 = arith.constant -6.000000e-01 : f32
    %553 = vector.broadcast %cst_195 : f32 to vector<16x16xf32>
    %554 = arith.subf %421, %553 : vector<16x16xf32>
    %cst_196 = arith.constant 2.500000e+00 : f32
    %555 = vector.broadcast %cst_196 : f32 to vector<16x16xf32>
    %556 = arith.mulf %554, %555 : vector<16x16xf32>
    %557 = arith.mulf %556, %466 : vector<16x16xf32>
    %cst_197 = arith.constant 2.000000e-01 : f32
    %558 = vector.broadcast %cst_197 : f32 to vector<16x16xf32>
    %559 = arith.subf %558, %421 : vector<16x16xf32>
    %cst_198 = arith.constant 2.500000e+00 : f32
    %560 = vector.broadcast %cst_198 : f32 to vector<16x16xf32>
    %561 = arith.mulf %559, %560 : vector<16x16xf32>
    %562 = arith.mulf %561, %473 : vector<16x16xf32>
    %563 = arith.addf %557, %562 : vector<16x16xf32>
    %cst_199 = arith.constant -2.000000e-01 : f32
    %564 = vector.broadcast %cst_199 : f32 to vector<16x16xf32>
    %565 = arith.subf %421, %564 : vector<16x16xf32>
    %cst_200 = arith.constant 2.500000e+00 : f32
    %566 = vector.broadcast %cst_200 : f32 to vector<16x16xf32>
    %567 = arith.mulf %565, %566 : vector<16x16xf32>
    %568 = arith.mulf %567, %473 : vector<16x16xf32>
    %cst_201 = arith.constant 6.000000e-01 : f32
    %569 = vector.broadcast %cst_201 : f32 to vector<16x16xf32>
    %570 = arith.subf %569, %421 : vector<16x16xf32>
    %cst_202 = arith.constant 2.500000e+00 : f32
    %571 = vector.broadcast %cst_202 : f32 to vector<16x16xf32>
    %572 = arith.mulf %570, %571 : vector<16x16xf32>
    %573 = arith.mulf %572, %480 : vector<16x16xf32>
    %574 = arith.addf %568, %573 : vector<16x16xf32>
    %cst_203 = arith.constant 2.000000e-01 : f32
    %575 = vector.broadcast %cst_203 : f32 to vector<16x16xf32>
    %576 = arith.subf %421, %575 : vector<16x16xf32>
    %cst_204 = arith.constant 2.500000e+00 : f32
    %577 = vector.broadcast %cst_204 : f32 to vector<16x16xf32>
    %578 = arith.mulf %576, %577 : vector<16x16xf32>
    %579 = arith.mulf %578, %480 : vector<16x16xf32>
    %cst_205 = arith.constant 1.000000e+00 : f32
    %580 = vector.broadcast %cst_205 : f32 to vector<16x16xf32>
    %581 = arith.subf %580, %421 : vector<16x16xf32>
    %cst_206 = arith.constant 2.500000e+00 : f32
    %582 = vector.broadcast %cst_206 : f32 to vector<16x16xf32>
    %583 = arith.mulf %581, %582 : vector<16x16xf32>
    %584 = arith.mulf %583, %487 : vector<16x16xf32>
    %585 = arith.addf %579, %584 : vector<16x16xf32>
    %cst_207 = arith.constant 6.000000e-01 : f32
    %586 = vector.broadcast %cst_207 : f32 to vector<16x16xf32>
    %587 = arith.subf %421, %586 : vector<16x16xf32>
    %cst_208 = arith.constant 2.500000e+00 : f32
    %588 = vector.broadcast %cst_208 : f32 to vector<16x16xf32>
    %589 = arith.mulf %587, %588 : vector<16x16xf32>
    %590 = arith.mulf %589, %487 : vector<16x16xf32>
    %cst_209 = arith.constant 1.400000e+00 : f32
    %591 = vector.broadcast %cst_209 : f32 to vector<16x16xf32>
    %592 = arith.subf %591, %421 : vector<16x16xf32>
    %cst_210 = arith.constant 2.500000e+00 : f32
    %593 = vector.broadcast %cst_210 : f32 to vector<16x16xf32>
    %594 = arith.mulf %592, %593 : vector<16x16xf32>
    %595 = arith.mulf %594, %494 : vector<16x16xf32>
    %596 = arith.addf %590, %595 : vector<16x16xf32>
    %cst_211 = arith.constant 1.000000e+00 : f32
    %597 = vector.broadcast %cst_211 : f32 to vector<16x16xf32>
    %598 = arith.subf %421, %597 : vector<16x16xf32>
    %cst_212 = arith.constant 2.500000e+00 : f32
    %599 = vector.broadcast %cst_212 : f32 to vector<16x16xf32>
    %600 = arith.mulf %598, %599 : vector<16x16xf32>
    %601 = arith.mulf %600, %494 : vector<16x16xf32>
    %cst_213 = arith.constant 1.800000e+00 : f32
    %602 = vector.broadcast %cst_213 : f32 to vector<16x16xf32>
    %603 = arith.subf %602, %421 : vector<16x16xf32>
    %cst_214 = arith.constant 2.500000e+00 : f32
    %604 = vector.broadcast %cst_214 : f32 to vector<16x16xf32>
    %605 = arith.mulf %603, %604 : vector<16x16xf32>
    %606 = arith.mulf %605, %501 : vector<16x16xf32>
    %607 = arith.addf %601, %606 : vector<16x16xf32>
    %cst_215 = arith.constant 1.400000e+00 : f32
    %608 = vector.broadcast %cst_215 : f32 to vector<16x16xf32>
    %609 = arith.subf %421, %608 : vector<16x16xf32>
    %cst_216 = arith.constant 2.500000e+00 : f32
    %610 = vector.broadcast %cst_216 : f32 to vector<16x16xf32>
    %611 = arith.mulf %609, %610 : vector<16x16xf32>
    %612 = arith.mulf %611, %501 : vector<16x16xf32>
    %cst_217 = arith.constant 2.200000e+00 : f32
    %613 = vector.broadcast %cst_217 : f32 to vector<16x16xf32>
    %614 = arith.subf %613, %421 : vector<16x16xf32>
    %cst_218 = arith.constant 2.500000e+00 : f32
    %615 = vector.broadcast %cst_218 : f32 to vector<16x16xf32>
    %616 = arith.mulf %614, %615 : vector<16x16xf32>
    %617 = arith.mulf %616, %508 : vector<16x16xf32>
    %618 = arith.addf %612, %617 : vector<16x16xf32>
    %cst_219 = arith.constant -2.200000e+00 : f32
    %619 = vector.broadcast %cst_219 : f32 to vector<16x16xf32>
    %620 = arith.subf %421, %619 : vector<16x16xf32>
    %cst_220 = arith.constant 1.250000e+00 : f32
    %621 = vector.broadcast %cst_220 : f32 to vector<16x16xf32>
    %622 = arith.mulf %620, %621 : vector<16x16xf32>
    %623 = arith.mulf %622, %519 : vector<16x16xf32>
    %cst_221 = arith.constant -1.000000e+00 : f32
    %624 = vector.broadcast %cst_221 : f32 to vector<16x16xf32>
    %625 = arith.subf %624, %421 : vector<16x16xf32>
    %cst_222 = arith.constant 1.250000e+00 : f32
    %626 = vector.broadcast %cst_222 : f32 to vector<16x16xf32>
    %627 = arith.mulf %625, %626 : vector<16x16xf32>
    %628 = arith.mulf %627, %530 : vector<16x16xf32>
    %629 = arith.addf %623, %628 : vector<16x16xf32>
    %cst_223 = arith.constant -1.800000e+00 : f32
    %630 = vector.broadcast %cst_223 : f32 to vector<16x16xf32>
    %631 = arith.subf %421, %630 : vector<16x16xf32>
    %cst_224 = arith.constant 1.250000e+00 : f32
    %632 = vector.broadcast %cst_224 : f32 to vector<16x16xf32>
    %633 = arith.mulf %631, %632 : vector<16x16xf32>
    %634 = arith.mulf %633, %530 : vector<16x16xf32>
    %cst_225 = arith.constant -6.000000e-01 : f32
    %635 = vector.broadcast %cst_225 : f32 to vector<16x16xf32>
    %636 = arith.subf %635, %421 : vector<16x16xf32>
    %cst_226 = arith.constant 1.250000e+00 : f32
    %637 = vector.broadcast %cst_226 : f32 to vector<16x16xf32>
    %638 = arith.mulf %636, %637 : vector<16x16xf32>
    %639 = arith.mulf %638, %541 : vector<16x16xf32>
    %640 = arith.addf %634, %639 : vector<16x16xf32>
    %cst_227 = arith.constant -1.400000e+00 : f32
    %641 = vector.broadcast %cst_227 : f32 to vector<16x16xf32>
    %642 = arith.subf %421, %641 : vector<16x16xf32>
    %cst_228 = arith.constant 1.250000e+00 : f32
    %643 = vector.broadcast %cst_228 : f32 to vector<16x16xf32>
    %644 = arith.mulf %642, %643 : vector<16x16xf32>
    %645 = arith.mulf %644, %541 : vector<16x16xf32>
    %cst_229 = arith.constant -2.000000e-01 : f32
    %646 = vector.broadcast %cst_229 : f32 to vector<16x16xf32>
    %647 = arith.subf %646, %421 : vector<16x16xf32>
    %cst_230 = arith.constant 1.250000e+00 : f32
    %648 = vector.broadcast %cst_230 : f32 to vector<16x16xf32>
    %649 = arith.mulf %647, %648 : vector<16x16xf32>
    %650 = arith.mulf %649, %552 : vector<16x16xf32>
    %651 = arith.addf %645, %650 : vector<16x16xf32>
    %cst_231 = arith.constant -1.000000e+00 : f32
    %652 = vector.broadcast %cst_231 : f32 to vector<16x16xf32>
    %653 = arith.subf %421, %652 : vector<16x16xf32>
    %cst_232 = arith.constant 1.250000e+00 : f32
    %654 = vector.broadcast %cst_232 : f32 to vector<16x16xf32>
    %655 = arith.mulf %653, %654 : vector<16x16xf32>
    %656 = arith.mulf %655, %552 : vector<16x16xf32>
    %cst_233 = arith.constant 2.000000e-01 : f32
    %657 = vector.broadcast %cst_233 : f32 to vector<16x16xf32>
    %658 = arith.subf %657, %421 : vector<16x16xf32>
    %cst_234 = arith.constant 1.250000e+00 : f32
    %659 = vector.broadcast %cst_234 : f32 to vector<16x16xf32>
    %660 = arith.mulf %658, %659 : vector<16x16xf32>
    %661 = arith.mulf %660, %563 : vector<16x16xf32>
    %662 = arith.addf %656, %661 : vector<16x16xf32>
    %cst_235 = arith.constant -6.000000e-01 : f32
    %663 = vector.broadcast %cst_235 : f32 to vector<16x16xf32>
    %664 = arith.subf %421, %663 : vector<16x16xf32>
    %cst_236 = arith.constant 1.250000e+00 : f32
    %665 = vector.broadcast %cst_236 : f32 to vector<16x16xf32>
    %666 = arith.mulf %664, %665 : vector<16x16xf32>
    %667 = arith.mulf %666, %563 : vector<16x16xf32>
    %cst_237 = arith.constant 6.000000e-01 : f32
    %668 = vector.broadcast %cst_237 : f32 to vector<16x16xf32>
    %669 = arith.subf %668, %421 : vector<16x16xf32>
    %cst_238 = arith.constant 1.250000e+00 : f32
    %670 = vector.broadcast %cst_238 : f32 to vector<16x16xf32>
    %671 = arith.mulf %669, %670 : vector<16x16xf32>
    %672 = arith.mulf %671, %574 : vector<16x16xf32>
    %673 = arith.addf %667, %672 : vector<16x16xf32>
    %cst_239 = arith.constant -2.000000e-01 : f32
    %674 = vector.broadcast %cst_239 : f32 to vector<16x16xf32>
    %675 = arith.subf %421, %674 : vector<16x16xf32>
    %cst_240 = arith.constant 1.250000e+00 : f32
    %676 = vector.broadcast %cst_240 : f32 to vector<16x16xf32>
    %677 = arith.mulf %675, %676 : vector<16x16xf32>
    %678 = arith.mulf %677, %574 : vector<16x16xf32>
    %cst_241 = arith.constant 1.000000e+00 : f32
    %679 = vector.broadcast %cst_241 : f32 to vector<16x16xf32>
    %680 = arith.subf %679, %421 : vector<16x16xf32>
    %cst_242 = arith.constant 1.250000e+00 : f32
    %681 = vector.broadcast %cst_242 : f32 to vector<16x16xf32>
    %682 = arith.mulf %680, %681 : vector<16x16xf32>
    %683 = arith.mulf %682, %585 : vector<16x16xf32>
    %684 = arith.addf %678, %683 : vector<16x16xf32>
    %cst_243 = arith.constant 2.000000e-01 : f32
    %685 = vector.broadcast %cst_243 : f32 to vector<16x16xf32>
    %686 = arith.subf %421, %685 : vector<16x16xf32>
    %cst_244 = arith.constant 1.250000e+00 : f32
    %687 = vector.broadcast %cst_244 : f32 to vector<16x16xf32>
    %688 = arith.mulf %686, %687 : vector<16x16xf32>
    %689 = arith.mulf %688, %585 : vector<16x16xf32>
    %cst_245 = arith.constant 1.400000e+00 : f32
    %690 = vector.broadcast %cst_245 : f32 to vector<16x16xf32>
    %691 = arith.subf %690, %421 : vector<16x16xf32>
    %cst_246 = arith.constant 1.250000e+00 : f32
    %692 = vector.broadcast %cst_246 : f32 to vector<16x16xf32>
    %693 = arith.mulf %691, %692 : vector<16x16xf32>
    %694 = arith.mulf %693, %596 : vector<16x16xf32>
    %695 = arith.addf %689, %694 : vector<16x16xf32>
    %cst_247 = arith.constant 6.000000e-01 : f32
    %696 = vector.broadcast %cst_247 : f32 to vector<16x16xf32>
    %697 = arith.subf %421, %696 : vector<16x16xf32>
    %cst_248 = arith.constant 1.250000e+00 : f32
    %698 = vector.broadcast %cst_248 : f32 to vector<16x16xf32>
    %699 = arith.mulf %697, %698 : vector<16x16xf32>
    %700 = arith.mulf %699, %596 : vector<16x16xf32>
    %cst_249 = arith.constant 1.800000e+00 : f32
    %701 = vector.broadcast %cst_249 : f32 to vector<16x16xf32>
    %702 = arith.subf %701, %421 : vector<16x16xf32>
    %cst_250 = arith.constant 1.250000e+00 : f32
    %703 = vector.broadcast %cst_250 : f32 to vector<16x16xf32>
    %704 = arith.mulf %702, %703 : vector<16x16xf32>
    %705 = arith.mulf %704, %607 : vector<16x16xf32>
    %706 = arith.addf %700, %705 : vector<16x16xf32>
    %cst_251 = arith.constant 1.000000e+00 : f32
    %707 = vector.broadcast %cst_251 : f32 to vector<16x16xf32>
    %708 = arith.subf %421, %707 : vector<16x16xf32>
    %cst_252 = arith.constant 1.250000e+00 : f32
    %709 = vector.broadcast %cst_252 : f32 to vector<16x16xf32>
    %710 = arith.mulf %708, %709 : vector<16x16xf32>
    %711 = arith.mulf %710, %607 : vector<16x16xf32>
    %cst_253 = arith.constant 2.200000e+00 : f32
    %712 = vector.broadcast %cst_253 : f32 to vector<16x16xf32>
    %713 = arith.subf %712, %421 : vector<16x16xf32>
    %cst_254 = arith.constant 1.250000e+00 : f32
    %714 = vector.broadcast %cst_254 : f32 to vector<16x16xf32>
    %715 = arith.mulf %713, %714 : vector<16x16xf32>
    %716 = arith.mulf %715, %618 : vector<16x16xf32>
    %717 = arith.addf %711, %716 : vector<16x16xf32>
    %cst_255 = arith.constant -2.200000e+00 : f32
    %718 = vector.broadcast %cst_255 : f32 to vector<16x16xf32>
    %719 = arith.subf %421, %718 : vector<16x16xf32>
    %cst_256 = arith.constant 0.833333313 : f32
    %720 = vector.broadcast %cst_256 : f32 to vector<16x16xf32>
    %721 = arith.mulf %719, %720 : vector<16x16xf32>
    %722 = arith.mulf %721, %629 : vector<16x16xf32>
    %cst_257 = arith.constant -6.000000e-01 : f32
    %723 = vector.broadcast %cst_257 : f32 to vector<16x16xf32>
    %724 = arith.subf %723, %421 : vector<16x16xf32>
    %cst_258 = arith.constant 0.833333313 : f32
    %725 = vector.broadcast %cst_258 : f32 to vector<16x16xf32>
    %726 = arith.mulf %724, %725 : vector<16x16xf32>
    %727 = arith.mulf %726, %640 : vector<16x16xf32>
    %728 = arith.addf %722, %727 : vector<16x16xf32>
    %cst_259 = arith.constant -1.800000e+00 : f32
    %729 = vector.broadcast %cst_259 : f32 to vector<16x16xf32>
    %730 = arith.subf %421, %729 : vector<16x16xf32>
    %cst_260 = arith.constant 0.833333313 : f32
    %731 = vector.broadcast %cst_260 : f32 to vector<16x16xf32>
    %732 = arith.mulf %730, %731 : vector<16x16xf32>
    %733 = arith.mulf %732, %640 : vector<16x16xf32>
    %cst_261 = arith.constant -2.000000e-01 : f32
    %734 = vector.broadcast %cst_261 : f32 to vector<16x16xf32>
    %735 = arith.subf %734, %421 : vector<16x16xf32>
    %cst_262 = arith.constant 0.833333313 : f32
    %736 = vector.broadcast %cst_262 : f32 to vector<16x16xf32>
    %737 = arith.mulf %735, %736 : vector<16x16xf32>
    %738 = arith.mulf %737, %651 : vector<16x16xf32>
    %739 = arith.addf %733, %738 : vector<16x16xf32>
    %cst_263 = arith.constant -1.400000e+00 : f32
    %740 = vector.broadcast %cst_263 : f32 to vector<16x16xf32>
    %741 = arith.subf %421, %740 : vector<16x16xf32>
    %cst_264 = arith.constant 0.833333313 : f32
    %742 = vector.broadcast %cst_264 : f32 to vector<16x16xf32>
    %743 = arith.mulf %741, %742 : vector<16x16xf32>
    %744 = arith.mulf %743, %651 : vector<16x16xf32>
    %cst_265 = arith.constant 2.000000e-01 : f32
    %745 = vector.broadcast %cst_265 : f32 to vector<16x16xf32>
    %746 = arith.subf %745, %421 : vector<16x16xf32>
    %cst_266 = arith.constant 0.833333313 : f32
    %747 = vector.broadcast %cst_266 : f32 to vector<16x16xf32>
    %748 = arith.mulf %746, %747 : vector<16x16xf32>
    %749 = arith.mulf %748, %662 : vector<16x16xf32>
    %750 = arith.addf %744, %749 : vector<16x16xf32>
    %cst_267 = arith.constant -1.000000e+00 : f32
    %751 = vector.broadcast %cst_267 : f32 to vector<16x16xf32>
    %752 = arith.subf %421, %751 : vector<16x16xf32>
    %cst_268 = arith.constant 0.833333313 : f32
    %753 = vector.broadcast %cst_268 : f32 to vector<16x16xf32>
    %754 = arith.mulf %752, %753 : vector<16x16xf32>
    %755 = arith.mulf %754, %662 : vector<16x16xf32>
    %cst_269 = arith.constant 6.000000e-01 : f32
    %756 = vector.broadcast %cst_269 : f32 to vector<16x16xf32>
    %757 = arith.subf %756, %421 : vector<16x16xf32>
    %cst_270 = arith.constant 0.833333313 : f32
    %758 = vector.broadcast %cst_270 : f32 to vector<16x16xf32>
    %759 = arith.mulf %757, %758 : vector<16x16xf32>
    %760 = arith.mulf %759, %673 : vector<16x16xf32>
    %761 = arith.addf %755, %760 : vector<16x16xf32>
    %cst_271 = arith.constant -6.000000e-01 : f32
    %762 = vector.broadcast %cst_271 : f32 to vector<16x16xf32>
    %763 = arith.subf %421, %762 : vector<16x16xf32>
    %cst_272 = arith.constant 0.833333313 : f32
    %764 = vector.broadcast %cst_272 : f32 to vector<16x16xf32>
    %765 = arith.mulf %763, %764 : vector<16x16xf32>
    %766 = arith.mulf %765, %673 : vector<16x16xf32>
    %cst_273 = arith.constant 1.000000e+00 : f32
    %767 = vector.broadcast %cst_273 : f32 to vector<16x16xf32>
    %768 = arith.subf %767, %421 : vector<16x16xf32>
    %cst_274 = arith.constant 0.833333313 : f32
    %769 = vector.broadcast %cst_274 : f32 to vector<16x16xf32>
    %770 = arith.mulf %768, %769 : vector<16x16xf32>
    %771 = arith.mulf %770, %684 : vector<16x16xf32>
    %772 = arith.addf %766, %771 : vector<16x16xf32>
    %cst_275 = arith.constant -2.000000e-01 : f32
    %773 = vector.broadcast %cst_275 : f32 to vector<16x16xf32>
    %774 = arith.subf %421, %773 : vector<16x16xf32>
    %cst_276 = arith.constant 0.833333313 : f32
    %775 = vector.broadcast %cst_276 : f32 to vector<16x16xf32>
    %776 = arith.mulf %774, %775 : vector<16x16xf32>
    %777 = arith.mulf %776, %684 : vector<16x16xf32>
    %cst_277 = arith.constant 1.400000e+00 : f32
    %778 = vector.broadcast %cst_277 : f32 to vector<16x16xf32>
    %779 = arith.subf %778, %421 : vector<16x16xf32>
    %cst_278 = arith.constant 0.833333313 : f32
    %780 = vector.broadcast %cst_278 : f32 to vector<16x16xf32>
    %781 = arith.mulf %779, %780 : vector<16x16xf32>
    %782 = arith.mulf %781, %695 : vector<16x16xf32>
    %783 = arith.addf %777, %782 : vector<16x16xf32>
    %cst_279 = arith.constant 2.000000e-01 : f32
    %784 = vector.broadcast %cst_279 : f32 to vector<16x16xf32>
    %785 = arith.subf %421, %784 : vector<16x16xf32>
    %cst_280 = arith.constant 0.833333313 : f32
    %786 = vector.broadcast %cst_280 : f32 to vector<16x16xf32>
    %787 = arith.mulf %785, %786 : vector<16x16xf32>
    %788 = arith.mulf %787, %695 : vector<16x16xf32>
    %cst_281 = arith.constant 1.800000e+00 : f32
    %789 = vector.broadcast %cst_281 : f32 to vector<16x16xf32>
    %790 = arith.subf %789, %421 : vector<16x16xf32>
    %cst_282 = arith.constant 0.833333313 : f32
    %791 = vector.broadcast %cst_282 : f32 to vector<16x16xf32>
    %792 = arith.mulf %790, %791 : vector<16x16xf32>
    %793 = arith.mulf %792, %706 : vector<16x16xf32>
    %794 = arith.addf %788, %793 : vector<16x16xf32>
    %cst_283 = arith.constant 6.000000e-01 : f32
    %795 = vector.broadcast %cst_283 : f32 to vector<16x16xf32>
    %796 = arith.subf %421, %795 : vector<16x16xf32>
    %cst_284 = arith.constant 0.833333313 : f32
    %797 = vector.broadcast %cst_284 : f32 to vector<16x16xf32>
    %798 = arith.mulf %796, %797 : vector<16x16xf32>
    %799 = arith.mulf %798, %706 : vector<16x16xf32>
    %cst_285 = arith.constant 2.200000e+00 : f32
    %800 = vector.broadcast %cst_285 : f32 to vector<16x16xf32>
    %801 = arith.subf %800, %421 : vector<16x16xf32>
    %cst_286 = arith.constant 0.833333313 : f32
    %802 = vector.broadcast %cst_286 : f32 to vector<16x16xf32>
    %803 = arith.mulf %801, %802 : vector<16x16xf32>
    %804 = arith.mulf %803, %717 : vector<16x16xf32>
    %805 = arith.addf %799, %804 : vector<16x16xf32>
    %806 = tpu.concatenate %728, %739, %750, %761, %772, %783, %794, %805 in 1 : vector<16x16xf32>, vector<16x16xf32>, vector<16x16xf32>, vector<16x16xf32>, vector<16x16xf32>, vector<16x16xf32>, vector<16x16xf32>, vector<16x16xf32> -> vector<16x128xf32>
    %807 = arith.truncf %806 : vector<16x128xf32> to vector<16x128xbf16>
    %cst_287 = arith.constant dense<0.000000e+00> : vector<16x8xf32>
    %808 = tpu.matmul %807, %423, %cst_287 {dimension_numbers = #tpu.dot_dimension_numbers<[1], [0], [0], [1], [0, 0, 1, 1], [], []>} : vector<16x128xbf16>, vector<128x8xbf16>, vector<16x8xf32> -> vector<16x8xf32>
    %809 = arith.addf %431, %808 : vector<16x8xf32>
    %c0_288 = arith.constant 0 : index
    %c0_289 = arith.constant 0 : index
    %810 = vector.load %arg2[%c0_288, %c0_289] : memref<16x2xi32, #tpu.memory_space<vmem>>, vector<16x2xi32>
    %811 = tpu.iota {dimensions = array<i32: 1>} : vector<16x16xi32>
    %812 = vector.extract_strided_slice %810 {offsets = [0, 0], sizes = [16, 1], strides = [1, 1]} : vector<16x2xi32> to vector<16x1xi32>
    %813 = vector.broadcast %812 : vector<16x1xi32> to vector<16x16xi32>
    %814 = arith.cmpi eq, %811, %813 : vector<16x16xi32>
    %815 = arith.extui %814 : vector<16x16xi1> to vector<16x16xi32>
    %816 = arith.sitofp %815 : vector<16x16xi32> to vector<16x16xf32>
    %817 = arith.truncf %816 : vector<16x16xf32> to vector<16x16xbf16>
    %818 = vector.extract_strided_slice %810 {offsets = [0, 1], sizes = [16, 1], strides = [1, 1]} : vector<16x2xi32> to vector<16x1xi32>
    %819 = vector.broadcast %818 : vector<16x1xi32> to vector<16x16xi32>
    %820 = arith.cmpi eq, %811, %819 : vector<16x16xi32>
    %821 = arith.extui %820 : vector<16x16xi1> to vector<16x16xi32>
    %822 = arith.sitofp %821 : vector<16x16xi32> to vector<16x16xf32>
    %823 = arith.truncf %822 : vector<16x16xf32> to vector<16x16xbf16>
    %824 = arith.truncf %410 : vector<16x8xf32> to vector<16x8xbf16>
    %cst_290 = arith.constant dense<0.000000e+00> : vector<16x8xf32>
    %825 = tpu.matmul %817, %824, %cst_290 {dimension_numbers = #tpu.dot_dimension_numbers<[1], [0], [0], [1], [0, 0, 1, 1], [], []>} : vector<16x16xbf16>, vector<16x8xbf16>, vector<16x8xf32> -> vector<16x8xf32>
    %cst_291 = arith.constant dense<0.000000e+00> : vector<16x8xf32>
    %826 = tpu.matmul %823, %824, %cst_291 {dimension_numbers = #tpu.dot_dimension_numbers<[1], [0], [0], [1], [0, 0, 1, 1], [], []>} : vector<16x16xbf16>, vector<16x8xbf16>, vector<16x8xf32> -> vector<16x8xf32>
    %827 = arith.mulf %825, %826 : vector<16x8xf32>
    %c384 = arith.constant 384 : index
    %c0_292 = arith.constant 0 : index
    %828 = vector.load %arg3[%c384, %c0_292] : memref<832x128xbf16, #tpu.memory_space<vmem>>, vector<8x16xbf16>
    %c400 = arith.constant 400 : index
    %c0_293 = arith.constant 0 : index
    %829 = vector.load %arg3[%c400, %c0_293] : memref<832x128xbf16, #tpu.memory_space<vmem>>, vector<64x16xbf16>
    %830 = arith.negf %827 : vector<16x8xf32>
    %831 = math.exp %830 : vector<16x8xf32>
    %cst_294 = arith.constant 1.000000e+00 : f32
    %832 = vector.broadcast %cst_294 : f32 to vector<16x8xf32>
    %833 = arith.addf %832, %831 : vector<16x8xf32>
    %834 = arith.divf %832, %833 : vector<16x8xf32>
    %835 = arith.mulf %827, %834 : vector<16x8xf32>
    %836 = arith.truncf %835 : vector<16x8xf32> to vector<16x8xbf16>
    %cst_295 = arith.constant dense<0.000000e+00> : vector<16x16xf32>
    %837 = tpu.matmul %836, %828, %cst_295 {dimension_numbers = #tpu.dot_dimension_numbers<[1], [0], [0], [1], [0, 0, 1, 1], [], []>} : vector<16x8xbf16>, vector<8x16xbf16>, vector<16x16xf32> -> vector<16x16xf32>
    %cst_296 = arith.constant -2.200000e+00 : f32
    %838 = vector.broadcast %cst_296 : f32 to vector<16x8xf32>
    %839 = arith.cmpf oge, %827, %838 : vector<16x8xf32>
    %cst_297 = arith.constant -1.800000e+00 : f32
    %840 = vector.broadcast %cst_297 : f32 to vector<16x8xf32>
    %841 = arith.cmpf olt, %827, %840 : vector<16x8xf32>
    %842 = arith.andi %839, %841 : vector<16x8xi1>
    %843 = arith.extui %842 : vector<16x8xi1> to vector<16x8xi32>
    %844 = arith.sitofp %843 : vector<16x8xi32> to vector<16x8xf32>
    %cst_298 = arith.constant -1.800000e+00 : f32
    %845 = vector.broadcast %cst_298 : f32 to vector<16x8xf32>
    %846 = arith.cmpf oge, %827, %845 : vector<16x8xf32>
    %cst_299 = arith.constant -1.400000e+00 : f32
    %847 = vector.broadcast %cst_299 : f32 to vector<16x8xf32>
    %848 = arith.cmpf olt, %827, %847 : vector<16x8xf32>
    %849 = arith.andi %846, %848 : vector<16x8xi1>
    %850 = arith.extui %849 : vector<16x8xi1> to vector<16x8xi32>
    %851 = arith.sitofp %850 : vector<16x8xi32> to vector<16x8xf32>
    %cst_300 = arith.constant -1.400000e+00 : f32
    %852 = vector.broadcast %cst_300 : f32 to vector<16x8xf32>
    %853 = arith.cmpf oge, %827, %852 : vector<16x8xf32>
    %cst_301 = arith.constant -1.000000e+00 : f32
    %854 = vector.broadcast %cst_301 : f32 to vector<16x8xf32>
    %855 = arith.cmpf olt, %827, %854 : vector<16x8xf32>
    %856 = arith.andi %853, %855 : vector<16x8xi1>
    %857 = arith.extui %856 : vector<16x8xi1> to vector<16x8xi32>
    %858 = arith.sitofp %857 : vector<16x8xi32> to vector<16x8xf32>
    %cst_302 = arith.constant -1.000000e+00 : f32
    %859 = vector.broadcast %cst_302 : f32 to vector<16x8xf32>
    %860 = arith.cmpf oge, %827, %859 : vector<16x8xf32>
    %cst_303 = arith.constant -6.000000e-01 : f32
    %861 = vector.broadcast %cst_303 : f32 to vector<16x8xf32>
    %862 = arith.cmpf olt, %827, %861 : vector<16x8xf32>
    %863 = arith.andi %860, %862 : vector<16x8xi1>
    %864 = arith.extui %863 : vector<16x8xi1> to vector<16x8xi32>
    %865 = arith.sitofp %864 : vector<16x8xi32> to vector<16x8xf32>
    %cst_304 = arith.constant -6.000000e-01 : f32
    %866 = vector.broadcast %cst_304 : f32 to vector<16x8xf32>
    %867 = arith.cmpf oge, %827, %866 : vector<16x8xf32>
    %cst_305 = arith.constant -2.000000e-01 : f32
    %868 = vector.broadcast %cst_305 : f32 to vector<16x8xf32>
    %869 = arith.cmpf olt, %827, %868 : vector<16x8xf32>
    %870 = arith.andi %867, %869 : vector<16x8xi1>
    %871 = arith.extui %870 : vector<16x8xi1> to vector<16x8xi32>
    %872 = arith.sitofp %871 : vector<16x8xi32> to vector<16x8xf32>
    %cst_306 = arith.constant -2.000000e-01 : f32
    %873 = vector.broadcast %cst_306 : f32 to vector<16x8xf32>
    %874 = arith.cmpf oge, %827, %873 : vector<16x8xf32>
    %cst_307 = arith.constant 2.000000e-01 : f32
    %875 = vector.broadcast %cst_307 : f32 to vector<16x8xf32>
    %876 = arith.cmpf olt, %827, %875 : vector<16x8xf32>
    %877 = arith.andi %874, %876 : vector<16x8xi1>
    %878 = arith.extui %877 : vector<16x8xi1> to vector<16x8xi32>
    %879 = arith.sitofp %878 : vector<16x8xi32> to vector<16x8xf32>
    %cst_308 = arith.constant 2.000000e-01 : f32
    %880 = vector.broadcast %cst_308 : f32 to vector<16x8xf32>
    %881 = arith.cmpf oge, %827, %880 : vector<16x8xf32>
    %cst_309 = arith.constant 6.000000e-01 : f32
    %882 = vector.broadcast %cst_309 : f32 to vector<16x8xf32>
    %883 = arith.cmpf olt, %827, %882 : vector<16x8xf32>
    %884 = arith.andi %881, %883 : vector<16x8xi1>
    %885 = arith.extui %884 : vector<16x8xi1> to vector<16x8xi32>
    %886 = arith.sitofp %885 : vector<16x8xi32> to vector<16x8xf32>
    %cst_310 = arith.constant 6.000000e-01 : f32
    %887 = vector.broadcast %cst_310 : f32 to vector<16x8xf32>
    %888 = arith.cmpf oge, %827, %887 : vector<16x8xf32>
    %cst_311 = arith.constant 1.000000e+00 : f32
    %889 = vector.broadcast %cst_311 : f32 to vector<16x8xf32>
    %890 = arith.cmpf olt, %827, %889 : vector<16x8xf32>
    %891 = arith.andi %888, %890 : vector<16x8xi1>
    %892 = arith.extui %891 : vector<16x8xi1> to vector<16x8xi32>
    %893 = arith.sitofp %892 : vector<16x8xi32> to vector<16x8xf32>
    %cst_312 = arith.constant 1.000000e+00 : f32
    %894 = vector.broadcast %cst_312 : f32 to vector<16x8xf32>
    %895 = arith.cmpf oge, %827, %894 : vector<16x8xf32>
    %cst_313 = arith.constant 1.400000e+00 : f32
    %896 = vector.broadcast %cst_313 : f32 to vector<16x8xf32>
    %897 = arith.cmpf olt, %827, %896 : vector<16x8xf32>
    %898 = arith.andi %895, %897 : vector<16x8xi1>
    %899 = arith.extui %898 : vector<16x8xi1> to vector<16x8xi32>
    %900 = arith.sitofp %899 : vector<16x8xi32> to vector<16x8xf32>
    %cst_314 = arith.constant 1.400000e+00 : f32
    %901 = vector.broadcast %cst_314 : f32 to vector<16x8xf32>
    %902 = arith.cmpf oge, %827, %901 : vector<16x8xf32>
    %cst_315 = arith.constant 1.800000e+00 : f32
    %903 = vector.broadcast %cst_315 : f32 to vector<16x8xf32>
    %904 = arith.cmpf olt, %827, %903 : vector<16x8xf32>
    %905 = arith.andi %902, %904 : vector<16x8xi1>
    %906 = arith.extui %905 : vector<16x8xi1> to vector<16x8xi32>
    %907 = arith.sitofp %906 : vector<16x8xi32> to vector<16x8xf32>
    %cst_316 = arith.constant 1.800000e+00 : f32
    %908 = vector.broadcast %cst_316 : f32 to vector<16x8xf32>
    %909 = arith.cmpf oge, %827, %908 : vector<16x8xf32>
    %cst_317 = arith.constant 2.200000e+00 : f32
    %910 = vector.broadcast %cst_317 : f32 to vector<16x8xf32>
    %911 = arith.cmpf olt, %827, %910 : vector<16x8xf32>
    %912 = arith.andi %909, %911 : vector<16x8xi1>
    %913 = arith.extui %912 : vector<16x8xi1> to vector<16x8xi32>
    %914 = arith.sitofp %913 : vector<16x8xi32> to vector<16x8xf32>
    %cst_318 = arith.constant -2.200000e+00 : f32
    %915 = vector.broadcast %cst_318 : f32 to vector<16x8xf32>
    %916 = arith.subf %827, %915 : vector<16x8xf32>
    %cst_319 = arith.constant 2.500000e+00 : f32
    %917 = vector.broadcast %cst_319 : f32 to vector<16x8xf32>
    %918 = arith.mulf %916, %917 : vector<16x8xf32>
    %919 = arith.mulf %918, %844 : vector<16x8xf32>
    %cst_320 = arith.constant -1.400000e+00 : f32
    %920 = vector.broadcast %cst_320 : f32 to vector<16x8xf32>
    %921 = arith.subf %920, %827 : vector<16x8xf32>
    %cst_321 = arith.constant 2.500000e+00 : f32
    %922 = vector.broadcast %cst_321 : f32 to vector<16x8xf32>
    %923 = arith.mulf %921, %922 : vector<16x8xf32>
    %924 = arith.mulf %923, %851 : vector<16x8xf32>
    %925 = arith.addf %919, %924 : vector<16x8xf32>
    %cst_322 = arith.constant -1.800000e+00 : f32
    %926 = vector.broadcast %cst_322 : f32 to vector<16x8xf32>
    %927 = arith.subf %827, %926 : vector<16x8xf32>
    %cst_323 = arith.constant 2.500000e+00 : f32
    %928 = vector.broadcast %cst_323 : f32 to vector<16x8xf32>
    %929 = arith.mulf %927, %928 : vector<16x8xf32>
    %930 = arith.mulf %929, %851 : vector<16x8xf32>
    %cst_324 = arith.constant -1.000000e+00 : f32
    %931 = vector.broadcast %cst_324 : f32 to vector<16x8xf32>
    %932 = arith.subf %931, %827 : vector<16x8xf32>
    %cst_325 = arith.constant 2.500000e+00 : f32
    %933 = vector.broadcast %cst_325 : f32 to vector<16x8xf32>
    %934 = arith.mulf %932, %933 : vector<16x8xf32>
    %935 = arith.mulf %934, %858 : vector<16x8xf32>
    %936 = arith.addf %930, %935 : vector<16x8xf32>
    %cst_326 = arith.constant -1.400000e+00 : f32
    %937 = vector.broadcast %cst_326 : f32 to vector<16x8xf32>
    %938 = arith.subf %827, %937 : vector<16x8xf32>
    %cst_327 = arith.constant 2.500000e+00 : f32
    %939 = vector.broadcast %cst_327 : f32 to vector<16x8xf32>
    %940 = arith.mulf %938, %939 : vector<16x8xf32>
    %941 = arith.mulf %940, %858 : vector<16x8xf32>
    %cst_328 = arith.constant -6.000000e-01 : f32
    %942 = vector.broadcast %cst_328 : f32 to vector<16x8xf32>
    %943 = arith.subf %942, %827 : vector<16x8xf32>
    %cst_329 = arith.constant 2.500000e+00 : f32
    %944 = vector.broadcast %cst_329 : f32 to vector<16x8xf32>
    %945 = arith.mulf %943, %944 : vector<16x8xf32>
    %946 = arith.mulf %945, %865 : vector<16x8xf32>
    %947 = arith.addf %941, %946 : vector<16x8xf32>
    %cst_330 = arith.constant -1.000000e+00 : f32
    %948 = vector.broadcast %cst_330 : f32 to vector<16x8xf32>
    %949 = arith.subf %827, %948 : vector<16x8xf32>
    %cst_331 = arith.constant 2.500000e+00 : f32
    %950 = vector.broadcast %cst_331 : f32 to vector<16x8xf32>
    %951 = arith.mulf %949, %950 : vector<16x8xf32>
    %952 = arith.mulf %951, %865 : vector<16x8xf32>
    %cst_332 = arith.constant -2.000000e-01 : f32
    %953 = vector.broadcast %cst_332 : f32 to vector<16x8xf32>
    %954 = arith.subf %953, %827 : vector<16x8xf32>
    %cst_333 = arith.constant 2.500000e+00 : f32
    %955 = vector.broadcast %cst_333 : f32 to vector<16x8xf32>
    %956 = arith.mulf %954, %955 : vector<16x8xf32>
    %957 = arith.mulf %956, %872 : vector<16x8xf32>
    %958 = arith.addf %952, %957 : vector<16x8xf32>
    %cst_334 = arith.constant -6.000000e-01 : f32
    %959 = vector.broadcast %cst_334 : f32 to vector<16x8xf32>
    %960 = arith.subf %827, %959 : vector<16x8xf32>
    %cst_335 = arith.constant 2.500000e+00 : f32
    %961 = vector.broadcast %cst_335 : f32 to vector<16x8xf32>
    %962 = arith.mulf %960, %961 : vector<16x8xf32>
    %963 = arith.mulf %962, %872 : vector<16x8xf32>
    %cst_336 = arith.constant 2.000000e-01 : f32
    %964 = vector.broadcast %cst_336 : f32 to vector<16x8xf32>
    %965 = arith.subf %964, %827 : vector<16x8xf32>
    %cst_337 = arith.constant 2.500000e+00 : f32
    %966 = vector.broadcast %cst_337 : f32 to vector<16x8xf32>
    %967 = arith.mulf %965, %966 : vector<16x8xf32>
    %968 = arith.mulf %967, %879 : vector<16x8xf32>
    %969 = arith.addf %963, %968 : vector<16x8xf32>
    %cst_338 = arith.constant -2.000000e-01 : f32
    %970 = vector.broadcast %cst_338 : f32 to vector<16x8xf32>
    %971 = arith.subf %827, %970 : vector<16x8xf32>
    %cst_339 = arith.constant 2.500000e+00 : f32
    %972 = vector.broadcast %cst_339 : f32 to vector<16x8xf32>
    %973 = arith.mulf %971, %972 : vector<16x8xf32>
    %974 = arith.mulf %973, %879 : vector<16x8xf32>
    %cst_340 = arith.constant 6.000000e-01 : f32
    %975 = vector.broadcast %cst_340 : f32 to vector<16x8xf32>
    %976 = arith.subf %975, %827 : vector<16x8xf32>
    %cst_341 = arith.constant 2.500000e+00 : f32
    %977 = vector.broadcast %cst_341 : f32 to vector<16x8xf32>
    %978 = arith.mulf %976, %977 : vector<16x8xf32>
    %979 = arith.mulf %978, %886 : vector<16x8xf32>
    %980 = arith.addf %974, %979 : vector<16x8xf32>
    %cst_342 = arith.constant 2.000000e-01 : f32
    %981 = vector.broadcast %cst_342 : f32 to vector<16x8xf32>
    %982 = arith.subf %827, %981 : vector<16x8xf32>
    %cst_343 = arith.constant 2.500000e+00 : f32
    %983 = vector.broadcast %cst_343 : f32 to vector<16x8xf32>
    %984 = arith.mulf %982, %983 : vector<16x8xf32>
    %985 = arith.mulf %984, %886 : vector<16x8xf32>
    %cst_344 = arith.constant 1.000000e+00 : f32
    %986 = vector.broadcast %cst_344 : f32 to vector<16x8xf32>
    %987 = arith.subf %986, %827 : vector<16x8xf32>
    %cst_345 = arith.constant 2.500000e+00 : f32
    %988 = vector.broadcast %cst_345 : f32 to vector<16x8xf32>
    %989 = arith.mulf %987, %988 : vector<16x8xf32>
    %990 = arith.mulf %989, %893 : vector<16x8xf32>
    %991 = arith.addf %985, %990 : vector<16x8xf32>
    %cst_346 = arith.constant 6.000000e-01 : f32
    %992 = vector.broadcast %cst_346 : f32 to vector<16x8xf32>
    %993 = arith.subf %827, %992 : vector<16x8xf32>
    %cst_347 = arith.constant 2.500000e+00 : f32
    %994 = vector.broadcast %cst_347 : f32 to vector<16x8xf32>
    %995 = arith.mulf %993, %994 : vector<16x8xf32>
    %996 = arith.mulf %995, %893 : vector<16x8xf32>
    %cst_348 = arith.constant 1.400000e+00 : f32
    %997 = vector.broadcast %cst_348 : f32 to vector<16x8xf32>
    %998 = arith.subf %997, %827 : vector<16x8xf32>
    %cst_349 = arith.constant 2.500000e+00 : f32
    %999 = vector.broadcast %cst_349 : f32 to vector<16x8xf32>
    %1000 = arith.mulf %998, %999 : vector<16x8xf32>
    %1001 = arith.mulf %1000, %900 : vector<16x8xf32>
    %1002 = arith.addf %996, %1001 : vector<16x8xf32>
    %cst_350 = arith.constant 1.000000e+00 : f32
    %1003 = vector.broadcast %cst_350 : f32 to vector<16x8xf32>
    %1004 = arith.subf %827, %1003 : vector<16x8xf32>
    %cst_351 = arith.constant 2.500000e+00 : f32
    %1005 = vector.broadcast %cst_351 : f32 to vector<16x8xf32>
    %1006 = arith.mulf %1004, %1005 : vector<16x8xf32>
    %1007 = arith.mulf %1006, %900 : vector<16x8xf32>
    %cst_352 = arith.constant 1.800000e+00 : f32
    %1008 = vector.broadcast %cst_352 : f32 to vector<16x8xf32>
    %1009 = arith.subf %1008, %827 : vector<16x8xf32>
    %cst_353 = arith.constant 2.500000e+00 : f32
    %1010 = vector.broadcast %cst_353 : f32 to vector<16x8xf32>
    %1011 = arith.mulf %1009, %1010 : vector<16x8xf32>
    %1012 = arith.mulf %1011, %907 : vector<16x8xf32>
    %1013 = arith.addf %1007, %1012 : vector<16x8xf32>
    %cst_354 = arith.constant 1.400000e+00 : f32
    %1014 = vector.broadcast %cst_354 : f32 to vector<16x8xf32>
    %1015 = arith.subf %827, %1014 : vector<16x8xf32>
    %cst_355 = arith.constant 2.500000e+00 : f32
    %1016 = vector.broadcast %cst_355 : f32 to vector<16x8xf32>
    %1017 = arith.mulf %1015, %1016 : vector<16x8xf32>
    %1018 = arith.mulf %1017, %907 : vector<16x8xf32>
    %cst_356 = arith.constant 2.200000e+00 : f32
    %1019 = vector.broadcast %cst_356 : f32 to vector<16x8xf32>
    %1020 = arith.subf %1019, %827 : vector<16x8xf32>
    %cst_357 = arith.constant 2.500000e+00 : f32
    %1021 = vector.broadcast %cst_357 : f32 to vector<16x8xf32>
    %1022 = arith.mulf %1020, %1021 : vector<16x8xf32>
    %1023 = arith.mulf %1022, %914 : vector<16x8xf32>
    %1024 = arith.addf %1018, %1023 : vector<16x8xf32>
    %cst_358 = arith.constant -2.200000e+00 : f32
    %1025 = vector.broadcast %cst_358 : f32 to vector<16x8xf32>
    %1026 = arith.subf %827, %1025 : vector<16x8xf32>
    %cst_359 = arith.constant 1.250000e+00 : f32
    %1027 = vector.broadcast %cst_359 : f32 to vector<16x8xf32>
    %1028 = arith.mulf %1026, %1027 : vector<16x8xf32>
    %1029 = arith.mulf %1028, %925 : vector<16x8xf32>
    %cst_360 = arith.constant -1.000000e+00 : f32
    %1030 = vector.broadcast %cst_360 : f32 to vector<16x8xf32>
    %1031 = arith.subf %1030, %827 : vector<16x8xf32>
    %cst_361 = arith.constant 1.250000e+00 : f32
    %1032 = vector.broadcast %cst_361 : f32 to vector<16x8xf32>
    %1033 = arith.mulf %1031, %1032 : vector<16x8xf32>
    %1034 = arith.mulf %1033, %936 : vector<16x8xf32>
    %1035 = arith.addf %1029, %1034 : vector<16x8xf32>
    %cst_362 = arith.constant -1.800000e+00 : f32
    %1036 = vector.broadcast %cst_362 : f32 to vector<16x8xf32>
    %1037 = arith.subf %827, %1036 : vector<16x8xf32>
    %cst_363 = arith.constant 1.250000e+00 : f32
    %1038 = vector.broadcast %cst_363 : f32 to vector<16x8xf32>
    %1039 = arith.mulf %1037, %1038 : vector<16x8xf32>
    %1040 = arith.mulf %1039, %936 : vector<16x8xf32>
    %cst_364 = arith.constant -6.000000e-01 : f32
    %1041 = vector.broadcast %cst_364 : f32 to vector<16x8xf32>
    %1042 = arith.subf %1041, %827 : vector<16x8xf32>
    %cst_365 = arith.constant 1.250000e+00 : f32
    %1043 = vector.broadcast %cst_365 : f32 to vector<16x8xf32>
    %1044 = arith.mulf %1042, %1043 : vector<16x8xf32>
    %1045 = arith.mulf %1044, %947 : vector<16x8xf32>
    %1046 = arith.addf %1040, %1045 : vector<16x8xf32>
    %cst_366 = arith.constant -1.400000e+00 : f32
    %1047 = vector.broadcast %cst_366 : f32 to vector<16x8xf32>
    %1048 = arith.subf %827, %1047 : vector<16x8xf32>
    %cst_367 = arith.constant 1.250000e+00 : f32
    %1049 = vector.broadcast %cst_367 : f32 to vector<16x8xf32>
    %1050 = arith.mulf %1048, %1049 : vector<16x8xf32>
    %1051 = arith.mulf %1050, %947 : vector<16x8xf32>
    %cst_368 = arith.constant -2.000000e-01 : f32
    %1052 = vector.broadcast %cst_368 : f32 to vector<16x8xf32>
    %1053 = arith.subf %1052, %827 : vector<16x8xf32>
    %cst_369 = arith.constant 1.250000e+00 : f32
    %1054 = vector.broadcast %cst_369 : f32 to vector<16x8xf32>
    %1055 = arith.mulf %1053, %1054 : vector<16x8xf32>
    %1056 = arith.mulf %1055, %958 : vector<16x8xf32>
    %1057 = arith.addf %1051, %1056 : vector<16x8xf32>
    %cst_370 = arith.constant -1.000000e+00 : f32
    %1058 = vector.broadcast %cst_370 : f32 to vector<16x8xf32>
    %1059 = arith.subf %827, %1058 : vector<16x8xf32>
    %cst_371 = arith.constant 1.250000e+00 : f32
    %1060 = vector.broadcast %cst_371 : f32 to vector<16x8xf32>
    %1061 = arith.mulf %1059, %1060 : vector<16x8xf32>
    %1062 = arith.mulf %1061, %958 : vector<16x8xf32>
    %cst_372 = arith.constant 2.000000e-01 : f32
    %1063 = vector.broadcast %cst_372 : f32 to vector<16x8xf32>
    %1064 = arith.subf %1063, %827 : vector<16x8xf32>
    %cst_373 = arith.constant 1.250000e+00 : f32
    %1065 = vector.broadcast %cst_373 : f32 to vector<16x8xf32>
    %1066 = arith.mulf %1064, %1065 : vector<16x8xf32>
    %1067 = arith.mulf %1066, %969 : vector<16x8xf32>
    %1068 = arith.addf %1062, %1067 : vector<16x8xf32>
    %cst_374 = arith.constant -6.000000e-01 : f32
    %1069 = vector.broadcast %cst_374 : f32 to vector<16x8xf32>
    %1070 = arith.subf %827, %1069 : vector<16x8xf32>
    %cst_375 = arith.constant 1.250000e+00 : f32
    %1071 = vector.broadcast %cst_375 : f32 to vector<16x8xf32>
    %1072 = arith.mulf %1070, %1071 : vector<16x8xf32>
    %1073 = arith.mulf %1072, %969 : vector<16x8xf32>
    %cst_376 = arith.constant 6.000000e-01 : f32
    %1074 = vector.broadcast %cst_376 : f32 to vector<16x8xf32>
    %1075 = arith.subf %1074, %827 : vector<16x8xf32>
    %cst_377 = arith.constant 1.250000e+00 : f32
    %1076 = vector.broadcast %cst_377 : f32 to vector<16x8xf32>
    %1077 = arith.mulf %1075, %1076 : vector<16x8xf32>
    %1078 = arith.mulf %1077, %980 : vector<16x8xf32>
    %1079 = arith.addf %1073, %1078 : vector<16x8xf32>
    %cst_378 = arith.constant -2.000000e-01 : f32
    %1080 = vector.broadcast %cst_378 : f32 to vector<16x8xf32>
    %1081 = arith.subf %827, %1080 : vector<16x8xf32>
    %cst_379 = arith.constant 1.250000e+00 : f32
    %1082 = vector.broadcast %cst_379 : f32 to vector<16x8xf32>
    %1083 = arith.mulf %1081, %1082 : vector<16x8xf32>
    %1084 = arith.mulf %1083, %980 : vector<16x8xf32>
    %cst_380 = arith.constant 1.000000e+00 : f32
    %1085 = vector.broadcast %cst_380 : f32 to vector<16x8xf32>
    %1086 = arith.subf %1085, %827 : vector<16x8xf32>
    %cst_381 = arith.constant 1.250000e+00 : f32
    %1087 = vector.broadcast %cst_381 : f32 to vector<16x8xf32>
    %1088 = arith.mulf %1086, %1087 : vector<16x8xf32>
    %1089 = arith.mulf %1088, %991 : vector<16x8xf32>
    %1090 = arith.addf %1084, %1089 : vector<16x8xf32>
    %cst_382 = arith.constant 2.000000e-01 : f32
    %1091 = vector.broadcast %cst_382 : f32 to vector<16x8xf32>
    %1092 = arith.subf %827, %1091 : vector<16x8xf32>
    %cst_383 = arith.constant 1.250000e+00 : f32
    %1093 = vector.broadcast %cst_383 : f32 to vector<16x8xf32>
    %1094 = arith.mulf %1092, %1093 : vector<16x8xf32>
    %1095 = arith.mulf %1094, %991 : vector<16x8xf32>
    %cst_384 = arith.constant 1.400000e+00 : f32
    %1096 = vector.broadcast %cst_384 : f32 to vector<16x8xf32>
    %1097 = arith.subf %1096, %827 : vector<16x8xf32>
    %cst_385 = arith.constant 1.250000e+00 : f32
    %1098 = vector.broadcast %cst_385 : f32 to vector<16x8xf32>
    %1099 = arith.mulf %1097, %1098 : vector<16x8xf32>
    %1100 = arith.mulf %1099, %1002 : vector<16x8xf32>
    %1101 = arith.addf %1095, %1100 : vector<16x8xf32>
    %cst_386 = arith.constant 6.000000e-01 : f32
    %1102 = vector.broadcast %cst_386 : f32 to vector<16x8xf32>
    %1103 = arith.subf %827, %1102 : vector<16x8xf32>
    %cst_387 = arith.constant 1.250000e+00 : f32
    %1104 = vector.broadcast %cst_387 : f32 to vector<16x8xf32>
    %1105 = arith.mulf %1103, %1104 : vector<16x8xf32>
    %1106 = arith.mulf %1105, %1002 : vector<16x8xf32>
    %cst_388 = arith.constant 1.800000e+00 : f32
    %1107 = vector.broadcast %cst_388 : f32 to vector<16x8xf32>
    %1108 = arith.subf %1107, %827 : vector<16x8xf32>
    %cst_389 = arith.constant 1.250000e+00 : f32
    %1109 = vector.broadcast %cst_389 : f32 to vector<16x8xf32>
    %1110 = arith.mulf %1108, %1109 : vector<16x8xf32>
    %1111 = arith.mulf %1110, %1013 : vector<16x8xf32>
    %1112 = arith.addf %1106, %1111 : vector<16x8xf32>
    %cst_390 = arith.constant 1.000000e+00 : f32
    %1113 = vector.broadcast %cst_390 : f32 to vector<16x8xf32>
    %1114 = arith.subf %827, %1113 : vector<16x8xf32>
    %cst_391 = arith.constant 1.250000e+00 : f32
    %1115 = vector.broadcast %cst_391 : f32 to vector<16x8xf32>
    %1116 = arith.mulf %1114, %1115 : vector<16x8xf32>
    %1117 = arith.mulf %1116, %1013 : vector<16x8xf32>
    %cst_392 = arith.constant 2.200000e+00 : f32
    %1118 = vector.broadcast %cst_392 : f32 to vector<16x8xf32>
    %1119 = arith.subf %1118, %827 : vector<16x8xf32>
    %cst_393 = arith.constant 1.250000e+00 : f32
    %1120 = vector.broadcast %cst_393 : f32 to vector<16x8xf32>
    %1121 = arith.mulf %1119, %1120 : vector<16x8xf32>
    %1122 = arith.mulf %1121, %1024 : vector<16x8xf32>
    %1123 = arith.addf %1117, %1122 : vector<16x8xf32>
    %cst_394 = arith.constant -2.200000e+00 : f32
    %1124 = vector.broadcast %cst_394 : f32 to vector<16x8xf32>
    %1125 = arith.subf %827, %1124 : vector<16x8xf32>
    %cst_395 = arith.constant 0.833333313 : f32
    %1126 = vector.broadcast %cst_395 : f32 to vector<16x8xf32>
    %1127 = arith.mulf %1125, %1126 : vector<16x8xf32>
    %1128 = arith.mulf %1127, %1035 : vector<16x8xf32>
    %cst_396 = arith.constant -6.000000e-01 : f32
    %1129 = vector.broadcast %cst_396 : f32 to vector<16x8xf32>
    %1130 = arith.subf %1129, %827 : vector<16x8xf32>
    %cst_397 = arith.constant 0.833333313 : f32
    %1131 = vector.broadcast %cst_397 : f32 to vector<16x8xf32>
    %1132 = arith.mulf %1130, %1131 : vector<16x8xf32>
    %1133 = arith.mulf %1132, %1046 : vector<16x8xf32>
    %1134 = arith.addf %1128, %1133 : vector<16x8xf32>
    %cst_398 = arith.constant -1.800000e+00 : f32
    %1135 = vector.broadcast %cst_398 : f32 to vector<16x8xf32>
    %1136 = arith.subf %827, %1135 : vector<16x8xf32>
    %cst_399 = arith.constant 0.833333313 : f32
    %1137 = vector.broadcast %cst_399 : f32 to vector<16x8xf32>
    %1138 = arith.mulf %1136, %1137 : vector<16x8xf32>
    %1139 = arith.mulf %1138, %1046 : vector<16x8xf32>
    %cst_400 = arith.constant -2.000000e-01 : f32
    %1140 = vector.broadcast %cst_400 : f32 to vector<16x8xf32>
    %1141 = arith.subf %1140, %827 : vector<16x8xf32>
    %cst_401 = arith.constant 0.833333313 : f32
    %1142 = vector.broadcast %cst_401 : f32 to vector<16x8xf32>
    %1143 = arith.mulf %1141, %1142 : vector<16x8xf32>
    %1144 = arith.mulf %1143, %1057 : vector<16x8xf32>
    %1145 = arith.addf %1139, %1144 : vector<16x8xf32>
    %cst_402 = arith.constant -1.400000e+00 : f32
    %1146 = vector.broadcast %cst_402 : f32 to vector<16x8xf32>
    %1147 = arith.subf %827, %1146 : vector<16x8xf32>
    %cst_403 = arith.constant 0.833333313 : f32
    %1148 = vector.broadcast %cst_403 : f32 to vector<16x8xf32>
    %1149 = arith.mulf %1147, %1148 : vector<16x8xf32>
    %1150 = arith.mulf %1149, %1057 : vector<16x8xf32>
    %cst_404 = arith.constant 2.000000e-01 : f32
    %1151 = vector.broadcast %cst_404 : f32 to vector<16x8xf32>
    %1152 = arith.subf %1151, %827 : vector<16x8xf32>
    %cst_405 = arith.constant 0.833333313 : f32
    %1153 = vector.broadcast %cst_405 : f32 to vector<16x8xf32>
    %1154 = arith.mulf %1152, %1153 : vector<16x8xf32>
    %1155 = arith.mulf %1154, %1068 : vector<16x8xf32>
    %1156 = arith.addf %1150, %1155 : vector<16x8xf32>
    %cst_406 = arith.constant -1.000000e+00 : f32
    %1157 = vector.broadcast %cst_406 : f32 to vector<16x8xf32>
    %1158 = arith.subf %827, %1157 : vector<16x8xf32>
    %cst_407 = arith.constant 0.833333313 : f32
    %1159 = vector.broadcast %cst_407 : f32 to vector<16x8xf32>
    %1160 = arith.mulf %1158, %1159 : vector<16x8xf32>
    %1161 = arith.mulf %1160, %1068 : vector<16x8xf32>
    %cst_408 = arith.constant 6.000000e-01 : f32
    %1162 = vector.broadcast %cst_408 : f32 to vector<16x8xf32>
    %1163 = arith.subf %1162, %827 : vector<16x8xf32>
    %cst_409 = arith.constant 0.833333313 : f32
    %1164 = vector.broadcast %cst_409 : f32 to vector<16x8xf32>
    %1165 = arith.mulf %1163, %1164 : vector<16x8xf32>
    %1166 = arith.mulf %1165, %1079 : vector<16x8xf32>
    %1167 = arith.addf %1161, %1166 : vector<16x8xf32>
    %cst_410 = arith.constant -6.000000e-01 : f32
    %1168 = vector.broadcast %cst_410 : f32 to vector<16x8xf32>
    %1169 = arith.subf %827, %1168 : vector<16x8xf32>
    %cst_411 = arith.constant 0.833333313 : f32
    %1170 = vector.broadcast %cst_411 : f32 to vector<16x8xf32>
    %1171 = arith.mulf %1169, %1170 : vector<16x8xf32>
    %1172 = arith.mulf %1171, %1079 : vector<16x8xf32>
    %cst_412 = arith.constant 1.000000e+00 : f32
    %1173 = vector.broadcast %cst_412 : f32 to vector<16x8xf32>
    %1174 = arith.subf %1173, %827 : vector<16x8xf32>
    %cst_413 = arith.constant 0.833333313 : f32
    %1175 = vector.broadcast %cst_413 : f32 to vector<16x8xf32>
    %1176 = arith.mulf %1174, %1175 : vector<16x8xf32>
    %1177 = arith.mulf %1176, %1090 : vector<16x8xf32>
    %1178 = arith.addf %1172, %1177 : vector<16x8xf32>
    %cst_414 = arith.constant -2.000000e-01 : f32
    %1179 = vector.broadcast %cst_414 : f32 to vector<16x8xf32>
    %1180 = arith.subf %827, %1179 : vector<16x8xf32>
    %cst_415 = arith.constant 0.833333313 : f32
    %1181 = vector.broadcast %cst_415 : f32 to vector<16x8xf32>
    %1182 = arith.mulf %1180, %1181 : vector<16x8xf32>
    %1183 = arith.mulf %1182, %1090 : vector<16x8xf32>
    %cst_416 = arith.constant 1.400000e+00 : f32
    %1184 = vector.broadcast %cst_416 : f32 to vector<16x8xf32>
    %1185 = arith.subf %1184, %827 : vector<16x8xf32>
    %cst_417 = arith.constant 0.833333313 : f32
    %1186 = vector.broadcast %cst_417 : f32 to vector<16x8xf32>
    %1187 = arith.mulf %1185, %1186 : vector<16x8xf32>
    %1188 = arith.mulf %1187, %1101 : vector<16x8xf32>
    %1189 = arith.addf %1183, %1188 : vector<16x8xf32>
    %cst_418 = arith.constant 2.000000e-01 : f32
    %1190 = vector.broadcast %cst_418 : f32 to vector<16x8xf32>
    %1191 = arith.subf %827, %1190 : vector<16x8xf32>
    %cst_419 = arith.constant 0.833333313 : f32
    %1192 = vector.broadcast %cst_419 : f32 to vector<16x8xf32>
    %1193 = arith.mulf %1191, %1192 : vector<16x8xf32>
    %1194 = arith.mulf %1193, %1101 : vector<16x8xf32>
    %cst_420 = arith.constant 1.800000e+00 : f32
    %1195 = vector.broadcast %cst_420 : f32 to vector<16x8xf32>
    %1196 = arith.subf %1195, %827 : vector<16x8xf32>
    %cst_421 = arith.constant 0.833333313 : f32
    %1197 = vector.broadcast %cst_421 : f32 to vector<16x8xf32>
    %1198 = arith.mulf %1196, %1197 : vector<16x8xf32>
    %1199 = arith.mulf %1198, %1112 : vector<16x8xf32>
    %1200 = arith.addf %1194, %1199 : vector<16x8xf32>
    %cst_422 = arith.constant 6.000000e-01 : f32
    %1201 = vector.broadcast %cst_422 : f32 to vector<16x8xf32>
    %1202 = arith.subf %827, %1201 : vector<16x8xf32>
    %cst_423 = arith.constant 0.833333313 : f32
    %1203 = vector.broadcast %cst_423 : f32 to vector<16x8xf32>
    %1204 = arith.mulf %1202, %1203 : vector<16x8xf32>
    %1205 = arith.mulf %1204, %1112 : vector<16x8xf32>
    %cst_424 = arith.constant 2.200000e+00 : f32
    %1206 = vector.broadcast %cst_424 : f32 to vector<16x8xf32>
    %1207 = arith.subf %1206, %827 : vector<16x8xf32>
    %cst_425 = arith.constant 0.833333313 : f32
    %1208 = vector.broadcast %cst_425 : f32 to vector<16x8xf32>
    %1209 = arith.mulf %1207, %1208 : vector<16x8xf32>
    %1210 = arith.mulf %1209, %1123 : vector<16x8xf32>
    %1211 = arith.addf %1205, %1210 : vector<16x8xf32>
    %1212 = tpu.concatenate %1134, %1145, %1156, %1167, %1178, %1189, %1200, %1211 in 1 : vector<16x8xf32>, vector<16x8xf32>, vector<16x8xf32>, vector<16x8xf32>, vector<16x8xf32>, vector<16x8xf32>, vector<16x8xf32>, vector<16x8xf32> -> vector<16x64xf32>
    %1213 = arith.truncf %1212 : vector<16x64xf32> to vector<16x64xbf16>
    %cst_426 = arith.constant dense<0.000000e+00> : vector<16x16xf32>
    %1214 = tpu.matmul %1213, %829, %cst_426 {dimension_numbers = #tpu.dot_dimension_numbers<[1], [0], [0], [1], [0, 0, 1, 1], [], []>} : vector<16x64xbf16>, vector<64x16xbf16>, vector<16x16xf32> -> vector<16x16xf32>
    %1215 = arith.addf %837, %1214 : vector<16x16xf32>
    %c464 = arith.constant 464 : index
    %c0_427 = arith.constant 0 : index
    %1216 = vector.load %arg3[%c464, %c0_427] : memref<832x128xbf16, #tpu.memory_space<vmem>>, vector<16x1xbf16>
    %c480 = arith.constant 480 : index
    %c0_428 = arith.constant 0 : index
    %1217 = vector.load %arg3[%c480, %c0_428] : memref<832x128xbf16, #tpu.memory_space<vmem>>, vector<128x1xbf16>
    %1218 = arith.negf %1215 : vector<16x16xf32>
    %1219 = math.exp %1218 : vector<16x16xf32>
    %cst_429 = arith.constant 1.000000e+00 : f32
    %1220 = vector.broadcast %cst_429 : f32 to vector<16x16xf32>
    %1221 = arith.addf %1220, %1219 : vector<16x16xf32>
    %1222 = arith.divf %1220, %1221 : vector<16x16xf32>
    %1223 = arith.mulf %1215, %1222 : vector<16x16xf32>
    %1224 = arith.truncf %1223 : vector<16x16xf32> to vector<16x16xbf16>
    %cst_430 = arith.constant dense<0.000000e+00> : vector<16x1xf32>
    %1225 = tpu.matmul %1224, %1216, %cst_430 {dimension_numbers = #tpu.dot_dimension_numbers<[1], [0], [0], [1], [0, 0, 1, 1], [], []>} : vector<16x16xbf16>, vector<16x1xbf16>, vector<16x1xf32> -> vector<16x1xf32>
    %cst_431 = arith.constant -2.200000e+00 : f32
    %1226 = vector.broadcast %cst_431 : f32 to vector<16x16xf32>
    %1227 = arith.cmpf oge, %1215, %1226 : vector<16x16xf32>
    %cst_432 = arith.constant -1.800000e+00 : f32
    %1228 = vector.broadcast %cst_432 : f32 to vector<16x16xf32>
    %1229 = arith.cmpf olt, %1215, %1228 : vector<16x16xf32>
    %1230 = arith.andi %1227, %1229 : vector<16x16xi1>
    %1231 = arith.extui %1230 : vector<16x16xi1> to vector<16x16xi32>
    %1232 = arith.sitofp %1231 : vector<16x16xi32> to vector<16x16xf32>
    %cst_433 = arith.constant -1.800000e+00 : f32
    %1233 = vector.broadcast %cst_433 : f32 to vector<16x16xf32>
    %1234 = arith.cmpf oge, %1215, %1233 : vector<16x16xf32>
    %cst_434 = arith.constant -1.400000e+00 : f32
    %1235 = vector.broadcast %cst_434 : f32 to vector<16x16xf32>
    %1236 = arith.cmpf olt, %1215, %1235 : vector<16x16xf32>
    %1237 = arith.andi %1234, %1236 : vector<16x16xi1>
    %1238 = arith.extui %1237 : vector<16x16xi1> to vector<16x16xi32>
    %1239 = arith.sitofp %1238 : vector<16x16xi32> to vector<16x16xf32>
    %cst_435 = arith.constant -1.400000e+00 : f32
    %1240 = vector.broadcast %cst_435 : f32 to vector<16x16xf32>
    %1241 = arith.cmpf oge, %1215, %1240 : vector<16x16xf32>
    %cst_436 = arith.constant -1.000000e+00 : f32
    %1242 = vector.broadcast %cst_436 : f32 to vector<16x16xf32>
    %1243 = arith.cmpf olt, %1215, %1242 : vector<16x16xf32>
    %1244 = arith.andi %1241, %1243 : vector<16x16xi1>
    %1245 = arith.extui %1244 : vector<16x16xi1> to vector<16x16xi32>
    %1246 = arith.sitofp %1245 : vector<16x16xi32> to vector<16x16xf32>
    %cst_437 = arith.constant -1.000000e+00 : f32
    %1247 = vector.broadcast %cst_437 : f32 to vector<16x16xf32>
    %1248 = arith.cmpf oge, %1215, %1247 : vector<16x16xf32>
    %cst_438 = arith.constant -6.000000e-01 : f32
    %1249 = vector.broadcast %cst_438 : f32 to vector<16x16xf32>
    %1250 = arith.cmpf olt, %1215, %1249 : vector<16x16xf32>
    %1251 = arith.andi %1248, %1250 : vector<16x16xi1>
    %1252 = arith.extui %1251 : vector<16x16xi1> to vector<16x16xi32>
    %1253 = arith.sitofp %1252 : vector<16x16xi32> to vector<16x16xf32>
    %cst_439 = arith.constant -6.000000e-01 : f32
    %1254 = vector.broadcast %cst_439 : f32 to vector<16x16xf32>
    %1255 = arith.cmpf oge, %1215, %1254 : vector<16x16xf32>
    %cst_440 = arith.constant -2.000000e-01 : f32
    %1256 = vector.broadcast %cst_440 : f32 to vector<16x16xf32>
    %1257 = arith.cmpf olt, %1215, %1256 : vector<16x16xf32>
    %1258 = arith.andi %1255, %1257 : vector<16x16xi1>
    %1259 = arith.extui %1258 : vector<16x16xi1> to vector<16x16xi32>
    %1260 = arith.sitofp %1259 : vector<16x16xi32> to vector<16x16xf32>
    %cst_441 = arith.constant -2.000000e-01 : f32
    %1261 = vector.broadcast %cst_441 : f32 to vector<16x16xf32>
    %1262 = arith.cmpf oge, %1215, %1261 : vector<16x16xf32>
    %cst_442 = arith.constant 2.000000e-01 : f32
    %1263 = vector.broadcast %cst_442 : f32 to vector<16x16xf32>
    %1264 = arith.cmpf olt, %1215, %1263 : vector<16x16xf32>
    %1265 = arith.andi %1262, %1264 : vector<16x16xi1>
    %1266 = arith.extui %1265 : vector<16x16xi1> to vector<16x16xi32>
    %1267 = arith.sitofp %1266 : vector<16x16xi32> to vector<16x16xf32>
    %cst_443 = arith.constant 2.000000e-01 : f32
    %1268 = vector.broadcast %cst_443 : f32 to vector<16x16xf32>
    %1269 = arith.cmpf oge, %1215, %1268 : vector<16x16xf32>
    %cst_444 = arith.constant 6.000000e-01 : f32
    %1270 = vector.broadcast %cst_444 : f32 to vector<16x16xf32>
    %1271 = arith.cmpf olt, %1215, %1270 : vector<16x16xf32>
    %1272 = arith.andi %1269, %1271 : vector<16x16xi1>
    %1273 = arith.extui %1272 : vector<16x16xi1> to vector<16x16xi32>
    %1274 = arith.sitofp %1273 : vector<16x16xi32> to vector<16x16xf32>
    %cst_445 = arith.constant 6.000000e-01 : f32
    %1275 = vector.broadcast %cst_445 : f32 to vector<16x16xf32>
    %1276 = arith.cmpf oge, %1215, %1275 : vector<16x16xf32>
    %cst_446 = arith.constant 1.000000e+00 : f32
    %1277 = vector.broadcast %cst_446 : f32 to vector<16x16xf32>
    %1278 = arith.cmpf olt, %1215, %1277 : vector<16x16xf32>
    %1279 = arith.andi %1276, %1278 : vector<16x16xi1>
    %1280 = arith.extui %1279 : vector<16x16xi1> to vector<16x16xi32>
    %1281 = arith.sitofp %1280 : vector<16x16xi32> to vector<16x16xf32>
    %cst_447 = arith.constant 1.000000e+00 : f32
    %1282 = vector.broadcast %cst_447 : f32 to vector<16x16xf32>
    %1283 = arith.cmpf oge, %1215, %1282 : vector<16x16xf32>
    %cst_448 = arith.constant 1.400000e+00 : f32
    %1284 = vector.broadcast %cst_448 : f32 to vector<16x16xf32>
    %1285 = arith.cmpf olt, %1215, %1284 : vector<16x16xf32>
    %1286 = arith.andi %1283, %1285 : vector<16x16xi1>
    %1287 = arith.extui %1286 : vector<16x16xi1> to vector<16x16xi32>
    %1288 = arith.sitofp %1287 : vector<16x16xi32> to vector<16x16xf32>
    %cst_449 = arith.constant 1.400000e+00 : f32
    %1289 = vector.broadcast %cst_449 : f32 to vector<16x16xf32>
    %1290 = arith.cmpf oge, %1215, %1289 : vector<16x16xf32>
    %cst_450 = arith.constant 1.800000e+00 : f32
    %1291 = vector.broadcast %cst_450 : f32 to vector<16x16xf32>
    %1292 = arith.cmpf olt, %1215, %1291 : vector<16x16xf32>
    %1293 = arith.andi %1290, %1292 : vector<16x16xi1>
    %1294 = arith.extui %1293 : vector<16x16xi1> to vector<16x16xi32>
    %1295 = arith.sitofp %1294 : vector<16x16xi32> to vector<16x16xf32>
    %cst_451 = arith.constant 1.800000e+00 : f32
    %1296 = vector.broadcast %cst_451 : f32 to vector<16x16xf32>
    %1297 = arith.cmpf oge, %1215, %1296 : vector<16x16xf32>
    %cst_452 = arith.constant 2.200000e+00 : f32
    %1298 = vector.broadcast %cst_452 : f32 to vector<16x16xf32>
    %1299 = arith.cmpf olt, %1215, %1298 : vector<16x16xf32>
    %1300 = arith.andi %1297, %1299 : vector<16x16xi1>
    %1301 = arith.extui %1300 : vector<16x16xi1> to vector<16x16xi32>
    %1302 = arith.sitofp %1301 : vector<16x16xi32> to vector<16x16xf32>
    %cst_453 = arith.constant -2.200000e+00 : f32
    %1303 = vector.broadcast %cst_453 : f32 to vector<16x16xf32>
    %1304 = arith.subf %1215, %1303 : vector<16x16xf32>
    %cst_454 = arith.constant 2.500000e+00 : f32
    %1305 = vector.broadcast %cst_454 : f32 to vector<16x16xf32>
    %1306 = arith.mulf %1304, %1305 : vector<16x16xf32>
    %1307 = arith.mulf %1306, %1232 : vector<16x16xf32>
    %cst_455 = arith.constant -1.400000e+00 : f32
    %1308 = vector.broadcast %cst_455 : f32 to vector<16x16xf32>
    %1309 = arith.subf %1308, %1215 : vector<16x16xf32>
    %cst_456 = arith.constant 2.500000e+00 : f32
    %1310 = vector.broadcast %cst_456 : f32 to vector<16x16xf32>
    %1311 = arith.mulf %1309, %1310 : vector<16x16xf32>
    %1312 = arith.mulf %1311, %1239 : vector<16x16xf32>
    %1313 = arith.addf %1307, %1312 : vector<16x16xf32>
    %cst_457 = arith.constant -1.800000e+00 : f32
    %1314 = vector.broadcast %cst_457 : f32 to vector<16x16xf32>
    %1315 = arith.subf %1215, %1314 : vector<16x16xf32>
    %cst_458 = arith.constant 2.500000e+00 : f32
    %1316 = vector.broadcast %cst_458 : f32 to vector<16x16xf32>
    %1317 = arith.mulf %1315, %1316 : vector<16x16xf32>
    %1318 = arith.mulf %1317, %1239 : vector<16x16xf32>
    %cst_459 = arith.constant -1.000000e+00 : f32
    %1319 = vector.broadcast %cst_459 : f32 to vector<16x16xf32>
    %1320 = arith.subf %1319, %1215 : vector<16x16xf32>
    %cst_460 = arith.constant 2.500000e+00 : f32
    %1321 = vector.broadcast %cst_460 : f32 to vector<16x16xf32>
    %1322 = arith.mulf %1320, %1321 : vector<16x16xf32>
    %1323 = arith.mulf %1322, %1246 : vector<16x16xf32>
    %1324 = arith.addf %1318, %1323 : vector<16x16xf32>
    %cst_461 = arith.constant -1.400000e+00 : f32
    %1325 = vector.broadcast %cst_461 : f32 to vector<16x16xf32>
    %1326 = arith.subf %1215, %1325 : vector<16x16xf32>
    %cst_462 = arith.constant 2.500000e+00 : f32
    %1327 = vector.broadcast %cst_462 : f32 to vector<16x16xf32>
    %1328 = arith.mulf %1326, %1327 : vector<16x16xf32>
    %1329 = arith.mulf %1328, %1246 : vector<16x16xf32>
    %cst_463 = arith.constant -6.000000e-01 : f32
    %1330 = vector.broadcast %cst_463 : f32 to vector<16x16xf32>
    %1331 = arith.subf %1330, %1215 : vector<16x16xf32>
    %cst_464 = arith.constant 2.500000e+00 : f32
    %1332 = vector.broadcast %cst_464 : f32 to vector<16x16xf32>
    %1333 = arith.mulf %1331, %1332 : vector<16x16xf32>
    %1334 = arith.mulf %1333, %1253 : vector<16x16xf32>
    %1335 = arith.addf %1329, %1334 : vector<16x16xf32>
    %cst_465 = arith.constant -1.000000e+00 : f32
    %1336 = vector.broadcast %cst_465 : f32 to vector<16x16xf32>
    %1337 = arith.subf %1215, %1336 : vector<16x16xf32>
    %cst_466 = arith.constant 2.500000e+00 : f32
    %1338 = vector.broadcast %cst_466 : f32 to vector<16x16xf32>
    %1339 = arith.mulf %1337, %1338 : vector<16x16xf32>
    %1340 = arith.mulf %1339, %1253 : vector<16x16xf32>
    %cst_467 = arith.constant -2.000000e-01 : f32
    %1341 = vector.broadcast %cst_467 : f32 to vector<16x16xf32>
    %1342 = arith.subf %1341, %1215 : vector<16x16xf32>
    %cst_468 = arith.constant 2.500000e+00 : f32
    %1343 = vector.broadcast %cst_468 : f32 to vector<16x16xf32>
    %1344 = arith.mulf %1342, %1343 : vector<16x16xf32>
    %1345 = arith.mulf %1344, %1260 : vector<16x16xf32>
    %1346 = arith.addf %1340, %1345 : vector<16x16xf32>
    %cst_469 = arith.constant -6.000000e-01 : f32
    %1347 = vector.broadcast %cst_469 : f32 to vector<16x16xf32>
    %1348 = arith.subf %1215, %1347 : vector<16x16xf32>
    %cst_470 = arith.constant 2.500000e+00 : f32
    %1349 = vector.broadcast %cst_470 : f32 to vector<16x16xf32>
    %1350 = arith.mulf %1348, %1349 : vector<16x16xf32>
    %1351 = arith.mulf %1350, %1260 : vector<16x16xf32>
    %cst_471 = arith.constant 2.000000e-01 : f32
    %1352 = vector.broadcast %cst_471 : f32 to vector<16x16xf32>
    %1353 = arith.subf %1352, %1215 : vector<16x16xf32>
    %cst_472 = arith.constant 2.500000e+00 : f32
    %1354 = vector.broadcast %cst_472 : f32 to vector<16x16xf32>
    %1355 = arith.mulf %1353, %1354 : vector<16x16xf32>
    %1356 = arith.mulf %1355, %1267 : vector<16x16xf32>
    %1357 = arith.addf %1351, %1356 : vector<16x16xf32>
    %cst_473 = arith.constant -2.000000e-01 : f32
    %1358 = vector.broadcast %cst_473 : f32 to vector<16x16xf32>
    %1359 = arith.subf %1215, %1358 : vector<16x16xf32>
    %cst_474 = arith.constant 2.500000e+00 : f32
    %1360 = vector.broadcast %cst_474 : f32 to vector<16x16xf32>
    %1361 = arith.mulf %1359, %1360 : vector<16x16xf32>
    %1362 = arith.mulf %1361, %1267 : vector<16x16xf32>
    %cst_475 = arith.constant 6.000000e-01 : f32
    %1363 = vector.broadcast %cst_475 : f32 to vector<16x16xf32>
    %1364 = arith.subf %1363, %1215 : vector<16x16xf32>
    %cst_476 = arith.constant 2.500000e+00 : f32
    %1365 = vector.broadcast %cst_476 : f32 to vector<16x16xf32>
    %1366 = arith.mulf %1364, %1365 : vector<16x16xf32>
    %1367 = arith.mulf %1366, %1274 : vector<16x16xf32>
    %1368 = arith.addf %1362, %1367 : vector<16x16xf32>
    %cst_477 = arith.constant 2.000000e-01 : f32
    %1369 = vector.broadcast %cst_477 : f32 to vector<16x16xf32>
    %1370 = arith.subf %1215, %1369 : vector<16x16xf32>
    %cst_478 = arith.constant 2.500000e+00 : f32
    %1371 = vector.broadcast %cst_478 : f32 to vector<16x16xf32>
    %1372 = arith.mulf %1370, %1371 : vector<16x16xf32>
    %1373 = arith.mulf %1372, %1274 : vector<16x16xf32>
    %cst_479 = arith.constant 1.000000e+00 : f32
    %1374 = vector.broadcast %cst_479 : f32 to vector<16x16xf32>
    %1375 = arith.subf %1374, %1215 : vector<16x16xf32>
    %cst_480 = arith.constant 2.500000e+00 : f32
    %1376 = vector.broadcast %cst_480 : f32 to vector<16x16xf32>
    %1377 = arith.mulf %1375, %1376 : vector<16x16xf32>
    %1378 = arith.mulf %1377, %1281 : vector<16x16xf32>
    %1379 = arith.addf %1373, %1378 : vector<16x16xf32>
    %cst_481 = arith.constant 6.000000e-01 : f32
    %1380 = vector.broadcast %cst_481 : f32 to vector<16x16xf32>
    %1381 = arith.subf %1215, %1380 : vector<16x16xf32>
    %cst_482 = arith.constant 2.500000e+00 : f32
    %1382 = vector.broadcast %cst_482 : f32 to vector<16x16xf32>
    %1383 = arith.mulf %1381, %1382 : vector<16x16xf32>
    %1384 = arith.mulf %1383, %1281 : vector<16x16xf32>
    %cst_483 = arith.constant 1.400000e+00 : f32
    %1385 = vector.broadcast %cst_483 : f32 to vector<16x16xf32>
    %1386 = arith.subf %1385, %1215 : vector<16x16xf32>
    %cst_484 = arith.constant 2.500000e+00 : f32
    %1387 = vector.broadcast %cst_484 : f32 to vector<16x16xf32>
    %1388 = arith.mulf %1386, %1387 : vector<16x16xf32>
    %1389 = arith.mulf %1388, %1288 : vector<16x16xf32>
    %1390 = arith.addf %1384, %1389 : vector<16x16xf32>
    %cst_485 = arith.constant 1.000000e+00 : f32
    %1391 = vector.broadcast %cst_485 : f32 to vector<16x16xf32>
    %1392 = arith.subf %1215, %1391 : vector<16x16xf32>
    %cst_486 = arith.constant 2.500000e+00 : f32
    %1393 = vector.broadcast %cst_486 : f32 to vector<16x16xf32>
    %1394 = arith.mulf %1392, %1393 : vector<16x16xf32>
    %1395 = arith.mulf %1394, %1288 : vector<16x16xf32>
    %cst_487 = arith.constant 1.800000e+00 : f32
    %1396 = vector.broadcast %cst_487 : f32 to vector<16x16xf32>
    %1397 = arith.subf %1396, %1215 : vector<16x16xf32>
    %cst_488 = arith.constant 2.500000e+00 : f32
    %1398 = vector.broadcast %cst_488 : f32 to vector<16x16xf32>
    %1399 = arith.mulf %1397, %1398 : vector<16x16xf32>
    %1400 = arith.mulf %1399, %1295 : vector<16x16xf32>
    %1401 = arith.addf %1395, %1400 : vector<16x16xf32>
    %cst_489 = arith.constant 1.400000e+00 : f32
    %1402 = vector.broadcast %cst_489 : f32 to vector<16x16xf32>
    %1403 = arith.subf %1215, %1402 : vector<16x16xf32>
    %cst_490 = arith.constant 2.500000e+00 : f32
    %1404 = vector.broadcast %cst_490 : f32 to vector<16x16xf32>
    %1405 = arith.mulf %1403, %1404 : vector<16x16xf32>
    %1406 = arith.mulf %1405, %1295 : vector<16x16xf32>
    %cst_491 = arith.constant 2.200000e+00 : f32
    %1407 = vector.broadcast %cst_491 : f32 to vector<16x16xf32>
    %1408 = arith.subf %1407, %1215 : vector<16x16xf32>
    %cst_492 = arith.constant 2.500000e+00 : f32
    %1409 = vector.broadcast %cst_492 : f32 to vector<16x16xf32>
    %1410 = arith.mulf %1408, %1409 : vector<16x16xf32>
    %1411 = arith.mulf %1410, %1302 : vector<16x16xf32>
    %1412 = arith.addf %1406, %1411 : vector<16x16xf32>
    %cst_493 = arith.constant -2.200000e+00 : f32
    %1413 = vector.broadcast %cst_493 : f32 to vector<16x16xf32>
    %1414 = arith.subf %1215, %1413 : vector<16x16xf32>
    %cst_494 = arith.constant 1.250000e+00 : f32
    %1415 = vector.broadcast %cst_494 : f32 to vector<16x16xf32>
    %1416 = arith.mulf %1414, %1415 : vector<16x16xf32>
    %1417 = arith.mulf %1416, %1313 : vector<16x16xf32>
    %cst_495 = arith.constant -1.000000e+00 : f32
    %1418 = vector.broadcast %cst_495 : f32 to vector<16x16xf32>
    %1419 = arith.subf %1418, %1215 : vector<16x16xf32>
    %cst_496 = arith.constant 1.250000e+00 : f32
    %1420 = vector.broadcast %cst_496 : f32 to vector<16x16xf32>
    %1421 = arith.mulf %1419, %1420 : vector<16x16xf32>
    %1422 = arith.mulf %1421, %1324 : vector<16x16xf32>
    %1423 = arith.addf %1417, %1422 : vector<16x16xf32>
    %cst_497 = arith.constant -1.800000e+00 : f32
    %1424 = vector.broadcast %cst_497 : f32 to vector<16x16xf32>
    %1425 = arith.subf %1215, %1424 : vector<16x16xf32>
    %cst_498 = arith.constant 1.250000e+00 : f32
    %1426 = vector.broadcast %cst_498 : f32 to vector<16x16xf32>
    %1427 = arith.mulf %1425, %1426 : vector<16x16xf32>
    %1428 = arith.mulf %1427, %1324 : vector<16x16xf32>
    %cst_499 = arith.constant -6.000000e-01 : f32
    %1429 = vector.broadcast %cst_499 : f32 to vector<16x16xf32>
    %1430 = arith.subf %1429, %1215 : vector<16x16xf32>
    %cst_500 = arith.constant 1.250000e+00 : f32
    %1431 = vector.broadcast %cst_500 : f32 to vector<16x16xf32>
    %1432 = arith.mulf %1430, %1431 : vector<16x16xf32>
    %1433 = arith.mulf %1432, %1335 : vector<16x16xf32>
    %1434 = arith.addf %1428, %1433 : vector<16x16xf32>
    %cst_501 = arith.constant -1.400000e+00 : f32
    %1435 = vector.broadcast %cst_501 : f32 to vector<16x16xf32>
    %1436 = arith.subf %1215, %1435 : vector<16x16xf32>
    %cst_502 = arith.constant 1.250000e+00 : f32
    %1437 = vector.broadcast %cst_502 : f32 to vector<16x16xf32>
    %1438 = arith.mulf %1436, %1437 : vector<16x16xf32>
    %1439 = arith.mulf %1438, %1335 : vector<16x16xf32>
    %cst_503 = arith.constant -2.000000e-01 : f32
    %1440 = vector.broadcast %cst_503 : f32 to vector<16x16xf32>
    %1441 = arith.subf %1440, %1215 : vector<16x16xf32>
    %cst_504 = arith.constant 1.250000e+00 : f32
    %1442 = vector.broadcast %cst_504 : f32 to vector<16x16xf32>
    %1443 = arith.mulf %1441, %1442 : vector<16x16xf32>
    %1444 = arith.mulf %1443, %1346 : vector<16x16xf32>
    %1445 = arith.addf %1439, %1444 : vector<16x16xf32>
    %cst_505 = arith.constant -1.000000e+00 : f32
    %1446 = vector.broadcast %cst_505 : f32 to vector<16x16xf32>
    %1447 = arith.subf %1215, %1446 : vector<16x16xf32>
    %cst_506 = arith.constant 1.250000e+00 : f32
    %1448 = vector.broadcast %cst_506 : f32 to vector<16x16xf32>
    %1449 = arith.mulf %1447, %1448 : vector<16x16xf32>
    %1450 = arith.mulf %1449, %1346 : vector<16x16xf32>
    %cst_507 = arith.constant 2.000000e-01 : f32
    %1451 = vector.broadcast %cst_507 : f32 to vector<16x16xf32>
    %1452 = arith.subf %1451, %1215 : vector<16x16xf32>
    %cst_508 = arith.constant 1.250000e+00 : f32
    %1453 = vector.broadcast %cst_508 : f32 to vector<16x16xf32>
    %1454 = arith.mulf %1452, %1453 : vector<16x16xf32>
    %1455 = arith.mulf %1454, %1357 : vector<16x16xf32>
    %1456 = arith.addf %1450, %1455 : vector<16x16xf32>
    %cst_509 = arith.constant -6.000000e-01 : f32
    %1457 = vector.broadcast %cst_509 : f32 to vector<16x16xf32>
    %1458 = arith.subf %1215, %1457 : vector<16x16xf32>
    %cst_510 = arith.constant 1.250000e+00 : f32
    %1459 = vector.broadcast %cst_510 : f32 to vector<16x16xf32>
    %1460 = arith.mulf %1458, %1459 : vector<16x16xf32>
    %1461 = arith.mulf %1460, %1357 : vector<16x16xf32>
    %cst_511 = arith.constant 6.000000e-01 : f32
    %1462 = vector.broadcast %cst_511 : f32 to vector<16x16xf32>
    %1463 = arith.subf %1462, %1215 : vector<16x16xf32>
    %cst_512 = arith.constant 1.250000e+00 : f32
    %1464 = vector.broadcast %cst_512 : f32 to vector<16x16xf32>
    %1465 = arith.mulf %1463, %1464 : vector<16x16xf32>
    %1466 = arith.mulf %1465, %1368 : vector<16x16xf32>
    %1467 = arith.addf %1461, %1466 : vector<16x16xf32>
    %cst_513 = arith.constant -2.000000e-01 : f32
    %1468 = vector.broadcast %cst_513 : f32 to vector<16x16xf32>
    %1469 = arith.subf %1215, %1468 : vector<16x16xf32>
    %cst_514 = arith.constant 1.250000e+00 : f32
    %1470 = vector.broadcast %cst_514 : f32 to vector<16x16xf32>
    %1471 = arith.mulf %1469, %1470 : vector<16x16xf32>
    %1472 = arith.mulf %1471, %1368 : vector<16x16xf32>
    %cst_515 = arith.constant 1.000000e+00 : f32
    %1473 = vector.broadcast %cst_515 : f32 to vector<16x16xf32>
    %1474 = arith.subf %1473, %1215 : vector<16x16xf32>
    %cst_516 = arith.constant 1.250000e+00 : f32
    %1475 = vector.broadcast %cst_516 : f32 to vector<16x16xf32>
    %1476 = arith.mulf %1474, %1475 : vector<16x16xf32>
    %1477 = arith.mulf %1476, %1379 : vector<16x16xf32>
    %1478 = arith.addf %1472, %1477 : vector<16x16xf32>
    %cst_517 = arith.constant 2.000000e-01 : f32
    %1479 = vector.broadcast %cst_517 : f32 to vector<16x16xf32>
    %1480 = arith.subf %1215, %1479 : vector<16x16xf32>
    %cst_518 = arith.constant 1.250000e+00 : f32
    %1481 = vector.broadcast %cst_518 : f32 to vector<16x16xf32>
    %1482 = arith.mulf %1480, %1481 : vector<16x16xf32>
    %1483 = arith.mulf %1482, %1379 : vector<16x16xf32>
    %cst_519 = arith.constant 1.400000e+00 : f32
    %1484 = vector.broadcast %cst_519 : f32 to vector<16x16xf32>
    %1485 = arith.subf %1484, %1215 : vector<16x16xf32>
    %cst_520 = arith.constant 1.250000e+00 : f32
    %1486 = vector.broadcast %cst_520 : f32 to vector<16x16xf32>
    %1487 = arith.mulf %1485, %1486 : vector<16x16xf32>
    %1488 = arith.mulf %1487, %1390 : vector<16x16xf32>
    %1489 = arith.addf %1483, %1488 : vector<16x16xf32>
    %cst_521 = arith.constant 6.000000e-01 : f32
    %1490 = vector.broadcast %cst_521 : f32 to vector<16x16xf32>
    %1491 = arith.subf %1215, %1490 : vector<16x16xf32>
    %cst_522 = arith.constant 1.250000e+00 : f32
    %1492 = vector.broadcast %cst_522 : f32 to vector<16x16xf32>
    %1493 = arith.mulf %1491, %1492 : vector<16x16xf32>
    %1494 = arith.mulf %1493, %1390 : vector<16x16xf32>
    %cst_523 = arith.constant 1.800000e+00 : f32
    %1495 = vector.broadcast %cst_523 : f32 to vector<16x16xf32>
    %1496 = arith.subf %1495, %1215 : vector<16x16xf32>
    %cst_524 = arith.constant 1.250000e+00 : f32
    %1497 = vector.broadcast %cst_524 : f32 to vector<16x16xf32>
    %1498 = arith.mulf %1496, %1497 : vector<16x16xf32>
    %1499 = arith.mulf %1498, %1401 : vector<16x16xf32>
    %1500 = arith.addf %1494, %1499 : vector<16x16xf32>
    %cst_525 = arith.constant 1.000000e+00 : f32
    %1501 = vector.broadcast %cst_525 : f32 to vector<16x16xf32>
    %1502 = arith.subf %1215, %1501 : vector<16x16xf32>
    %cst_526 = arith.constant 1.250000e+00 : f32
    %1503 = vector.broadcast %cst_526 : f32 to vector<16x16xf32>
    %1504 = arith.mulf %1502, %1503 : vector<16x16xf32>
    %1505 = arith.mulf %1504, %1401 : vector<16x16xf32>
    %cst_527 = arith.constant 2.200000e+00 : f32
    %1506 = vector.broadcast %cst_527 : f32 to vector<16x16xf32>
    %1507 = arith.subf %1506, %1215 : vector<16x16xf32>
    %cst_528 = arith.constant 1.250000e+00 : f32
    %1508 = vector.broadcast %cst_528 : f32 to vector<16x16xf32>
    %1509 = arith.mulf %1507, %1508 : vector<16x16xf32>
    %1510 = arith.mulf %1509, %1412 : vector<16x16xf32>
    %1511 = arith.addf %1505, %1510 : vector<16x16xf32>
    %cst_529 = arith.constant -2.200000e+00 : f32
    %1512 = vector.broadcast %cst_529 : f32 to vector<16x16xf32>
    %1513 = arith.subf %1215, %1512 : vector<16x16xf32>
    %cst_530 = arith.constant 0.833333313 : f32
    %1514 = vector.broadcast %cst_530 : f32 to vector<16x16xf32>
    %1515 = arith.mulf %1513, %1514 : vector<16x16xf32>
    %1516 = arith.mulf %1515, %1423 : vector<16x16xf32>
    %cst_531 = arith.constant -6.000000e-01 : f32
    %1517 = vector.broadcast %cst_531 : f32 to vector<16x16xf32>
    %1518 = arith.subf %1517, %1215 : vector<16x16xf32>
    %cst_532 = arith.constant 0.833333313 : f32
    %1519 = vector.broadcast %cst_532 : f32 to vector<16x16xf32>
    %1520 = arith.mulf %1518, %1519 : vector<16x16xf32>
    %1521 = arith.mulf %1520, %1434 : vector<16x16xf32>
    %1522 = arith.addf %1516, %1521 : vector<16x16xf32>
    %cst_533 = arith.constant -1.800000e+00 : f32
    %1523 = vector.broadcast %cst_533 : f32 to vector<16x16xf32>
    %1524 = arith.subf %1215, %1523 : vector<16x16xf32>
    %cst_534 = arith.constant 0.833333313 : f32
    %1525 = vector.broadcast %cst_534 : f32 to vector<16x16xf32>
    %1526 = arith.mulf %1524, %1525 : vector<16x16xf32>
    %1527 = arith.mulf %1526, %1434 : vector<16x16xf32>
    %cst_535 = arith.constant -2.000000e-01 : f32
    %1528 = vector.broadcast %cst_535 : f32 to vector<16x16xf32>
    %1529 = arith.subf %1528, %1215 : vector<16x16xf32>
    %cst_536 = arith.constant 0.833333313 : f32
    %1530 = vector.broadcast %cst_536 : f32 to vector<16x16xf32>
    %1531 = arith.mulf %1529, %1530 : vector<16x16xf32>
    %1532 = arith.mulf %1531, %1445 : vector<16x16xf32>
    %1533 = arith.addf %1527, %1532 : vector<16x16xf32>
    %cst_537 = arith.constant -1.400000e+00 : f32
    %1534 = vector.broadcast %cst_537 : f32 to vector<16x16xf32>
    %1535 = arith.subf %1215, %1534 : vector<16x16xf32>
    %cst_538 = arith.constant 0.833333313 : f32
    %1536 = vector.broadcast %cst_538 : f32 to vector<16x16xf32>
    %1537 = arith.mulf %1535, %1536 : vector<16x16xf32>
    %1538 = arith.mulf %1537, %1445 : vector<16x16xf32>
    %cst_539 = arith.constant 2.000000e-01 : f32
    %1539 = vector.broadcast %cst_539 : f32 to vector<16x16xf32>
    %1540 = arith.subf %1539, %1215 : vector<16x16xf32>
    %cst_540 = arith.constant 0.833333313 : f32
    %1541 = vector.broadcast %cst_540 : f32 to vector<16x16xf32>
    %1542 = arith.mulf %1540, %1541 : vector<16x16xf32>
    %1543 = arith.mulf %1542, %1456 : vector<16x16xf32>
    %1544 = arith.addf %1538, %1543 : vector<16x16xf32>
    %cst_541 = arith.constant -1.000000e+00 : f32
    %1545 = vector.broadcast %cst_541 : f32 to vector<16x16xf32>
    %1546 = arith.subf %1215, %1545 : vector<16x16xf32>
    %cst_542 = arith.constant 0.833333313 : f32
    %1547 = vector.broadcast %cst_542 : f32 to vector<16x16xf32>
    %1548 = arith.mulf %1546, %1547 : vector<16x16xf32>
    %1549 = arith.mulf %1548, %1456 : vector<16x16xf32>
    %cst_543 = arith.constant 6.000000e-01 : f32
    %1550 = vector.broadcast %cst_543 : f32 to vector<16x16xf32>
    %1551 = arith.subf %1550, %1215 : vector<16x16xf32>
    %cst_544 = arith.constant 0.833333313 : f32
    %1552 = vector.broadcast %cst_544 : f32 to vector<16x16xf32>
    %1553 = arith.mulf %1551, %1552 : vector<16x16xf32>
    %1554 = arith.mulf %1553, %1467 : vector<16x16xf32>
    %1555 = arith.addf %1549, %1554 : vector<16x16xf32>
    %cst_545 = arith.constant -6.000000e-01 : f32
    %1556 = vector.broadcast %cst_545 : f32 to vector<16x16xf32>
    %1557 = arith.subf %1215, %1556 : vector<16x16xf32>
    %cst_546 = arith.constant 0.833333313 : f32
    %1558 = vector.broadcast %cst_546 : f32 to vector<16x16xf32>
    %1559 = arith.mulf %1557, %1558 : vector<16x16xf32>
    %1560 = arith.mulf %1559, %1467 : vector<16x16xf32>
    %cst_547 = arith.constant 1.000000e+00 : f32
    %1561 = vector.broadcast %cst_547 : f32 to vector<16x16xf32>
    %1562 = arith.subf %1561, %1215 : vector<16x16xf32>
    %cst_548 = arith.constant 0.833333313 : f32
    %1563 = vector.broadcast %cst_548 : f32 to vector<16x16xf32>
    %1564 = arith.mulf %1562, %1563 : vector<16x16xf32>
    %1565 = arith.mulf %1564, %1478 : vector<16x16xf32>
    %1566 = arith.addf %1560, %1565 : vector<16x16xf32>
    %cst_549 = arith.constant -2.000000e-01 : f32
    %1567 = vector.broadcast %cst_549 : f32 to vector<16x16xf32>
    %1568 = arith.subf %1215, %1567 : vector<16x16xf32>
    %cst_550 = arith.constant 0.833333313 : f32
    %1569 = vector.broadcast %cst_550 : f32 to vector<16x16xf32>
    %1570 = arith.mulf %1568, %1569 : vector<16x16xf32>
    %1571 = arith.mulf %1570, %1478 : vector<16x16xf32>
    %cst_551 = arith.constant 1.400000e+00 : f32
    %1572 = vector.broadcast %cst_551 : f32 to vector<16x16xf32>
    %1573 = arith.subf %1572, %1215 : vector<16x16xf32>
    %cst_552 = arith.constant 0.833333313 : f32
    %1574 = vector.broadcast %cst_552 : f32 to vector<16x16xf32>
    %1575 = arith.mulf %1573, %1574 : vector<16x16xf32>
    %1576 = arith.mulf %1575, %1489 : vector<16x16xf32>
    %1577 = arith.addf %1571, %1576 : vector<16x16xf32>
    %cst_553 = arith.constant 2.000000e-01 : f32
    %1578 = vector.broadcast %cst_553 : f32 to vector<16x16xf32>
    %1579 = arith.subf %1215, %1578 : vector<16x16xf32>
    %cst_554 = arith.constant 0.833333313 : f32
    %1580 = vector.broadcast %cst_554 : f32 to vector<16x16xf32>
    %1581 = arith.mulf %1579, %1580 : vector<16x16xf32>
    %1582 = arith.mulf %1581, %1489 : vector<16x16xf32>
    %cst_555 = arith.constant 1.800000e+00 : f32
    %1583 = vector.broadcast %cst_555 : f32 to vector<16x16xf32>
    %1584 = arith.subf %1583, %1215 : vector<16x16xf32>
    %cst_556 = arith.constant 0.833333313 : f32
    %1585 = vector.broadcast %cst_556 : f32 to vector<16x16xf32>
    %1586 = arith.mulf %1584, %1585 : vector<16x16xf32>
    %1587 = arith.mulf %1586, %1500 : vector<16x16xf32>
    %1588 = arith.addf %1582, %1587 : vector<16x16xf32>
    %cst_557 = arith.constant 6.000000e-01 : f32
    %1589 = vector.broadcast %cst_557 : f32 to vector<16x16xf32>
    %1590 = arith.subf %1215, %1589 : vector<16x16xf32>
    %cst_558 = arith.constant 0.833333313 : f32
    %1591 = vector.broadcast %cst_558 : f32 to vector<16x16xf32>
    %1592 = arith.mulf %1590, %1591 : vector<16x16xf32>
    %1593 = arith.mulf %1592, %1500 : vector<16x16xf32>
    %cst_559 = arith.constant 2.200000e+00 : f32
    %1594 = vector.broadcast %cst_559 : f32 to vector<16x16xf32>
    %1595 = arith.subf %1594, %1215 : vector<16x16xf32>
    %cst_560 = arith.constant 0.833333313 : f32
    %1596 = vector.broadcast %cst_560 : f32 to vector<16x16xf32>
    %1597 = arith.mulf %1595, %1596 : vector<16x16xf32>
    %1598 = arith.mulf %1597, %1511 : vector<16x16xf32>
    %1599 = arith.addf %1593, %1598 : vector<16x16xf32>
    %1600 = tpu.concatenate %1522, %1533, %1544, %1555, %1566, %1577, %1588, %1599 in 1 : vector<16x16xf32>, vector<16x16xf32>, vector<16x16xf32>, vector<16x16xf32>, vector<16x16xf32>, vector<16x16xf32>, vector<16x16xf32>, vector<16x16xf32> -> vector<16x128xf32>
    %1601 = arith.truncf %1600 : vector<16x128xf32> to vector<16x128xbf16>
    %cst_561 = arith.constant dense<0.000000e+00> : vector<16x1xf32>
    %1602 = tpu.matmul %1601, %1217, %cst_561 {dimension_numbers = #tpu.dot_dimension_numbers<[1], [0], [0], [1], [0, 0, 1, 1], [], []>} : vector<16x128xbf16>, vector<128x1xbf16>, vector<16x1xf32> -> vector<16x1xf32>
    %1603 = arith.addf %1225, %1602 : vector<16x1xf32>
    %1604 = arith.negf %1603 : vector<16x1xf32>
    %1605 = math.exp %1604 : vector<16x1xf32>
    %cst_562 = arith.constant 1.000000e+00 : f32
    %1606 = vector.broadcast %cst_562 : f32 to vector<16x1xf32>
    %1607 = arith.addf %1606, %1605 : vector<16x1xf32>
    %1608 = arith.divf %1606, %1607 : vector<16x1xf32>
    %c608 = arith.constant 608 : index
    %c0_563 = arith.constant 0 : index
    %1609 = vector.load %arg3[%c608, %c0_563] : memref<832x128xbf16, #tpu.memory_space<vmem>>, vector<8x16xbf16>
    %c624 = arith.constant 624 : index
    %c0_564 = arith.constant 0 : index
    %1610 = vector.load %arg3[%c624, %c0_564] : memref<832x128xbf16, #tpu.memory_space<vmem>>, vector<64x16xbf16>
    %1611 = arith.negf %410 : vector<16x8xf32>
    %1612 = math.exp %1611 : vector<16x8xf32>
    %cst_565 = arith.constant 1.000000e+00 : f32
    %1613 = vector.broadcast %cst_565 : f32 to vector<16x8xf32>
    %1614 = arith.addf %1613, %1612 : vector<16x8xf32>
    %1615 = arith.divf %1613, %1614 : vector<16x8xf32>
    %1616 = arith.mulf %410, %1615 : vector<16x8xf32>
    %1617 = arith.truncf %1616 : vector<16x8xf32> to vector<16x8xbf16>
    %cst_566 = arith.constant dense<0.000000e+00> : vector<16x16xf32>
    %1618 = tpu.matmul %1617, %1609, %cst_566 {dimension_numbers = #tpu.dot_dimension_numbers<[1], [0], [0], [1], [0, 0, 1, 1], [], []>} : vector<16x8xbf16>, vector<8x16xbf16>, vector<16x16xf32> -> vector<16x16xf32>
    %cst_567 = arith.constant -2.200000e+00 : f32
    %1619 = vector.broadcast %cst_567 : f32 to vector<16x8xf32>
    %1620 = arith.cmpf oge, %410, %1619 : vector<16x8xf32>
    %cst_568 = arith.constant -1.800000e+00 : f32
    %1621 = vector.broadcast %cst_568 : f32 to vector<16x8xf32>
    %1622 = arith.cmpf olt, %410, %1621 : vector<16x8xf32>
    %1623 = arith.andi %1620, %1622 : vector<16x8xi1>
    %1624 = arith.extui %1623 : vector<16x8xi1> to vector<16x8xi32>
    %1625 = arith.sitofp %1624 : vector<16x8xi32> to vector<16x8xf32>
    %cst_569 = arith.constant -1.800000e+00 : f32
    %1626 = vector.broadcast %cst_569 : f32 to vector<16x8xf32>
    %1627 = arith.cmpf oge, %410, %1626 : vector<16x8xf32>
    %cst_570 = arith.constant -1.400000e+00 : f32
    %1628 = vector.broadcast %cst_570 : f32 to vector<16x8xf32>
    %1629 = arith.cmpf olt, %410, %1628 : vector<16x8xf32>
    %1630 = arith.andi %1627, %1629 : vector<16x8xi1>
    %1631 = arith.extui %1630 : vector<16x8xi1> to vector<16x8xi32>
    %1632 = arith.sitofp %1631 : vector<16x8xi32> to vector<16x8xf32>
    %cst_571 = arith.constant -1.400000e+00 : f32
    %1633 = vector.broadcast %cst_571 : f32 to vector<16x8xf32>
    %1634 = arith.cmpf oge, %410, %1633 : vector<16x8xf32>
    %cst_572 = arith.constant -1.000000e+00 : f32
    %1635 = vector.broadcast %cst_572 : f32 to vector<16x8xf32>
    %1636 = arith.cmpf olt, %410, %1635 : vector<16x8xf32>
    %1637 = arith.andi %1634, %1636 : vector<16x8xi1>
    %1638 = arith.extui %1637 : vector<16x8xi1> to vector<16x8xi32>
    %1639 = arith.sitofp %1638 : vector<16x8xi32> to vector<16x8xf32>
    %cst_573 = arith.constant -1.000000e+00 : f32
    %1640 = vector.broadcast %cst_573 : f32 to vector<16x8xf32>
    %1641 = arith.cmpf oge, %410, %1640 : vector<16x8xf32>
    %cst_574 = arith.constant -6.000000e-01 : f32
    %1642 = vector.broadcast %cst_574 : f32 to vector<16x8xf32>
    %1643 = arith.cmpf olt, %410, %1642 : vector<16x8xf32>
    %1644 = arith.andi %1641, %1643 : vector<16x8xi1>
    %1645 = arith.extui %1644 : vector<16x8xi1> to vector<16x8xi32>
    %1646 = arith.sitofp %1645 : vector<16x8xi32> to vector<16x8xf32>
    %cst_575 = arith.constant -6.000000e-01 : f32
    %1647 = vector.broadcast %cst_575 : f32 to vector<16x8xf32>
    %1648 = arith.cmpf oge, %410, %1647 : vector<16x8xf32>
    %cst_576 = arith.constant -2.000000e-01 : f32
    %1649 = vector.broadcast %cst_576 : f32 to vector<16x8xf32>
    %1650 = arith.cmpf olt, %410, %1649 : vector<16x8xf32>
    %1651 = arith.andi %1648, %1650 : vector<16x8xi1>
    %1652 = arith.extui %1651 : vector<16x8xi1> to vector<16x8xi32>
    %1653 = arith.sitofp %1652 : vector<16x8xi32> to vector<16x8xf32>
    %cst_577 = arith.constant -2.000000e-01 : f32
    %1654 = vector.broadcast %cst_577 : f32 to vector<16x8xf32>
    %1655 = arith.cmpf oge, %410, %1654 : vector<16x8xf32>
    %cst_578 = arith.constant 2.000000e-01 : f32
    %1656 = vector.broadcast %cst_578 : f32 to vector<16x8xf32>
    %1657 = arith.cmpf olt, %410, %1656 : vector<16x8xf32>
    %1658 = arith.andi %1655, %1657 : vector<16x8xi1>
    %1659 = arith.extui %1658 : vector<16x8xi1> to vector<16x8xi32>
    %1660 = arith.sitofp %1659 : vector<16x8xi32> to vector<16x8xf32>
    %cst_579 = arith.constant 2.000000e-01 : f32
    %1661 = vector.broadcast %cst_579 : f32 to vector<16x8xf32>
    %1662 = arith.cmpf oge, %410, %1661 : vector<16x8xf32>
    %cst_580 = arith.constant 6.000000e-01 : f32
    %1663 = vector.broadcast %cst_580 : f32 to vector<16x8xf32>
    %1664 = arith.cmpf olt, %410, %1663 : vector<16x8xf32>
    %1665 = arith.andi %1662, %1664 : vector<16x8xi1>
    %1666 = arith.extui %1665 : vector<16x8xi1> to vector<16x8xi32>
    %1667 = arith.sitofp %1666 : vector<16x8xi32> to vector<16x8xf32>
    %cst_581 = arith.constant 6.000000e-01 : f32
    %1668 = vector.broadcast %cst_581 : f32 to vector<16x8xf32>
    %1669 = arith.cmpf oge, %410, %1668 : vector<16x8xf32>
    %cst_582 = arith.constant 1.000000e+00 : f32
    %1670 = vector.broadcast %cst_582 : f32 to vector<16x8xf32>
    %1671 = arith.cmpf olt, %410, %1670 : vector<16x8xf32>
    %1672 = arith.andi %1669, %1671 : vector<16x8xi1>
    %1673 = arith.extui %1672 : vector<16x8xi1> to vector<16x8xi32>
    %1674 = arith.sitofp %1673 : vector<16x8xi32> to vector<16x8xf32>
    %cst_583 = arith.constant 1.000000e+00 : f32
    %1675 = vector.broadcast %cst_583 : f32 to vector<16x8xf32>
    %1676 = arith.cmpf oge, %410, %1675 : vector<16x8xf32>
    %cst_584 = arith.constant 1.400000e+00 : f32
    %1677 = vector.broadcast %cst_584 : f32 to vector<16x8xf32>
    %1678 = arith.cmpf olt, %410, %1677 : vector<16x8xf32>
    %1679 = arith.andi %1676, %1678 : vector<16x8xi1>
    %1680 = arith.extui %1679 : vector<16x8xi1> to vector<16x8xi32>
    %1681 = arith.sitofp %1680 : vector<16x8xi32> to vector<16x8xf32>
    %cst_585 = arith.constant 1.400000e+00 : f32
    %1682 = vector.broadcast %cst_585 : f32 to vector<16x8xf32>
    %1683 = arith.cmpf oge, %410, %1682 : vector<16x8xf32>
    %cst_586 = arith.constant 1.800000e+00 : f32
    %1684 = vector.broadcast %cst_586 : f32 to vector<16x8xf32>
    %1685 = arith.cmpf olt, %410, %1684 : vector<16x8xf32>
    %1686 = arith.andi %1683, %1685 : vector<16x8xi1>
    %1687 = arith.extui %1686 : vector<16x8xi1> to vector<16x8xi32>
    %1688 = arith.sitofp %1687 : vector<16x8xi32> to vector<16x8xf32>
    %cst_587 = arith.constant 1.800000e+00 : f32
    %1689 = vector.broadcast %cst_587 : f32 to vector<16x8xf32>
    %1690 = arith.cmpf oge, %410, %1689 : vector<16x8xf32>
    %cst_588 = arith.constant 2.200000e+00 : f32
    %1691 = vector.broadcast %cst_588 : f32 to vector<16x8xf32>
    %1692 = arith.cmpf olt, %410, %1691 : vector<16x8xf32>
    %1693 = arith.andi %1690, %1692 : vector<16x8xi1>
    %1694 = arith.extui %1693 : vector<16x8xi1> to vector<16x8xi32>
    %1695 = arith.sitofp %1694 : vector<16x8xi32> to vector<16x8xf32>
    %cst_589 = arith.constant -2.200000e+00 : f32
    %1696 = vector.broadcast %cst_589 : f32 to vector<16x8xf32>
    %1697 = arith.subf %410, %1696 : vector<16x8xf32>
    %cst_590 = arith.constant 2.500000e+00 : f32
    %1698 = vector.broadcast %cst_590 : f32 to vector<16x8xf32>
    %1699 = arith.mulf %1697, %1698 : vector<16x8xf32>
    %1700 = arith.mulf %1699, %1625 : vector<16x8xf32>
    %cst_591 = arith.constant -1.400000e+00 : f32
    %1701 = vector.broadcast %cst_591 : f32 to vector<16x8xf32>
    %1702 = arith.subf %1701, %410 : vector<16x8xf32>
    %cst_592 = arith.constant 2.500000e+00 : f32
    %1703 = vector.broadcast %cst_592 : f32 to vector<16x8xf32>
    %1704 = arith.mulf %1702, %1703 : vector<16x8xf32>
    %1705 = arith.mulf %1704, %1632 : vector<16x8xf32>
    %1706 = arith.addf %1700, %1705 : vector<16x8xf32>
    %cst_593 = arith.constant -1.800000e+00 : f32
    %1707 = vector.broadcast %cst_593 : f32 to vector<16x8xf32>
    %1708 = arith.subf %410, %1707 : vector<16x8xf32>
    %cst_594 = arith.constant 2.500000e+00 : f32
    %1709 = vector.broadcast %cst_594 : f32 to vector<16x8xf32>
    %1710 = arith.mulf %1708, %1709 : vector<16x8xf32>
    %1711 = arith.mulf %1710, %1632 : vector<16x8xf32>
    %cst_595 = arith.constant -1.000000e+00 : f32
    %1712 = vector.broadcast %cst_595 : f32 to vector<16x8xf32>
    %1713 = arith.subf %1712, %410 : vector<16x8xf32>
    %cst_596 = arith.constant 2.500000e+00 : f32
    %1714 = vector.broadcast %cst_596 : f32 to vector<16x8xf32>
    %1715 = arith.mulf %1713, %1714 : vector<16x8xf32>
    %1716 = arith.mulf %1715, %1639 : vector<16x8xf32>
    %1717 = arith.addf %1711, %1716 : vector<16x8xf32>
    %cst_597 = arith.constant -1.400000e+00 : f32
    %1718 = vector.broadcast %cst_597 : f32 to vector<16x8xf32>
    %1719 = arith.subf %410, %1718 : vector<16x8xf32>
    %cst_598 = arith.constant 2.500000e+00 : f32
    %1720 = vector.broadcast %cst_598 : f32 to vector<16x8xf32>
    %1721 = arith.mulf %1719, %1720 : vector<16x8xf32>
    %1722 = arith.mulf %1721, %1639 : vector<16x8xf32>
    %cst_599 = arith.constant -6.000000e-01 : f32
    %1723 = vector.broadcast %cst_599 : f32 to vector<16x8xf32>
    %1724 = arith.subf %1723, %410 : vector<16x8xf32>
    %cst_600 = arith.constant 2.500000e+00 : f32
    %1725 = vector.broadcast %cst_600 : f32 to vector<16x8xf32>
    %1726 = arith.mulf %1724, %1725 : vector<16x8xf32>
    %1727 = arith.mulf %1726, %1646 : vector<16x8xf32>
    %1728 = arith.addf %1722, %1727 : vector<16x8xf32>
    %cst_601 = arith.constant -1.000000e+00 : f32
    %1729 = vector.broadcast %cst_601 : f32 to vector<16x8xf32>
    %1730 = arith.subf %410, %1729 : vector<16x8xf32>
    %cst_602 = arith.constant 2.500000e+00 : f32
    %1731 = vector.broadcast %cst_602 : f32 to vector<16x8xf32>
    %1732 = arith.mulf %1730, %1731 : vector<16x8xf32>
    %1733 = arith.mulf %1732, %1646 : vector<16x8xf32>
    %cst_603 = arith.constant -2.000000e-01 : f32
    %1734 = vector.broadcast %cst_603 : f32 to vector<16x8xf32>
    %1735 = arith.subf %1734, %410 : vector<16x8xf32>
    %cst_604 = arith.constant 2.500000e+00 : f32
    %1736 = vector.broadcast %cst_604 : f32 to vector<16x8xf32>
    %1737 = arith.mulf %1735, %1736 : vector<16x8xf32>
    %1738 = arith.mulf %1737, %1653 : vector<16x8xf32>
    %1739 = arith.addf %1733, %1738 : vector<16x8xf32>
    %cst_605 = arith.constant -6.000000e-01 : f32
    %1740 = vector.broadcast %cst_605 : f32 to vector<16x8xf32>
    %1741 = arith.subf %410, %1740 : vector<16x8xf32>
    %cst_606 = arith.constant 2.500000e+00 : f32
    %1742 = vector.broadcast %cst_606 : f32 to vector<16x8xf32>
    %1743 = arith.mulf %1741, %1742 : vector<16x8xf32>
    %1744 = arith.mulf %1743, %1653 : vector<16x8xf32>
    %cst_607 = arith.constant 2.000000e-01 : f32
    %1745 = vector.broadcast %cst_607 : f32 to vector<16x8xf32>
    %1746 = arith.subf %1745, %410 : vector<16x8xf32>
    %cst_608 = arith.constant 2.500000e+00 : f32
    %1747 = vector.broadcast %cst_608 : f32 to vector<16x8xf32>
    %1748 = arith.mulf %1746, %1747 : vector<16x8xf32>
    %1749 = arith.mulf %1748, %1660 : vector<16x8xf32>
    %1750 = arith.addf %1744, %1749 : vector<16x8xf32>
    %cst_609 = arith.constant -2.000000e-01 : f32
    %1751 = vector.broadcast %cst_609 : f32 to vector<16x8xf32>
    %1752 = arith.subf %410, %1751 : vector<16x8xf32>
    %cst_610 = arith.constant 2.500000e+00 : f32
    %1753 = vector.broadcast %cst_610 : f32 to vector<16x8xf32>
    %1754 = arith.mulf %1752, %1753 : vector<16x8xf32>
    %1755 = arith.mulf %1754, %1660 : vector<16x8xf32>
    %cst_611 = arith.constant 6.000000e-01 : f32
    %1756 = vector.broadcast %cst_611 : f32 to vector<16x8xf32>
    %1757 = arith.subf %1756, %410 : vector<16x8xf32>
    %cst_612 = arith.constant 2.500000e+00 : f32
    %1758 = vector.broadcast %cst_612 : f32 to vector<16x8xf32>
    %1759 = arith.mulf %1757, %1758 : vector<16x8xf32>
    %1760 = arith.mulf %1759, %1667 : vector<16x8xf32>
    %1761 = arith.addf %1755, %1760 : vector<16x8xf32>
    %cst_613 = arith.constant 2.000000e-01 : f32
    %1762 = vector.broadcast %cst_613 : f32 to vector<16x8xf32>
    %1763 = arith.subf %410, %1762 : vector<16x8xf32>
    %cst_614 = arith.constant 2.500000e+00 : f32
    %1764 = vector.broadcast %cst_614 : f32 to vector<16x8xf32>
    %1765 = arith.mulf %1763, %1764 : vector<16x8xf32>
    %1766 = arith.mulf %1765, %1667 : vector<16x8xf32>
    %cst_615 = arith.constant 1.000000e+00 : f32
    %1767 = vector.broadcast %cst_615 : f32 to vector<16x8xf32>
    %1768 = arith.subf %1767, %410 : vector<16x8xf32>
    %cst_616 = arith.constant 2.500000e+00 : f32
    %1769 = vector.broadcast %cst_616 : f32 to vector<16x8xf32>
    %1770 = arith.mulf %1768, %1769 : vector<16x8xf32>
    %1771 = arith.mulf %1770, %1674 : vector<16x8xf32>
    %1772 = arith.addf %1766, %1771 : vector<16x8xf32>
    %cst_617 = arith.constant 6.000000e-01 : f32
    %1773 = vector.broadcast %cst_617 : f32 to vector<16x8xf32>
    %1774 = arith.subf %410, %1773 : vector<16x8xf32>
    %cst_618 = arith.constant 2.500000e+00 : f32
    %1775 = vector.broadcast %cst_618 : f32 to vector<16x8xf32>
    %1776 = arith.mulf %1774, %1775 : vector<16x8xf32>
    %1777 = arith.mulf %1776, %1674 : vector<16x8xf32>
    %cst_619 = arith.constant 1.400000e+00 : f32
    %1778 = vector.broadcast %cst_619 : f32 to vector<16x8xf32>
    %1779 = arith.subf %1778, %410 : vector<16x8xf32>
    %cst_620 = arith.constant 2.500000e+00 : f32
    %1780 = vector.broadcast %cst_620 : f32 to vector<16x8xf32>
    %1781 = arith.mulf %1779, %1780 : vector<16x8xf32>
    %1782 = arith.mulf %1781, %1681 : vector<16x8xf32>
    %1783 = arith.addf %1777, %1782 : vector<16x8xf32>
    %cst_621 = arith.constant 1.000000e+00 : f32
    %1784 = vector.broadcast %cst_621 : f32 to vector<16x8xf32>
    %1785 = arith.subf %410, %1784 : vector<16x8xf32>
    %cst_622 = arith.constant 2.500000e+00 : f32
    %1786 = vector.broadcast %cst_622 : f32 to vector<16x8xf32>
    %1787 = arith.mulf %1785, %1786 : vector<16x8xf32>
    %1788 = arith.mulf %1787, %1681 : vector<16x8xf32>
    %cst_623 = arith.constant 1.800000e+00 : f32
    %1789 = vector.broadcast %cst_623 : f32 to vector<16x8xf32>
    %1790 = arith.subf %1789, %410 : vector<16x8xf32>
    %cst_624 = arith.constant 2.500000e+00 : f32
    %1791 = vector.broadcast %cst_624 : f32 to vector<16x8xf32>
    %1792 = arith.mulf %1790, %1791 : vector<16x8xf32>
    %1793 = arith.mulf %1792, %1688 : vector<16x8xf32>
    %1794 = arith.addf %1788, %1793 : vector<16x8xf32>
    %cst_625 = arith.constant 1.400000e+00 : f32
    %1795 = vector.broadcast %cst_625 : f32 to vector<16x8xf32>
    %1796 = arith.subf %410, %1795 : vector<16x8xf32>
    %cst_626 = arith.constant 2.500000e+00 : f32
    %1797 = vector.broadcast %cst_626 : f32 to vector<16x8xf32>
    %1798 = arith.mulf %1796, %1797 : vector<16x8xf32>
    %1799 = arith.mulf %1798, %1688 : vector<16x8xf32>
    %cst_627 = arith.constant 2.200000e+00 : f32
    %1800 = vector.broadcast %cst_627 : f32 to vector<16x8xf32>
    %1801 = arith.subf %1800, %410 : vector<16x8xf32>
    %cst_628 = arith.constant 2.500000e+00 : f32
    %1802 = vector.broadcast %cst_628 : f32 to vector<16x8xf32>
    %1803 = arith.mulf %1801, %1802 : vector<16x8xf32>
    %1804 = arith.mulf %1803, %1695 : vector<16x8xf32>
    %1805 = arith.addf %1799, %1804 : vector<16x8xf32>
    %cst_629 = arith.constant -2.200000e+00 : f32
    %1806 = vector.broadcast %cst_629 : f32 to vector<16x8xf32>
    %1807 = arith.subf %410, %1806 : vector<16x8xf32>
    %cst_630 = arith.constant 1.250000e+00 : f32
    %1808 = vector.broadcast %cst_630 : f32 to vector<16x8xf32>
    %1809 = arith.mulf %1807, %1808 : vector<16x8xf32>
    %1810 = arith.mulf %1809, %1706 : vector<16x8xf32>
    %cst_631 = arith.constant -1.000000e+00 : f32
    %1811 = vector.broadcast %cst_631 : f32 to vector<16x8xf32>
    %1812 = arith.subf %1811, %410 : vector<16x8xf32>
    %cst_632 = arith.constant 1.250000e+00 : f32
    %1813 = vector.broadcast %cst_632 : f32 to vector<16x8xf32>
    %1814 = arith.mulf %1812, %1813 : vector<16x8xf32>
    %1815 = arith.mulf %1814, %1717 : vector<16x8xf32>
    %1816 = arith.addf %1810, %1815 : vector<16x8xf32>
    %cst_633 = arith.constant -1.800000e+00 : f32
    %1817 = vector.broadcast %cst_633 : f32 to vector<16x8xf32>
    %1818 = arith.subf %410, %1817 : vector<16x8xf32>
    %cst_634 = arith.constant 1.250000e+00 : f32
    %1819 = vector.broadcast %cst_634 : f32 to vector<16x8xf32>
    %1820 = arith.mulf %1818, %1819 : vector<16x8xf32>
    %1821 = arith.mulf %1820, %1717 : vector<16x8xf32>
    %cst_635 = arith.constant -6.000000e-01 : f32
    %1822 = vector.broadcast %cst_635 : f32 to vector<16x8xf32>
    %1823 = arith.subf %1822, %410 : vector<16x8xf32>
    %cst_636 = arith.constant 1.250000e+00 : f32
    %1824 = vector.broadcast %cst_636 : f32 to vector<16x8xf32>
    %1825 = arith.mulf %1823, %1824 : vector<16x8xf32>
    %1826 = arith.mulf %1825, %1728 : vector<16x8xf32>
    %1827 = arith.addf %1821, %1826 : vector<16x8xf32>
    %cst_637 = arith.constant -1.400000e+00 : f32
    %1828 = vector.broadcast %cst_637 : f32 to vector<16x8xf32>
    %1829 = arith.subf %410, %1828 : vector<16x8xf32>
    %cst_638 = arith.constant 1.250000e+00 : f32
    %1830 = vector.broadcast %cst_638 : f32 to vector<16x8xf32>
    %1831 = arith.mulf %1829, %1830 : vector<16x8xf32>
    %1832 = arith.mulf %1831, %1728 : vector<16x8xf32>
    %cst_639 = arith.constant -2.000000e-01 : f32
    %1833 = vector.broadcast %cst_639 : f32 to vector<16x8xf32>
    %1834 = arith.subf %1833, %410 : vector<16x8xf32>
    %cst_640 = arith.constant 1.250000e+00 : f32
    %1835 = vector.broadcast %cst_640 : f32 to vector<16x8xf32>
    %1836 = arith.mulf %1834, %1835 : vector<16x8xf32>
    %1837 = arith.mulf %1836, %1739 : vector<16x8xf32>
    %1838 = arith.addf %1832, %1837 : vector<16x8xf32>
    %cst_641 = arith.constant -1.000000e+00 : f32
    %1839 = vector.broadcast %cst_641 : f32 to vector<16x8xf32>
    %1840 = arith.subf %410, %1839 : vector<16x8xf32>
    %cst_642 = arith.constant 1.250000e+00 : f32
    %1841 = vector.broadcast %cst_642 : f32 to vector<16x8xf32>
    %1842 = arith.mulf %1840, %1841 : vector<16x8xf32>
    %1843 = arith.mulf %1842, %1739 : vector<16x8xf32>
    %cst_643 = arith.constant 2.000000e-01 : f32
    %1844 = vector.broadcast %cst_643 : f32 to vector<16x8xf32>
    %1845 = arith.subf %1844, %410 : vector<16x8xf32>
    %cst_644 = arith.constant 1.250000e+00 : f32
    %1846 = vector.broadcast %cst_644 : f32 to vector<16x8xf32>
    %1847 = arith.mulf %1845, %1846 : vector<16x8xf32>
    %1848 = arith.mulf %1847, %1750 : vector<16x8xf32>
    %1849 = arith.addf %1843, %1848 : vector<16x8xf32>
    %cst_645 = arith.constant -6.000000e-01 : f32
    %1850 = vector.broadcast %cst_645 : f32 to vector<16x8xf32>
    %1851 = arith.subf %410, %1850 : vector<16x8xf32>
    %cst_646 = arith.constant 1.250000e+00 : f32
    %1852 = vector.broadcast %cst_646 : f32 to vector<16x8xf32>
    %1853 = arith.mulf %1851, %1852 : vector<16x8xf32>
    %1854 = arith.mulf %1853, %1750 : vector<16x8xf32>
    %cst_647 = arith.constant 6.000000e-01 : f32
    %1855 = vector.broadcast %cst_647 : f32 to vector<16x8xf32>
    %1856 = arith.subf %1855, %410 : vector<16x8xf32>
    %cst_648 = arith.constant 1.250000e+00 : f32
    %1857 = vector.broadcast %cst_648 : f32 to vector<16x8xf32>
    %1858 = arith.mulf %1856, %1857 : vector<16x8xf32>
    %1859 = arith.mulf %1858, %1761 : vector<16x8xf32>
    %1860 = arith.addf %1854, %1859 : vector<16x8xf32>
    %cst_649 = arith.constant -2.000000e-01 : f32
    %1861 = vector.broadcast %cst_649 : f32 to vector<16x8xf32>
    %1862 = arith.subf %410, %1861 : vector<16x8xf32>
    %cst_650 = arith.constant 1.250000e+00 : f32
    %1863 = vector.broadcast %cst_650 : f32 to vector<16x8xf32>
    %1864 = arith.mulf %1862, %1863 : vector<16x8xf32>
    %1865 = arith.mulf %1864, %1761 : vector<16x8xf32>
    %cst_651 = arith.constant 1.000000e+00 : f32
    %1866 = vector.broadcast %cst_651 : f32 to vector<16x8xf32>
    %1867 = arith.subf %1866, %410 : vector<16x8xf32>
    %cst_652 = arith.constant 1.250000e+00 : f32
    %1868 = vector.broadcast %cst_652 : f32 to vector<16x8xf32>
    %1869 = arith.mulf %1867, %1868 : vector<16x8xf32>
    %1870 = arith.mulf %1869, %1772 : vector<16x8xf32>
    %1871 = arith.addf %1865, %1870 : vector<16x8xf32>
    %cst_653 = arith.constant 2.000000e-01 : f32
    %1872 = vector.broadcast %cst_653 : f32 to vector<16x8xf32>
    %1873 = arith.subf %410, %1872 : vector<16x8xf32>
    %cst_654 = arith.constant 1.250000e+00 : f32
    %1874 = vector.broadcast %cst_654 : f32 to vector<16x8xf32>
    %1875 = arith.mulf %1873, %1874 : vector<16x8xf32>
    %1876 = arith.mulf %1875, %1772 : vector<16x8xf32>
    %cst_655 = arith.constant 1.400000e+00 : f32
    %1877 = vector.broadcast %cst_655 : f32 to vector<16x8xf32>
    %1878 = arith.subf %1877, %410 : vector<16x8xf32>
    %cst_656 = arith.constant 1.250000e+00 : f32
    %1879 = vector.broadcast %cst_656 : f32 to vector<16x8xf32>
    %1880 = arith.mulf %1878, %1879 : vector<16x8xf32>
    %1881 = arith.mulf %1880, %1783 : vector<16x8xf32>
    %1882 = arith.addf %1876, %1881 : vector<16x8xf32>
    %cst_657 = arith.constant 6.000000e-01 : f32
    %1883 = vector.broadcast %cst_657 : f32 to vector<16x8xf32>
    %1884 = arith.subf %410, %1883 : vector<16x8xf32>
    %cst_658 = arith.constant 1.250000e+00 : f32
    %1885 = vector.broadcast %cst_658 : f32 to vector<16x8xf32>
    %1886 = arith.mulf %1884, %1885 : vector<16x8xf32>
    %1887 = arith.mulf %1886, %1783 : vector<16x8xf32>
    %cst_659 = arith.constant 1.800000e+00 : f32
    %1888 = vector.broadcast %cst_659 : f32 to vector<16x8xf32>
    %1889 = arith.subf %1888, %410 : vector<16x8xf32>
    %cst_660 = arith.constant 1.250000e+00 : f32
    %1890 = vector.broadcast %cst_660 : f32 to vector<16x8xf32>
    %1891 = arith.mulf %1889, %1890 : vector<16x8xf32>
    %1892 = arith.mulf %1891, %1794 : vector<16x8xf32>
    %1893 = arith.addf %1887, %1892 : vector<16x8xf32>
    %cst_661 = arith.constant 1.000000e+00 : f32
    %1894 = vector.broadcast %cst_661 : f32 to vector<16x8xf32>
    %1895 = arith.subf %410, %1894 : vector<16x8xf32>
    %cst_662 = arith.constant 1.250000e+00 : f32
    %1896 = vector.broadcast %cst_662 : f32 to vector<16x8xf32>
    %1897 = arith.mulf %1895, %1896 : vector<16x8xf32>
    %1898 = arith.mulf %1897, %1794 : vector<16x8xf32>
    %cst_663 = arith.constant 2.200000e+00 : f32
    %1899 = vector.broadcast %cst_663 : f32 to vector<16x8xf32>
    %1900 = arith.subf %1899, %410 : vector<16x8xf32>
    %cst_664 = arith.constant 1.250000e+00 : f32
    %1901 = vector.broadcast %cst_664 : f32 to vector<16x8xf32>
    %1902 = arith.mulf %1900, %1901 : vector<16x8xf32>
    %1903 = arith.mulf %1902, %1805 : vector<16x8xf32>
    %1904 = arith.addf %1898, %1903 : vector<16x8xf32>
    %cst_665 = arith.constant -2.200000e+00 : f32
    %1905 = vector.broadcast %cst_665 : f32 to vector<16x8xf32>
    %1906 = arith.subf %410, %1905 : vector<16x8xf32>
    %cst_666 = arith.constant 0.833333313 : f32
    %1907 = vector.broadcast %cst_666 : f32 to vector<16x8xf32>
    %1908 = arith.mulf %1906, %1907 : vector<16x8xf32>
    %1909 = arith.mulf %1908, %1816 : vector<16x8xf32>
    %cst_667 = arith.constant -6.000000e-01 : f32
    %1910 = vector.broadcast %cst_667 : f32 to vector<16x8xf32>
    %1911 = arith.subf %1910, %410 : vector<16x8xf32>
    %cst_668 = arith.constant 0.833333313 : f32
    %1912 = vector.broadcast %cst_668 : f32 to vector<16x8xf32>
    %1913 = arith.mulf %1911, %1912 : vector<16x8xf32>
    %1914 = arith.mulf %1913, %1827 : vector<16x8xf32>
    %1915 = arith.addf %1909, %1914 : vector<16x8xf32>
    %cst_669 = arith.constant -1.800000e+00 : f32
    %1916 = vector.broadcast %cst_669 : f32 to vector<16x8xf32>
    %1917 = arith.subf %410, %1916 : vector<16x8xf32>
    %cst_670 = arith.constant 0.833333313 : f32
    %1918 = vector.broadcast %cst_670 : f32 to vector<16x8xf32>
    %1919 = arith.mulf %1917, %1918 : vector<16x8xf32>
    %1920 = arith.mulf %1919, %1827 : vector<16x8xf32>
    %cst_671 = arith.constant -2.000000e-01 : f32
    %1921 = vector.broadcast %cst_671 : f32 to vector<16x8xf32>
    %1922 = arith.subf %1921, %410 : vector<16x8xf32>
    %cst_672 = arith.constant 0.833333313 : f32
    %1923 = vector.broadcast %cst_672 : f32 to vector<16x8xf32>
    %1924 = arith.mulf %1922, %1923 : vector<16x8xf32>
    %1925 = arith.mulf %1924, %1838 : vector<16x8xf32>
    %1926 = arith.addf %1920, %1925 : vector<16x8xf32>
    %cst_673 = arith.constant -1.400000e+00 : f32
    %1927 = vector.broadcast %cst_673 : f32 to vector<16x8xf32>
    %1928 = arith.subf %410, %1927 : vector<16x8xf32>
    %cst_674 = arith.constant 0.833333313 : f32
    %1929 = vector.broadcast %cst_674 : f32 to vector<16x8xf32>
    %1930 = arith.mulf %1928, %1929 : vector<16x8xf32>
    %1931 = arith.mulf %1930, %1838 : vector<16x8xf32>
    %cst_675 = arith.constant 2.000000e-01 : f32
    %1932 = vector.broadcast %cst_675 : f32 to vector<16x8xf32>
    %1933 = arith.subf %1932, %410 : vector<16x8xf32>
    %cst_676 = arith.constant 0.833333313 : f32
    %1934 = vector.broadcast %cst_676 : f32 to vector<16x8xf32>
    %1935 = arith.mulf %1933, %1934 : vector<16x8xf32>
    %1936 = arith.mulf %1935, %1849 : vector<16x8xf32>
    %1937 = arith.addf %1931, %1936 : vector<16x8xf32>
    %cst_677 = arith.constant -1.000000e+00 : f32
    %1938 = vector.broadcast %cst_677 : f32 to vector<16x8xf32>
    %1939 = arith.subf %410, %1938 : vector<16x8xf32>
    %cst_678 = arith.constant 0.833333313 : f32
    %1940 = vector.broadcast %cst_678 : f32 to vector<16x8xf32>
    %1941 = arith.mulf %1939, %1940 : vector<16x8xf32>
    %1942 = arith.mulf %1941, %1849 : vector<16x8xf32>
    %cst_679 = arith.constant 6.000000e-01 : f32
    %1943 = vector.broadcast %cst_679 : f32 to vector<16x8xf32>
    %1944 = arith.subf %1943, %410 : vector<16x8xf32>
    %cst_680 = arith.constant 0.833333313 : f32
    %1945 = vector.broadcast %cst_680 : f32 to vector<16x8xf32>
    %1946 = arith.mulf %1944, %1945 : vector<16x8xf32>
    %1947 = arith.mulf %1946, %1860 : vector<16x8xf32>
    %1948 = arith.addf %1942, %1947 : vector<16x8xf32>
    %cst_681 = arith.constant -6.000000e-01 : f32
    %1949 = vector.broadcast %cst_681 : f32 to vector<16x8xf32>
    %1950 = arith.subf %410, %1949 : vector<16x8xf32>
    %cst_682 = arith.constant 0.833333313 : f32
    %1951 = vector.broadcast %cst_682 : f32 to vector<16x8xf32>
    %1952 = arith.mulf %1950, %1951 : vector<16x8xf32>
    %1953 = arith.mulf %1952, %1860 : vector<16x8xf32>
    %cst_683 = arith.constant 1.000000e+00 : f32
    %1954 = vector.broadcast %cst_683 : f32 to vector<16x8xf32>
    %1955 = arith.subf %1954, %410 : vector<16x8xf32>
    %cst_684 = arith.constant 0.833333313 : f32
    %1956 = vector.broadcast %cst_684 : f32 to vector<16x8xf32>
    %1957 = arith.mulf %1955, %1956 : vector<16x8xf32>
    %1958 = arith.mulf %1957, %1871 : vector<16x8xf32>
    %1959 = arith.addf %1953, %1958 : vector<16x8xf32>
    %cst_685 = arith.constant -2.000000e-01 : f32
    %1960 = vector.broadcast %cst_685 : f32 to vector<16x8xf32>
    %1961 = arith.subf %410, %1960 : vector<16x8xf32>
    %cst_686 = arith.constant 0.833333313 : f32
    %1962 = vector.broadcast %cst_686 : f32 to vector<16x8xf32>
    %1963 = arith.mulf %1961, %1962 : vector<16x8xf32>
    %1964 = arith.mulf %1963, %1871 : vector<16x8xf32>
    %cst_687 = arith.constant 1.400000e+00 : f32
    %1965 = vector.broadcast %cst_687 : f32 to vector<16x8xf32>
    %1966 = arith.subf %1965, %410 : vector<16x8xf32>
    %cst_688 = arith.constant 0.833333313 : f32
    %1967 = vector.broadcast %cst_688 : f32 to vector<16x8xf32>
    %1968 = arith.mulf %1966, %1967 : vector<16x8xf32>
    %1969 = arith.mulf %1968, %1882 : vector<16x8xf32>
    %1970 = arith.addf %1964, %1969 : vector<16x8xf32>
    %cst_689 = arith.constant 2.000000e-01 : f32
    %1971 = vector.broadcast %cst_689 : f32 to vector<16x8xf32>
    %1972 = arith.subf %410, %1971 : vector<16x8xf32>
    %cst_690 = arith.constant 0.833333313 : f32
    %1973 = vector.broadcast %cst_690 : f32 to vector<16x8xf32>
    %1974 = arith.mulf %1972, %1973 : vector<16x8xf32>
    %1975 = arith.mulf %1974, %1882 : vector<16x8xf32>
    %cst_691 = arith.constant 1.800000e+00 : f32
    %1976 = vector.broadcast %cst_691 : f32 to vector<16x8xf32>
    %1977 = arith.subf %1976, %410 : vector<16x8xf32>
    %cst_692 = arith.constant 0.833333313 : f32
    %1978 = vector.broadcast %cst_692 : f32 to vector<16x8xf32>
    %1979 = arith.mulf %1977, %1978 : vector<16x8xf32>
    %1980 = arith.mulf %1979, %1893 : vector<16x8xf32>
    %1981 = arith.addf %1975, %1980 : vector<16x8xf32>
    %cst_693 = arith.constant 6.000000e-01 : f32
    %1982 = vector.broadcast %cst_693 : f32 to vector<16x8xf32>
    %1983 = arith.subf %410, %1982 : vector<16x8xf32>
    %cst_694 = arith.constant 0.833333313 : f32
    %1984 = vector.broadcast %cst_694 : f32 to vector<16x8xf32>
    %1985 = arith.mulf %1983, %1984 : vector<16x8xf32>
    %1986 = arith.mulf %1985, %1893 : vector<16x8xf32>
    %cst_695 = arith.constant 2.200000e+00 : f32
    %1987 = vector.broadcast %cst_695 : f32 to vector<16x8xf32>
    %1988 = arith.subf %1987, %410 : vector<16x8xf32>
    %cst_696 = arith.constant 0.833333313 : f32
    %1989 = vector.broadcast %cst_696 : f32 to vector<16x8xf32>
    %1990 = arith.mulf %1988, %1989 : vector<16x8xf32>
    %1991 = arith.mulf %1990, %1904 : vector<16x8xf32>
    %1992 = arith.addf %1986, %1991 : vector<16x8xf32>
    %1993 = tpu.concatenate %1915, %1926, %1937, %1948, %1959, %1970, %1981, %1992 in 1 : vector<16x8xf32>, vector<16x8xf32>, vector<16x8xf32>, vector<16x8xf32>, vector<16x8xf32>, vector<16x8xf32>, vector<16x8xf32>, vector<16x8xf32> -> vector<16x64xf32>
    %1994 = arith.truncf %1993 : vector<16x64xf32> to vector<16x64xbf16>
    %cst_697 = arith.constant dense<0.000000e+00> : vector<16x16xf32>
    %1995 = tpu.matmul %1994, %1610, %cst_697 {dimension_numbers = #tpu.dot_dimension_numbers<[1], [0], [0], [1], [0, 0, 1, 1], [], []>} : vector<16x64xbf16>, vector<64x16xbf16>, vector<16x16xf32> -> vector<16x16xf32>
    %1996 = arith.addf %1618, %1995 : vector<16x16xf32>
    %cst_698 = arith.constant 0.000000e+00 : f32
    %1997 = vector.broadcast %cst_698 : f32 to vector<16x16xf32>
    %1998 = arith.maximumf %1996, %1997 : vector<16x16xf32>
    %c688 = arith.constant 688 : index
    %c0_699 = arith.constant 0 : index
    %1999 = vector.load %arg3[%c688, %c0_699] : memref<832x128xbf16, #tpu.memory_space<vmem>>, vector<16x1xbf16>
    %c704 = arith.constant 704 : index
    %c0_700 = arith.constant 0 : index
    %2000 = vector.load %arg3[%c704, %c0_700] : memref<832x128xbf16, #tpu.memory_space<vmem>>, vector<128x1xbf16>
    %2001 = arith.negf %1998 : vector<16x16xf32>
    %2002 = math.exp %2001 : vector<16x16xf32>
    %cst_701 = arith.constant 1.000000e+00 : f32
    %2003 = vector.broadcast %cst_701 : f32 to vector<16x16xf32>
    %2004 = arith.addf %2003, %2002 : vector<16x16xf32>
    %2005 = arith.divf %2003, %2004 : vector<16x16xf32>
    %2006 = arith.mulf %1998, %2005 : vector<16x16xf32>
    %2007 = arith.truncf %2006 : vector<16x16xf32> to vector<16x16xbf16>
    %cst_702 = arith.constant dense<0.000000e+00> : vector<16x1xf32>
    %2008 = tpu.matmul %2007, %1999, %cst_702 {dimension_numbers = #tpu.dot_dimension_numbers<[1], [0], [0], [1], [0, 0, 1, 1], [], []>} : vector<16x16xbf16>, vector<16x1xbf16>, vector<16x1xf32> -> vector<16x1xf32>
    %cst_703 = arith.constant -2.200000e+00 : f32
    %2009 = vector.broadcast %cst_703 : f32 to vector<16x16xf32>
    %2010 = arith.cmpf oge, %1998, %2009 : vector<16x16xf32>
    %cst_704 = arith.constant -1.800000e+00 : f32
    %2011 = vector.broadcast %cst_704 : f32 to vector<16x16xf32>
    %2012 = arith.cmpf olt, %1998, %2011 : vector<16x16xf32>
    %2013 = arith.andi %2010, %2012 : vector<16x16xi1>
    %2014 = arith.extui %2013 : vector<16x16xi1> to vector<16x16xi32>
    %2015 = arith.sitofp %2014 : vector<16x16xi32> to vector<16x16xf32>
    %cst_705 = arith.constant -1.800000e+00 : f32
    %2016 = vector.broadcast %cst_705 : f32 to vector<16x16xf32>
    %2017 = arith.cmpf oge, %1998, %2016 : vector<16x16xf32>
    %cst_706 = arith.constant -1.400000e+00 : f32
    %2018 = vector.broadcast %cst_706 : f32 to vector<16x16xf32>
    %2019 = arith.cmpf olt, %1998, %2018 : vector<16x16xf32>
    %2020 = arith.andi %2017, %2019 : vector<16x16xi1>
    %2021 = arith.extui %2020 : vector<16x16xi1> to vector<16x16xi32>
    %2022 = arith.sitofp %2021 : vector<16x16xi32> to vector<16x16xf32>
    %cst_707 = arith.constant -1.400000e+00 : f32
    %2023 = vector.broadcast %cst_707 : f32 to vector<16x16xf32>
    %2024 = arith.cmpf oge, %1998, %2023 : vector<16x16xf32>
    %cst_708 = arith.constant -1.000000e+00 : f32
    %2025 = vector.broadcast %cst_708 : f32 to vector<16x16xf32>
    %2026 = arith.cmpf olt, %1998, %2025 : vector<16x16xf32>
    %2027 = arith.andi %2024, %2026 : vector<16x16xi1>
    %2028 = arith.extui %2027 : vector<16x16xi1> to vector<16x16xi32>
    %2029 = arith.sitofp %2028 : vector<16x16xi32> to vector<16x16xf32>
    %cst_709 = arith.constant -1.000000e+00 : f32
    %2030 = vector.broadcast %cst_709 : f32 to vector<16x16xf32>
    %2031 = arith.cmpf oge, %1998, %2030 : vector<16x16xf32>
    %cst_710 = arith.constant -6.000000e-01 : f32
    %2032 = vector.broadcast %cst_710 : f32 to vector<16x16xf32>
    %2033 = arith.cmpf olt, %1998, %2032 : vector<16x16xf32>
    %2034 = arith.andi %2031, %2033 : vector<16x16xi1>
    %2035 = arith.extui %2034 : vector<16x16xi1> to vector<16x16xi32>
    %2036 = arith.sitofp %2035 : vector<16x16xi32> to vector<16x16xf32>
    %cst_711 = arith.constant -6.000000e-01 : f32
    %2037 = vector.broadcast %cst_711 : f32 to vector<16x16xf32>
    %2038 = arith.cmpf oge, %1998, %2037 : vector<16x16xf32>
    %cst_712 = arith.constant -2.000000e-01 : f32
    %2039 = vector.broadcast %cst_712 : f32 to vector<16x16xf32>
    %2040 = arith.cmpf olt, %1998, %2039 : vector<16x16xf32>
    %2041 = arith.andi %2038, %2040 : vector<16x16xi1>
    %2042 = arith.extui %2041 : vector<16x16xi1> to vector<16x16xi32>
    %2043 = arith.sitofp %2042 : vector<16x16xi32> to vector<16x16xf32>
    %cst_713 = arith.constant -2.000000e-01 : f32
    %2044 = vector.broadcast %cst_713 : f32 to vector<16x16xf32>
    %2045 = arith.cmpf oge, %1998, %2044 : vector<16x16xf32>
    %cst_714 = arith.constant 2.000000e-01 : f32
    %2046 = vector.broadcast %cst_714 : f32 to vector<16x16xf32>
    %2047 = arith.cmpf olt, %1998, %2046 : vector<16x16xf32>
    %2048 = arith.andi %2045, %2047 : vector<16x16xi1>
    %2049 = arith.extui %2048 : vector<16x16xi1> to vector<16x16xi32>
    %2050 = arith.sitofp %2049 : vector<16x16xi32> to vector<16x16xf32>
    %cst_715 = arith.constant 2.000000e-01 : f32
    %2051 = vector.broadcast %cst_715 : f32 to vector<16x16xf32>
    %2052 = arith.cmpf oge, %1998, %2051 : vector<16x16xf32>
    %cst_716 = arith.constant 6.000000e-01 : f32
    %2053 = vector.broadcast %cst_716 : f32 to vector<16x16xf32>
    %2054 = arith.cmpf olt, %1998, %2053 : vector<16x16xf32>
    %2055 = arith.andi %2052, %2054 : vector<16x16xi1>
    %2056 = arith.extui %2055 : vector<16x16xi1> to vector<16x16xi32>
    %2057 = arith.sitofp %2056 : vector<16x16xi32> to vector<16x16xf32>
    %cst_717 = arith.constant 6.000000e-01 : f32
    %2058 = vector.broadcast %cst_717 : f32 to vector<16x16xf32>
    %2059 = arith.cmpf oge, %1998, %2058 : vector<16x16xf32>
    %cst_718 = arith.constant 1.000000e+00 : f32
    %2060 = vector.broadcast %cst_718 : f32 to vector<16x16xf32>
    %2061 = arith.cmpf olt, %1998, %2060 : vector<16x16xf32>
    %2062 = arith.andi %2059, %2061 : vector<16x16xi1>
    %2063 = arith.extui %2062 : vector<16x16xi1> to vector<16x16xi32>
    %2064 = arith.sitofp %2063 : vector<16x16xi32> to vector<16x16xf32>
    %cst_719 = arith.constant 1.000000e+00 : f32
    %2065 = vector.broadcast %cst_719 : f32 to vector<16x16xf32>
    %2066 = arith.cmpf oge, %1998, %2065 : vector<16x16xf32>
    %cst_720 = arith.constant 1.400000e+00 : f32
    %2067 = vector.broadcast %cst_720 : f32 to vector<16x16xf32>
    %2068 = arith.cmpf olt, %1998, %2067 : vector<16x16xf32>
    %2069 = arith.andi %2066, %2068 : vector<16x16xi1>
    %2070 = arith.extui %2069 : vector<16x16xi1> to vector<16x16xi32>
    %2071 = arith.sitofp %2070 : vector<16x16xi32> to vector<16x16xf32>
    %cst_721 = arith.constant 1.400000e+00 : f32
    %2072 = vector.broadcast %cst_721 : f32 to vector<16x16xf32>
    %2073 = arith.cmpf oge, %1998, %2072 : vector<16x16xf32>
    %cst_722 = arith.constant 1.800000e+00 : f32
    %2074 = vector.broadcast %cst_722 : f32 to vector<16x16xf32>
    %2075 = arith.cmpf olt, %1998, %2074 : vector<16x16xf32>
    %2076 = arith.andi %2073, %2075 : vector<16x16xi1>
    %2077 = arith.extui %2076 : vector<16x16xi1> to vector<16x16xi32>
    %2078 = arith.sitofp %2077 : vector<16x16xi32> to vector<16x16xf32>
    %cst_723 = arith.constant 1.800000e+00 : f32
    %2079 = vector.broadcast %cst_723 : f32 to vector<16x16xf32>
    %2080 = arith.cmpf oge, %1998, %2079 : vector<16x16xf32>
    %cst_724 = arith.constant 2.200000e+00 : f32
    %2081 = vector.broadcast %cst_724 : f32 to vector<16x16xf32>
    %2082 = arith.cmpf olt, %1998, %2081 : vector<16x16xf32>
    %2083 = arith.andi %2080, %2082 : vector<16x16xi1>
    %2084 = arith.extui %2083 : vector<16x16xi1> to vector<16x16xi32>
    %2085 = arith.sitofp %2084 : vector<16x16xi32> to vector<16x16xf32>
    %cst_725 = arith.constant -2.200000e+00 : f32
    %2086 = vector.broadcast %cst_725 : f32 to vector<16x16xf32>
    %2087 = arith.subf %1998, %2086 : vector<16x16xf32>
    %cst_726 = arith.constant 2.500000e+00 : f32
    %2088 = vector.broadcast %cst_726 : f32 to vector<16x16xf32>
    %2089 = arith.mulf %2087, %2088 : vector<16x16xf32>
    %2090 = arith.mulf %2089, %2015 : vector<16x16xf32>
    %cst_727 = arith.constant -1.400000e+00 : f32
    %2091 = vector.broadcast %cst_727 : f32 to vector<16x16xf32>
    %2092 = arith.subf %2091, %1998 : vector<16x16xf32>
    %cst_728 = arith.constant 2.500000e+00 : f32
    %2093 = vector.broadcast %cst_728 : f32 to vector<16x16xf32>
    %2094 = arith.mulf %2092, %2093 : vector<16x16xf32>
    %2095 = arith.mulf %2094, %2022 : vector<16x16xf32>
    %2096 = arith.addf %2090, %2095 : vector<16x16xf32>
    %cst_729 = arith.constant -1.800000e+00 : f32
    %2097 = vector.broadcast %cst_729 : f32 to vector<16x16xf32>
    %2098 = arith.subf %1998, %2097 : vector<16x16xf32>
    %cst_730 = arith.constant 2.500000e+00 : f32
    %2099 = vector.broadcast %cst_730 : f32 to vector<16x16xf32>
    %2100 = arith.mulf %2098, %2099 : vector<16x16xf32>
    %2101 = arith.mulf %2100, %2022 : vector<16x16xf32>
    %cst_731 = arith.constant -1.000000e+00 : f32
    %2102 = vector.broadcast %cst_731 : f32 to vector<16x16xf32>
    %2103 = arith.subf %2102, %1998 : vector<16x16xf32>
    %cst_732 = arith.constant 2.500000e+00 : f32
    %2104 = vector.broadcast %cst_732 : f32 to vector<16x16xf32>
    %2105 = arith.mulf %2103, %2104 : vector<16x16xf32>
    %2106 = arith.mulf %2105, %2029 : vector<16x16xf32>
    %2107 = arith.addf %2101, %2106 : vector<16x16xf32>
    %cst_733 = arith.constant -1.400000e+00 : f32
    %2108 = vector.broadcast %cst_733 : f32 to vector<16x16xf32>
    %2109 = arith.subf %1998, %2108 : vector<16x16xf32>
    %cst_734 = arith.constant 2.500000e+00 : f32
    %2110 = vector.broadcast %cst_734 : f32 to vector<16x16xf32>
    %2111 = arith.mulf %2109, %2110 : vector<16x16xf32>
    %2112 = arith.mulf %2111, %2029 : vector<16x16xf32>
    %cst_735 = arith.constant -6.000000e-01 : f32
    %2113 = vector.broadcast %cst_735 : f32 to vector<16x16xf32>
    %2114 = arith.subf %2113, %1998 : vector<16x16xf32>
    %cst_736 = arith.constant 2.500000e+00 : f32
    %2115 = vector.broadcast %cst_736 : f32 to vector<16x16xf32>
    %2116 = arith.mulf %2114, %2115 : vector<16x16xf32>
    %2117 = arith.mulf %2116, %2036 : vector<16x16xf32>
    %2118 = arith.addf %2112, %2117 : vector<16x16xf32>
    %cst_737 = arith.constant -1.000000e+00 : f32
    %2119 = vector.broadcast %cst_737 : f32 to vector<16x16xf32>
    %2120 = arith.subf %1998, %2119 : vector<16x16xf32>
    %cst_738 = arith.constant 2.500000e+00 : f32
    %2121 = vector.broadcast %cst_738 : f32 to vector<16x16xf32>
    %2122 = arith.mulf %2120, %2121 : vector<16x16xf32>
    %2123 = arith.mulf %2122, %2036 : vector<16x16xf32>
    %cst_739 = arith.constant -2.000000e-01 : f32
    %2124 = vector.broadcast %cst_739 : f32 to vector<16x16xf32>
    %2125 = arith.subf %2124, %1998 : vector<16x16xf32>
    %cst_740 = arith.constant 2.500000e+00 : f32
    %2126 = vector.broadcast %cst_740 : f32 to vector<16x16xf32>
    %2127 = arith.mulf %2125, %2126 : vector<16x16xf32>
    %2128 = arith.mulf %2127, %2043 : vector<16x16xf32>
    %2129 = arith.addf %2123, %2128 : vector<16x16xf32>
    %cst_741 = arith.constant -6.000000e-01 : f32
    %2130 = vector.broadcast %cst_741 : f32 to vector<16x16xf32>
    %2131 = arith.subf %1998, %2130 : vector<16x16xf32>
    %cst_742 = arith.constant 2.500000e+00 : f32
    %2132 = vector.broadcast %cst_742 : f32 to vector<16x16xf32>
    %2133 = arith.mulf %2131, %2132 : vector<16x16xf32>
    %2134 = arith.mulf %2133, %2043 : vector<16x16xf32>
    %cst_743 = arith.constant 2.000000e-01 : f32
    %2135 = vector.broadcast %cst_743 : f32 to vector<16x16xf32>
    %2136 = arith.subf %2135, %1998 : vector<16x16xf32>
    %cst_744 = arith.constant 2.500000e+00 : f32
    %2137 = vector.broadcast %cst_744 : f32 to vector<16x16xf32>
    %2138 = arith.mulf %2136, %2137 : vector<16x16xf32>
    %2139 = arith.mulf %2138, %2050 : vector<16x16xf32>
    %2140 = arith.addf %2134, %2139 : vector<16x16xf32>
    %cst_745 = arith.constant -2.000000e-01 : f32
    %2141 = vector.broadcast %cst_745 : f32 to vector<16x16xf32>
    %2142 = arith.subf %1998, %2141 : vector<16x16xf32>
    %cst_746 = arith.constant 2.500000e+00 : f32
    %2143 = vector.broadcast %cst_746 : f32 to vector<16x16xf32>
    %2144 = arith.mulf %2142, %2143 : vector<16x16xf32>
    %2145 = arith.mulf %2144, %2050 : vector<16x16xf32>
    %cst_747 = arith.constant 6.000000e-01 : f32
    %2146 = vector.broadcast %cst_747 : f32 to vector<16x16xf32>
    %2147 = arith.subf %2146, %1998 : vector<16x16xf32>
    %cst_748 = arith.constant 2.500000e+00 : f32
    %2148 = vector.broadcast %cst_748 : f32 to vector<16x16xf32>
    %2149 = arith.mulf %2147, %2148 : vector<16x16xf32>
    %2150 = arith.mulf %2149, %2057 : vector<16x16xf32>
    %2151 = arith.addf %2145, %2150 : vector<16x16xf32>
    %cst_749 = arith.constant 2.000000e-01 : f32
    %2152 = vector.broadcast %cst_749 : f32 to vector<16x16xf32>
    %2153 = arith.subf %1998, %2152 : vector<16x16xf32>
    %cst_750 = arith.constant 2.500000e+00 : f32
    %2154 = vector.broadcast %cst_750 : f32 to vector<16x16xf32>
    %2155 = arith.mulf %2153, %2154 : vector<16x16xf32>
    %2156 = arith.mulf %2155, %2057 : vector<16x16xf32>
    %cst_751 = arith.constant 1.000000e+00 : f32
    %2157 = vector.broadcast %cst_751 : f32 to vector<16x16xf32>
    %2158 = arith.subf %2157, %1998 : vector<16x16xf32>
    %cst_752 = arith.constant 2.500000e+00 : f32
    %2159 = vector.broadcast %cst_752 : f32 to vector<16x16xf32>
    %2160 = arith.mulf %2158, %2159 : vector<16x16xf32>
    %2161 = arith.mulf %2160, %2064 : vector<16x16xf32>
    %2162 = arith.addf %2156, %2161 : vector<16x16xf32>
    %cst_753 = arith.constant 6.000000e-01 : f32
    %2163 = vector.broadcast %cst_753 : f32 to vector<16x16xf32>
    %2164 = arith.subf %1998, %2163 : vector<16x16xf32>
    %cst_754 = arith.constant 2.500000e+00 : f32
    %2165 = vector.broadcast %cst_754 : f32 to vector<16x16xf32>
    %2166 = arith.mulf %2164, %2165 : vector<16x16xf32>
    %2167 = arith.mulf %2166, %2064 : vector<16x16xf32>
    %cst_755 = arith.constant 1.400000e+00 : f32
    %2168 = vector.broadcast %cst_755 : f32 to vector<16x16xf32>
    %2169 = arith.subf %2168, %1998 : vector<16x16xf32>
    %cst_756 = arith.constant 2.500000e+00 : f32
    %2170 = vector.broadcast %cst_756 : f32 to vector<16x16xf32>
    %2171 = arith.mulf %2169, %2170 : vector<16x16xf32>
    %2172 = arith.mulf %2171, %2071 : vector<16x16xf32>
    %2173 = arith.addf %2167, %2172 : vector<16x16xf32>
    %cst_757 = arith.constant 1.000000e+00 : f32
    %2174 = vector.broadcast %cst_757 : f32 to vector<16x16xf32>
    %2175 = arith.subf %1998, %2174 : vector<16x16xf32>
    %cst_758 = arith.constant 2.500000e+00 : f32
    %2176 = vector.broadcast %cst_758 : f32 to vector<16x16xf32>
    %2177 = arith.mulf %2175, %2176 : vector<16x16xf32>
    %2178 = arith.mulf %2177, %2071 : vector<16x16xf32>
    %cst_759 = arith.constant 1.800000e+00 : f32
    %2179 = vector.broadcast %cst_759 : f32 to vector<16x16xf32>
    %2180 = arith.subf %2179, %1998 : vector<16x16xf32>
    %cst_760 = arith.constant 2.500000e+00 : f32
    %2181 = vector.broadcast %cst_760 : f32 to vector<16x16xf32>
    %2182 = arith.mulf %2180, %2181 : vector<16x16xf32>
    %2183 = arith.mulf %2182, %2078 : vector<16x16xf32>
    %2184 = arith.addf %2178, %2183 : vector<16x16xf32>
    %cst_761 = arith.constant 1.400000e+00 : f32
    %2185 = vector.broadcast %cst_761 : f32 to vector<16x16xf32>
    %2186 = arith.subf %1998, %2185 : vector<16x16xf32>
    %cst_762 = arith.constant 2.500000e+00 : f32
    %2187 = vector.broadcast %cst_762 : f32 to vector<16x16xf32>
    %2188 = arith.mulf %2186, %2187 : vector<16x16xf32>
    %2189 = arith.mulf %2188, %2078 : vector<16x16xf32>
    %cst_763 = arith.constant 2.200000e+00 : f32
    %2190 = vector.broadcast %cst_763 : f32 to vector<16x16xf32>
    %2191 = arith.subf %2190, %1998 : vector<16x16xf32>
    %cst_764 = arith.constant 2.500000e+00 : f32
    %2192 = vector.broadcast %cst_764 : f32 to vector<16x16xf32>
    %2193 = arith.mulf %2191, %2192 : vector<16x16xf32>
    %2194 = arith.mulf %2193, %2085 : vector<16x16xf32>
    %2195 = arith.addf %2189, %2194 : vector<16x16xf32>
    %cst_765 = arith.constant -2.200000e+00 : f32
    %2196 = vector.broadcast %cst_765 : f32 to vector<16x16xf32>
    %2197 = arith.subf %1998, %2196 : vector<16x16xf32>
    %cst_766 = arith.constant 1.250000e+00 : f32
    %2198 = vector.broadcast %cst_766 : f32 to vector<16x16xf32>
    %2199 = arith.mulf %2197, %2198 : vector<16x16xf32>
    %2200 = arith.mulf %2199, %2096 : vector<16x16xf32>
    %cst_767 = arith.constant -1.000000e+00 : f32
    %2201 = vector.broadcast %cst_767 : f32 to vector<16x16xf32>
    %2202 = arith.subf %2201, %1998 : vector<16x16xf32>
    %cst_768 = arith.constant 1.250000e+00 : f32
    %2203 = vector.broadcast %cst_768 : f32 to vector<16x16xf32>
    %2204 = arith.mulf %2202, %2203 : vector<16x16xf32>
    %2205 = arith.mulf %2204, %2107 : vector<16x16xf32>
    %2206 = arith.addf %2200, %2205 : vector<16x16xf32>
    %cst_769 = arith.constant -1.800000e+00 : f32
    %2207 = vector.broadcast %cst_769 : f32 to vector<16x16xf32>
    %2208 = arith.subf %1998, %2207 : vector<16x16xf32>
    %cst_770 = arith.constant 1.250000e+00 : f32
    %2209 = vector.broadcast %cst_770 : f32 to vector<16x16xf32>
    %2210 = arith.mulf %2208, %2209 : vector<16x16xf32>
    %2211 = arith.mulf %2210, %2107 : vector<16x16xf32>
    %cst_771 = arith.constant -6.000000e-01 : f32
    %2212 = vector.broadcast %cst_771 : f32 to vector<16x16xf32>
    %2213 = arith.subf %2212, %1998 : vector<16x16xf32>
    %cst_772 = arith.constant 1.250000e+00 : f32
    %2214 = vector.broadcast %cst_772 : f32 to vector<16x16xf32>
    %2215 = arith.mulf %2213, %2214 : vector<16x16xf32>
    %2216 = arith.mulf %2215, %2118 : vector<16x16xf32>
    %2217 = arith.addf %2211, %2216 : vector<16x16xf32>
    %cst_773 = arith.constant -1.400000e+00 : f32
    %2218 = vector.broadcast %cst_773 : f32 to vector<16x16xf32>
    %2219 = arith.subf %1998, %2218 : vector<16x16xf32>
    %cst_774 = arith.constant 1.250000e+00 : f32
    %2220 = vector.broadcast %cst_774 : f32 to vector<16x16xf32>
    %2221 = arith.mulf %2219, %2220 : vector<16x16xf32>
    %2222 = arith.mulf %2221, %2118 : vector<16x16xf32>
    %cst_775 = arith.constant -2.000000e-01 : f32
    %2223 = vector.broadcast %cst_775 : f32 to vector<16x16xf32>
    %2224 = arith.subf %2223, %1998 : vector<16x16xf32>
    %cst_776 = arith.constant 1.250000e+00 : f32
    %2225 = vector.broadcast %cst_776 : f32 to vector<16x16xf32>
    %2226 = arith.mulf %2224, %2225 : vector<16x16xf32>
    %2227 = arith.mulf %2226, %2129 : vector<16x16xf32>
    %2228 = arith.addf %2222, %2227 : vector<16x16xf32>
    %cst_777 = arith.constant -1.000000e+00 : f32
    %2229 = vector.broadcast %cst_777 : f32 to vector<16x16xf32>
    %2230 = arith.subf %1998, %2229 : vector<16x16xf32>
    %cst_778 = arith.constant 1.250000e+00 : f32
    %2231 = vector.broadcast %cst_778 : f32 to vector<16x16xf32>
    %2232 = arith.mulf %2230, %2231 : vector<16x16xf32>
    %2233 = arith.mulf %2232, %2129 : vector<16x16xf32>
    %cst_779 = arith.constant 2.000000e-01 : f32
    %2234 = vector.broadcast %cst_779 : f32 to vector<16x16xf32>
    %2235 = arith.subf %2234, %1998 : vector<16x16xf32>
    %cst_780 = arith.constant 1.250000e+00 : f32
    %2236 = vector.broadcast %cst_780 : f32 to vector<16x16xf32>
    %2237 = arith.mulf %2235, %2236 : vector<16x16xf32>
    %2238 = arith.mulf %2237, %2140 : vector<16x16xf32>
    %2239 = arith.addf %2233, %2238 : vector<16x16xf32>
    %cst_781 = arith.constant -6.000000e-01 : f32
    %2240 = vector.broadcast %cst_781 : f32 to vector<16x16xf32>
    %2241 = arith.subf %1998, %2240 : vector<16x16xf32>
    %cst_782 = arith.constant 1.250000e+00 : f32
    %2242 = vector.broadcast %cst_782 : f32 to vector<16x16xf32>
    %2243 = arith.mulf %2241, %2242 : vector<16x16xf32>
    %2244 = arith.mulf %2243, %2140 : vector<16x16xf32>
    %cst_783 = arith.constant 6.000000e-01 : f32
    %2245 = vector.broadcast %cst_783 : f32 to vector<16x16xf32>
    %2246 = arith.subf %2245, %1998 : vector<16x16xf32>
    %cst_784 = arith.constant 1.250000e+00 : f32
    %2247 = vector.broadcast %cst_784 : f32 to vector<16x16xf32>
    %2248 = arith.mulf %2246, %2247 : vector<16x16xf32>
    %2249 = arith.mulf %2248, %2151 : vector<16x16xf32>
    %2250 = arith.addf %2244, %2249 : vector<16x16xf32>
    %cst_785 = arith.constant -2.000000e-01 : f32
    %2251 = vector.broadcast %cst_785 : f32 to vector<16x16xf32>
    %2252 = arith.subf %1998, %2251 : vector<16x16xf32>
    %cst_786 = arith.constant 1.250000e+00 : f32
    %2253 = vector.broadcast %cst_786 : f32 to vector<16x16xf32>
    %2254 = arith.mulf %2252, %2253 : vector<16x16xf32>
    %2255 = arith.mulf %2254, %2151 : vector<16x16xf32>
    %cst_787 = arith.constant 1.000000e+00 : f32
    %2256 = vector.broadcast %cst_787 : f32 to vector<16x16xf32>
    %2257 = arith.subf %2256, %1998 : vector<16x16xf32>
    %cst_788 = arith.constant 1.250000e+00 : f32
    %2258 = vector.broadcast %cst_788 : f32 to vector<16x16xf32>
    %2259 = arith.mulf %2257, %2258 : vector<16x16xf32>
    %2260 = arith.mulf %2259, %2162 : vector<16x16xf32>
    %2261 = arith.addf %2255, %2260 : vector<16x16xf32>
    %cst_789 = arith.constant 2.000000e-01 : f32
    %2262 = vector.broadcast %cst_789 : f32 to vector<16x16xf32>
    %2263 = arith.subf %1998, %2262 : vector<16x16xf32>
    %cst_790 = arith.constant 1.250000e+00 : f32
    %2264 = vector.broadcast %cst_790 : f32 to vector<16x16xf32>
    %2265 = arith.mulf %2263, %2264 : vector<16x16xf32>
    %2266 = arith.mulf %2265, %2162 : vector<16x16xf32>
    %cst_791 = arith.constant 1.400000e+00 : f32
    %2267 = vector.broadcast %cst_791 : f32 to vector<16x16xf32>
    %2268 = arith.subf %2267, %1998 : vector<16x16xf32>
    %cst_792 = arith.constant 1.250000e+00 : f32
    %2269 = vector.broadcast %cst_792 : f32 to vector<16x16xf32>
    %2270 = arith.mulf %2268, %2269 : vector<16x16xf32>
    %2271 = arith.mulf %2270, %2173 : vector<16x16xf32>
    %2272 = arith.addf %2266, %2271 : vector<16x16xf32>
    %cst_793 = arith.constant 6.000000e-01 : f32
    %2273 = vector.broadcast %cst_793 : f32 to vector<16x16xf32>
    %2274 = arith.subf %1998, %2273 : vector<16x16xf32>
    %cst_794 = arith.constant 1.250000e+00 : f32
    %2275 = vector.broadcast %cst_794 : f32 to vector<16x16xf32>
    %2276 = arith.mulf %2274, %2275 : vector<16x16xf32>
    %2277 = arith.mulf %2276, %2173 : vector<16x16xf32>
    %cst_795 = arith.constant 1.800000e+00 : f32
    %2278 = vector.broadcast %cst_795 : f32 to vector<16x16xf32>
    %2279 = arith.subf %2278, %1998 : vector<16x16xf32>
    %cst_796 = arith.constant 1.250000e+00 : f32
    %2280 = vector.broadcast %cst_796 : f32 to vector<16x16xf32>
    %2281 = arith.mulf %2279, %2280 : vector<16x16xf32>
    %2282 = arith.mulf %2281, %2184 : vector<16x16xf32>
    %2283 = arith.addf %2277, %2282 : vector<16x16xf32>
    %cst_797 = arith.constant 1.000000e+00 : f32
    %2284 = vector.broadcast %cst_797 : f32 to vector<16x16xf32>
    %2285 = arith.subf %1998, %2284 : vector<16x16xf32>
    %cst_798 = arith.constant 1.250000e+00 : f32
    %2286 = vector.broadcast %cst_798 : f32 to vector<16x16xf32>
    %2287 = arith.mulf %2285, %2286 : vector<16x16xf32>
    %2288 = arith.mulf %2287, %2184 : vector<16x16xf32>
    %cst_799 = arith.constant 2.200000e+00 : f32
    %2289 = vector.broadcast %cst_799 : f32 to vector<16x16xf32>
    %2290 = arith.subf %2289, %1998 : vector<16x16xf32>
    %cst_800 = arith.constant 1.250000e+00 : f32
    %2291 = vector.broadcast %cst_800 : f32 to vector<16x16xf32>
    %2292 = arith.mulf %2290, %2291 : vector<16x16xf32>
    %2293 = arith.mulf %2292, %2195 : vector<16x16xf32>
    %2294 = arith.addf %2288, %2293 : vector<16x16xf32>
    %cst_801 = arith.constant -2.200000e+00 : f32
    %2295 = vector.broadcast %cst_801 : f32 to vector<16x16xf32>
    %2296 = arith.subf %1998, %2295 : vector<16x16xf32>
    %cst_802 = arith.constant 0.833333313 : f32
    %2297 = vector.broadcast %cst_802 : f32 to vector<16x16xf32>
    %2298 = arith.mulf %2296, %2297 : vector<16x16xf32>
    %2299 = arith.mulf %2298, %2206 : vector<16x16xf32>
    %cst_803 = arith.constant -6.000000e-01 : f32
    %2300 = vector.broadcast %cst_803 : f32 to vector<16x16xf32>
    %2301 = arith.subf %2300, %1998 : vector<16x16xf32>
    %cst_804 = arith.constant 0.833333313 : f32
    %2302 = vector.broadcast %cst_804 : f32 to vector<16x16xf32>
    %2303 = arith.mulf %2301, %2302 : vector<16x16xf32>
    %2304 = arith.mulf %2303, %2217 : vector<16x16xf32>
    %2305 = arith.addf %2299, %2304 : vector<16x16xf32>
    %cst_805 = arith.constant -1.800000e+00 : f32
    %2306 = vector.broadcast %cst_805 : f32 to vector<16x16xf32>
    %2307 = arith.subf %1998, %2306 : vector<16x16xf32>
    %cst_806 = arith.constant 0.833333313 : f32
    %2308 = vector.broadcast %cst_806 : f32 to vector<16x16xf32>
    %2309 = arith.mulf %2307, %2308 : vector<16x16xf32>
    %2310 = arith.mulf %2309, %2217 : vector<16x16xf32>
    %cst_807 = arith.constant -2.000000e-01 : f32
    %2311 = vector.broadcast %cst_807 : f32 to vector<16x16xf32>
    %2312 = arith.subf %2311, %1998 : vector<16x16xf32>
    %cst_808 = arith.constant 0.833333313 : f32
    %2313 = vector.broadcast %cst_808 : f32 to vector<16x16xf32>
    %2314 = arith.mulf %2312, %2313 : vector<16x16xf32>
    %2315 = arith.mulf %2314, %2228 : vector<16x16xf32>
    %2316 = arith.addf %2310, %2315 : vector<16x16xf32>
    %cst_809 = arith.constant -1.400000e+00 : f32
    %2317 = vector.broadcast %cst_809 : f32 to vector<16x16xf32>
    %2318 = arith.subf %1998, %2317 : vector<16x16xf32>
    %cst_810 = arith.constant 0.833333313 : f32
    %2319 = vector.broadcast %cst_810 : f32 to vector<16x16xf32>
    %2320 = arith.mulf %2318, %2319 : vector<16x16xf32>
    %2321 = arith.mulf %2320, %2228 : vector<16x16xf32>
    %cst_811 = arith.constant 2.000000e-01 : f32
    %2322 = vector.broadcast %cst_811 : f32 to vector<16x16xf32>
    %2323 = arith.subf %2322, %1998 : vector<16x16xf32>
    %cst_812 = arith.constant 0.833333313 : f32
    %2324 = vector.broadcast %cst_812 : f32 to vector<16x16xf32>
    %2325 = arith.mulf %2323, %2324 : vector<16x16xf32>
    %2326 = arith.mulf %2325, %2239 : vector<16x16xf32>
    %2327 = arith.addf %2321, %2326 : vector<16x16xf32>
    %cst_813 = arith.constant -1.000000e+00 : f32
    %2328 = vector.broadcast %cst_813 : f32 to vector<16x16xf32>
    %2329 = arith.subf %1998, %2328 : vector<16x16xf32>
    %cst_814 = arith.constant 0.833333313 : f32
    %2330 = vector.broadcast %cst_814 : f32 to vector<16x16xf32>
    %2331 = arith.mulf %2329, %2330 : vector<16x16xf32>
    %2332 = arith.mulf %2331, %2239 : vector<16x16xf32>
    %cst_815 = arith.constant 6.000000e-01 : f32
    %2333 = vector.broadcast %cst_815 : f32 to vector<16x16xf32>
    %2334 = arith.subf %2333, %1998 : vector<16x16xf32>
    %cst_816 = arith.constant 0.833333313 : f32
    %2335 = vector.broadcast %cst_816 : f32 to vector<16x16xf32>
    %2336 = arith.mulf %2334, %2335 : vector<16x16xf32>
    %2337 = arith.mulf %2336, %2250 : vector<16x16xf32>
    %2338 = arith.addf %2332, %2337 : vector<16x16xf32>
    %cst_817 = arith.constant -6.000000e-01 : f32
    %2339 = vector.broadcast %cst_817 : f32 to vector<16x16xf32>
    %2340 = arith.subf %1998, %2339 : vector<16x16xf32>
    %cst_818 = arith.constant 0.833333313 : f32
    %2341 = vector.broadcast %cst_818 : f32 to vector<16x16xf32>
    %2342 = arith.mulf %2340, %2341 : vector<16x16xf32>
    %2343 = arith.mulf %2342, %2250 : vector<16x16xf32>
    %cst_819 = arith.constant 1.000000e+00 : f32
    %2344 = vector.broadcast %cst_819 : f32 to vector<16x16xf32>
    %2345 = arith.subf %2344, %1998 : vector<16x16xf32>
    %cst_820 = arith.constant 0.833333313 : f32
    %2346 = vector.broadcast %cst_820 : f32 to vector<16x16xf32>
    %2347 = arith.mulf %2345, %2346 : vector<16x16xf32>
    %2348 = arith.mulf %2347, %2261 : vector<16x16xf32>
    %2349 = arith.addf %2343, %2348 : vector<16x16xf32>
    %cst_821 = arith.constant -2.000000e-01 : f32
    %2350 = vector.broadcast %cst_821 : f32 to vector<16x16xf32>
    %2351 = arith.subf %1998, %2350 : vector<16x16xf32>
    %cst_822 = arith.constant 0.833333313 : f32
    %2352 = vector.broadcast %cst_822 : f32 to vector<16x16xf32>
    %2353 = arith.mulf %2351, %2352 : vector<16x16xf32>
    %2354 = arith.mulf %2353, %2261 : vector<16x16xf32>
    %cst_823 = arith.constant 1.400000e+00 : f32
    %2355 = vector.broadcast %cst_823 : f32 to vector<16x16xf32>
    %2356 = arith.subf %2355, %1998 : vector<16x16xf32>
    %cst_824 = arith.constant 0.833333313 : f32
    %2357 = vector.broadcast %cst_824 : f32 to vector<16x16xf32>
    %2358 = arith.mulf %2356, %2357 : vector<16x16xf32>
    %2359 = arith.mulf %2358, %2272 : vector<16x16xf32>
    %2360 = arith.addf %2354, %2359 : vector<16x16xf32>
    %cst_825 = arith.constant 2.000000e-01 : f32
    %2361 = vector.broadcast %cst_825 : f32 to vector<16x16xf32>
    %2362 = arith.subf %1998, %2361 : vector<16x16xf32>
    %cst_826 = arith.constant 0.833333313 : f32
    %2363 = vector.broadcast %cst_826 : f32 to vector<16x16xf32>
    %2364 = arith.mulf %2362, %2363 : vector<16x16xf32>
    %2365 = arith.mulf %2364, %2272 : vector<16x16xf32>
    %cst_827 = arith.constant 1.800000e+00 : f32
    %2366 = vector.broadcast %cst_827 : f32 to vector<16x16xf32>
    %2367 = arith.subf %2366, %1998 : vector<16x16xf32>
    %cst_828 = arith.constant 0.833333313 : f32
    %2368 = vector.broadcast %cst_828 : f32 to vector<16x16xf32>
    %2369 = arith.mulf %2367, %2368 : vector<16x16xf32>
    %2370 = arith.mulf %2369, %2283 : vector<16x16xf32>
    %2371 = arith.addf %2365, %2370 : vector<16x16xf32>
    %cst_829 = arith.constant 6.000000e-01 : f32
    %2372 = vector.broadcast %cst_829 : f32 to vector<16x16xf32>
    %2373 = arith.subf %1998, %2372 : vector<16x16xf32>
    %cst_830 = arith.constant 0.833333313 : f32
    %2374 = vector.broadcast %cst_830 : f32 to vector<16x16xf32>
    %2375 = arith.mulf %2373, %2374 : vector<16x16xf32>
    %2376 = arith.mulf %2375, %2283 : vector<16x16xf32>
    %cst_831 = arith.constant 2.200000e+00 : f32
    %2377 = vector.broadcast %cst_831 : f32 to vector<16x16xf32>
    %2378 = arith.subf %2377, %1998 : vector<16x16xf32>
    %cst_832 = arith.constant 0.833333313 : f32
    %2379 = vector.broadcast %cst_832 : f32 to vector<16x16xf32>
    %2380 = arith.mulf %2378, %2379 : vector<16x16xf32>
    %2381 = arith.mulf %2380, %2294 : vector<16x16xf32>
    %2382 = arith.addf %2376, %2381 : vector<16x16xf32>
    %2383 = tpu.concatenate %2305, %2316, %2327, %2338, %2349, %2360, %2371, %2382 in 1 : vector<16x16xf32>, vector<16x16xf32>, vector<16x16xf32>, vector<16x16xf32>, vector<16x16xf32>, vector<16x16xf32>, vector<16x16xf32>, vector<16x16xf32> -> vector<16x128xf32>
    %2384 = arith.truncf %2383 : vector<16x128xf32> to vector<16x128xbf16>
    %cst_833 = arith.constant dense<0.000000e+00> : vector<16x1xf32>
    %2385 = tpu.matmul %2384, %2000, %cst_833 {dimension_numbers = #tpu.dot_dimension_numbers<[1], [0], [0], [1], [0, 0, 1, 1], [], []>} : vector<16x128xbf16>, vector<128x1xbf16>, vector<16x1xf32> -> vector<16x1xf32>
    %2386 = arith.addf %2008, %2385 : vector<16x1xf32>
    %cst_834 = arith.constant 0.000000e+00 : f32
    %2387 = vector.broadcast %cst_834 : f32 to vector<16x1xf32>
    %2388 = arith.maximumf %2386, %2387 : vector<16x1xf32>
    %cst_835 = arith.constant 0.000000e+00 : f32
    %2389 = vector.broadcast %cst_835 : f32 to vector<16x128xf32>
    %c0_836 = arith.constant 0 : index
    %c0_837 = arith.constant 0 : index
    %2390 = vector.load %arg4[%c0_836, %c0_837] : memref<16x128xf32, #tpu.memory_space<vmem>>, vector<16x128xf32>
    tpu.vector_store %arg4[%c0_836, %c0_837], %2389 {strides = array<i32>} : memref<16x128xf32, #tpu.memory_space<vmem>>, vector<16x128xf32>,
    %c0_838 = arith.constant 0 : index
    %c0_839 = arith.constant 0 : index
    %2391 = vector.load %arg4[%c0_838, %c0_839] : memref<16x128xf32, #tpu.memory_space<vmem>>, vector<16x8xf32>
    tpu.vector_store %arg4[%c0_838, %c0_839], %809 {strides = array<i32>} : memref<16x128xf32, #tpu.memory_space<vmem>>, vector<16x8xf32>,
    %c0_840 = arith.constant 0 : index
    %c8 = arith.constant 8 : index
    %2392 = vector.load %arg4[%c0_840, %c8] : memref<16x128xf32, #tpu.memory_space<vmem>>, vector<16x8xf32>
    tpu.vector_store %arg4[%c0_840, %c8], %410 {strides = array<i32>} : memref<16x128xf32, #tpu.memory_space<vmem>>, vector<16x8xf32>,
    %c0_841 = arith.constant 0 : index
    %c16_842 = arith.constant 16 : index
    %2393 = vector.load %arg4[%c0_841, %c16_842] : memref<16x128xf32, #tpu.memory_space<vmem>>, vector<16x1xf32>
    tpu.vector_store %arg4[%c0_841, %c16_842], %2388 {strides = array<i32>} : memref<16x128xf32, #tpu.memory_space<vmem>>, vector<16x1xf32>,
    %c0_843 = arith.constant 0 : index
    %c17 = arith.constant 17 : index
    %2394 = vector.load %arg4[%c0_843, %c17] : memref<16x128xf32, #tpu.memory_space<vmem>>, vector<16x1xf32>
    tpu.vector_store %arg4[%c0_843, %c17], %1608 {strides = array<i32>} : memref<16x128xf32, #tpu.memory_space<vmem>>, vector<16x1xf32>,
    return
  }
}

</mosaic_0001>

<llo_original>
// kernel: tgae_forward.1
$region0: #{tgae_forward.1}
  #allocation0 [shape = 'u32[]', space=smem, size = 0x4, offset = 0x4, fixed_abs, tag = 'smem constant byte address 0x4 - core index']
  #allocation1 [shape = 'u32[144,128]{1,0:T(1,128)}', space=vmem, size = 0x12000, scoped, tag = 'internal scratch']
  %s0 = inlined_call_operand.vmem [shape: bf16[16,16], index: 0, kind: input, shape index: {}]
  %s1 = inlined_call_operand.vmem [shape: bf16[16,8], index: 1, kind: input, shape index: {}]
  %s2 = inlined_call_operand.vmem [shape: s32[16,2], index: 2, kind: input, shape index: {}]
  %s3 = inlined_call_operand.vmem [shape: bf16[832,128], index: 3, kind: input, shape index: {}]
  %s4 = inlined_call_operand.vmem [shape: f32[16,128], index: 4, kind: output, shape index: {}]
  %s5 = sld [smem:[#allocation0]]
  $region26: #{tgae_forward.1} parent=0
    _
  %s7 = ssub.s32 1, %s5
  %s8 = scalar_select 0, %s7, %s5
  // Predicated region
  $region2: #{tgae_forward.1} parent=0 // pred_check
    _
  $region3: #{tgae_forward.1} parent=0 // pred_check_branch
    %10 = sbr.rel (0) target = $region5
  $region4: #{tgae_forward.1} parent=0 // pred_region
    _
  $region5: #{tgae_forward.1} parent=0 // pred_fallthru
    _
  // Predicated region
  $region6: #{tgae_forward.1} parent=0 // pred_check
    _
  $region7: #{tgae_forward.1} parent=0 // pred_check_branch
    %12 = sbr.rel (0) target = $region9
  $region8: #{tgae_forward.1} parent=0 // pred_region
    _
  $region9: #{tgae_forward.1} parent=0 // pred_fallthru
    _
  // Predicated region
  $region10: #{tgae_forward.1} parent=0 // pred_check
    _
  $region11: #{tgae_forward.1} parent=0 // pred_check_branch
    %14 = sbr.rel (0) target = $region13
  $region12: #{tgae_forward.1} parent=0 // pred_region
    _
  $region13: #{tgae_forward.1} parent=0 // pred_fallthru
    _
  // Predicated region
  $region14: #{tgae_forward.1} parent=0 // pred_check
    _
  $region15: #{tgae_forward.1} parent=0 // pred_check_branch
    %16 = sbr.rel (0) target = $region17
  $region16: #{tgae_forward.1} parent=0 // pred_region
    _
  $region17: #{tgae_forward.1} parent=0 // pred_fallthru
    _
  %v18 = vld [vmem:[%s0] sm:$0xf]
  %v19 = vld [vmem:[%s0 + $0x4] sm:$0xf]
  %v20 = vld [vmem:[%s1] sm:$0xf]
  %v21 = vld [vmem:[%s1 + $0x4] sm:$0xf]
  %v22 = vld [vmem:[%s3] sm:$0xf]
  %v25 = vunpack.c.l.b16 %v20
  %v26 = vunpack.c.l.b16 %v21
  %v27 = vpack.c.b16 %v26, %v25
  %vm28 = vcmask 64512
  %v30 = vsel %vm28, %v27, 0
  %vm32 = vcmask 1043456
  %v34 = vsel %vm32, %v22, 0
  %36 = vmatprep.subr.bf16.mxu0 0
  %37 = vmatpush1.bf16.msra.mxu0 0
  %38 = vmatprep.subr.bf16.mxu0 0
  %39 = vmatpush1.bf16.msra.mxu0 0
  %40 = vmatprep.subr.bf16.mxu0 0
  %41 = vmatpush1.bf16.msra.mxu0 0
  %42 = vmatprep.subr.bf16.mxu0 0
  %43 = vmatpush1.bf16.msra.mxu0 0
  %44 = vmatprep.subr.bf16.mxu0 0
  %45 = vmatpush1.bf16.msra.mxu0 0
  %46 = vmatprep.subr.bf16.mxu0 0
  %47 = vmatpush1.bf16.msra.mxu0 0
  %48 = vmatprep.subr.bf16.mxu0 0
  %49 = vmatpush1.bf16.msra.mxu0 0
  %50 = vmatprep.subr.bf16.mxu0 0
  %51 = vmatpush1.bf16.msra.mxu0 %v34
  %52 = vmatprep.subr.bf16.mxu0 0
  %53 = vmatpush2.bf16.msra.mxu0 0
  %54 = vmatprep.subr.bf16.mxu0 0
  %55 = vmatpush2.bf16.msra.mxu0 0
  %56 = vmatprep.subr.bf16.mxu0 0
  %57 = vmatpush2.bf16.msra.mxu0 0
  %58 = vmatprep.subr.bf16.mxu0 0
  %59 = vmatpush2.bf16.msra.mxu0 0
  %60 = vmatprep.subr.bf16.mxu0 0
  %61 = vmatpush2.bf16.msra.mxu0 0
  %62 = vmatprep.subr.bf16.mxu0 0
  %63 = vmatpush2.bf16.msra.mxu0 0
  %64 = vmatprep.subr.bf16.mxu0 0
  %65 = vmatpush2.bf16.msra.mxu0 0
  %66 = vmatprep.subr.bf16.mxu0 0
  %67 = vmatpush2.bf16.msra.mxu0 0
  %68 = vmatprep.mubr.bf16.mxu0 0
  %69 = vmatmul.mubr.bf16.gmra.mxu0 %v30
  %v70 = vpop.f32.mrf.mxu0
  %v71 = vadd.f32 0.0, %v70
  %v72 = vpop.f32.mrf.mxu0
  %v73 = vpop.f32.mrf.mxu0
  %v74 = vadd.f32 0.0, %v73
  %v75 = vpop.f32.mrf.mxu0
  %76 = vdwg.mxu0
  %v77 = vpack.c.bf16 %v74, %v71
  %v78 = vld [vmem:[%s3 + $0x8] sm:$0x1]
  %v79 = vunpack.c.l.bf16 %v78
  %v80 = vlaneseq
  %v81 = vshrl.u32 %v80, 7
  %v82 = vsub.s32 0, %v81
  %v83 = vrot.slane %v79, %v82
  %v86 = vunpack.c.l.b16 %v18
  %v87 = vunpack.c.l.b16 %v19
  %v88 = vpack.c.b16 %v87, %v86
  %vm89 = vcmask 130048
  %v91 = vsel %vm89, %v88, 0
  %93 = vmatprep.subr.bf16.mxu0 0
  %94 = vmatpush1.bf16.msra.mxu0 0
  %95 = vmatprep.subr.bf16.mxu0 0
  %96 = vmatpush1.bf16.msra.mxu0 0
  %97 = vmatprep.subr.bf16.mxu0 0
  %98 = vmatpush1.bf16.msra.mxu0 0
  %99 = vmatprep.subr.bf16.mxu0 0
  %100 = vmatpush1.bf16.msra.mxu0 0
  %101 = vmatprep.subr.bf16.mxu0 0
  %102 = vmatpush1.bf16.msra.mxu0 0
  %103 = vmatprep.subr.bf16.mxu0 0
  %104 = vmatpush1.bf16.msra.mxu0 0
  %105 = vmatprep.subr.bf16.mxu0 0
  %106 = vmatpush1.bf16.msra.mxu0 0
  %107 = vmatprep.subr.bf16.mxu0 0
  %108 = vmatpush1.bf16.msra.mxu0 %v77
  %109 = vmatprep.subr.bf16.mxu0 0
  %110 = vmatpush2.bf16.msra.mxu0 0
  %111 = vmatprep.subr.bf16.mxu0 0
  %112 = vmatpush2.bf16.msra.mxu0 0
  %113 = vmatprep.subr.bf16.mxu0 0
  %114 = vmatpush2.bf16.msra.mxu0 0
  %115 = vmatprep.subr.bf16.mxu0 0
  %116 = vmatpush2.bf16.msra.mxu0 0
  %117 = vmatprep.subr.bf16.mxu0 0
  %118 = vmatpush2.bf16.msra.mxu0 0
  %119 = vmatprep.subr.bf16.mxu0 0
  %120 = vmatpush2.bf16.msra.mxu0 0
  %121 = vmatprep.subr.bf16.mxu0 0
  %122 = vmatpush2.bf16.msra.mxu0 0
  %123 = vmatprep.subr.bf16.mxu0 0
  %124 = vmatpush2.bf16.msra.mxu0 0
  %125 = vmatprep.mubr.bf16.mxu0 0
  %126 = vmatmul.mubr.bf16.gmra.mxu0 %v91
  %v127 = vpop.f32.mrf.mxu0
  %v128 = vadd.f32 %v83, %v127
  %v129 = vpop.f32.mrf.mxu0
  %v130 = vpop.f32.mrf.mxu0
  %v131 = vadd.f32 %v83, %v130
  %v132 = vpop.f32.mrf.mxu0
  %133 = vdwg.mxu0
  %v134 = vmax.f32 %v128, 0.0
  %v135 = vmax.f32 %v131, 0.0
  %v136 = vpack.c.bf16 %v135, %v134
  %v137 = vld [vmem:[%s3 + $0x10] sm:$0xf]
  %v138 = vld [vmem:[%s3 + $0x14] sm:$0xf]
  %v141 = vunpack.c.l.b16 %v137
  %v142 = vunpack.c.l.b16 %v138
  %v143 = vpack.c.b16 %v142, %v141
  %v146 = vsel %vm89, %v136, 0
  %148 = vmatprep.subr.bf16.mxu0 0
  %149 = vmatpush1.bf16.msra.mxu0 0
  %150 = vmatprep.subr.bf16.mxu0 0
  %151 = vmatpush1.bf16.msra.mxu0 0
  %152 = vmatprep.subr.bf16.mxu0 0
  %153 = vmatpush1.bf16.msra.mxu0 0
  %154 = vmatprep.subr.bf16.mxu0 0
  %155 = vmatpush1.bf16.msra.mxu0 0
  %156 = vmatprep.subr.bf16.mxu0 0
  %157 = vmatpush1.bf16.msra.mxu0 0
  %158 = vmatprep.subr.bf16.mxu0 0
  %159 = vmatpush1.bf16.msra.mxu0 0
  %160 = vmatprep.subr.bf16.mxu0 0
  %161 = vmatpush1.bf16.msra.mxu0 0
  %162 = vmatprep.subr.bf16.mxu0 0
  %163 = vmatpush1.bf16.msra.mxu0 %v143
  %164 = vmatprep.subr.bf16.mxu0 0
  %165 = vmatpush2.bf16.msra.mxu0 0
  %166 = vmatprep.subr.bf16.mxu0 0
  %167 = vmatpush2.bf16.msra.mxu0 0
  %168 = vmatprep.subr.bf16.mxu0 0
  %169 = vmatpush2.bf16.msra.mxu0 0
  %170 = vmatprep.subr.bf16.mxu0 0
  %171 = vmatpush2.bf16.msra.mxu0 0
  %172 = vmatprep.subr.bf16.mxu0 0
  %173 = vmatpush2.bf16.msra.mxu0 0
  %174 = vmatprep.subr.bf16.mxu0 0
  %175 = vmatpush2.bf16.msra.mxu0 0
  %176 = vmatprep.subr.bf16.mxu0 0
  %177 = vmatpush2.bf16.msra.mxu0 0
  %178 = vmatprep.subr.bf16.mxu0 0
  %179 = vmatpush2.bf16.msra.mxu0 0
  %180 = vmatprep.mubr.bf16.mxu0 0
  %181 = vmatmul.mubr.bf16.gmra.mxu0 %v146
  %v182 = vpop.f32.mrf.mxu0
  %v183 = vadd.f32 0.0, %v182
  %v184 = vpop.f32.mrf.mxu0
  %v185 = vpop.f32.mrf.mxu0
  %v186 = vadd.f32 0.0, %v185
  %v187 = vpop.f32.mrf.mxu0
  %188 = vdwg.mxu0
  %v189 = vpack.c.bf16 %v186, %v183
  %v190 = vld [vmem:[%s3 + $0x18] sm:$0x1]
  %v191 = vunpack.c.l.bf16 %v190
  %v192 = vlaneseq
  %v193 = vshrl.u32 %v192, 7
  %v194 = vsub.s32 0, %v193
  %v195 = vrot.slane %v191, %v194
  %196 = vmatprep.subr.bf16.mxu0 0
  %197 = vmatpush1.bf16.msra.mxu0 0
  %198 = vmatprep.subr.bf16.mxu0 0
  %199 = vmatpush1.bf16.msra.mxu0 0
  %200 = vmatprep.subr.bf16.mxu0 0
  %201 = vmatpush1.bf16.msra.mxu0 0
  %202 = vmatprep.subr.bf16.mxu0 0
  %203 = vmatpush1.bf16.msra.mxu0 0
  %204 = vmatprep.subr.bf16.mxu0 0
  %205 = vmatpush1.bf16.msra.mxu0 0
  %206 = vmatprep.subr.bf16.mxu0 0
  %207 = vmatpush1.bf16.msra.mxu0 0
  %208 = vmatprep.subr.bf16.mxu0 0
  %209 = vmatpush1.bf16.msra.mxu0 0
  %210 = vmatprep.subr.bf16.mxu0 0
  %211 = vmatpush1.bf16.msra.mxu0 %v189
  %212 = vmatprep.subr.bf16.mxu0 0
  %213 = vmatpush2.bf16.msra.mxu0 0
  %214 = vmatprep.subr.bf16.mxu0 0
  %215 = vmatpush2.bf16.msra.mxu0 0
  %216 = vmatprep.subr.bf16.mxu0 0
  %217 = vmatpush2.bf16.msra.mxu0 0
  %218 = vmatprep.subr.bf16.mxu0 0
  %219 = vmatpush2.bf16.msra.mxu0 0
  %220 = vmatprep.subr.bf16.mxu0 0
  %221 = vmatpush2.bf16.msra.mxu0 0
  %222 = vmatprep.subr.bf16.mxu0 0
  %223 = vmatpush2.bf16.msra.mxu0 0
  %224 = vmatprep.subr.bf16.mxu0 0
  %225 = vmatpush2.bf16.msra.mxu0 0
  %226 = vmatprep.subr.bf16.mxu0 0
  %227 = vmatpush2.bf16.msra.mxu0 0
  %228 = vmatprep.mubr.bf16.mxu0 0
  %229 = vmatmul.mubr.bf16.gmra.mxu0 %v91
  %v230 = vpop.f32.mrf.mxu0
  %v231 = vadd.f32 %v195, %v230
  %v232 = vpop.f32.mrf.mxu0
  %v233 = vpop.f32.mrf.mxu0
  %v234 = vadd.f32 %v195, %v233
  %v235 = vpop.f32.mrf.mxu0
  %236 = vdwg.mxu0
  %v237 = vmax.f32 %v231, 0.0
  %v238 = vmax.f32 %v234, 0.0
  %v239 = vld [vmem:[%s3 + $0x20] sm:$0xf]
  %v240 = vld [vmem:[%s3 + $0x24] sm:$0xf]
  %v241 = vld [vmem:[%s3 + $0x28] sm:$0xf]
  %v242 = vld [vmem:[%s3 + $0x2c] sm:$0xf]
  %v243 = vld [vmem:[%s3 + $0x30] sm:$0xf]
  %v244 = vld [vmem:[%s3 + $0x34] sm:$0xf]
  %v245 = vld [vmem:[%s3 + $0x38] sm:$0xf]
  %v246 = vld [vmem:[%s3 + $0x3c] sm:$0xf]
  %v247 = vld [vmem:[%s3 + $0x40] sm:$0xf]
  %v248 = vld [vmem:[%s3 + $0x44] sm:$0xf]
  %v249 = vld [vmem:[%s3 + $0x48] sm:$0xf]
  %v250 = vld [vmem:[%s3 + $0x4c] sm:$0xf]
  %v251 = vld [vmem:[%s3 + $0x50] sm:$0xf]
  %v252 = vld [vmem:[%s3 + $0x54] sm:$0xf]
  %v253 = vld [vmem:[%s3 + $0x58] sm:$0xf]
  %v254 = vld [vmem:[%s3 + $0x5c] sm:$0xf]
  %v255 = vld [vmem:[%s3 + $0x60] sm:$0xf]
  %v256 = vld [vmem:[%s3 + $0x64] sm:$0xf]
  %v257 = vxor.u32 %v237, 2147483648
  %v258 = vxor.u32 %v238, 2147483648
  %v259 = vmul.f32 %v257, 1.442695
  %v260 = vpow.pop %v259
  %v261 = vmul.f32 %v258, 1.442695
  %v262 = vpow.pop %v261
  %v263 = vadd.f32 %v260, 1.0
  %v264 = vadd.f32 %v262, 1.0
  %v265 = vrcp.pop %v263
  %v266 = vmul.f32 1.0, %v265
  %v267 = vrcp.pop %v264
  %v268 = vmul.f32 1.0, %v267
  %v269 = vmul.f32 %v237, %v266
  %v270 = vmul.f32 %v238, %v268
  %v271 = vpack.c.bf16 %v270, %v269
  %vm272 = vcmp.ge.f32.partialorder %v237, -2.2
  %vm273 = vcmp.ge.f32.partialorder %v238, -2.2
  %vm274 = vcmp.lt.f32.partialorder %v237, -1.8
  %vm275 = vcmp.lt.f32.partialorder %v238, -1.8
  %vm276 = vmand %vm272, %vm274
  %vm277 = vmand %vm273, %vm275
  %v278 = vsel %vm276, 1, 0
  %v279 = vsel %vm277, 1, 0
  %v280 = vcvt.s32.f32 %v278
  %v281 = vcvt.s32.f32 %v279
  %vm282 = vcmp.ge.f32.partialorder %v237, -1.8
  %vm283 = vcmp.ge.f32.partialorder %v238, -1.8
  %vm284 = vcmp.lt.f32.partialorder %v237, -1.4
  %vm285 = vcmp.lt.f32.partialorder %v238, -1.4
  %vm286 = vmand %vm282, %vm284
  %vm287 = vmand %vm283, %vm285
  %v288 = vsel %vm286, 1, 0
  %v289 = vsel %vm287, 1, 0
  %v290 = vcvt.s32.f32 %v288
  %v291 = vcvt.s32.f32 %v289
  %vm292 = vcmp.ge.f32.partialorder %v237, -1.4
  %vm293 = vcmp.ge.f32.partialorder %v238, -1.4
  %vm294 = vcmp.lt.f32.partialorder %v237, -1.0
  %vm295 = vcmp.lt.f32.partialorder %v238, -1.0
  %vm296 = vmand %vm292, %vm294
  %vm297 = vmand %vm293, %vm295
  %v298 = vsel %vm296, 1, 0
  %v299 = vsel %vm297, 1, 0
  %v300 = vcvt.s32.f32 %v298
  %v301 = vcvt.s32.f32 %v299
  %vm302 = vcmp.ge.f32.partialorder %v237, -1.0
  %vm303 = vcmp.ge.f32.partialorder %v238, -1.0
  %vm304 = vcmp.lt.f32.partialorder %v237, -0.6
  %vm305 = vcmp.lt.f32.partialorder %v238, -0.6
  %vm306 = vmand %vm302, %vm304
  %vm307 = vmand %vm303, %vm305
  %v308 = vsel %vm306, 1, 0
  %v309 = vsel %vm307, 1, 0
  %v310 = vcvt.s32.f32 %v308
  %v311 = vcvt.s32.f32 %v309
  %vm312 = vcmp.ge.f32.partialorder %v237, -0.6
  %vm313 = vcmp.ge.f32.partialorder %v238, -0.6
  %vm314 = vcmp.lt.f32.partialorder %v237, -0.2
  %vm315 = vcmp.lt.f32.partialorder %v238, -0.2
  %vm316 = vmand %vm312, %vm314
  %vm317 = vmand %vm313, %vm315
  %v318 = vsel %vm316, 1, 0
  %v319 = vsel %vm317, 1, 0
  %v320 = vcvt.s32.f32 %v318
  %v321 = vcvt.s32.f32 %v319
  %vm322 = vcmp.ge.f32.partialorder %v237, -0.2
  %vm323 = vcmp.ge.f32.partialorder %v238, -0.2
  %vm324 = vcmp.lt.f32.partialorder %v237, 0.2
  %vm325 = vcmp.lt.f32.partialorder %v238, 0.2
  %vm326 = vmand %vm322, %vm324
  %vm327 = vmand %vm323, %vm325
  %v328 = vsel %vm326, 1, 0
  %v329 = vsel %vm327, 1, 0
  %v330 = vcvt.s32.f32 %v328
  %v331 = vcvt.s32.f32 %v329
  %vm332 = vcmp.ge.f32.partialorder %v237, 0.2
  %vm333 = vcmp.ge.f32.partialorder %v238, 0.2
  %vm334 = vcmp.lt.f32.partialorder %v237, 0.6
  %vm335 = vcmp.lt.f32.partialorder %v238, 0.6
  %vm336 = vmand %vm332, %vm334
  %vm337 = vmand %vm333, %vm335
  %v338 = vsel %vm336, 1, 0
  %v339 = vsel %vm337, 1, 0
  %v340 = vcvt.s32.f32 %v338
  %v341 = vcvt.s32.f32 %v339
  %vm342 = vcmp.ge.f32.partialorder %v237, 0.6
  %vm343 = vcmp.ge.f32.partialorder %v238, 0.6
  %vm344 = vcmp.lt.f32.partialorder %v237, 1.0
  %vm345 = vcmp.lt.f32.partialorder %v238, 1.0
  %vm346 = vmand %vm342, %vm344
  %vm347 = vmand %vm343, %vm345
  %v348 = vsel %vm346, 1, 0
  %v349 = vsel %vm347, 1, 0
  %v350 = vcvt.s32.f32 %v348
  %v351 = vcvt.s32.f32 %v349
  %vm352 = vcmp.ge.f32.partialorder %v237, 1.0
  %vm353 = vcmp.ge.f32.partialorder %v238, 1.0
  %vm354 = vcmp.lt.f32.partialorder %v237, 1.4
  %vm355 = vcmp.lt.f32.partialorder %v238, 1.4
  %vm356 = vmand %vm352, %vm354
  %vm357 = vmand %vm353, %vm355
  %v358 = vsel %vm356, 1, 0
  %v359 = vsel %vm357, 1, 0
  %v360 = vcvt.s32.f32 %v358
  %v361 = vcvt.s32.f32 %v359
  %vm362 = vcmp.ge.f32.partialorder %v237, 1.4
  %vm363 = vcmp.ge.f32.partialorder %v238, 1.4
  %vm364 = vcmp.lt.f32.partialorder %v237, 1.8
  %vm365 = vcmp.lt.f32.partialorder %v238, 1.8
  %vm366 = vmand %vm362, %vm364
  %vm367 = vmand %vm363, %vm365
  %v368 = vsel %vm366, 1, 0
  %v369 = vsel %vm367, 1, 0
  %v370 = vcvt.s32.f32 %v368
  %v371 = vcvt.s32.f32 %v369
  %vm372 = vcmp.ge.f32.partialorder %v237, 1.8
  %vm373 = vcmp.ge.f32.partialorder %v238, 1.8
  %vm374 = vcmp.lt.f32.partialorder %v237, 2.2
  %vm375 = vcmp.lt.f32.partialorder %v238, 2.2
  %vm376 = vmand %vm372, %vm374
  %vm377 = vmand %vm373, %vm375
  %v378 = vsel %vm376, 1, 0
  %v379 = vsel %vm377, 1, 0
  %v380 = vcvt.s32.f32 %v378
  %v381 = vcvt.s32.f32 %v379
  %v382 = vsub.f32 %v237, -2.2
  %v383 = vsub.f32 %v238, -2.2
  %v384 = vmul.f32 %v382, 2.5
  %v385 = vmul.f32 %v383, 2.5
  %v386 = vmul.f32 %v384, %v280
  %v387 = vmul.f32 %v385, %v281
  %v388 = vsub.f32 -1.4, %v237
  %v389 = vsub.f32 -1.4, %v238
  %v390 = vmul.f32 %v388, 2.5
  %v391 = vmul.f32 %v389, 2.5
  %v392 = vmul.f32 %v390, %v290
  %v393 = vmul.f32 %v391, %v291
  %v394 = vadd.f32 %v386, %v392
  %v395 = vadd.f32 %v387, %v393
  %v396 = vsub.f32 %v237, -1.8
  %v397 = vsub.f32 %v238, -1.8
  %v398 = vmul.f32 %v396, 2.5
  %v399 = vmul.f32 %v397, 2.5
  %v400 = vmul.f32 %v398, %v290
  %v401 = vmul.f32 %v399, %v291
  %v402 = vsub.f32 -1.0, %v237
  %v403 = vsub.f32 -1.0, %v238
  %v404 = vmul.f32 %v402, 2.5
  %v405 = vmul.f32 %v403, 2.5
  %v406 = vmul.f32 %v404, %v300
  %v407 = vmul.f32 %v405, %v301
  %v408 = vadd.f32 %v400, %v406
  %v409 = vadd.f32 %v401, %v407
  %v410 = vsub.f32 %v237, -1.4
  %v411 = vsub.f32 %v238, -1.4
  %v412 = vmul.f32 %v410, 2.5
  %v413 = vmul.f32 %v411, 2.5
  %v414 = vmul.f32 %v412, %v300
  %v415 = vmul.f32 %v413, %v301
  %v416 = vsub.f32 -0.6, %v237
  %v417 = vsub.f32 -0.6, %v238
  %v418 = vmul.f32 %v416, 2.5
  %v419 = vmul.f32 %v417, 2.5
  %v420 = vmul.f32 %v418, %v310
  %v421 = vmul.f32 %v419, %v311
  %v422 = vadd.f32 %v414, %v420
  %v423 = vadd.f32 %v415, %v421
  %v424 = vsub.f32 %v237, -1.0
  %v425 = vsub.f32 %v238, -1.0
  %v426 = vmul.f32 %v424, 2.5
  %v427 = vmul.f32 %v425, 2.5
  %v428 = vmul.f32 %v426, %v310
  %v429 = vmul.f32 %v427, %v311
  %v430 = vsub.f32 -0.2, %v237
  %v431 = vsub.f32 -0.2, %v238
  %v432 = vmul.f32 %v430, 2.5
  %v433 = vmul.f32 %v431, 2.5
  %v434 = vmul.f32 %v432, %v320
  %v435 = vmul.f32 %v433, %v321
  %v436 = vadd.f32 %v428, %v434
  %v437 = vadd.f32 %v429, %v435
  %v438 = vsub.f32 %v237, -0.6
  %v439 = vsub.f32 %v238, -0.6
  %v440 = vmul.f32 %v438, 2.5
  %v441 = vmul.f32 %v439, 2.5
  %v442 = vmul.f32 %v440, %v320
  %v443 = vmul.f32 %v441, %v321
  %v444 = vsub.f32 0.2, %v237
  %v445 = vsub.f32 0.2, %v238
  %v446 = vmul.f32 %v444, 2.5
  %v447 = vmul.f32 %v445, 2.5
  %v448 = vmul.f32 %v446, %v330
  %v449 = vmul.f32 %v447, %v331
  %v450 = vadd.f32 %v442, %v448
  %v451 = vadd.f32 %v443, %v449
  %v452 = vsub.f32 %v237, -0.2
  %v453 = vsub.f32 %v238, -0.2
  %v454 = vmul.f32 %v452, 2.5
  %v455 = vmul.f32 %v453, 2.5
  %v456 = vmul.f32 %v454, %v330
  %v457 = vmul.f32 %v455, %v331
  %v458 = vsub.f32 0.6, %v237
  %v459 = vsub.f32 0.6, %v238
  %v460 = vmul.f32 %v458, 2.5
  %v461 = vmul.f32 %v459, 2.5
  %v462 = vmul.f32 %v460, %v340
  %v463 = vmul.f32 %v461, %v341
  %v464 = vadd.f32 %v456, %v462
  %v465 = vadd.f32 %v457, %v463
  %v466 = vsub.f32 %v237, 0.2
  %v467 = vsub.f32 %v238, 0.2
  %v468 = vmul.f32 %v466, 2.5
  %v469 = vmul.f32 %v467, 2.5
  %v470 = vmul.f32 %v468, %v340
  %v471 = vmul.f32 %v469, %v341
  %v472 = vsub.f32 1.0, %v237
  %v473 = vsub.f32 1.0, %v238
  %v474 = vmul.f32 %v472, 2.5
  %v475 = vmul.f32 %v473, 2.5
  %v476 = vmul.f32 %v474, %v350
  %v477 = vmul.f32 %v475, %v351
  %v478 = vadd.f32 %v470, %v476
  %v479 = vadd.f32 %v471, %v477
  %v480 = vsub.f32 %v237, 0.6
  %v481 = vsub.f32 %v238, 0.6
  %v482 = vmul.f32 %v480, 2.5
  %v483 = vmul.f32 %v481, 2.5
  %v484 = vmul.f32 %v482, %v350
  %v485 = vmul.f32 %v483, %v351
  %v486 = vsub.f32 1.4, %v237
  %v487 = vsub.f32 1.4, %v238
  %v488 = vmul.f32 %v486, 2.5
  %v489 = vmul.f32 %v487, 2.5
  %v490 = vmul.f32 %v488, %v360
  %v491 = vmul.f32 %v489, %v361
  %v492 = vadd.f32 %v484, %v490
  %v493 = vadd.f32 %v485, %v491
  %v494 = vsub.f32 %v237, 1.0
  %v495 = vsub.f32 %v238, 1.0
  %v496 = vmul.f32 %v494, 2.5
  %v497 = vmul.f32 %v495, 2.5
  %v498 = vmul.f32 %v496, %v360
  %v499 = vmul.f32 %v497, %v361
  %v500 = vsub.f32 1.8, %v237
  %v501 = vsub.f32 1.8, %v238
  %v502 = vmul.f32 %v500, 2.5
  %v503 = vmul.f32 %v501, 2.5
  %v504 = vmul.f32 %v502, %v370
  %v505 = vmul.f32 %v503, %v371
  %v506 = vadd.f32 %v498, %v504
  %v507 = vadd.f32 %v499, %v505
  %v508 = vsub.f32 %v237, 1.4
  %v509 = vsub.f32 %v238, 1.4
  %v510 = vmul.f32 %v508, 2.5
  %v511 = vmul.f32 %v509, 2.5
  %v512 = vmul.f32 %v510, %v370
  %v513 = vmul.f32 %v511, %v371
  %v514 = vsub.f32 2.2, %v237
  %v515 = vsub.f32 2.2, %v238
  %v516 = vmul.f32 %v514, 2.5
  %v517 = vmul.f32 %v515, 2.5
  %v518 = vmul.f32 %v516, %v380
  %v519 = vmul.f32 %v517, %v381
  %v520 = vadd.f32 %v512, %v518
  %v521 = vadd.f32 %v513, %v519
  %v522 = vmul.f32 %v382, 1.25
  %v523 = vmul.f32 %v383, 1.25
  %v524 = vmul.f32 %v522, %v394
  %v525 = vmul.f32 %v523, %v395
  %v526 = vmul.f32 %v402, 1.25
  %v527 = vmul.f32 %v403, 1.25
  %v528 = vmul.f32 %v526, %v408
  %v529 = vmul.f32 %v527, %v409
  %v530 = vadd.f32 %v524, %v528
  %v531 = vadd.f32 %v525, %v529
  %v532 = vmul.f32 %v396, 1.25
  %v533 = vmul.f32 %v397, 1.25
  %v534 = vmul.f32 %v532, %v408
  %v535 = vmul.f32 %v533, %v409
  %v536 = vmul.f32 %v416, 1.25
  %v537 = vmul.f32 %v417, 1.25
  %v538 = vmul.f32 %v536, %v422
  %v539 = vmul.f32 %v537, %v423
  %v540 = vadd.f32 %v534, %v538
  %v541 = vadd.f32 %v535, %v539
  %v542 = vmul.f32 %v410, 1.25
  %v543 = vmul.f32 %v411, 1.25
  %v544 = vmul.f32 %v542, %v422
  %v545 = vmul.f32 %v543, %v423
  %v546 = vmul.f32 %v430, 1.25
  %v547 = vmul.f32 %v431, 1.25
  %v548 = vmul.f32 %v546, %v436
  %v549 = vmul.f32 %v547, %v437
  %v550 = vadd.f32 %v544, %v548
  %v551 = vadd.f32 %v545, %v549
  %v552 = vmul.f32 %v424, 1.25
  %v553 = vmul.f32 %v425, 1.25
  %v554 = vmul.f32 %v552, %v436
  %v555 = vmul.f32 %v553, %v437
  %v556 = vmul.f32 %v444, 1.25
  %v557 = vmul.f32 %v445, 1.25
  %v558 = vmul.f32 %v556, %v450
  %v559 = vmul.f32 %v557, %v451
  %v560 = vadd.f32 %v554, %v558
  %v561 = vadd.f32 %v555, %v559
  %v562 = vmul.f32 %v438, 1.25
  %v563 = vmul.f32 %v439, 1.25
  %v564 = vmul.f32 %v562, %v450
  %v565 = vmul.f32 %v563, %v451
  %v566 = vmul.f32 %v458, 1.25
  %v567 = vmul.f32 %v459, 1.25
  %v568 = vmul.f32 %v566, %v464
  %v569 = vmul.f32 %v567, %v465
  %v570 = vadd.f32 %v564, %v568
  %v571 = vadd.f32 %v565, %v569
  %v572 = vmul.f32 %v452, 1.25
  %v573 = vmul.f32 %v453, 1.25
  %v574 = vmul.f32 %v572, %v464
  %v575 = vmul.f32 %v573, %v465
  %v576 = vmul.f32 %v472, 1.25
  %v577 = vmul.f32 %v473, 1.25
  %v578 = vmul.f32 %v576, %v478
  %v579 = vmul.f32 %v577, %v479
  %v580 = vadd.f32 %v574, %v578
  %v581 = vadd.f32 %v575, %v579
  %v582 = vmul.f32 %v466, 1.25
  %v583 = vmul.f32 %v467, 1.25
  %v584 = vmul.f32 %v582, %v478
  %v585 = vmul.f32 %v583, %v479
  %v586 = vmul.f32 %v486, 1.25
  %v587 = vmul.f32 %v487, 1.25
  %v588 = vmul.f32 %v586, %v492
  %v589 = vmul.f32 %v587, %v493
  %v590 = vadd.f32 %v584, %v588
  %v591 = vadd.f32 %v585, %v589
  %v592 = vmul.f32 %v480, 1.25
  %v593 = vmul.f32 %v481, 1.25
  %v594 = vmul.f32 %v592, %v492
  %v595 = vmul.f32 %v593, %v493
  %v596 = vmul.f32 %v500, 1.25
  %v597 = vmul.f32 %v501, 1.25
  %v598 = vmul.f32 %v596, %v506
  %v599 = vmul.f32 %v597, %v507
  %v600 = vadd.f32 %v594, %v598
  %v601 = vadd.f32 %v595, %v599
  %v602 = vmul.f32 %v494, 1.25
  %v603 = vmul.f32 %v495, 1.25
  %v604 = vmul.f32 %v602, %v506
  %v605 = vmul.f32 %v603, %v507
  %v606 = vmul.f32 %v514, 1.25
  %v607 = vmul.f32 %v515, 1.25
  %v608 = vmul.f32 %v606, %v520
  %v609 = vmul.f32 %v607, %v521
  %v610 = vadd.f32 %v604, %v608
  %v611 = vadd.f32 %v605, %v609
  %v612 = vmul.f32 %v382, 0.8333333
  %v613 = vmul.f32 %v383, 0.8333333
  %v614 = vmul.f32 %v612, %v530
  %v615 = vmul.f32 %v613, %v531
  %v616 = vmul.f32 %v416, 0.8333333
  %v617 = vmul.f32 %v417, 0.8333333
  %v618 = vmul.f32 %v616, %v540
  %v619 = vmul.f32 %v617, %v541
  %v620 = vadd.f32 %v614, %v618
  %v621 = vadd.f32 %v615, %v619
  %v622 = vmul.f32 %v396, 0.8333333
  %v623 = vmul.f32 %v397, 0.8333333
  %v624 = vmul.f32 %v622, %v540
  %v625 = vmul.f32 %v623, %v541
  %v626 = vmul.f32 %v430, 0.8333333
  %v627 = vmul.f32 %v431, 0.8333333
  %v628 = vmul.f32 %v626, %v550
  %v629 = vmul.f32 %v627, %v551
  %v630 = vadd.f32 %v624, %v628
  %v631 = vadd.f32 %v625, %v629
  %v632 = vmul.f32 %v410, 0.8333333
  %v633 = vmul.f32 %v411, 0.8333333
  %v634 = vmul.f32 %v632, %v550
  %v635 = vmul.f32 %v633, %v551
  %v636 = vmul.f32 %v444, 0.8333333
  %v637 = vmul.f32 %v445, 0.8333333
  %v638 = vmul.f32 %v636, %v560
  %v639 = vmul.f32 %v637, %v561
  %v640 = vadd.f32 %v634, %v638
  %v641 = vadd.f32 %v635, %v639
  %v642 = vmul.f32 %v424, 0.8333333
  %v643 = vmul.f32 %v425, 0.8333333
  %v644 = vmul.f32 %v642, %v560
  %v645 = vmul.f32 %v643, %v561
  %v646 = vmul.f32 %v458, 0.8333333
  %v647 = vmul.f32 %v459, 0.8333333
  %v648 = vmul.f32 %v646, %v570
  %v649 = vmul.f32 %v647, %v571
  %v650 = vadd.f32 %v644, %v648
  %v651 = vadd.f32 %v645, %v649
  %v652 = vmul.f32 %v438, 0.8333333
  %v653 = vmul.f32 %v439, 0.8333333
  %v654 = vmul.f32 %v652, %v570
  %v655 = vmul.f32 %v653, %v571
  %v656 = vmul.f32 %v472, 0.8333333
  %v657 = vmul.f32 %v473, 0.8333333
  %v658 = vmul.f32 %v656, %v580
  %v659 = vmul.f32 %v657, %v581
  %v660 = vadd.f32 %v654, %v658
  %v661 = vadd.f32 %v655, %v659
  %v662 = vmul.f32 %v452, 0.8333333
  %v663 = vmul.f32 %v453, 0.8333333
  %v664 = vmul.f32 %v662, %v580
  %v665 = vmul.f32 %v663, %v581
  %v666 = vmul.f32 %v486, 0.8333333
  %v667 = vmul.f32 %v487, 0.8333333
  %v668 = vmul.f32 %v666, %v590
  %v669 = vmul.f32 %v667, %v591
  %v670 = vadd.f32 %v664, %v668
  %v671 = vadd.f32 %v665, %v669
  %v672 = vmul.f32 %v466, 0.8333333
  %v673 = vmul.f32 %v467, 0.8333333
  %v674 = vmul.f32 %v672, %v590
  %v675 = vmul.f32 %v673, %v591
  %v676 = vmul.f32 %v500, 0.8333333
  %v677 = vmul.f32 %v501, 0.8333333
  %v678 = vmul.f32 %v676, %v600
  %v679 = vmul.f32 %v677, %v601
  %v680 = vadd.f32 %v674, %v678
  %v681 = vadd.f32 %v675, %v679
  %v682 = vmul.f32 %v480, 0.8333333
  %v683 = vmul.f32 %v481, 0.8333333
  %v684 = vmul.f32 %v682, %v600
  %v685 = vmul.f32 %v683, %v601
  %v686 = vmul.f32 %v514, 0.8333333
  %v687 = vmul.f32 %v515, 0.8333333
  %v688 = vmul.f32 %v686, %v610
  %v689 = vmul.f32 %v687, %v611
  %v690 = vadd.f32 %v684, %v688
  %v691 = vadd.f32 %v685, %v689
  %694 = vrot.lane.b32.xlu0 %v630, 16
  %v695 = vpop.permute.xlu0 %694
  %696 = vrot.lane.b32.xlu0 %v631, 16
  %v697 = vpop.permute.xlu0 %696
  %702 = vrot.lane.b32.xlu0 %v640, 32
  %v703 = vpop.permute.xlu0 %702
  %704 = vrot.lane.b32.xlu0 %v641, 32
  %v705 = vpop.permute.xlu0 %704
  %710 = vrot.lane.b32.xlu0 %v650, 48
  %v711 = vpop.permute.xlu0 %710
  %712 = vrot.lane.b32.xlu0 %v651, 48
  %v713 = vpop.permute.xlu0 %712
  %718 = vrot.lane.b32.xlu0 %v660, 64
  %v719 = vpop.permute.xlu0 %718
  %720 = vrot.lane.b32.xlu0 %v661, 64
  %v721 = vpop.permute.xlu0 %720
  %726 = vrot.lane.b32.xlu0 %v670, 80
  %v727 = vpop.permute.xlu0 %726
  %728 = vrot.lane.b32.xlu0 %v671, 80
  %v729 = vpop.permute.xlu0 %728
  %734 = vrot.lane.b32.xlu0 %v680, 96
  %v735 = vpop.permute.xlu0 %734
  %736 = vrot.lane.b32.xlu0 %v681, 96
  %v737 = vpop.permute.xlu0 %736
  %742 = vrot.lane.b32.xlu0 %v690, 112
  %v743 = vpop.permute.xlu0 %742
  %744 = vrot.lane.b32.xlu0 %v691, 112
  %v745 = vpop.permute.xlu0 %744
  %v748 = vsel %vm89, %v620, %v695
  %v749 = vsel %vm89, %v621, %v697
  %vm750 = vcmask 261120
  %v751 = vsel %vm750, %v748, %v703
  %v752 = vsel %vm750, %v749, %v705
  %vm753 = vcmask 392192
  %v754 = vsel %vm753, %v751, %v711
  %v755 = vsel %vm753, %v752, %v713
  %vm756 = vcmask 523264
  %v757 = vsel %vm756, %v754, %v719
  %v758 = vsel %vm756, %v755, %v721
  %vm759 = vcmask 654336
  %v760 = vsel %vm759, %v757, %v727
  %v761 = vsel %vm759, %v758, %v729
  %vm762 = vcmask 785408
  %v763 = vsel %vm762, %v760, %v735
  %v764 = vsel %vm762, %v761, %v737
  %vm765 = vcmask 916480
  %v766 = vsel %vm765, %v763, %v743
  %v767 = vsel %vm765, %v764, %v745
  %v768 = vpack.c.bf16 %v767, %v766
  %v785 = vunpack.c.l.b16 %v241
  %v786 = vunpack.c.l.b16 %v242
  %v787 = vunpack.c.l.b16 %v243
  %v788 = vunpack.c.l.b16 %v244
  %v789 = vunpack.c.l.b16 %v245
  %v790 = vunpack.c.l.b16 %v246
  %v791 = vunpack.c.l.b16 %v247
  %v792 = vunpack.c.l.b16 %v248
  %v793 = vunpack.c.l.b16 %v249
  %v794 = vunpack.c.l.b16 %v250
  %v795 = vunpack.c.l.b16 %v251
  %v796 = vunpack.c.l.b16 %v252
  %v797 = vunpack.c.l.b16 %v253
  %v798 = vunpack.c.l.b16 %v254
  %v799 = vunpack.c.l.b16 %v255
  %v800 = vunpack.c.l.b16 %v256
  %v801 = vpack.c.b16 %v786, %v785
  %v802 = vpack.c.b16 %v788, %v787
  %v803 = vpack.c.b16 %v790, %v789
  %v804 = vpack.c.b16 %v792, %v791
  %v805 = vpack.c.b16 %v794, %v793
  %v806 = vpack.c.b16 %v796, %v795
  %v807 = vpack.c.b16 %v798, %v797
  %v808 = vpack.c.b16 %v800, %v799
  %817 = vmatprep.subr.bf16.mxu0 0
  %818 = vmatpush1.bf16.msra.mxu0 %v808
  %819 = vmatprep.subr.bf16.mxu0 0
  %820 = vmatpush1.bf16.msra.mxu0 %v807
  %821 = vmatprep.subr.bf16.mxu0 0
  %822 = vmatpush1.bf16.msra.mxu0 %v806
  %823 = vmatprep.subr.bf16.mxu0 0
  %824 = vmatpush1.bf16.msra.mxu0 %v805
  %825 = vmatprep.subr.bf16.mxu0 0
  %826 = vmatpush1.bf16.msra.mxu0 %v804
  %827 = vmatprep.subr.bf16.mxu0 0
  %828 = vmatpush1.bf16.msra.mxu0 %v803
  %829 = vmatprep.subr.bf16.mxu0 0
  %830 = vmatpush1.bf16.msra.mxu0 %v802
  %831 = vmatprep.subr.bf16.mxu0 0
  %832 = vmatpush1.bf16.msra.mxu0 %v801
  %833 = vmatprep.subr.bf16.mxu0 0
  %834 = vmatpush2.bf16.msra.mxu0 0
  %835 = vmatprep.subr.bf16.mxu0 0
  %836 = vmatpush2.bf16.msra.mxu0 0
  %837 = vmatprep.subr.bf16.mxu0 0
  %838 = vmatpush2.bf16.msra.mxu0 0
  %839 = vmatprep.subr.bf16.mxu0 0
  %840 = vmatpush2.bf16.msra.mxu0 0
  %841 = vmatprep.subr.bf16.mxu0 0
  %842 = vmatpush2.bf16.msra.mxu0 0
  %843 = vmatprep.subr.bf16.mxu0 0
  %844 = vmatpush2.bf16.msra.mxu0 0
  %845 = vmatprep.subr.bf16.mxu0 0
  %846 = vmatpush2.bf16.msra.mxu0 0
  %847 = vmatprep.subr.bf16.mxu0 0
  %848 = vmatpush2.bf16.msra.mxu0 0
  %849 = vmatprep.mubr.bf16.mxu0 0
  %850 = vmatmul.mubr.bf16.gmra.mxu0 %v768
  %v851 = vpop.f32.mrf.mxu0
  %v852 = vadd.f32 0.0, %v851
  %v853 = vpop.f32.mrf.mxu0
  %v854 = vpop.f32.mrf.mxu0
  %v855 = vadd.f32 0.0, %v854
  %v856 = vpop.f32.mrf.mxu0
  %857 = vdwg.mxu0
  %v860 = vunpack.c.l.b16 %v239
  %v861 = vunpack.c.l.b16 %v240
  %v862 = vpack.c.b16 %v861, %v860
  %v865 = vsel %vm89, %v271, 0
  %867 = vmatprep.subr.bf16.mxu0 0
  %868 = vmatpush1.bf16.msra.mxu0 0
  %869 = vmatprep.subr.bf16.mxu0 0
  %870 = vmatpush1.bf16.msra.mxu0 0
  %871 = vmatprep.subr.bf16.mxu0 0
  %872 = vmatpush1.bf16.msra.mxu0 0
  %873 = vmatprep.subr.bf16.mxu0 0
  %874 = vmatpush1.bf16.msra.mxu0 0
  %875 = vmatprep.subr.bf16.mxu0 0
  %876 = vmatpush1.bf16.msra.mxu0 0
  %877 = vmatprep.subr.bf16.mxu0 0
  %878 = vmatpush1.bf16.msra.mxu0 0
  %879 = vmatprep.subr.bf16.mxu0 0
  %880 = vmatpush1.bf16.msra.mxu0 0
  %881 = vmatprep.subr.bf16.mxu0 0
  %882 = vmatpush1.bf16.msra.mxu0 %v862
  %883 = vmatprep.subr.bf16.mxu0 0
  %884 = vmatpush2.bf16.msra.mxu0 0
  %885 = vmatprep.subr.bf16.mxu0 0
  %886 = vmatpush2.bf16.msra.mxu0 0
  %887 = vmatprep.subr.bf16.mxu0 0
  %888 = vmatpush2.bf16.msra.mxu0 0
  %889 = vmatprep.subr.bf16.mxu0 0
  %890 = vmatpush2.bf16.msra.mxu0 0
  %891 = vmatprep.subr.bf16.mxu0 0
  %892 = vmatpush2.bf16.msra.mxu0 0
  %893 = vmatprep.subr.bf16.mxu0 0
  %894 = vmatpush2.bf16.msra.mxu0 0
  %895 = vmatprep.subr.bf16.mxu0 0
  %896 = vmatpush2.bf16.msra.mxu0 0
  %897 = vmatprep.subr.bf16.mxu0 0
  %898 = vmatpush2.bf16.msra.mxu0 0
  %899 = vmatprep.mubr.bf16.mxu0 0
  %900 = vmatmul.mubr.bf16.gmra.mxu0 %v865
  %v901 = vpop.f32.mrf.mxu0
  %v902 = vadd.f32 %v852, %v901
  %v903 = vpop.f32.mrf.mxu0
  %v904 = vpop.f32.mrf.mxu0
  %v905 = vadd.f32 %v855, %v904
  %v906 = vpop.f32.mrf.mxu0
  %907 = vdwg.mxu0
  %v908 = vpack.c.bf16 %v905, %v902
  %v909 = vld [vmem:[%s3 + $0x68] sm:$0xf]
  %v911 = vsel %vm28, %v908, 0
  %v914 = vsel %vm32, %v909, 0
  %916 = vmatprep.subr.bf16.mxu0 0
  %917 = vmatpush1.bf16.msra.mxu0 0
  %918 = vmatprep.subr.bf16.mxu0 0
  %919 = vmatpush1.bf16.msra.mxu0 0
  %920 = vmatprep.subr.bf16.mxu0 0
  %921 = vmatpush1.bf16.msra.mxu0 0
  %922 = vmatprep.subr.bf16.mxu0 0
  %923 = vmatpush1.bf16.msra.mxu0 0
  %924 = vmatprep.subr.bf16.mxu0 0
  %925 = vmatpush1.bf16.msra.mxu0 0
  %926 = vmatprep.subr.bf16.mxu0 0
  %927 = vmatpush1.bf16.msra.mxu0 0
  %928 = vmatprep.subr.bf16.mxu0 0
  %929 = vmatpush1.bf16.msra.mxu0 0
  %930 = vmatprep.subr.bf16.mxu0 0
  %931 = vmatpush1.bf16.msra.mxu0 %v914
  %932 = vmatprep.subr.bf16.mxu0 0
  %933 = vmatpush2.bf16.msra.mxu0 0
  %934 = vmatprep.subr.bf16.mxu0 0
  %935 = vmatpush2.bf16.msra.mxu0 0
  %936 = vmatprep.subr.bf16.mxu0 0
  %937 = vmatpush2.bf16.msra.mxu0 0
  %938 = vmatprep.subr.bf16.mxu0 0
  %939 = vmatpush2.bf16.msra.mxu0 0
  %940 = vmatprep.subr.bf16.mxu0 0
  %941 = vmatpush2.bf16.msra.mxu0 0
  %942 = vmatprep.subr.bf16.mxu0 0
  %943 = vmatpush2.bf16.msra.mxu0 0
  %944 = vmatprep.subr.bf16.mxu0 0
  %945 = vmatpush2.bf16.msra.mxu0 0
  %946 = vmatprep.subr.bf16.mxu0 0
  %947 = vmatpush2.bf16.msra.mxu0 0
  %948 = vmatprep.mubr.bf16.mxu0 0
  %949 = vmatmul.mubr.bf16.gmra.mxu0 %v911
  %v950 = vpop.f32.mrf.mxu0
  %v951 = vadd.f32 0.0, %v950
  %v952 = vpop.f32.mrf.mxu0
  %v953 = vpop.f32.mrf.mxu0
  %v954 = vadd.f32 0.0, %v953
  %v955 = vpop.f32.mrf.mxu0
  %956 = vdwg.mxu0
  %v957 = vpack.c.bf16 %v954, %v951
  %v958 = vld [vmem:[%s3 + $0x70] sm:$0x1]
  %v959 = vunpack.c.l.bf16 %v958
  %v960 = vlaneseq
  %v961 = vshrl.u32 %v960, 7
  %v962 = vsub.s32 0, %v961
  %v963 = vrot.slane %v959, %v962
  %964 = vmatprep.subr.bf16.mxu0 0
  %965 = vmatpush1.bf16.msra.mxu0 0
  %966 = vmatprep.subr.bf16.mxu0 0
  %967 = vmatpush1.bf16.msra.mxu0 0
  %968 = vmatprep.subr.bf16.mxu0 0
  %969 = vmatpush1.bf16.msra.mxu0 0
  %970 = vmatprep.subr.bf16.mxu0 0
  %971 = vmatpush1.bf16.msra.mxu0 0
  %972 = vmatprep.subr.bf16.mxu0 0
  %973 = vmatpush1.bf16.msra.mxu0 0
  %974 = vmatprep.subr.bf16.mxu0 0
  %975 = vmatpush1.bf16.msra.mxu0 0
  %976 = vmatprep.subr.bf16.mxu0 0
  %977 = vmatpush1.bf16.msra.mxu0 0
  %978 = vmatprep.subr.bf16.mxu0 0
  %979 = vmatpush1.bf16.msra.mxu0 %v957
  %980 = vmatprep.subr.bf16.mxu0 0
  %981 = vmatpush2.bf16.msra.mxu0 0
  %982 = vmatprep.subr.bf16.mxu0 0
  %983 = vmatpush2.bf16.msra.mxu0 0
  %984 = vmatprep.subr.bf16.mxu0 0
  %985 = vmatpush2.bf16.msra.mxu0 0
  %986 = vmatprep.subr.bf16.mxu0 0
  %987 = vmatpush2.bf16.msra.mxu0 0
  %988 = vmatprep.subr.bf16.mxu0 0
  %989 = vmatpush2.bf16.msra.mxu0 0
  %990 = vmatprep.subr.bf16.mxu0 0
  %991 = vmatpush2.bf16.msra.mxu0 0
  %992 = vmatprep.subr.bf16.mxu0 0
  %993 = vmatpush2.bf16.msra.mxu0 0
  %994 = vmatprep.subr.bf16.mxu0 0
  %995 = vmatpush2.bf16.msra.mxu0 0
  %996 = vmatprep.mubr.bf16.mxu0 0
  %997 = vmatmul.mubr.bf16.gmra.mxu0 %v91
  %v998 = vpop.f32.mrf.mxu0
  %v999 = vadd.f32 %v963, %v998
  %v1000 = vpop.f32.mrf.mxu0
  %v1001 = vpop.f32.mrf.mxu0
  %v1002 = vadd.f32 %v963, %v1001
  %v1003 = vpop.f32.mrf.mxu0
  %1004 = vdwg.mxu0
  %v1005 = vmax.f32 %v999, 0.0
  %v1006 = vmax.f32 %v1002, 0.0
  %v1007 = vld [vmem:[%s3 + $0x78] sm:$0xf]
  %v1008 = vld [vmem:[%s3 + $0x7c] sm:$0xf]
  %v1009 = vld [vmem:[%s3 + $0x80] sm:$0xf]
  %v1010 = vld [vmem:[%s3 + $0x84] sm:$0xf]
  %v1011 = vld [vmem:[%s3 + $0x88] sm:$0xf]
  %v1012 = vld [vmem:[%s3 + $0x8c] sm:$0xf]
  %v1013 = vld [vmem:[%s3 + $0x90] sm:$0xf]
  %v1014 = vld [vmem:[%s3 + $0x94] sm:$0xf]
  %v1015 = vld [vmem:[%s3 + $0x98] sm:$0xf]
  %v1016 = vld [vmem:[%s3 + $0x9c] sm:$0xf]
  %v1017 = vld [vmem:[%s3 + $0xa0] sm:$0xf]
  %v1018 = vld [vmem:[%s3 + $0xa4] sm:$0xf]
  %v1019 = vld [vmem:[%s3 + $0xa8] sm:$0xf]
  %v1020 = vld [vmem:[%s3 + $0xac] sm:$0xf]
  %v1021 = vld [vmem:[%s3 + $0xb0] sm:$0xf]
  %v1022 = vld [vmem:[%s3 + $0xb4] sm:$0xf]
  %v1023 = vld [vmem:[%s3 + $0xb8] sm:$0xf]
  %v1024 = vld [vmem:[%s3 + $0xbc] sm:$0xf]
  %v1025 = vxor.u32 %v1005, 2147483648
  %v1026 = vxor.u32 %v1006, 2147483648
  %v1027 = vmul.f32 %v1025, 1.442695
  %v1028 = vpow.pop %v1027
  %v1029 = vmul.f32 %v1026, 1.442695
  %v1030 = vpow.pop %v1029
  %v1031 = vadd.f32 %v1028, 1.0
  %v1032 = vadd.f32 %v1030, 1.0
  %v1033 = vrcp.pop %v1031
  %v1034 = vmul.f32 1.0, %v1033
  %v1035 = vrcp.pop %v1032
  %v1036 = vmul.f32 1.0, %v1035
  %v1037 = vmul.f32 %v1005, %v1034
  %v1038 = vmul.f32 %v1006, %v1036
  %v1039 = vpack.c.bf16 %v1038, %v1037
  %vm1040 = vcmp.ge.f32.partialorder %v1005, -2.2
  %vm1041 = vcmp.ge.f32.partialorder %v1006, -2.2
  %vm1042 = vcmp.lt.f32.partialorder %v1005, -1.8
  %vm1043 = vcmp.lt.f32.partialorder %v1006, -1.8
  %vm1044 = vmand %vm1040, %vm1042
  %vm1045 = vmand %vm1041, %vm1043
  %v1046 = vsel %vm1044, 1, 0
  %v1047 = vsel %vm1045, 1, 0
  %v1048 = vcvt.s32.f32 %v1046
  %v1049 = vcvt.s32.f32 %v1047
  %vm1050 = vcmp.ge.f32.partialorder %v1005, -1.8
  %vm1051 = vcmp.ge.f32.partialorder %v1006, -1.8
  %vm1052 = vcmp.lt.f32.partialorder %v1005, -1.4
  %vm1053 = vcmp.lt.f32.partialorder %v1006, -1.4
  %vm1054 = vmand %vm1050, %vm1052
  %vm1055 = vmand %vm1051, %vm1053
  %v1056 = vsel %vm1054, 1, 0
  %v1057 = vsel %vm1055, 1, 0
  %v1058 = vcvt.s32.f32 %v1056
  %v1059 = vcvt.s32.f32 %v1057
  %vm1060 = vcmp.ge.f32.partialorder %v1005, -1.4
  %vm1061 = vcmp.ge.f32.partialorder %v1006, -1.4
  %vm1062 = vcmp.lt.f32.partialorder %v1005, -1.0
  %vm1063 = vcmp.lt.f32.partialorder %v1006, -1.0
  %vm1064 = vmand %vm1060, %vm1062
  %vm1065 = vmand %vm1061, %vm1063
  %v1066 = vsel %vm1064, 1, 0
  %v1067 = vsel %vm1065, 1, 0
  %v1068 = vcvt.s32.f32 %v1066
  %v1069 = vcvt.s32.f32 %v1067
  %vm1070 = vcmp.ge.f32.partialorder %v1005, -1.0
  %vm1071 = vcmp.ge.f32.partialorder %v1006, -1.0
  %vm1072 = vcmp.lt.f32.partialorder %v1005, -0.6
  %vm1073 = vcmp.lt.f32.partialorder %v1006, -0.6
  %vm1074 = vmand %vm1070, %vm1072
  %vm1075 = vmand %vm1071, %vm1073
  %v1076 = vsel %vm1074, 1, 0
  %v1077 = vsel %vm1075, 1, 0
  %v1078 = vcvt.s32.f32 %v1076
  %v1079 = vcvt.s32.f32 %v1077
  %vm1080 = vcmp.ge.f32.partialorder %v1005, -0.6
  %vm1081 = vcmp.ge.f32.partialorder %v1006, -0.6
  %vm1082 = vcmp.lt.f32.partialorder %v1005, -0.2
  %vm1083 = vcmp.lt.f32.partialorder %v1006, -0.2
  %vm1084 = vmand %vm1080, %vm1082
  %vm1085 = vmand %vm1081, %vm1083
  %v1086 = vsel %vm1084, 1, 0
  %v1087 = vsel %vm1085, 1, 0
  %v1088 = vcvt.s32.f32 %v1086
  %v1089 = vcvt.s32.f32 %v1087
  %vm1090 = vcmp.ge.f32.partialorder %v1005, -0.2
  %vm1091 = vcmp.ge.f32.partialorder %v1006, -0.2
  %vm1092 = vcmp.lt.f32.partialorder %v1005, 0.2
  %vm1093 = vcmp.lt.f32.partialorder %v1006, 0.2
  %vm1094 = vmand %vm1090, %vm1092
  %vm1095 = vmand %vm1091, %vm1093
  %v1096 = vsel %vm1094, 1, 0
  %v1097 = vsel %vm1095, 1, 0
  %v1098 = vcvt.s32.f32 %v1096
  %v1099 = vcvt.s32.f32 %v1097
  %vm1100 = vcmp.ge.f32.partialorder %v1005, 0.2
  %vm1101 = vcmp.ge.f32.partialorder %v1006, 0.2
  %vm1102 = vcmp.lt.f32.partialorder %v1005, 0.6
  %vm1103 = vcmp.lt.f32.partialorder %v1006, 0.6
  %vm1104 = vmand %vm1100, %vm1102
  %vm1105 = vmand %vm1101, %vm1103
  %v1106 = vsel %vm1104, 1, 0
  %v1107 = vsel %vm1105, 1, 0
  %v1108 = vcvt.s32.f32 %v1106
  %v1109 = vcvt.s32.f32 %v1107
  %vm1110 = vcmp.ge.f32.partialorder %v1005, 0.6
  %vm1111 = vcmp.ge.f32.partialorder %v1006, 0.6
  %vm1112 = vcmp.lt.f32.partialorder %v1005, 1.0
  %vm1113 = vcmp.lt.f32.partialorder %v1006, 1.0
  %vm1114 = vmand %vm1110, %vm1112
  %vm1115 = vmand %vm1111, %vm1113
  %v1116 = vsel %vm1114, 1, 0
  %v1117 = vsel %vm1115, 1, 0
  %v1118 = vcvt.s32.f32 %v1116
  %v1119 = vcvt.s32.f32 %v1117
  %vm1120 = vcmp.ge.f32.partialorder %v1005, 1.0
  %vm1121 = vcmp.ge.f32.partialorder %v1006, 1.0
  %vm1122 = vcmp.lt.f32.partialorder %v1005, 1.4
  %vm1123 = vcmp.lt.f32.partialorder %v1006, 1.4
  %vm1124 = vmand %vm1120, %vm1122
  %vm1125 = vmand %vm1121, %vm1123
  %v1126 = vsel %vm1124, 1, 0
  %v1127 = vsel %vm1125, 1, 0
  %v1128 = vcvt.s32.f32 %v1126
  %v1129 = vcvt.s32.f32 %v1127
  %vm1130 = vcmp.ge.f32.partialorder %v1005, 1.4
  %vm1131 = vcmp.ge.f32.partialorder %v1006, 1.4
  %vm1132 = vcmp.lt.f32.partialorder %v1005, 1.8
  %vm1133 = vcmp.lt.f32.partialorder %v1006, 1.8
  %vm1134 = vmand %vm1130, %vm1132
  %vm1135 = vmand %vm1131, %vm1133
  %v1136 = vsel %vm1134, 1, 0
  %v1137 = vsel %vm1135, 1, 0
  %v1138 = vcvt.s32.f32 %v1136
  %v1139 = vcvt.s32.f32 %v1137
  %vm1140 = vcmp.ge.f32.partialorder %v1005, 1.8
  %vm1141 = vcmp.ge.f32.partialorder %v1006, 1.8
  %vm1142 = vcmp.lt.f32.partialorder %v1005, 2.2
  %vm1143 = vcmp.lt.f32.partialorder %v1006, 2.2
  %vm1144 = vmand %vm1140, %vm1142
  %vm1145 = vmand %vm1141, %vm1143
  %v1146 = vsel %vm1144, 1, 0
  %v1147 = vsel %vm1145, 1, 0
  %v1148 = vcvt.s32.f32 %v1146
  %v1149 = vcvt.s32.f32 %v1147
  %v1150 = vsub.f32 %v1005, -2.2
  %v1151 = vsub.f32 %v1006, -2.2
  %v1152 = vmul.f32 %v1150, 2.5
  %v1153 = vmul.f32 %v1151, 2.5
  %v1154 = vmul.f32 %v1152, %v1048
  %v1155 = vmul.f32 %v1153, %v1049
  %v1156 = vsub.f32 -1.4, %v1005
  %v1157 = vsub.f32 -1.4, %v1006
  %v1158 = vmul.f32 %v1156, 2.5
  %v1159 = vmul.f32 %v1157, 2.5
  %v1160 = vmul.f32 %v1158, %v1058
  %v1161 = vmul.f32 %v1159, %v1059
  %v1162 = vadd.f32 %v1154, %v1160
  %v1163 = vadd.f32 %v1155, %v1161
  %v1164 = vsub.f32 %v1005, -1.8
  %v1165 = vsub.f32 %v1006, -1.8
  %v1166 = vmul.f32 %v1164, 2.5
  %v1167 = vmul.f32 %v1165, 2.5
  %v1168 = vmul.f32 %v1166, %v1058
  %v1169 = vmul.f32 %v1167, %v1059
  %v1170 = vsub.f32 -1.0, %v1005
  %v1171 = vsub.f32 -1.0, %v1006
  %v1172 = vmul.f32 %v1170, 2.5
  %v1173 = vmul.f32 %v1171, 2.5
  %v1174 = vmul.f32 %v1172, %v1068
  %v1175 = vmul.f32 %v1173, %v1069
  %v1176 = vadd.f32 %v1168, %v1174
  %v1177 = vadd.f32 %v1169, %v1175
  %v1178 = vsub.f32 %v1005, -1.4
  %v1179 = vsub.f32 %v1006, -1.4
  %v1180 = vmul.f32 %v1178, 2.5
  %v1181 = vmul.f32 %v1179, 2.5
  %v1182 = vmul.f32 %v1180, %v1068
  %v1183 = vmul.f32 %v1181, %v1069
  %v1184 = vsub.f32 -0.6, %v1005
  %v1185 = vsub.f32 -0.6, %v1006
  %v1186 = vmul.f32 %v1184, 2.5
  %v1187 = vmul.f32 %v1185, 2.5
  %v1188 = vmul.f32 %v1186, %v1078
  %v1189 = vmul.f32 %v1187, %v1079
  %v1190 = vadd.f32 %v1182, %v1188
  %v1191 = vadd.f32 %v1183, %v1189
  %v1192 = vsub.f32 %v1005, -1.0
  %v1193 = vsub.f32 %v1006, -1.0
  %v1194 = vmul.f32 %v1192, 2.5
  %v1195 = vmul.f32 %v1193, 2.5
  %v1196 = vmul.f32 %v1194, %v1078
  %v1197 = vmul.f32 %v1195, %v1079
  %v1198 = vsub.f32 -0.2, %v1005
  %v1199 = vsub.f32 -0.2, %v1006
  %v1200 = vmul.f32 %v1198, 2.5
  %v1201 = vmul.f32 %v1199, 2.5
  %v1202 = vmul.f32 %v1200, %v1088
  %v1203 = vmul.f32 %v1201, %v1089
  %v1204 = vadd.f32 %v1196, %v1202
  %v1205 = vadd.f32 %v1197, %v1203
  %v1206 = vsub.f32 %v1005, -0.6
  %v1207 = vsub.f32 %v1006, -0.6
  %v1208 = vmul.f32 %v1206, 2.5
  %v1209 = vmul.f32 %v1207, 2.5
  %v1210 = vmul.f32 %v1208, %v1088
  %v1211 = vmul.f32 %v1209, %v1089
  %v1212 = vsub.f32 0.2, %v1005
  %v1213 = vsub.f32 0.2, %v1006
  %v1214 = vmul.f32 %v1212, 2.5
  %v1215 = vmul.f32 %v1213, 2.5
  %v1216 = vmul.f32 %v1214, %v1098
  %v1217 = vmul.f32 %v1215, %v1099
  %v1218 = vadd.f32 %v1210, %v1216
  %v1219 = vadd.f32 %v1211, %v1217
  %v1220 = vsub.f32 %v1005, -0.2
  %v1221 = vsub.f32 %v1006, -0.2
  %v1222 = vmul.f32 %v1220, 2.5
  %v1223 = vmul.f32 %v1221, 2.5
  %v1224 = vmul.f32 %v1222, %v1098
  %v1225 = vmul.f32 %v1223, %v1099
  %v1226 = vsub.f32 0.6, %v1005
  %v1227 = vsub.f32 0.6, %v1006
  %v1228 = vmul.f32 %v1226, 2.5
  %v1229 = vmul.f32 %v1227, 2.5
  %v1230 = vmul.f32 %v1228, %v1108
  %v1231 = vmul.f32 %v1229, %v1109
  %v1232 = vadd.f32 %v1224, %v1230
  %v1233 = vadd.f32 %v1225, %v1231
  %v1234 = vsub.f32 %v1005, 0.2
  %v1235 = vsub.f32 %v1006, 0.2
  %v1236 = vmul.f32 %v1234, 2.5
  %v1237 = vmul.f32 %v1235, 2.5
  %v1238 = vmul.f32 %v1236, %v1108
  %v1239 = vmul.f32 %v1237, %v1109
  %v1240 = vsub.f32 1.0, %v1005
  %v1241 = vsub.f32 1.0, %v1006
  %v1242 = vmul.f32 %v1240, 2.5
  %v1243 = vmul.f32 %v1241, 2.5
  %v1244 = vmul.f32 %v1242, %v1118
  %v1245 = vmul.f32 %v1243, %v1119
  %v1246 = vadd.f32 %v1238, %v1244
  %v1247 = vadd.f32 %v1239, %v1245
  %v1248 = vsub.f32 %v1005, 0.6
  %v1249 = vsub.f32 %v1006, 0.6
  %v1250 = vmul.f32 %v1248, 2.5
  %v1251 = vmul.f32 %v1249, 2.5
  %v1252 = vmul.f32 %v1250, %v1118
  %v1253 = vmul.f32 %v1251, %v1119
  %v1254 = vsub.f32 1.4, %v1005
  %v1255 = vsub.f32 1.4, %v1006
  %v1256 = vmul.f32 %v1254, 2.5
  %v1257 = vmul.f32 %v1255, 2.5
  %v1258 = vmul.f32 %v1256, %v1128
  %v1259 = vmul.f32 %v1257, %v1129
  %v1260 = vadd.f32 %v1252, %v1258
  %v1261 = vadd.f32 %v1253, %v1259
  %v1262 = vsub.f32 %v1005, 1.0
  %v1263 = vsub.f32 %v1006, 1.0
  %v1264 = vmul.f32 %v1262, 2.5
  %v1265 = vmul.f32 %v1263, 2.5
  %v1266 = vmul.f32 %v1264, %v1128
  %v1267 = vmul.f32 %v1265, %v1129
  %v1268 = vsub.f32 1.8, %v1005
  %v1269 = vsub.f32 1.8, %v1006
  %v1270 = vmul.f32 %v1268, 2.5
  %v1271 = vmul.f32 %v1269, 2.5
  %v1272 = vmul.f32 %v1270, %v1138
  %v1273 = vmul.f32 %v1271, %v1139
  %v1274 = vadd.f32 %v1266, %v1272
  %v1275 = vadd.f32 %v1267, %v1273
  %v1276 = vsub.f32 %v1005, 1.4
  %v1277 = vsub.f32 %v1006, 1.4
  %v1278 = vmul.f32 %v1276, 2.5
  %v1279 = vmul.f32 %v1277, 2.5
  %v1280 = vmul.f32 %v1278, %v1138
  %v1281 = vmul.f32 %v1279, %v1139
  %v1282 = vsub.f32 2.2, %v1005
  %v1283 = vsub.f32 2.2, %v1006
  %v1284 = vmul.f32 %v1282, 2.5
  %v1285 = vmul.f32 %v1283, 2.5
  %v1286 = vmul.f32 %v1284, %v1148
  %v1287 = vmul.f32 %v1285, %v1149
  %v1288 = vadd.f32 %v1280, %v1286
  %v1289 = vadd.f32 %v1281, %v1287
  %v1290 = vmul.f32 %v1150, 1.25
  %v1291 = vmul.f32 %v1151, 1.25
  %v1292 = vmul.f32 %v1290, %v1162
  %v1293 = vmul.f32 %v1291, %v1163
  %v1294 = vmul.f32 %v1170, 1.25
  %v1295 = vmul.f32 %v1171, 1.25
  %v1296 = vmul.f32 %v1294, %v1176
  %v1297 = vmul.f32 %v1295, %v1177
  %v1298 = vadd.f32 %v1292, %v1296
  %v1299 = vadd.f32 %v1293, %v1297
  %v1300 = vmul.f32 %v1164, 1.25
  %v1301 = vmul.f32 %v1165, 1.25
  %v1302 = vmul.f32 %v1300, %v1176
  %v1303 = vmul.f32 %v1301, %v1177
  %v1304 = vmul.f32 %v1184, 1.25
  %v1305 = vmul.f32 %v1185, 1.25
  %v1306 = vmul.f32 %v1304, %v1190
  %v1307 = vmul.f32 %v1305, %v1191
  %v1308 = vadd.f32 %v1302, %v1306
  %v1309 = vadd.f32 %v1303, %v1307
  %v1310 = vmul.f32 %v1178, 1.25
  %v1311 = vmul.f32 %v1179, 1.25
  %v1312 = vmul.f32 %v1310, %v1190
  %v1313 = vmul.f32 %v1311, %v1191
  %v1314 = vmul.f32 %v1198, 1.25
  %v1315 = vmul.f32 %v1199, 1.25
  %v1316 = vmul.f32 %v1314, %v1204
  %v1317 = vmul.f32 %v1315, %v1205
  %v1318 = vadd.f32 %v1312, %v1316
  %v1319 = vadd.f32 %v1313, %v1317
  %v1320 = vmul.f32 %v1192, 1.25
  %v1321 = vmul.f32 %v1193, 1.25
  %v1322 = vmul.f32 %v1320, %v1204
  %v1323 = vmul.f32 %v1321, %v1205
  %v1324 = vmul.f32 %v1212, 1.25
  %v1325 = vmul.f32 %v1213, 1.25
  %v1326 = vmul.f32 %v1324, %v1218
  %v1327 = vmul.f32 %v1325, %v1219
  %v1328 = vadd.f32 %v1322, %v1326
  %v1329 = vadd.f32 %v1323, %v1327
  %v1330 = vmul.f32 %v1206, 1.25
  %v1331 = vmul.f32 %v1207, 1.25
  %v1332 = vmul.f32 %v1330, %v1218
  %v1333 = vmul.f32 %v1331, %v1219
  %v1334 = vmul.f32 %v1226, 1.25
  %v1335 = vmul.f32 %v1227, 1.25
  %v1336 = vmul.f32 %v1334, %v1232
  %v1337 = vmul.f32 %v1335, %v1233
  %v1338 = vadd.f32 %v1332, %v1336
  %v1339 = vadd.f32 %v1333, %v1337
  %v1340 = vmul.f32 %v1220, 1.25
  %v1341 = vmul.f32 %v1221, 1.25
  %v1342 = vmul.f32 %v1340, %v1232
  %v1343 = vmul.f32 %v1341, %v1233
  %v1344 = vmul.f32 %v1240, 1.25
  %v1345 = vmul.f32 %v1241, 1.25
  %v1346 = vmul.f32 %v1344, %v1246
  %v1347 = vmul.f32 %v1345, %v1247
  %v1348 = vadd.f32 %v1342, %v1346
  %v1349 = vadd.f32 %v1343, %v1347
  %v1350 = vmul.f32 %v1234, 1.25
  %v1351 = vmul.f32 %v1235, 1.25
  %v1352 = vmul.f32 %v1350, %v1246
  %v1353 = vmul.f32 %v1351, %v1247
  %v1354 = vmul.f32 %v1254, 1.25
  %v1355 = vmul.f32 %v1255, 1.25
  %v1356 = vmul.f32 %v1354, %v1260
  %v1357 = vmul.f32 %v1355, %v1261
  %v1358 = vadd.f32 %v1352, %v1356
  %v1359 = vadd.f32 %v1353, %v1357
  %v1360 = vmul.f32 %v1248, 1.25
  %v1361 = vmul.f32 %v1249, 1.25
  %v1362 = vmul.f32 %v1360, %v1260
  %v1363 = vmul.f32 %v1361, %v1261
  %v1364 = vmul.f32 %v1268, 1.25
  %v1365 = vmul.f32 %v1269, 1.25
  %v1366 = vmul.f32 %v1364, %v1274
  %v1367 = vmul.f32 %v1365, %v1275
  %v1368 = vadd.f32 %v1362, %v1366
  %v1369 = vadd.f32 %v1363, %v1367
  %v1370 = vmul.f32 %v1262, 1.25
  %v1371 = vmul.f32 %v1263, 1.25
  %v1372 = vmul.f32 %v1370, %v1274
  %v1373 = vmul.f32 %v1371, %v1275
  %v1374 = vmul.f32 %v1282, 1.25
  %v1375 = vmul.f32 %v1283, 1.25
  %v1376 = vmul.f32 %v1374, %v1288
  %v1377 = vmul.f32 %v1375, %v1289
  %v1378 = vadd.f32 %v1372, %v1376
  %v1379 = vadd.f32 %v1373, %v1377
  %v1380 = vmul.f32 %v1150, 0.8333333
  %v1381 = vmul.f32 %v1151, 0.8333333
  %v1382 = vmul.f32 %v1380, %v1298
  %v1383 = vmul.f32 %v1381, %v1299
  %v1384 = vmul.f32 %v1184, 0.8333333
  %v1385 = vmul.f32 %v1185, 0.8333333
  %v1386 = vmul.f32 %v1384, %v1308
  %v1387 = vmul.f32 %v1385, %v1309
  %v1388 = vadd.f32 %v1382, %v1386
  %v1389 = vadd.f32 %v1383, %v1387
  %v1390 = vmul.f32 %v1164, 0.8333333
  %v1391 = vmul.f32 %v1165, 0.8333333
  %v1392 = vmul.f32 %v1390, %v1308
  %v1393 = vmul.f32 %v1391, %v1309
  %v1394 = vmul.f32 %v1198, 0.8333333
  %v1395 = vmul.f32 %v1199, 0.8333333
  %v1396 = vmul.f32 %v1394, %v1318
  %v1397 = vmul.f32 %v1395, %v1319
  %v1398 = vadd.f32 %v1392, %v1396
  %v1399 = vadd.f32 %v1393, %v1397
  %v1400 = vmul.f32 %v1178, 0.8333333
  %v1401 = vmul.f32 %v1179, 0.8333333
  %v1402 = vmul.f32 %v1400, %v1318
  %v1403 = vmul.f32 %v1401, %v1319
  %v1404 = vmul.f32 %v1212, 0.8333333
  %v1405 = vmul.f32 %v1213, 0.8333333
  %v1406 = vmul.f32 %v1404, %v1328
  %v1407 = vmul.f32 %v1405, %v1329
  %v1408 = vadd.f32 %v1402, %v1406
  %v1409 = vadd.f32 %v1403, %v1407
  %v1410 = vmul.f32 %v1192, 0.8333333
  %v1411 = vmul.f32 %v1193, 0.8333333
  %v1412 = vmul.f32 %v1410, %v1328
  %v1413 = vmul.f32 %v1411, %v1329
  %v1414 = vmul.f32 %v1226, 0.8333333
  %v1415 = vmul.f32 %v1227, 0.8333333
  %v1416 = vmul.f32 %v1414, %v1338
  %v1417 = vmul.f32 %v1415, %v1339
  %v1418 = vadd.f32 %v1412, %v1416
  %v1419 = vadd.f32 %v1413, %v1417
  %v1420 = vmul.f32 %v1206, 0.8333333
  %v1421 = vmul.f32 %v1207, 0.8333333
  %v1422 = vmul.f32 %v1420, %v1338
  %v1423 = vmul.f32 %v1421, %v1339
  %v1424 = vmul.f32 %v1240, 0.8333333
  %v1425 = vmul.f32 %v1241, 0.8333333
  %v1426 = vmul.f32 %v1424, %v1348
  %v1427 = vmul.f32 %v1425, %v1349
  %v1428 = vadd.f32 %v1422, %v1426
  %v1429 = vadd.f32 %v1423, %v1427
  %v1430 = vmul.f32 %v1220, 0.8333333
  %v1431 = vmul.f32 %v1221, 0.8333333
  %v1432 = vmul.f32 %v1430, %v1348
  %v1433 = vmul.f32 %v1431, %v1349
  %v1434 = vmul.f32 %v1254, 0.8333333
  %v1435 = vmul.f32 %v1255, 0.8333333
  %v1436 = vmul.f32 %v1434, %v1358
  %v1437 = vmul.f32 %v1435, %v1359
  %v1438 = vadd.f32 %v1432, %v1436
  %v1439 = vadd.f32 %v1433, %v1437
  %v1440 = vmul.f32 %v1234, 0.8333333
  %v1441 = vmul.f32 %v1235, 0.8333333
  %v1442 = vmul.f32 %v1440, %v1358
  %v1443 = vmul.f32 %v1441, %v1359
  %v1444 = vmul.f32 %v1268, 0.8333333
  %v1445 = vmul.f32 %v1269, 0.8333333
  %v1446 = vmul.f32 %v1444, %v1368
  %v1447 = vmul.f32 %v1445, %v1369
  %v1448 = vadd.f32 %v1442, %v1446
  %v1449 = vadd.f32 %v1443, %v1447
  %v1450 = vmul.f32 %v1248, 0.8333333
  %v1451 = vmul.f32 %v1249, 0.8333333
  %v1452 = vmul.f32 %v1450, %v1368
  %v1453 = vmul.f32 %v1451, %v1369
  %v1454 = vmul.f32 %v1282, 0.8333333
  %v1455 = vmul.f32 %v1283, 0.8333333
  %v1456 = vmul.f32 %v1454, %v1378
  %v1457 = vmul.f32 %v1455, %v1379
  %v1458 = vadd.f32 %v1452, %v1456
  %v1459 = vadd.f32 %v1453, %v1457
  %1462 = vrot.lane.b32.xlu0 %v1398, 16
  %v1463 = vpop.permute.xlu0 %1462
  %1464 = vrot.lane.b32.xlu0 %v1399, 16
  %v1465 = vpop.permute.xlu0 %1464
  %1470 = vrot.lane.b32.xlu0 %v1408, 32
  %v1471 = vpop.permute.xlu0 %1470
  %1472 = vrot.lane.b32.xlu0 %v1409, 32
  %v1473 = vpop.permute.xlu0 %1472
  %1478 = vrot.lane.b32.xlu0 %v1418, 48
  %v1479 = vpop.permute.xlu0 %1478
  %1480 = vrot.lane.b32.xlu0 %v1419, 48
  %v1481 = vpop.permute.xlu0 %1480
  %1486 = vrot.lane.b32.xlu0 %v1428, 64
  %v1487 = vpop.permute.xlu0 %1486
  %1488 = vrot.lane.b32.xlu0 %v1429, 64
  %v1489 = vpop.permute.xlu0 %1488
  %1494 = vrot.lane.b32.xlu0 %v1438, 80
  %v1495 = vpop.permute.xlu0 %1494
  %1496 = vrot.lane.b32.xlu0 %v1439, 80
  %v1497 = vpop.permute.xlu0 %1496
  %1502 = vrot.lane.b32.xlu0 %v1448, 96
  %v1503 = vpop.permute.xlu0 %1502
  %1504 = vrot.lane.b32.xlu0 %v1449, 96
  %v1505 = vpop.permute.xlu0 %1504
  %1510 = vrot.lane.b32.xlu0 %v1458, 112
  %v1511 = vpop.permute.xlu0 %1510
  %1512 = vrot.lane.b32.xlu0 %v1459, 112
  %v1513 = vpop.permute.xlu0 %1512
  %v1516 = vsel %vm89, %v1388, %v1463
  %v1517 = vsel %vm89, %v1389, %v1465
  %v1518 = vsel %vm750, %v1516, %v1471
  %v1519 = vsel %vm750, %v1517, %v1473
  %v1520 = vsel %vm753, %v1518, %v1479
  %v1521 = vsel %vm753, %v1519, %v1481
  %v1522 = vsel %vm756, %v1520, %v1487
  %v1523 = vsel %vm756, %v1521, %v1489
  %v1524 = vsel %vm759, %v1522, %v1495
  %v1525 = vsel %vm759, %v1523, %v1497
  %v1526 = vsel %vm762, %v1524, %v1503
  %v1527 = vsel %vm762, %v1525, %v1505
  %v1528 = vsel %vm765, %v1526, %v1511
  %v1529 = vsel %vm765, %v1527, %v1513
  %v1530 = vpack.c.bf16 %v1529, %v1528
  %v1547 = vunpack.c.l.b16 %v1009
  %v1548 = vunpack.c.l.b16 %v1010
  %v1549 = vunpack.c.l.b16 %v1011
  %v1550 = vunpack.c.l.b16 %v1012
  %v1551 = vunpack.c.l.b16 %v1013
  %v1552 = vunpack.c.l.b16 %v1014
  %v1553 = vunpack.c.l.b16 %v1015
  %v1554 = vunpack.c.l.b16 %v1016
  %v1555 = vunpack.c.l.b16 %v1017
  %v1556 = vunpack.c.l.b16 %v1018
  %v1557 = vunpack.c.l.b16 %v1019
  %v1558 = vunpack.c.l.b16 %v1020
  %v1559 = vunpack.c.l.b16 %v1021
  %v1560 = vunpack.c.l.b16 %v1022
  %v1561 = vunpack.c.l.b16 %v1023
  %v1562 = vunpack.c.l.b16 %v1024
  %v1563 = vpack.c.b16 %v1548, %v1547
  %v1564 = vpack.c.b16 %v1550, %v1549
  %v1565 = vpack.c.b16 %v1552, %v1551
  %v1566 = vpack.c.b16 %v1554, %v1553
  %v1567 = vpack.c.b16 %v1556, %v1555
  %v1568 = vpack.c.b16 %v1558, %v1557
  %v1569 = vpack.c.b16 %v1560, %v1559
  %v1570 = vpack.c.b16 %v1562, %v1561
  %1579 = vmatprep.subr.bf16.mxu0 0
  %1580 = vmatpush1.bf16.msra.mxu0 %v1570
  %1581 = vmatprep.subr.bf16.mxu0 0
  %1582 = vmatpush1.bf16.msra.mxu0 %v1569
  %1583 = vmatprep.subr.bf16.mxu0 0
  %1584 = vmatpush1.bf16.msra.mxu0 %v1568
  %1585 = vmatprep.subr.bf16.mxu0 0
  %1586 = vmatpush1.bf16.msra.mxu0 %v1567
  %1587 = vmatprep.subr.bf16.mxu0 0
  %1588 = vmatpush1.bf16.msra.mxu0 %v1566
  %1589 = vmatprep.subr.bf16.mxu0 0
  %1590 = vmatpush1.bf16.msra.mxu0 %v1565
  %1591 = vmatprep.subr.bf16.mxu0 0
  %1592 = vmatpush1.bf16.msra.mxu0 %v1564
  %1593 = vmatprep.subr.bf16.mxu0 0
  %1594 = vmatpush1.bf16.msra.mxu0 %v1563
  %1595 = vmatprep.subr.bf16.mxu0 0
  %1596 = vmatpush2.bf16.msra.mxu0 0
  %1597 = vmatprep.subr.bf16.mxu0 0
  %1598 = vmatpush2.bf16.msra.mxu0 0
  %1599 = vmatprep.subr.bf16.mxu0 0
  %1600 = vmatpush2.bf16.msra.mxu0 0
  %1601 = vmatprep.subr.bf16.mxu0 0
  %1602 = vmatpush2.bf16.msra.mxu0 0
  %1603 = vmatprep.subr.bf16.mxu0 0
  %1604 = vmatpush2.bf16.msra.mxu0 0
  %1605 = vmatprep.subr.bf16.mxu0 0
  %1606 = vmatpush2.bf16.msra.mxu0 0
  %1607 = vmatprep.subr.bf16.mxu0 0
  %1608 = vmatpush2.bf16.msra.mxu0 0
  %1609 = vmatprep.subr.bf16.mxu0 0
  %1610 = vmatpush2.bf16.msra.mxu0 0
  %1611 = vmatprep.mubr.bf16.mxu0 0
  %1612 = vmatmul.mubr.bf16.gmra.mxu0 %v1530
  %v1613 = vpop.f32.mrf.mxu0
  %v1614 = vadd.f32 0.0, %v1613
  %v1615 = vpop.f32.mrf.mxu0
  %v1616 = vpop.f32.mrf.mxu0
  %v1617 = vadd.f32 0.0, %v1616
  %v1618 = vpop.f32.mrf.mxu0
  %1619 = vdwg.mxu0
  %v1622 = vunpack.c.l.b16 %v1007
  %v1623 = vunpack.c.l.b16 %v1008
  %v1624 = vpack.c.b16 %v1623, %v1622
  %v1627 = vsel %vm89, %v1039, 0
  %1629 = vmatprep.subr.bf16.mxu0 0
  %1630 = vmatpush1.bf16.msra.mxu0 0
  %1631 = vmatprep.subr.bf16.mxu0 0
  %1632 = vmatpush1.bf16.msra.mxu0 0
  %1633 = vmatprep.subr.bf16.mxu0 0
  %1634 = vmatpush1.bf16.msra.mxu0 0
  %1635 = vmatprep.subr.bf16.mxu0 0
  %1636 = vmatpush1.bf16.msra.mxu0 0
  %1637 = vmatprep.subr.bf16.mxu0 0
  %1638 = vmatpush1.bf16.msra.mxu0 0
  %1639 = vmatprep.subr.bf16.mxu0 0
  %1640 = vmatpush1.bf16.msra.mxu0 0
  %1641 = vmatprep.subr.bf16.mxu0 0
  %1642 = vmatpush1.bf16.msra.mxu0 0
  %1643 = vmatprep.subr.bf16.mxu0 0
  %1644 = vmatpush1.bf16.msra.mxu0 %v1624
  %1645 = vmatprep.subr.bf16.mxu0 0
  %1646 = vmatpush2.bf16.msra.mxu0 0
  %1647 = vmatprep.subr.bf16.mxu0 0
  %1648 = vmatpush2.bf16.msra.mxu0 0
  %1649 = vmatprep.subr.bf16.mxu0 0
  %1650 = vmatpush2.bf16.msra.mxu0 0
  %1651 = vmatprep.subr.bf16.mxu0 0
  %1652 = vmatpush2.bf16.msra.mxu0 0
  %1653 = vmatprep.subr.bf16.mxu0 0
  %1654 = vmatpush2.bf16.msra.mxu0 0
  %1655 = vmatprep.subr.bf16.mxu0 0
  %1656 = vmatpush2.bf16.msra.mxu0 0
  %1657 = vmatprep.subr.bf16.mxu0 0
  %1658 = vmatpush2.bf16.msra.mxu0 0
  %1659 = vmatprep.subr.bf16.mxu0 0
  %1660 = vmatpush2.bf16.msra.mxu0 0
  %1661 = vmatprep.mubr.bf16.mxu0 0
  %1662 = vmatmul.mubr.bf16.gmra.mxu0 %v1627
  %v1663 = vpop.f32.mrf.mxu0
  %v1664 = vadd.f32 %v1614, %v1663
  %v1665 = vpop.f32.mrf.mxu0
  %v1666 = vpop.f32.mrf.mxu0
  %v1667 = vadd.f32 %v1617, %v1666
  %v1668 = vpop.f32.mrf.mxu0
  %1669 = vdwg.mxu0
  %v1670 = vld [vmem:[%s2] sm:$0xff]
  %v1671 = vld [vmem:[%s2 + $0x8] sm:$0xff]
  %v1672 = vlaneseq
  %v1673 = vand.u32 %v1672, 127
  %1674 = vset.pattern.permute.xlu0 0
  %1675 = vperm.xlu0 %1674, %v1670
  %v1676 = vpop.permute.xlu0 %1675
  %1677 = vset.pattern.permute.xlu0 0
  %1678 = vperm.xlu0 %1677, %v1671
  %v1679 = vpop.permute.xlu0 %1678
  %vm1680 = vcmp.eq.s32.totalorder %v1673, %v1676
  %vm1681 = vcmp.eq.s32.totalorder %v1673, %v1679
  %v1682 = vsel %vm1680, 1, 0
  %v1683 = vsel %vm1681, 1, 0
  %v1684 = vcvt.s32.f32 %v1682
  %v1685 = vcvt.s32.f32 %v1683
  %v1686 = vpack.c.bf16 %v1685, %v1684
  %1687 = vset.pattern.permute.xlu0 1
  %1688 = vperm.xlu0 %1687, %v1670
  %v1689 = vpop.permute.xlu0 %1688
  %1690 = vset.pattern.permute.xlu0 1
  %1691 = vperm.xlu0 %1690, %v1671
  %v1692 = vpop.permute.xlu0 %1691
  %vm1693 = vcmp.eq.s32.totalorder %v1673, %v1689
  %vm1694 = vcmp.eq.s32.totalorder %v1673, %v1692
  %v1695 = vsel %vm1693, 1, 0
  %v1696 = vsel %vm1694, 1, 0
  %v1697 = vcvt.s32.f32 %v1695
  %v1698 = vcvt.s32.f32 %v1696
  %v1699 = vpack.c.bf16 %v1698, %v1697
  %v1701 = vsel %vm89, %v1686, 0
  %1703 = vmatprep.subr.bf16.mxu0 0
  %1704 = vmatpush1.bf16.msra.mxu0 0
  %1705 = vmatprep.subr.bf16.mxu0 0
  %1706 = vmatpush1.bf16.msra.mxu0 0
  %1707 = vmatprep.subr.bf16.mxu0 0
  %1708 = vmatpush1.bf16.msra.mxu0 0
  %1709 = vmatprep.subr.bf16.mxu0 0
  %1710 = vmatpush1.bf16.msra.mxu0 0
  %1711 = vmatprep.subr.bf16.mxu0 0
  %1712 = vmatpush1.bf16.msra.mxu0 0
  %1713 = vmatprep.subr.bf16.mxu0 0
  %1714 = vmatpush1.bf16.msra.mxu0 0
  %1715 = vmatprep.subr.bf16.mxu0 0
  %1716 = vmatpush1.bf16.msra.mxu0 0
  %1717 = vmatprep.subr.bf16.mxu0 0
  %1718 = vmatpush1.bf16.msra.mxu0 %v908
  %1719 = vmatprep.subr.bf16.mxu0 0
  %1720 = vmatpush2.bf16.msra.mxu0 0
  %1721 = vmatprep.subr.bf16.mxu0 0
  %1722 = vmatpush2.bf16.msra.mxu0 0
  %1723 = vmatprep.subr.bf16.mxu0 0
  %1724 = vmatpush2.bf16.msra.mxu0 0
  %1725 = vmatprep.subr.bf16.mxu0 0
  %1726 = vmatpush2.bf16.msra.mxu0 0
  %1727 = vmatprep.subr.bf16.mxu0 0
  %1728 = vmatpush2.bf16.msra.mxu0 0
  %1729 = vmatprep.subr.bf16.mxu0 0
  %1730 = vmatpush2.bf16.msra.mxu0 0
  %1731 = vmatprep.subr.bf16.mxu0 0
  %1732 = vmatpush2.bf16.msra.mxu0 0
  %1733 = vmatprep.subr.bf16.mxu0 0
  %1734 = vmatpush2.bf16.msra.mxu0 0
  %1735 = vmatprep.mubr.bf16.mxu0 0
  %1736 = vmatmul.mubr.bf16.gmra.mxu0 %v1701
  %v1737 = vpop.f32.mrf.mxu0
  %v1738 = vadd.f32 0.0, %v1737
  %v1739 = vpop.f32.mrf.mxu0
  %v1740 = vpop.f32.mrf.mxu0
  %v1741 = vadd.f32 0.0, %v1740
  %v1742 = vpop.f32.mrf.mxu0
  %1743 = vdwg.mxu0
  %v1745 = vsel %vm89, %v1699, 0
  %1747 = vmatprep.subr.bf16.mxu0 0
  %1748 = vmatpush1.bf16.msra.mxu0 0
  %1749 = vmatprep.subr.bf16.mxu0 0
  %1750 = vmatpush1.bf16.msra.mxu0 0
  %1751 = vmatprep.subr.bf16.mxu0 0
  %1752 = vmatpush1.bf16.msra.mxu0 0
  %1753 = vmatprep.subr.bf16.mxu0 0
  %1754 = vmatpush1.bf16.msra.mxu0 0
  %1755 = vmatprep.subr.bf16.mxu0 0
  %1756 = vmatpush1.bf16.msra.mxu0 0
  %1757 = vmatprep.subr.bf16.mxu0 0
  %1758 = vmatpush1.bf16.msra.mxu0 0
  %1759 = vmatprep.subr.bf16.mxu0 0
  %1760 = vmatpush1.bf16.msra.mxu0 0
  %1761 = vmatprep.subr.bf16.mxu0 0
  %1762 = vmatpush1.bf16.msra.mxu0 %v908
  %1763 = vmatprep.subr.bf16.mxu0 0
  %1764 = vmatpush2.bf16.msra.mxu0 0
  %1765 = vmatprep.subr.bf16.mxu0 0
  %1766 = vmatpush2.bf16.msra.mxu0 0
  %1767 = vmatprep.subr.bf16.mxu0 0
  %1768 = vmatpush2.bf16.msra.mxu0 0
  %1769 = vmatprep.subr.bf16.mxu0 0
  %1770 = vmatpush2.bf16.msra.mxu0 0
  %1771 = vmatprep.subr.bf16.mxu0 0
  %1772 = vmatpush2.bf16.msra.mxu0 0
  %1773 = vmatprep.subr.bf16.mxu0 0
  %1774 = vmatpush2.bf16.msra.mxu0 0
  %1775 = vmatprep.subr.bf16.mxu0 0
  %1776 = vmatpush2.bf16.msra.mxu0 0
  %1777 = vmatprep.subr.bf16.mxu0 0
  %1778 = vmatpush2.bf16.msra.mxu0 0
  %1779 = vmatprep.mubr.bf16.mxu0 0
  %1780 = vmatmul.mubr.bf16.gmra.mxu0 %v1745
  %v1781 = vpop.f32.mrf.mxu0
  %v1782 = vadd.f32 0.0, %v1781
  %v1783 = vpop.f32.mrf.mxu0
  %v1784 = vpop.f32.mrf.mxu0
  %v1785 = vadd.f32 0.0, %v1784
  %v1786 = vpop.f32.mrf.mxu0
  %1787 = vdwg.mxu0
  %v1788 = vmul.f32 %v1738, %v1782
  %v1789 = vmul.f32 %v1741, %v1785
  %v1790 = vld [vmem:[%s3 + $0xc0] sm:$0xf]
  %v1791 = vld [vmem:[%s3 + $0xc8] sm:$0xf]
  %v1792 = vld [vmem:[%s3 + $0xcc] sm:$0xf]
  %v1793 = vld [vmem:[%s3 + $0xd0] sm:$0xf]
  %v1794 = vld [vmem:[%s3 + $0xd4] sm:$0xf]
  %v1795 = vld [vmem:[%s3 + $0xd8] sm:$0xf]
  %v1796 = vld [vmem:[%s3 + $0xdc] sm:$0xf]
  %v1797 = vld [vmem:[%s3 + $0xe0] sm:$0xf]
  %v1798 = vld [vmem:[%s3 + $0xe4] sm:$0xf]
  %v1799 = vxor.u32 %v1788, 2147483648
  %v1800 = vxor.u32 %v1789, 2147483648
  %v1801 = vmul.f32 %v1799, 1.442695
  %v1802 = vpow.pop %v1801
  %v1803 = vmul.f32 %v1800, 1.442695
  %v1804 = vpow.pop %v1803
  %v1805 = vadd.f32 %v1802, 1.0
  %v1806 = vadd.f32 %v1804, 1.0
  %v1807 = vrcp.pop %v1805
  %v1808 = vmul.f32 1.0, %v1807
  %v1809 = vrcp.pop %v1806
  %v1810 = vmul.f32 1.0, %v1809
  %v1811 = vmul.f32 %v1788, %v1808
  %v1812 = vmul.f32 %v1789, %v1810
  %v1813 = vpack.c.bf16 %v1812, %v1811
  %vm1814 = vcmp.ge.f32.partialorder %v1788, -2.2
  %vm1815 = vcmp.ge.f32.partialorder %v1789, -2.2
  %vm1816 = vcmp.lt.f32.partialorder %v1788, -1.8
  %vm1817 = vcmp.lt.f32.partialorder %v1789, -1.8
  %vm1818 = vmand %vm1814, %vm1816
  %vm1819 = vmand %vm1815, %vm1817
  %v1820 = vsel %vm1818, 1, 0
  %v1821 = vsel %vm1819, 1, 0
  %v1822 = vcvt.s32.f32 %v1820
  %v1823 = vcvt.s32.f32 %v1821
  %vm1824 = vcmp.ge.f32.partialorder %v1788, -1.8
  %vm1825 = vcmp.ge.f32.partialorder %v1789, -1.8
  %vm1826 = vcmp.lt.f32.partialorder %v1788, -1.4
  %vm1827 = vcmp.lt.f32.partialorder %v1789, -1.4
  %vm1828 = vmand %vm1824, %vm1826
  %vm1829 = vmand %vm1825, %vm1827
  %v1830 = vsel %vm1828, 1, 0
  %v1831 = vsel %vm1829, 1, 0
  %v1832 = vcvt.s32.f32 %v1830
  %v1833 = vcvt.s32.f32 %v1831
  %vm1834 = vcmp.ge.f32.partialorder %v1788, -1.4
  %vm1835 = vcmp.ge.f32.partialorder %v1789, -1.4
  %vm1836 = vcmp.lt.f32.partialorder %v1788, -1.0
  %vm1837 = vcmp.lt.f32.partialorder %v1789, -1.0
  %vm1838 = vmand %vm1834, %vm1836
  %vm1839 = vmand %vm1835, %vm1837
  %v1840 = vsel %vm1838, 1, 0
  %v1841 = vsel %vm1839, 1, 0
  %v1842 = vcvt.s32.f32 %v1840
  %v1843 = vcvt.s32.f32 %v1841
  %vm1844 = vcmp.ge.f32.partialorder %v1788, -1.0
  %vm1845 = vcmp.ge.f32.partialorder %v1789, -1.0
  %vm1846 = vcmp.lt.f32.partialorder %v1788, -0.6
  %vm1847 = vcmp.lt.f32.partialorder %v1789, -0.6
  %vm1848 = vmand %vm1844, %vm1846
  %vm1849 = vmand %vm1845, %vm1847
  %v1850 = vsel %vm1848, 1, 0
  %v1851 = vsel %vm1849, 1, 0
  %v1852 = vcvt.s32.f32 %v1850
  %v1853 = vcvt.s32.f32 %v1851
  %vm1854 = vcmp.ge.f32.partialorder %v1788, -0.6
  %vm1855 = vcmp.ge.f32.partialorder %v1789, -0.6
  %vm1856 = vcmp.lt.f32.partialorder %v1788, -0.2
  %vm1857 = vcmp.lt.f32.partialorder %v1789, -0.2
  %vm1858 = vmand %vm1854, %vm1856
  %vm1859 = vmand %vm1855, %vm1857
  %v1860 = vsel %vm1858, 1, 0
  %v1861 = vsel %vm1859, 1, 0
  %v1862 = vcvt.s32.f32 %v1860
  %v1863 = vcvt.s32.f32 %v1861
  %vm1864 = vcmp.ge.f32.partialorder %v1788, -0.2
  %vm1865 = vcmp.ge.f32.partialorder %v1789, -0.2
  %vm1866 = vcmp.lt.f32.partialorder %v1788, 0.2
  %vm1867 = vcmp.lt.f32.partialorder %v1789, 0.2
  %vm1868 = vmand %vm1864, %vm1866
  %vm1869 = vmand %vm1865, %vm1867
  %v1870 = vsel %vm1868, 1, 0
  %v1871 = vsel %vm1869, 1, 0
  %v1872 = vcvt.s32.f32 %v1870
  %v1873 = vcvt.s32.f32 %v1871
  %vm1874 = vcmp.ge.f32.partialorder %v1788, 0.2
  %vm1875 = vcmp.ge.f32.partialorder %v1789, 0.2
  %vm1876 = vcmp.lt.f32.partialorder %v1788, 0.6
  %vm1877 = vcmp.lt.f32.partialorder %v1789, 0.6
  %vm1878 = vmand %vm1874, %vm1876
  %vm1879 = vmand %vm1875, %vm1877
  %v1880 = vsel %vm1878, 1, 0
  %v1881 = vsel %vm1879, 1, 0
  %v1882 = vcvt.s32.f32 %v1880
  %v1883 = vcvt.s32.f32 %v1881
  %vm1884 = vcmp.ge.f32.partialorder %v1788, 0.6
  %vm1885 = vcmp.ge.f32.partialorder %v1789, 0.6
  %vm1886 = vcmp.lt.f32.partialorder %v1788, 1.0
  %vm1887 = vcmp.lt.f32.partialorder %v1789, 1.0
  %vm1888 = vmand %vm1884, %vm1886
  %vm1889 = vmand %vm1885, %vm1887
  %v1890 = vsel %vm1888, 1, 0
  %v1891 = vsel %vm1889, 1, 0
  %v1892 = vcvt.s32.f32 %v1890
  %v1893 = vcvt.s32.f32 %v1891
  %vm1894 = vcmp.ge.f32.partialorder %v1788, 1.0
  %vm1895 = vcmp.ge.f32.partialorder %v1789, 1.0
  %vm1896 = vcmp.lt.f32.partialorder %v1788, 1.4
  %vm1897 = vcmp.lt.f32.partialorder %v1789, 1.4
  %vm1898 = vmand %vm1894, %vm1896
  %vm1899 = vmand %vm1895, %vm1897
  %v1900 = vsel %vm1898, 1, 0
  %v1901 = vsel %vm1899, 1, 0
  %v1902 = vcvt.s32.f32 %v1900
  %v1903 = vcvt.s32.f32 %v1901
  %vm1904 = vcmp.ge.f32.partialorder %v1788, 1.4
  %vm1905 = vcmp.ge.f32.partialorder %v1789, 1.4
  %vm1906 = vcmp.lt.f32.partialorder %v1788, 1.8
  %vm1907 = vcmp.lt.f32.partialorder %v1789, 1.8
  %vm1908 = vmand %vm1904, %vm1906
  %vm1909 = vmand %vm1905, %vm1907
  %v1910 = vsel %vm1908, 1, 0
  %v1911 = vsel %vm1909, 1, 0
  %v1912 = vcvt.s32.f32 %v1910
  %v1913 = vcvt.s32.f32 %v1911
  %vm1914 = vcmp.ge.f32.partialorder %v1788, 1.8
  %vm1915 = vcmp.ge.f32.partialorder %v1789, 1.8
  %vm1916 = vcmp.lt.f32.partialorder %v1788, 2.2
  %vm1917 = vcmp.lt.f32.partialorder %v1789, 2.2
  %vm1918 = vmand %vm1914, %vm1916
  %vm1919 = vmand %vm1915, %vm1917
  %v1920 = vsel %vm1918, 1, 0
  %v1921 = vsel %vm1919, 1, 0
  %v1922 = vcvt.s32.f32 %v1920
  %v1923 = vcvt.s32.f32 %v1921
  %v1924 = vsub.f32 %v1788, -2.2
  %v1925 = vsub.f32 %v1789, -2.2
  %v1926 = vmul.f32 %v1924, 2.5
  %v1927 = vmul.f32 %v1925, 2.5
  %v1928 = vmul.f32 %v1926, %v1822
  %v1929 = vmul.f32 %v1927, %v1823
  %v1930 = vsub.f32 -1.4, %v1788
  %v1931 = vsub.f32 -1.4, %v1789
  %v1932 = vmul.f32 %v1930, 2.5
  %v1933 = vmul.f32 %v1931, 2.5
  %v1934 = vmul.f32 %v1932, %v1832
  %v1935 = vmul.f32 %v1933, %v1833
  %v1936 = vadd.f32 %v1928, %v1934
  %v1937 = vadd.f32 %v1929, %v1935
  %v1938 = vsub.f32 %v1788, -1.8
  %v1939 = vsub.f32 %v1789, -1.8
  %v1940 = vmul.f32 %v1938, 2.5
  %v1941 = vmul.f32 %v1939, 2.5
  %v1942 = vmul.f32 %v1940, %v1832
  %v1943 = vmul.f32 %v1941, %v1833
  %v1944 = vsub.f32 -1.0, %v1788
  %v1945 = vsub.f32 -1.0, %v1789
  %v1946 = vmul.f32 %v1944, 2.5
  %v1947 = vmul.f32 %v1945, 2.5
  %v1948 = vmul.f32 %v1946, %v1842
  %v1949 = vmul.f32 %v1947, %v1843
  %v1950 = vadd.f32 %v1942, %v1948
  %v1951 = vadd.f32 %v1943, %v1949
  %v1952 = vsub.f32 %v1788, -1.4
  %v1953 = vsub.f32 %v1789, -1.4
  %v1954 = vmul.f32 %v1952, 2.5
  %v1955 = vmul.f32 %v1953, 2.5
  %v1956 = vmul.f32 %v1954, %v1842
  %v1957 = vmul.f32 %v1955, %v1843
  %v1958 = vsub.f32 -0.6, %v1788
  %v1959 = vsub.f32 -0.6, %v1789
  %v1960 = vmul.f32 %v1958, 2.5
  %v1961 = vmul.f32 %v1959, 2.5
  %v1962 = vmul.f32 %v1960, %v1852
  %v1963 = vmul.f32 %v1961, %v1853
  %v1964 = vadd.f32 %v1956, %v1962
  %v1965 = vadd.f32 %v1957, %v1963
  %v1966 = vsub.f32 %v1788, -1.0
  %v1967 = vsub.f32 %v1789, -1.0
  %v1968 = vmul.f32 %v1966, 2.5
  %v1969 = vmul.f32 %v1967, 2.5
  %v1970 = vmul.f32 %v1968, %v1852
  %v1971 = vmul.f32 %v1969, %v1853
  %v1972 = vsub.f32 -0.2, %v1788
  %v1973 = vsub.f32 -0.2, %v1789
  %v1974 = vmul.f32 %v1972, 2.5
  %v1975 = vmul.f32 %v1973, 2.5
  %v1976 = vmul.f32 %v1974, %v1862
  %v1977 = vmul.f32 %v1975, %v1863
  %v1978 = vadd.f32 %v1970, %v1976
  %v1979 = vadd.f32 %v1971, %v1977
  %v1980 = vsub.f32 %v1788, -0.6
  %v1981 = vsub.f32 %v1789, -0.6
  %v1982 = vmul.f32 %v1980, 2.5
  %v1983 = vmul.f32 %v1981, 2.5
  %v1984 = vmul.f32 %v1982, %v1862
  %v1985 = vmul.f32 %v1983, %v1863
  %v1986 = vsub.f32 0.2, %v1788
  %v1987 = vsub.f32 0.2, %v1789
  %v1988 = vmul.f32 %v1986, 2.5
  %v1989 = vmul.f32 %v1987, 2.5
  %v1990 = vmul.f32 %v1988, %v1872
  %v1991 = vmul.f32 %v1989, %v1873
  %v1992 = vadd.f32 %v1984, %v1990
  %v1993 = vadd.f32 %v1985, %v1991
  %v1994 = vsub.f32 %v1788, -0.2
  %v1995 = vsub.f32 %v1789, -0.2
  %v1996 = vmul.f32 %v1994, 2.5
  %v1997 = vmul.f32 %v1995, 2.5
  %v1998 = vmul.f32 %v1996, %v1872
  %v1999 = vmul.f32 %v1997, %v1873
  %v2000 = vsub.f32 0.6, %v1788
  %v2001 = vsub.f32 0.6, %v1789
  %v2002 = vmul.f32 %v2000, 2.5
  %v2003 = vmul.f32 %v2001, 2.5
  %v2004 = vmul.f32 %v2002, %v1882
  %v2005 = vmul.f32 %v2003, %v1883
  %v2006 = vadd.f32 %v1998, %v2004
  %v2007 = vadd.f32 %v1999, %v2005
  %v2008 = vsub.f32 %v1788, 0.2
  %v2009 = vsub.f32 %v1789, 0.2
  %v2010 = vmul.f32 %v2008, 2.5
  %v2011 = vmul.f32 %v2009, 2.5
  %v2012 = vmul.f32 %v2010, %v1882
  %v2013 = vmul.f32 %v2011, %v1883
  %v2014 = vsub.f32 1.0, %v1788
  %v2015 = vsub.f32 1.0, %v1789
  %v2016 = vmul.f32 %v2014, 2.5
  %v2017 = vmul.f32 %v2015, 2.5
  %v2018 = vmul.f32 %v2016, %v1892
  %v2019 = vmul.f32 %v2017, %v1893
  %v2020 = vadd.f32 %v2012, %v2018
  %v2021 = vadd.f32 %v2013, %v2019
  %v2022 = vsub.f32 %v1788, 0.6
  %v2023 = vsub.f32 %v1789, 0.6
  %v2024 = vmul.f32 %v2022, 2.5
  %v2025 = vmul.f32 %v2023, 2.5
  %v2026 = vmul.f32 %v2024, %v1892
  %v2027 = vmul.f32 %v2025, %v1893
  %v2028 = vsub.f32 1.4, %v1788
  %v2029 = vsub.f32 1.4, %v1789
  %v2030 = vmul.f32 %v2028, 2.5
  %v2031 = vmul.f32 %v2029, 2.5
  %v2032 = vmul.f32 %v2030, %v1902
  %v2033 = vmul.f32 %v2031, %v1903
  %v2034 = vadd.f32 %v2026, %v2032
  %v2035 = vadd.f32 %v2027, %v2033
  %v2036 = vsub.f32 %v1788, 1.0
  %v2037 = vsub.f32 %v1789, 1.0
  %v2038 = vmul.f32 %v2036, 2.5
  %v2039 = vmul.f32 %v2037, 2.5
  %v2040 = vmul.f32 %v2038, %v1902
  %v2041 = vmul.f32 %v2039, %v1903
  %v2042 = vsub.f32 1.8, %v1788
  %v2043 = vsub.f32 1.8, %v1789
  %v2044 = vmul.f32 %v2042, 2.5
  %v2045 = vmul.f32 %v2043, 2.5
  %v2046 = vmul.f32 %v2044, %v1912
  %v2047 = vmul.f32 %v2045, %v1913
  %v2048 = vadd.f32 %v2040, %v2046
  %v2049 = vadd.f32 %v2041, %v2047
  %v2050 = vsub.f32 %v1788, 1.4
  %v2051 = vsub.f32 %v1789, 1.4
  %v2052 = vmul.f32 %v2050, 2.5
  %v2053 = vmul.f32 %v2051, 2.5
  %v2054 = vmul.f32 %v2052, %v1912
  %v2055 = vmul.f32 %v2053, %v1913
  %v2056 = vsub.f32 2.2, %v1788
  %v2057 = vsub.f32 2.2, %v1789
  %v2058 = vmul.f32 %v2056, 2.5
  %v2059 = vmul.f32 %v2057, 2.5
  %v2060 = vmul.f32 %v2058, %v1922
  %v2061 = vmul.f32 %v2059, %v1923
  %v2062 = vadd.f32 %v2054, %v2060
  %v2063 = vadd.f32 %v2055, %v2061
  %v2064 = vmul.f32 %v1924, 1.25
  %v2065 = vmul.f32 %v1925, 1.25
  %v2066 = vmul.f32 %v2064, %v1936
  %v2067 = vmul.f32 %v2065, %v1937
  %v2068 = vmul.f32 %v1944, 1.25
  %v2069 = vmul.f32 %v1945, 1.25
  %v2070 = vmul.f32 %v2068, %v1950
  %v2071 = vmul.f32 %v2069, %v1951
  %v2072 = vadd.f32 %v2066, %v2070
  %v2073 = vadd.f32 %v2067, %v2071
  %v2074 = vmul.f32 %v1938, 1.25
  %v2075 = vmul.f32 %v1939, 1.25
  %v2076 = vmul.f32 %v2074, %v1950
  %v2077 = vmul.f32 %v2075, %v1951
  %v2078 = vmul.f32 %v1958, 1.25
  %v2079 = vmul.f32 %v1959, 1.25
  %v2080 = vmul.f32 %v2078, %v1964
  %v2081 = vmul.f32 %v2079, %v1965
  %v2082 = vadd.f32 %v2076, %v2080
  %v2083 = vadd.f32 %v2077, %v2081
  %v2084 = vmul.f32 %v1952, 1.25
  %v2085 = vmul.f32 %v1953, 1.25
  %v2086 = vmul.f32 %v2084, %v1964
  %v2087 = vmul.f32 %v2085, %v1965
  %v2088 = vmul.f32 %v1972, 1.25
  %v2089 = vmul.f32 %v1973, 1.25
  %v2090 = vmul.f32 %v2088, %v1978
  %v2091 = vmul.f32 %v2089, %v1979
  %v2092 = vadd.f32 %v2086, %v2090
  %v2093 = vadd.f32 %v2087, %v2091
  %v2094 = vmul.f32 %v1966, 1.25
  %v2095 = vmul.f32 %v1967, 1.25
  %v2096 = vmul.f32 %v2094, %v1978
  %v2097 = vmul.f32 %v2095, %v1979
  %v2098 = vmul.f32 %v1986, 1.25
  %v2099 = vmul.f32 %v1987, 1.25
  %v2100 = vmul.f32 %v2098, %v1992
  %v2101 = vmul.f32 %v2099, %v1993
  %v2102 = vadd.f32 %v2096, %v2100
  %v2103 = vadd.f32 %v2097, %v2101
  %v2104 = vmul.f32 %v1980, 1.25
  %v2105 = vmul.f32 %v1981, 1.25
  %v2106 = vmul.f32 %v2104, %v1992
  %v2107 = vmul.f32 %v2105, %v1993
  %v2108 = vmul.f32 %v2000, 1.25
  %v2109 = vmul.f32 %v2001, 1.25
  %v2110 = vmul.f32 %v2108, %v2006
  %v2111 = vmul.f32 %v2109, %v2007
  %v2112 = vadd.f32 %v2106, %v2110
  %v2113 = vadd.f32 %v2107, %v2111
  %v2114 = vmul.f32 %v1994, 1.25
  %v2115 = vmul.f32 %v1995, 1.25
  %v2116 = vmul.f32 %v2114, %v2006
  %v2117 = vmul.f32 %v2115, %v2007
  %v2118 = vmul.f32 %v2014, 1.25
  %v2119 = vmul.f32 %v2015, 1.25
  %v2120 = vmul.f32 %v2118, %v2020
  %v2121 = vmul.f32 %v2119, %v2021
  %v2122 = vadd.f32 %v2116, %v2120
  %v2123 = vadd.f32 %v2117, %v2121
  %v2124 = vmul.f32 %v2008, 1.25
  %v2125 = vmul.f32 %v2009, 1.25
  %v2126 = vmul.f32 %v2124, %v2020
  %v2127 = vmul.f32 %v2125, %v2021
  %v2128 = vmul.f32 %v2028, 1.25
  %v2129 = vmul.f32 %v2029, 1.25
  %v2130 = vmul.f32 %v2128, %v2034
  %v2131 = vmul.f32 %v2129, %v2035
  %v2132 = vadd.f32 %v2126, %v2130
  %v2133 = vadd.f32 %v2127, %v2131
  %v2134 = vmul.f32 %v2022, 1.25
  %v2135 = vmul.f32 %v2023, 1.25
  %v2136 = vmul.f32 %v2134, %v2034
  %v2137 = vmul.f32 %v2135, %v2035
  %v2138 = vmul.f32 %v2042, 1.25
  %v2139 = vmul.f32 %v2043, 1.25
  %v2140 = vmul.f32 %v2138, %v2048
  %v2141 = vmul.f32 %v2139, %v2049
  %v2142 = vadd.f32 %v2136, %v2140
  %v2143 = vadd.f32 %v2137, %v2141
  %v2144 = vmul.f32 %v2036, 1.25
  %v2145 = vmul.f32 %v2037, 1.25
  %v2146 = vmul.f32 %v2144, %v2048
  %v2147 = vmul.f32 %v2145, %v2049
  %v2148 = vmul.f32 %v2056, 1.25
  %v2149 = vmul.f32 %v2057, 1.25
  %v2150 = vmul.f32 %v2148, %v2062
  %v2151 = vmul.f32 %v2149, %v2063
  %v2152 = vadd.f32 %v2146, %v2150
  %v2153 = vadd.f32 %v2147, %v2151
  %v2154 = vmul.f32 %v1924, 0.8333333
  %v2155 = vmul.f32 %v1925, 0.8333333
  %v2156 = vmul.f32 %v2154, %v2072
  %v2157 = vmul.f32 %v2155, %v2073
  %v2158 = vmul.f32 %v1958, 0.8333333
  %v2159 = vmul.f32 %v1959, 0.8333333
  %v2160 = vmul.f32 %v2158, %v2082
  %v2161 = vmul.f32 %v2159, %v2083
  %v2162 = vadd.f32 %v2156, %v2160
  %v2163 = vadd.f32 %v2157, %v2161
  %v2164 = vmul.f32 %v1938, 0.8333333
  %v2165 = vmul.f32 %v1939, 0.8333333
  %v2166 = vmul.f32 %v2164, %v2082
  %v2167 = vmul.f32 %v2165, %v2083
  %v2168 = vmul.f32 %v1972, 0.8333333
  %v2169 = vmul.f32 %v1973, 0.8333333
  %v2170 = vmul.f32 %v2168, %v2092
  %v2171 = vmul.f32 %v2169, %v2093
  %v2172 = vadd.f32 %v2166, %v2170
  %v2173 = vadd.f32 %v2167, %v2171
  %v2174 = vmul.f32 %v1952, 0.8333333
  %v2175 = vmul.f32 %v1953, 0.8333333
  %v2176 = vmul.f32 %v2174, %v2092
  %v2177 = vmul.f32 %v2175, %v2093
  %v2178 = vmul.f32 %v1986, 0.8333333
  %v2179 = vmul.f32 %v1987, 0.8333333
  %v2180 = vmul.f32 %v2178, %v2102
  %v2181 = vmul.f32 %v2179, %v2103
  %v2182 = vadd.f32 %v2176, %v2180
  %v2183 = vadd.f32 %v2177, %v2181
  %v2184 = vmul.f32 %v1966, 0.8333333
  %v2185 = vmul.f32 %v1967, 0.8333333
  %v2186 = vmul.f32 %v2184, %v2102
  %v2187 = vmul.f32 %v2185, %v2103
  %v2188 = vmul.f32 %v2000, 0.8333333
  %v2189 = vmul.f32 %v2001, 0.8333333
  %v2190 = vmul.f32 %v2188, %v2112
  %v2191 = vmul.f32 %v2189, %v2113
  %v2192 = vadd.f32 %v2186, %v2190
  %v2193 = vadd.f32 %v2187, %v2191
  %v2194 = vmul.f32 %v1980, 0.8333333
  %v2195 = vmul.f32 %v1981, 0.8333333
  %v2196 = vmul.f32 %v2194, %v2112
  %v2197 = vmul.f32 %v2195, %v2113
  %v2198 = vmul.f32 %v2014, 0.8333333
  %v2199 = vmul.f32 %v2015, 0.8333333
  %v2200 = vmul.f32 %v2198, %v2122
  %v2201 = vmul.f32 %v2199, %v2123
  %v2202 = vadd.f32 %v2196, %v2200
  %v2203 = vadd.f32 %v2197, %v2201
  %v2204 = vmul.f32 %v1994, 0.8333333
  %v2205 = vmul.f32 %v1995, 0.8333333
  %v2206 = vmul.f32 %v2204, %v2122
  %v2207 = vmul.f32 %v2205, %v2123
  %v2208 = vmul.f32 %v2028, 0.8333333
  %v2209 = vmul.f32 %v2029, 0.8333333
  %v2210 = vmul.f32 %v2208, %v2132
  %v2211 = vmul.f32 %v2209, %v2133
  %v2212 = vadd.f32 %v2206, %v2210
  %v2213 = vadd.f32 %v2207, %v2211
  %v2214 = vmul.f32 %v2008, 0.8333333
  %v2215 = vmul.f32 %v2009, 0.8333333
  %v2216 = vmul.f32 %v2214, %v2132
  %v2217 = vmul.f32 %v2215, %v2133
  %v2218 = vmul.f32 %v2042, 0.8333333
  %v2219 = vmul.f32 %v2043, 0.8333333
  %v2220 = vmul.f32 %v2218, %v2142
  %v2221 = vmul.f32 %v2219, %v2143
  %v2222 = vadd.f32 %v2216, %v2220
  %v2223 = vadd.f32 %v2217, %v2221
  %v2224 = vmul.f32 %v2022, 0.8333333
  %v2225 = vmul.f32 %v2023, 0.8333333
  %v2226 = vmul.f32 %v2224, %v2142
  %v2227 = vmul.f32 %v2225, %v2143
  %v2228 = vmul.f32 %v2056, 0.8333333
  %v2229 = vmul.f32 %v2057, 0.8333333
  %v2230 = vmul.f32 %v2228, %v2152
  %v2231 = vmul.f32 %v2229, %v2153
  %v2232 = vadd.f32 %v2226, %v2230
  %v2233 = vadd.f32 %v2227, %v2231
  %2236 = vrot.lane.b32.xlu0 %v2172, 8
  %v2237 = vpop.permute.xlu0 %2236
  %2238 = vrot.lane.b32.xlu0 %v2173, 8
  %v2239 = vpop.permute.xlu0 %2238
  %2244 = vrot.lane.b32.xlu0 %v2182, 16
  %v2245 = vpop.permute.xlu0 %2244
  %2246 = vrot.lane.b32.xlu0 %v2183, 16
  %v2247 = vpop.permute.xlu0 %2246
  %2252 = vrot.lane.b32.xlu0 %v2192, 24
  %v2253 = vpop.permute.xlu0 %2252
  %2254 = vrot.lane.b32.xlu0 %v2193, 24
  %v2255 = vpop.permute.xlu0 %2254
  %2260 = vrot.lane.b32.xlu0 %v2202, 32
  %v2261 = vpop.permute.xlu0 %2260
  %2262 = vrot.lane.b32.xlu0 %v2203, 32
  %v2263 = vpop.permute.xlu0 %2262
  %2268 = vrot.lane.b32.xlu0 %v2212, 40
  %v2269 = vpop.permute.xlu0 %2268
  %2270 = vrot.lane.b32.xlu0 %v2213, 40
  %v2271 = vpop.permute.xlu0 %2270
  %2276 = vrot.lane.b32.xlu0 %v2222, 48
  %v2277 = vpop.permute.xlu0 %2276
  %2278 = vrot.lane.b32.xlu0 %v2223, 48
  %v2279 = vpop.permute.xlu0 %2278
  %2284 = vrot.lane.b32.xlu0 %v2232, 56
  %v2285 = vpop.permute.xlu0 %2284
  %2286 = vrot.lane.b32.xlu0 %v2233, 56
  %v2287 = vpop.permute.xlu0 %2286
  %v2290 = vsel %vm28, %v2162, %v2237
  %v2291 = vsel %vm28, %v2163, %v2239
  %v2292 = vsel %vm89, %v2290, %v2245
  %v2293 = vsel %vm89, %v2291, %v2247
  %vm2294 = vcmask 195584
  %v2295 = vsel %vm2294, %v2292, %v2253
  %v2296 = vsel %vm2294, %v2293, %v2255
  %v2297 = vsel %vm750, %v2295, %v2261
  %v2298 = vsel %vm750, %v2296, %v2263
  %vm2299 = vcmask 326656
  %v2300 = vsel %vm2299, %v2297, %v2269
  %v2301 = vsel %vm2299, %v2298, %v2271
  %v2302 = vsel %vm753, %v2300, %v2277
  %v2303 = vsel %vm753, %v2301, %v2279
  %vm2304 = vcmask 457728
  %v2305 = vsel %vm2304, %v2302, %v2285
  %v2306 = vsel %vm2304, %v2303, %v2287
  %v2307 = vpack.c.bf16 %v2306, %v2305
  %v2316 = vunpack.c.l.b16 %v1791
  %v2317 = vunpack.c.l.b16 %v1792
  %v2318 = vunpack.c.l.b16 %v1793
  %v2319 = vunpack.c.l.b16 %v1794
  %v2320 = vunpack.c.l.b16 %v1795
  %v2321 = vunpack.c.l.b16 %v1796
  %v2322 = vunpack.c.l.b16 %v1797
  %v2323 = vunpack.c.l.b16 %v1798
  %v2324 = vpack.c.b16 %v2317, %v2316
  %v2325 = vpack.c.b16 %v2319, %v2318
  %v2326 = vpack.c.b16 %v2321, %v2320
  %v2327 = vpack.c.b16 %v2323, %v2322
  %v2333 = vsel %vm756, %v2307, 0
  %2335 = vmatprep.subr.bf16.mxu0 0
  %2336 = vmatpush1.bf16.msra.mxu0 0
  %2337 = vmatprep.subr.bf16.mxu0 0
  %2338 = vmatpush1.bf16.msra.mxu0 0
  %2339 = vmatprep.subr.bf16.mxu0 0
  %2340 = vmatpush1.bf16.msra.mxu0 0
  %2341 = vmatprep.subr.bf16.mxu0 0
  %2342 = vmatpush1.bf16.msra.mxu0 0
  %2343 = vmatprep.subr.bf16.mxu0 0
  %2344 = vmatpush1.bf16.msra.mxu0 %v2327
  %2345 = vmatprep.subr.bf16.mxu0 0
  %2346 = vmatpush1.bf16.msra.mxu0 %v2326
  %2347 = vmatprep.subr.bf16.mxu0 0
  %2348 = vmatpush1.bf16.msra.mxu0 %v2325
  %2349 = vmatprep.subr.bf16.mxu0 0
  %2350 = vmatpush1.bf16.msra.mxu0 %v2324
  %2351 = vmatprep.subr.bf16.mxu0 0
  %2352 = vmatpush2.bf16.msra.mxu0 0
  %2353 = vmatprep.subr.bf16.mxu0 0
  %2354 = vmatpush2.bf16.msra.mxu0 0
  %2355 = vmatprep.subr.bf16.mxu0 0
  %2356 = vmatpush2.bf16.msra.mxu0 0
  %2357 = vmatprep.subr.bf16.mxu0 0
  %2358 = vmatpush2.bf16.msra.mxu0 0
  %2359 = vmatprep.subr.bf16.mxu0 0
  %2360 = vmatpush2.bf16.msra.mxu0 0
  %2361 = vmatprep.subr.bf16.mxu0 0
  %2362 = vmatpush2.bf16.msra.mxu0 0
  %2363 = vmatprep.subr.bf16.mxu0 0
  %2364 = vmatpush2.bf16.msra.mxu0 0
  %2365 = vmatprep.subr.bf16.mxu0 0
  %2366 = vmatpush2.bf16.msra.mxu0 0
  %2367 = vmatprep.mubr.bf16.mxu0 0
  %2368 = vmatmul.mubr.bf16.gmra.mxu0 %v2333
  %v2369 = vpop.f32.mrf.mxu0
  %v2370 = vadd.f32 0.0, %v2369
  %v2371 = vpop.f32.mrf.mxu0
  %v2372 = vpop.f32.mrf.mxu0
  %v2373 = vadd.f32 0.0, %v2372
  %v2374 = vpop.f32.mrf.mxu0
  %2375 = vdwg.mxu0
  %v2377 = vsel %vm28, %v1813, 0
  %v2380 = vsel %vm32, %v1790, 0
  %2382 = vmatprep.subr.bf16.mxu0 0
  %2383 = vmatpush1.bf16.msra.mxu0 0
  %2384 = vmatprep.subr.bf16.mxu0 0
  %2385 = vmatpush1.bf16.msra.mxu0 0
  %2386 = vmatprep.subr.bf16.mxu0 0
  %2387 = vmatpush1.bf16.msra.mxu0 0
  %2388 = vmatprep.subr.bf16.mxu0 0
  %2389 = vmatpush1.bf16.msra.mxu0 0
  %2390 = vmatprep.subr.bf16.mxu0 0
  %2391 = vmatpush1.bf16.msra.mxu0 0
  %2392 = vmatprep.subr.bf16.mxu0 0
  %2393 = vmatpush1.bf16.msra.mxu0 0
  %2394 = vmatprep.subr.bf16.mxu0 0
  %2395 = vmatpush1.bf16.msra.mxu0 0
  %2396 = vmatprep.subr.bf16.mxu0 0
  %2397 = vmatpush1.bf16.msra.mxu0 %v2380
  %2398 = vmatprep.subr.bf16.mxu0 0
  %2399 = vmatpush2.bf16.msra.mxu0 0
  %2400 = vmatprep.subr.bf16.mxu0 0
  %2401 = vmatpush2.bf16.msra.mxu0 0
  %2402 = vmatprep.subr.bf16.mxu0 0
  %2403 = vmatpush2.bf16.msra.mxu0 0
  %2404 = vmatprep.subr.bf16.mxu0 0
  %2405 = vmatpush2.bf16.msra.mxu0 0
  %2406 = vmatprep.subr.bf16.mxu0 0
  %2407 = vmatpush2.bf16.msra.mxu0 0
  %2408 = vmatprep.subr.bf16.mxu0 0
  %2409 = vmatpush2.bf16.msra.mxu0 0
  %2410 = vmatprep.subr.bf16.mxu0 0
  %2411 = vmatpush2.bf16.msra.mxu0 0
  %2412 = vmatprep.subr.bf16.mxu0 0
  %2413 = vmatpush2.bf16.msra.mxu0 0
  %2414 = vmatprep.mubr.bf16.mxu0 0
  %2415 = vmatmul.mubr.bf16.gmra.mxu0 %v2377
  %v2416 = vpop.f32.mrf.mxu0
  %v2417 = vadd.f32 %v2370, %v2416
  %v2418 = vpop.f32.mrf.mxu0
  %v2419 = vpop.f32.mrf.mxu0
  %v2420 = vadd.f32 %v2373, %v2419
  %v2421 = vpop.f32.mrf.mxu0
  %2422 = vdwg.mxu0
  %v2423 = vld [vmem:[%s3 + $0xe8] sm:$0xf]
  %v2424 = vld [vmem:[%s3 + $0xec] sm:$0xf]
  %v2425 = vld [vmem:[%s3 + $0xf0] sm:$0xf]
  %v2426 = vld [vmem:[%s3 + $0xf4] sm:$0xf]
  %v2427 = vld [vmem:[%s3 + $0xf8] sm:$0xf]
  %v2428 = vld [vmem:[%s3 + $0xfc] sm:$0xf]
  %v2429 = vld [vmem:[%s3 + $0x100] sm:$0xf]
  %v2430 = vld [vmem:[%s3 + $0x104] sm:$0xf]
  %v2431 = vld [vmem:[%s3 + $0x108] sm:$0xf]
  %v2432 = vld [vmem:[%s3 + $0x10c] sm:$0xf]
  %v2433 = vld [vmem:[%s3 + $0x110] sm:$0xf]
  %v2434 = vld [vmem:[%s3 + $0x114] sm:$0xf]
  %v2435 = vld [vmem:[%s3 + $0x118] sm:$0xf]
  %v2436 = vld [vmem:[%s3 + $0x11c] sm:$0xf]
  %v2437 = vld [vmem:[%s3 + $0x120] sm:$0xf]
  %v2438 = vld [vmem:[%s3 + $0x124] sm:$0xf]
  %v2439 = vld [vmem:[%s3 + $0x128] sm:$0xf]
  %v2440 = vld [vmem:[%s3 + $0x12c] sm:$0xf]
  %v2441 = vxor.u32 %v2417, 2147483648
  %v2442 = vxor.u32 %v2420, 2147483648
  %v2443 = vmul.f32 %v2441, 1.442695
  %v2444 = vpow.pop %v2443
  %v2445 = vmul.f32 %v2442, 1.442695
  %v2446 = vpow.pop %v2445
  %v2447 = vadd.f32 %v2444, 1.0
  %v2448 = vadd.f32 %v2446, 1.0
  %v2449 = vrcp.pop %v2447
  %v2450 = vmul.f32 1.0, %v2449
  %v2451 = vrcp.pop %v2448
  %v2452 = vmul.f32 1.0, %v2451
  %v2453 = vmul.f32 %v2417, %v2450
  %v2454 = vmul.f32 %v2420, %v2452
  %v2455 = vpack.c.bf16 %v2454, %v2453
  %vm2456 = vcmp.ge.f32.partialorder %v2417, -2.2
  %vm2457 = vcmp.ge.f32.partialorder %v2420, -2.2
  %vm2458 = vcmp.lt.f32.partialorder %v2417, -1.8
  %vm2459 = vcmp.lt.f32.partialorder %v2420, -1.8
  %vm2460 = vmand %vm2456, %vm2458
  %vm2461 = vmand %vm2457, %vm2459
  %v2462 = vsel %vm2460, 1, 0
  %v2463 = vsel %vm2461, 1, 0
  %v2464 = vcvt.s32.f32 %v2462
  %v2465 = vcvt.s32.f32 %v2463
  %vm2466 = vcmp.ge.f32.partialorder %v2417, -1.8
  %vm2467 = vcmp.ge.f32.partialorder %v2420, -1.8
  %vm2468 = vcmp.lt.f32.partialorder %v2417, -1.4
  %vm2469 = vcmp.lt.f32.partialorder %v2420, -1.4
  %vm2470 = vmand %vm2466, %vm2468
  %vm2471 = vmand %vm2467, %vm2469
  %v2472 = vsel %vm2470, 1, 0
  %v2473 = vsel %vm2471, 1, 0
  %v2474 = vcvt.s32.f32 %v2472
  %v2475 = vcvt.s32.f32 %v2473
  %vm2476 = vcmp.ge.f32.partialorder %v2417, -1.4
  %vm2477 = vcmp.ge.f32.partialorder %v2420, -1.4
  %vm2478 = vcmp.lt.f32.partialorder %v2417, -1.0
  %vm2479 = vcmp.lt.f32.partialorder %v2420, -1.0
  %vm2480 = vmand %vm2476, %vm2478
  %vm2481 = vmand %vm2477, %vm2479
  %v2482 = vsel %vm2480, 1, 0
  %v2483 = vsel %vm2481, 1, 0
  %v2484 = vcvt.s32.f32 %v2482
  %v2485 = vcvt.s32.f32 %v2483
  %vm2486 = vcmp.ge.f32.partialorder %v2417, -1.0
  %vm2487 = vcmp.ge.f32.partialorder %v2420, -1.0
  %vm2488 = vcmp.lt.f32.partialorder %v2417, -0.6
  %vm2489 = vcmp.lt.f32.partialorder %v2420, -0.6
  %vm2490 = vmand %vm2486, %vm2488
  %vm2491 = vmand %vm2487, %vm2489
  %v2492 = vsel %vm2490, 1, 0
  %v2493 = vsel %vm2491, 1, 0
  %v2494 = vcvt.s32.f32 %v2492
  %v2495 = vcvt.s32.f32 %v2493
  %vm2496 = vcmp.ge.f32.partialorder %v2417, -0.6
  %vm2497 = vcmp.ge.f32.partialorder %v2420, -0.6
  %vm2498 = vcmp.lt.f32.partialorder %v2417, -0.2
  %vm2499 = vcmp.lt.f32.partialorder %v2420, -0.2
  %vm2500 = vmand %vm2496, %vm2498
  %vm2501 = vmand %vm2497, %vm2499
  %v2502 = vsel %vm2500, 1, 0
  %v2503 = vsel %vm2501, 1, 0
  %v2504 = vcvt.s32.f32 %v2502
  %v2505 = vcvt.s32.f32 %v2503
  %vm2506 = vcmp.ge.f32.partialorder %v2417, -0.2
  %vm2507 = vcmp.ge.f32.partialorder %v2420, -0.2
  %vm2508 = vcmp.lt.f32.partialorder %v2417, 0.2
  %vm2509 = vcmp.lt.f32.partialorder %v2420, 0.2
  %vm2510 = vmand %vm2506, %vm2508
  %vm2511 = vmand %vm2507, %vm2509
  %v2512 = vsel %vm2510, 1, 0
  %v2513 = vsel %vm2511, 1, 0
  %v2514 = vcvt.s32.f32 %v2512
  %v2515 = vcvt.s32.f32 %v2513
  %vm2516 = vcmp.ge.f32.partialorder %v2417, 0.2
  %vm2517 = vcmp.ge.f32.partialorder %v2420, 0.2
  %vm2518 = vcmp.lt.f32.partialorder %v2417, 0.6
  %vm2519 = vcmp.lt.f32.partialorder %v2420, 0.6
  %vm2520 = vmand %vm2516, %vm2518
  %vm2521 = vmand %vm2517, %vm2519
  %v2522 = vsel %vm2520, 1, 0
  %v2523 = vsel %vm2521, 1, 0
  %v2524 = vcvt.s32.f32 %v2522
  %v2525 = vcvt.s32.f32 %v2523
  %vm2526 = vcmp.ge.f32.partialorder %v2417, 0.6
  %vm2527 = vcmp.ge.f32.partialorder %v2420, 0.6
  %vm2528 = vcmp.lt.f32.partialorder %v2417, 1.0
  %vm2529 = vcmp.lt.f32.partialorder %v2420, 1.0
  %vm2530 = vmand %vm2526, %vm2528
  %vm2531 = vmand %vm2527, %vm2529
  %v2532 = vsel %vm2530, 1, 0
  %v2533 = vsel %vm2531, 1, 0
  %v2534 = vcvt.s32.f32 %v2532
  %v2535 = vcvt.s32.f32 %v2533
  %vm2536 = vcmp.ge.f32.partialorder %v2417, 1.0
  %vm2537 = vcmp.ge.f32.partialorder %v2420, 1.0
  %vm2538 = vcmp.lt.f32.partialorder %v2417, 1.4
  %vm2539 = vcmp.lt.f32.partialorder %v2420, 1.4
  %vm2540 = vmand %vm2536, %vm2538
  %vm2541 = vmand %vm2537, %vm2539
  %v2542 = vsel %vm2540, 1, 0
  %v2543 = vsel %vm2541, 1, 0
  %v2544 = vcvt.s32.f32 %v2542
  %v2545 = vcvt.s32.f32 %v2543
  %vm2546 = vcmp.ge.f32.partialorder %v2417, 1.4
  %vm2547 = vcmp.ge.f32.partialorder %v2420, 1.4
  %vm2548 = vcmp.lt.f32.partialorder %v2417, 1.8
  %vm2549 = vcmp.lt.f32.partialorder %v2420, 1.8
  %vm2550 = vmand %vm2546, %vm2548
  %vm2551 = vmand %vm2547, %vm2549
  %v2552 = vsel %vm2550, 1, 0
  %v2553 = vsel %vm2551, 1, 0
  %v2554 = vcvt.s32.f32 %v2552
  %v2555 = vcvt.s32.f32 %v2553
  %vm2556 = vcmp.ge.f32.partialorder %v2417, 1.8
  %vm2557 = vcmp.ge.f32.partialorder %v2420, 1.8
  %vm2558 = vcmp.lt.f32.partialorder %v2417, 2.2
  %vm2559 = vcmp.lt.f32.partialorder %v2420, 2.2
  %vm2560 = vmand %vm2556, %vm2558
  %vm2561 = vmand %vm2557, %vm2559
  %v2562 = vsel %vm2560, 1, 0
  %v2563 = vsel %vm2561, 1, 0
  %v2564 = vcvt.s32.f32 %v2562
  %v2565 = vcvt.s32.f32 %v2563
  %v2566 = vsub.f32 %v2417, -2.2
  %v2567 = vsub.f32 %v2420, -2.2
  %v2568 = vmul.f32 %v2566, 2.5
  %v2569 = vmul.f32 %v2567, 2.5
  %v2570 = vmul.f32 %v2568, %v2464
  %v2571 = vmul.f32 %v2569, %v2465
  %v2572 = vsub.f32 -1.4, %v2417
  %v2573 = vsub.f32 -1.4, %v2420
  %v2574 = vmul.f32 %v2572, 2.5
  %v2575 = vmul.f32 %v2573, 2.5
  %v2576 = vmul.f32 %v2574, %v2474
  %v2577 = vmul.f32 %v2575, %v2475
  %v2578 = vadd.f32 %v2570, %v2576
  %v2579 = vadd.f32 %v2571, %v2577
  %v2580 = vsub.f32 %v2417, -1.8
  %v2581 = vsub.f32 %v2420, -1.8
  %v2582 = vmul.f32 %v2580, 2.5
  %v2583 = vmul.f32 %v2581, 2.5
  %v2584 = vmul.f32 %v2582, %v2474
  %v2585 = vmul.f32 %v2583, %v2475
  %v2586 = vsub.f32 -1.0, %v2417
  %v2587 = vsub.f32 -1.0, %v2420
  %v2588 = vmul.f32 %v2586, 2.5
  %v2589 = vmul.f32 %v2587, 2.5
  %v2590 = vmul.f32 %v2588, %v2484
  %v2591 = vmul.f32 %v2589, %v2485
  %v2592 = vadd.f32 %v2584, %v2590
  %v2593 = vadd.f32 %v2585, %v2591
  %v2594 = vsub.f32 %v2417, -1.4
  %v2595 = vsub.f32 %v2420, -1.4
  %v2596 = vmul.f32 %v2594, 2.5
  %v2597 = vmul.f32 %v2595, 2.5
  %v2598 = vmul.f32 %v2596, %v2484
  %v2599 = vmul.f32 %v2597, %v2485
  %v2600 = vsub.f32 -0.6, %v2417
  %v2601 = vsub.f32 -0.6, %v2420
  %v2602 = vmul.f32 %v2600, 2.5
  %v2603 = vmul.f32 %v2601, 2.5
  %v2604 = vmul.f32 %v2602, %v2494
  %v2605 = vmul.f32 %v2603, %v2495
  %v2606 = vadd.f32 %v2598, %v2604
  %v2607 = vadd.f32 %v2599, %v2605
  %v2608 = vsub.f32 %v2417, -1.0
  %v2609 = vsub.f32 %v2420, -1.0
  %v2610 = vmul.f32 %v2608, 2.5
  %v2611 = vmul.f32 %v2609, 2.5
  %v2612 = vmul.f32 %v2610, %v2494
  %v2613 = vmul.f32 %v2611, %v2495
  %v2614 = vsub.f32 -0.2, %v2417
  %v2615 = vsub.f32 -0.2, %v2420
  %v2616 = vmul.f32 %v2614, 2.5
  %v2617 = vmul.f32 %v2615, 2.5
  %v2618 = vmul.f32 %v2616, %v2504
  %v2619 = vmul.f32 %v2617, %v2505
  %v2620 = vadd.f32 %v2612, %v2618
  %v2621 = vadd.f32 %v2613, %v2619
  %v2622 = vsub.f32 %v2417, -0.6
  %v2623 = vsub.f32 %v2420, -0.6
  %v2624 = vmul.f32 %v2622, 2.5
  %v2625 = vmul.f32 %v2623, 2.5
  %v2626 = vmul.f32 %v2624, %v2504
  %v2627 = vmul.f32 %v2625, %v2505
  %v2628 = vsub.f32 0.2, %v2417
  %v2629 = vsub.f32 0.2, %v2420
  %v2630 = vmul.f32 %v2628, 2.5
  %v2631 = vmul.f32 %v2629, 2.5
  %v2632 = vmul.f32 %v2630, %v2514
  %v2633 = vmul.f32 %v2631, %v2515
  %v2634 = vadd.f32 %v2626, %v2632
  %v2635 = vadd.f32 %v2627, %v2633
  %v2636 = vsub.f32 %v2417, -0.2
  %v2637 = vsub.f32 %v2420, -0.2
  %v2638 = vmul.f32 %v2636, 2.5
  %v2639 = vmul.f32 %v2637, 2.5
  %v2640 = vmul.f32 %v2638, %v2514
  %v2641 = vmul.f32 %v2639, %v2515
  %v2642 = vsub.f32 0.6, %v2417
  %v2643 = vsub.f32 0.6, %v2420
  %v2644 = vmul.f32 %v2642, 2.5
  %v2645 = vmul.f32 %v2643, 2.5
  %v2646 = vmul.f32 %v2644, %v2524
  %v2647 = vmul.f32 %v2645, %v2525
  %v2648 = vadd.f32 %v2640, %v2646
  %v2649 = vadd.f32 %v2641, %v2647
  %v2650 = vsub.f32 %v2417, 0.2
  %v2651 = vsub.f32 %v2420, 0.2
  %v2652 = vmul.f32 %v2650, 2.5
  %v2653 = vmul.f32 %v2651, 2.5
  %v2654 = vmul.f32 %v2652, %v2524
  %v2655 = vmul.f32 %v2653, %v2525
  %v2656 = vsub.f32 1.0, %v2417
  %v2657 = vsub.f32 1.0, %v2420
  %v2658 = vmul.f32 %v2656, 2.5
  %v2659 = vmul.f32 %v2657, 2.5
  %v2660 = vmul.f32 %v2658, %v2534
  %v2661 = vmul.f32 %v2659, %v2535
  %v2662 = vadd.f32 %v2654, %v2660
  %v2663 = vadd.f32 %v2655, %v2661
  %v2664 = vsub.f32 %v2417, 0.6
  %v2665 = vsub.f32 %v2420, 0.6
  %v2666 = vmul.f32 %v2664, 2.5
  %v2667 = vmul.f32 %v2665, 2.5
  %v2668 = vmul.f32 %v2666, %v2534
  %v2669 = vmul.f32 %v2667, %v2535
  %v2670 = vsub.f32 1.4, %v2417
  %v2671 = vsub.f32 1.4, %v2420
  %v2672 = vmul.f32 %v2670, 2.5
  %v2673 = vmul.f32 %v2671, 2.5
  %v2674 = vmul.f32 %v2672, %v2544
  %v2675 = vmul.f32 %v2673, %v2545
  %v2676 = vadd.f32 %v2668, %v2674
  %v2677 = vadd.f32 %v2669, %v2675
  %v2678 = vsub.f32 %v2417, 1.0
  %v2679 = vsub.f32 %v2420, 1.0
  %v2680 = vmul.f32 %v2678, 2.5
  %v2681 = vmul.f32 %v2679, 2.5
  %v2682 = vmul.f32 %v2680, %v2544
  %v2683 = vmul.f32 %v2681, %v2545
  %v2684 = vsub.f32 1.8, %v2417
  %v2685 = vsub.f32 1.8, %v2420
  %v2686 = vmul.f32 %v2684, 2.5
  %v2687 = vmul.f32 %v2685, 2.5
  %v2688 = vmul.f32 %v2686, %v2554
  %v2689 = vmul.f32 %v2687, %v2555
  %v2690 = vadd.f32 %v2682, %v2688
  %v2691 = vadd.f32 %v2683, %v2689
  %v2692 = vsub.f32 %v2417, 1.4
  %v2693 = vsub.f32 %v2420, 1.4
  %v2694 = vmul.f32 %v2692, 2.5
  %v2695 = vmul.f32 %v2693, 2.5
  %v2696 = vmul.f32 %v2694, %v2554
  %v2697 = vmul.f32 %v2695, %v2555
  %v2698 = vsub.f32 2.2, %v2417
  %v2699 = vsub.f32 2.2, %v2420
  %v2700 = vmul.f32 %v2698, 2.5
  %v2701 = vmul.f32 %v2699, 2.5
  %v2702 = vmul.f32 %v2700, %v2564
  %v2703 = vmul.f32 %v2701, %v2565
  %v2704 = vadd.f32 %v2696, %v2702
  %v2705 = vadd.f32 %v2697, %v2703
  %v2706 = vmul.f32 %v2566, 1.25
  %v2707 = vmul.f32 %v2567, 1.25
  %v2708 = vmul.f32 %v2706, %v2578
  %v2709 = vmul.f32 %v2707, %v2579
  %v2710 = vmul.f32 %v2586, 1.25
  %v2711 = vmul.f32 %v2587, 1.25
  %v2712 = vmul.f32 %v2710, %v2592
  %v2713 = vmul.f32 %v2711, %v2593
  %v2714 = vadd.f32 %v2708, %v2712
  %v2715 = vadd.f32 %v2709, %v2713
  %v2716 = vmul.f32 %v2580, 1.25
  %v2717 = vmul.f32 %v2581, 1.25
  %v2718 = vmul.f32 %v2716, %v2592
  %v2719 = vmul.f32 %v2717, %v2593
  %v2720 = vmul.f32 %v2600, 1.25
  %v2721 = vmul.f32 %v2601, 1.25
  %v2722 = vmul.f32 %v2720, %v2606
  %v2723 = vmul.f32 %v2721, %v2607
  %v2724 = vadd.f32 %v2718, %v2722
  %v2725 = vadd.f32 %v2719, %v2723
  %v2726 = vmul.f32 %v2594, 1.25
  %v2727 = vmul.f32 %v2595, 1.25
  %v2728 = vmul.f32 %v2726, %v2606
  %v2729 = vmul.f32 %v2727, %v2607
  %v2730 = vmul.f32 %v2614, 1.25
  %v2731 = vmul.f32 %v2615, 1.25
  %v2732 = vmul.f32 %v2730, %v2620
  %v2733 = vmul.f32 %v2731, %v2621
  %v2734 = vadd.f32 %v2728, %v2732
  %v2735 = vadd.f32 %v2729, %v2733
  %v2736 = vmul.f32 %v2608, 1.25
  %v2737 = vmul.f32 %v2609, 1.25
  %v2738 = vmul.f32 %v2736, %v2620
  %v2739 = vmul.f32 %v2737, %v2621
  %v2740 = vmul.f32 %v2628, 1.25
  %v2741 = vmul.f32 %v2629, 1.25
  %v2742 = vmul.f32 %v2740, %v2634
  %v2743 = vmul.f32 %v2741, %v2635
  %v2744 = vadd.f32 %v2738, %v2742
  %v2745 = vadd.f32 %v2739, %v2743
  %v2746 = vmul.f32 %v2622, 1.25
  %v2747 = vmul.f32 %v2623, 1.25
  %v2748 = vmul.f32 %v2746, %v2634
  %v2749 = vmul.f32 %v2747, %v2635
  %v2750 = vmul.f32 %v2642, 1.25
  %v2751 = vmul.f32 %v2643, 1.25
  %v2752 = vmul.f32 %v2750, %v2648
  %v2753 = vmul.f32 %v2751, %v2649
  %v2754 = vadd.f32 %v2748, %v2752
  %v2755 = vadd.f32 %v2749, %v2753
  %v2756 = vmul.f32 %v2636, 1.25
  %v2757 = vmul.f32 %v2637, 1.25
  %v2758 = vmul.f32 %v2756, %v2648
  %v2759 = vmul.f32 %v2757, %v2649
  %v2760 = vmul.f32 %v2656, 1.25
  %v2761 = vmul.f32 %v2657, 1.25
  %v2762 = vmul.f32 %v2760, %v2662
  %v2763 = vmul.f32 %v2761, %v2663
  %v2764 = vadd.f32 %v2758, %v2762
  %v2765 = vadd.f32 %v2759, %v2763
  %v2766 = vmul.f32 %v2650, 1.25
  %v2767 = vmul.f32 %v2651, 1.25
  %v2768 = vmul.f32 %v2766, %v2662
  %v2769 = vmul.f32 %v2767, %v2663
  %v2770 = vmul.f32 %v2670, 1.25
  %v2771 = vmul.f32 %v2671, 1.25
  %v2772 = vmul.f32 %v2770, %v2676
  %v2773 = vmul.f32 %v2771, %v2677
  %v2774 = vadd.f32 %v2768, %v2772
  %v2775 = vadd.f32 %v2769, %v2773
  %v2776 = vmul.f32 %v2664, 1.25
  %v2777 = vmul.f32 %v2665, 1.25
  %v2778 = vmul.f32 %v2776, %v2676
  %v2779 = vmul.f32 %v2777, %v2677
  %v2780 = vmul.f32 %v2684, 1.25
  %v2781 = vmul.f32 %v2685, 1.25
  %v2782 = vmul.f32 %v2780, %v2690
  %v2783 = vmul.f32 %v2781, %v2691
  %v2784 = vadd.f32 %v2778, %v2782
  %v2785 = vadd.f32 %v2779, %v2783
  %v2786 = vmul.f32 %v2678, 1.25
  %v2787 = vmul.f32 %v2679, 1.25
  %v2788 = vmul.f32 %v2786, %v2690
  %v2789 = vmul.f32 %v2787, %v2691
  %v2790 = vmul.f32 %v2698, 1.25
  %v2791 = vmul.f32 %v2699, 1.25
  %v2792 = vmul.f32 %v2790, %v2704
  %v2793 = vmul.f32 %v2791, %v2705
  %v2794 = vadd.f32 %v2788, %v2792
  %v2795 = vadd.f32 %v2789, %v2793
  %v2796 = vmul.f32 %v2566, 0.8333333
  %v2797 = vmul.f32 %v2567, 0.8333333
  %v2798 = vmul.f32 %v2796, %v2714
  %v2799 = vmul.f32 %v2797, %v2715
  %v2800 = vmul.f32 %v2600, 0.8333333
  %v2801 = vmul.f32 %v2601, 0.8333333
  %v2802 = vmul.f32 %v2800, %v2724
  %v2803 = vmul.f32 %v2801, %v2725
  %v2804 = vadd.f32 %v2798, %v2802
  %v2805 = vadd.f32 %v2799, %v2803
  %v2806 = vmul.f32 %v2580, 0.8333333
  %v2807 = vmul.f32 %v2581, 0.8333333
  %v2808 = vmul.f32 %v2806, %v2724
  %v2809 = vmul.f32 %v2807, %v2725
  %v2810 = vmul.f32 %v2614, 0.8333333
  %v2811 = vmul.f32 %v2615, 0.8333333
  %v2812 = vmul.f32 %v2810, %v2734
  %v2813 = vmul.f32 %v2811, %v2735
  %v2814 = vadd.f32 %v2808, %v2812
  %v2815 = vadd.f32 %v2809, %v2813
  %v2816 = vmul.f32 %v2594, 0.8333333
  %v2817 = vmul.f32 %v2595, 0.8333333
  %v2818 = vmul.f32 %v2816, %v2734
  %v2819 = vmul.f32 %v2817, %v2735
  %v2820 = vmul.f32 %v2628, 0.8333333
  %v2821 = vmul.f32 %v2629, 0.8333333
  %v2822 = vmul.f32 %v2820, %v2744
  %v2823 = vmul.f32 %v2821, %v2745
  %v2824 = vadd.f32 %v2818, %v2822
  %v2825 = vadd.f32 %v2819, %v2823
  %v2826 = vmul.f32 %v2608, 0.8333333
  %v2827 = vmul.f32 %v2609, 0.8333333
  %v2828 = vmul.f32 %v2826, %v2744
  %v2829 = vmul.f32 %v2827, %v2745
  %v2830 = vmul.f32 %v2642, 0.8333333
  %v2831 = vmul.f32 %v2643, 0.8333333
  %v2832 = vmul.f32 %v2830, %v2754
  %v2833 = vmul.f32 %v2831, %v2755
  %v2834 = vadd.f32 %v2828, %v2832
  %v2835 = vadd.f32 %v2829, %v2833
  %v2836 = vmul.f32 %v2622, 0.8333333
  %v2837 = vmul.f32 %v2623, 0.8333333
  %v2838 = vmul.f32 %v2836, %v2754
  %v2839 = vmul.f32 %v2837, %v2755
  %v2840 = vmul.f32 %v2656, 0.8333333
  %v2841 = vmul.f32 %v2657, 0.8333333
  %v2842 = vmul.f32 %v2840, %v2764
  %v2843 = vmul.f32 %v2841, %v2765
  %v2844 = vadd.f32 %v2838, %v2842
  %v2845 = vadd.f32 %v2839, %v2843
  %v2846 = vmul.f32 %v2636, 0.8333333
  %v2847 = vmul.f32 %v2637, 0.8333333
  %v2848 = vmul.f32 %v2846, %v2764
  %v2849 = vmul.f32 %v2847, %v2765
  %v2850 = vmul.f32 %v2670, 0.8333333
  %v2851 = vmul.f32 %v2671, 0.8333333
  %v2852 = vmul.f32 %v2850, %v2774
  %v2853 = vmul.f32 %v2851, %v2775
  %v2854 = vadd.f32 %v2848, %v2852
  %v2855 = vadd.f32 %v2849, %v2853
  %v2856 = vmul.f32 %v2650, 0.8333333
  %v2857 = vmul.f32 %v2651, 0.8333333
  %v2858 = vmul.f32 %v2856, %v2774
  %v2859 = vmul.f32 %v2857, %v2775
  %v2860 = vmul.f32 %v2684, 0.8333333
  %v2861 = vmul.f32 %v2685, 0.8333333
  %v2862 = vmul.f32 %v2860, %v2784
  %v2863 = vmul.f32 %v2861, %v2785
  %v2864 = vadd.f32 %v2858, %v2862
  %v2865 = vadd.f32 %v2859, %v2863
  %v2866 = vmul.f32 %v2664, 0.8333333
  %v2867 = vmul.f32 %v2665, 0.8333333
  %v2868 = vmul.f32 %v2866, %v2784
  %v2869 = vmul.f32 %v2867, %v2785
  %v2870 = vmul.f32 %v2698, 0.8333333
  %v2871 = vmul.f32 %v2699, 0.8333333
  %v2872 = vmul.f32 %v2870, %v2794
  %v2873 = vmul.f32 %v2871, %v2795
  %v2874 = vadd.f32 %v2868, %v2872
  %v2875 = vadd.f32 %v2869, %v2873
  %2878 = vrot.lane.b32.xlu0 %v2814, 16
  %v2879 = vpop.permute.xlu0 %2878
  %2880 = vrot.lane.b32.xlu0 %v2815, 16
  %v2881 = vpop.permute.xlu0 %2880
  %2886 = vrot.lane.b32.xlu0 %v2824, 32
  %v2887 = vpop.permute.xlu0 %2886
  %2888 = vrot.lane.b32.xlu0 %v2825, 32
  %v2889 = vpop.permute.xlu0 %2888
  %2894 = vrot.lane.b32.xlu0 %v2834, 48
  %v2895 = vpop.permute.xlu0 %2894
  %2896 = vrot.lane.b32.xlu0 %v2835, 48
  %v2897 = vpop.permute.xlu0 %2896
  %2902 = vrot.lane.b32.xlu0 %v2844, 64
  %v2903 = vpop.permute.xlu0 %2902
  %2904 = vrot.lane.b32.xlu0 %v2845, 64
  %v2905 = vpop.permute.xlu0 %2904
  %2910 = vrot.lane.b32.xlu0 %v2854, 80
  %v2911 = vpop.permute.xlu0 %2910
  %2912 = vrot.lane.b32.xlu0 %v2855, 80
  %v2913 = vpop.permute.xlu0 %2912
  %2918 = vrot.lane.b32.xlu0 %v2864, 96
  %v2919 = vpop.permute.xlu0 %2918
  %2920 = vrot.lane.b32.xlu0 %v2865, 96
  %v2921 = vpop.permute.xlu0 %2920
  %2926 = vrot.lane.b32.xlu0 %v2874, 112
  %v2927 = vpop.permute.xlu0 %2926
  %2928 = vrot.lane.b32.xlu0 %v2875, 112
  %v2929 = vpop.permute.xlu0 %2928
  %v2932 = vsel %vm89, %v2804, %v2879
  %v2933 = vsel %vm89, %v2805, %v2881
  %v2934 = vsel %vm750, %v2932, %v2887
  %v2935 = vsel %vm750, %v2933, %v2889
  %v2936 = vsel %vm753, %v2934, %v2895
  %v2937 = vsel %vm753, %v2935, %v2897
  %v2938 = vsel %vm756, %v2936, %v2903
  %v2939 = vsel %vm756, %v2937, %v2905
  %v2940 = vsel %vm759, %v2938, %v2911
  %v2941 = vsel %vm759, %v2939, %v2913
  %v2942 = vsel %vm762, %v2940, %v2919
  %v2943 = vsel %vm762, %v2941, %v2921
  %v2944 = vsel %vm765, %v2942, %v2927
  %v2945 = vsel %vm765, %v2943, %v2929
  %v2946 = vpack.c.bf16 %v2945, %v2944
  %v2963 = vunpack.c.l.b16 %v2425
  %v2964 = vunpack.c.l.b16 %v2426
  %v2965 = vunpack.c.l.b16 %v2427
  %v2966 = vunpack.c.l.b16 %v2428
  %v2967 = vunpack.c.l.b16 %v2429
  %v2968 = vunpack.c.l.b16 %v2430
  %v2969 = vunpack.c.l.b16 %v2431
  %v2970 = vunpack.c.l.b16 %v2432
  %v2971 = vunpack.c.l.b16 %v2433
  %v2972 = vunpack.c.l.b16 %v2434
  %v2973 = vunpack.c.l.b16 %v2435
  %v2974 = vunpack.c.l.b16 %v2436
  %v2975 = vunpack.c.l.b16 %v2437
  %v2976 = vunpack.c.l.b16 %v2438
  %v2977 = vunpack.c.l.b16 %v2439
  %v2978 = vunpack.c.l.b16 %v2440
  %v2979 = vpack.c.b16 %v2964, %v2963
  %v2980 = vpack.c.b16 %v2966, %v2965
  %v2981 = vpack.c.b16 %v2968, %v2967
  %v2982 = vpack.c.b16 %v2970, %v2969
  %v2983 = vpack.c.b16 %v2972, %v2971
  %v2984 = vpack.c.b16 %v2974, %v2973
  %v2985 = vpack.c.b16 %v2976, %v2975
  %v2986 = vpack.c.b16 %v2978, %v2977
  %2995 = vmatprep.subr.bf16.mxu0 0
  %2996 = vmatpush1.bf16.msra.mxu0 %v2986
  %2997 = vmatprep.subr.bf16.mxu0 0
  %2998 = vmatpush1.bf16.msra.mxu0 %v2985
  %2999 = vmatprep.subr.bf16.mxu0 0
  %3000 = vmatpush1.bf16.msra.mxu0 %v2984
  %3001 = vmatprep.subr.bf16.mxu0 0
  %3002 = vmatpush1.bf16.msra.mxu0 %v2983
  %3003 = vmatprep.subr.bf16.mxu0 0
  %3004 = vmatpush1.bf16.msra.mxu0 %v2982
  %3005 = vmatprep.subr.bf16.mxu0 0
  %3006 = vmatpush1.bf16.msra.mxu0 %v2981
  %3007 = vmatprep.subr.bf16.mxu0 0
  %3008 = vmatpush1.bf16.msra.mxu0 %v2980
  %3009 = vmatprep.subr.bf16.mxu0 0
  %3010 = vmatpush1.bf16.msra.mxu0 %v2979
  %3011 = vmatprep.subr.bf16.mxu0 0
  %3012 = vmatpush2.bf16.msra.mxu0 0
  %3013 = vmatprep.subr.bf16.mxu0 0
  %3014 = vmatpush2.bf16.msra.mxu0 0
  %3015 = vmatprep.subr.bf16.mxu0 0
  %3016 = vmatpush2.bf16.msra.mxu0 0
  %3017 = vmatprep.subr.bf16.mxu0 0
  %3018 = vmatpush2.bf16.msra.mxu0 0
  %3019 = vmatprep.subr.bf16.mxu0 0
  %3020 = vmatpush2.bf16.msra.mxu0 0
  %3021 = vmatprep.subr.bf16.mxu0 0
  %3022 = vmatpush2.bf16.msra.mxu0 0
  %3023 = vmatprep.subr.bf16.mxu0 0
  %3024 = vmatpush2.bf16.msra.mxu0 0
  %3025 = vmatprep.subr.bf16.mxu0 0
  %3026 = vmatpush2.bf16.msra.mxu0 0
  %3027 = vmatprep.mubr.bf16.mxu0 0
  %3028 = vmatmul.mubr.bf16.gmra.mxu0 %v2946
  %v3029 = vpop.f32.mrf.mxu0
  %v3030 = vadd.f32 0.0, %v3029
  %v3031 = vpop.f32.mrf.mxu0
  %v3032 = vpop.f32.mrf.mxu0
  %v3033 = vadd.f32 0.0, %v3032
  %v3034 = vpop.f32.mrf.mxu0
  %3035 = vdwg.mxu0
  %v3038 = vunpack.c.l.b16 %v2423
  %v3039 = vunpack.c.l.b16 %v2424
  %v3040 = vpack.c.b16 %v3039, %v3038
  %v3043 = vsel %vm89, %v2455, 0
  %3045 = vmatprep.subr.bf16.mxu0 0
  %3046 = vmatpush1.bf16.msra.mxu0 0
  %3047 = vmatprep.subr.bf16.mxu0 0
  %3048 = vmatpush1.bf16.msra.mxu0 0
  %3049 = vmatprep.subr.bf16.mxu0 0
  %3050 = vmatpush1.bf16.msra.mxu0 0
  %3051 = vmatprep.subr.bf16.mxu0 0
  %3052 = vmatpush1.bf16.msra.mxu0 0
  %3053 = vmatprep.subr.bf16.mxu0 0
  %3054 = vmatpush1.bf16.msra.mxu0 0
  %3055 = vmatprep.subr.bf16.mxu0 0
  %3056 = vmatpush1.bf16.msra.mxu0 0
  %3057 = vmatprep.subr.bf16.mxu0 0
  %3058 = vmatpush1.bf16.msra.mxu0 0
  %3059 = vmatprep.subr.bf16.mxu0 0
  %3060 = vmatpush1.bf16.msra.mxu0 %v3040
  %3061 = vmatprep.subr.bf16.mxu0 0
  %3062 = vmatpush2.bf16.msra.mxu0 0
  %3063 = vmatprep.subr.bf16.mxu0 0
  %3064 = vmatpush2.bf16.msra.mxu0 0
  %3065 = vmatprep.subr.bf16.mxu0 0
  %3066 = vmatpush2.bf16.msra.mxu0 0
  %3067 = vmatprep.subr.bf16.mxu0 0
  %3068 = vmatpush2.bf16.msra.mxu0 0
  %3069 = vmatprep.subr.bf16.mxu0 0
  %3070 = vmatpush2.bf16.msra.mxu0 0
  %3071 = vmatprep.subr.bf16.mxu0 0
  %3072 = vmatpush2.bf16.msra.mxu0 0
  %3073 = vmatprep.subr.bf16.mxu0 0
  %3074 = vmatpush2.bf16.msra.mxu0 0
  %3075 = vmatprep.subr.bf16.mxu0 0
  %3076 = vmatpush2.bf16.msra.mxu0 0
  %3077 = vmatprep.mubr.bf16.mxu0 0
  %3078 = vmatmul.mubr.bf16.gmra.mxu0 %v3043
  %v3079 = vpop.f32.mrf.mxu0
  %v3080 = vadd.f32 %v3030, %v3079
  %v3081 = vpop.f32.mrf.mxu0
  %v3082 = vpop.f32.mrf.mxu0
  %v3083 = vadd.f32 %v3033, %v3082
  %v3084 = vpop.f32.mrf.mxu0
  %3085 = vdwg.mxu0
  %v3086 = vxor.u32 %v3080, 2147483648
  %v3087 = vxor.u32 %v3083, 2147483648
  %v3088 = vmul.f32 %v3086, 1.442695
  %v3089 = vpow.pop %v3088
  %v3090 = vmul.f32 %v3087, 1.442695
  %v3091 = vpow.pop %v3090
  %v3092 = vadd.f32 %v3089, 1.0
  %v3093 = vadd.f32 %v3091, 1.0
  %v3094 = vrcp.pop %v3092
  %v3095 = vmul.f32 1.0, %v3094
  %v3096 = vrcp.pop %v3093
  %v3097 = vmul.f32 1.0, %v3096
  %v3098 = vld [vmem:[%s3 + $0x130] sm:$0xf]
  %v3099 = vld [vmem:[%s3 + $0x138] sm:$0xf]
  %v3100 = vld [vmem:[%s3 + $0x13c] sm:$0xf]
  %v3101 = vld [vmem:[%s3 + $0x140] sm:$0xf]
  %v3102 = vld [vmem:[%s3 + $0x144] sm:$0xf]
  %v3103 = vld [vmem:[%s3 + $0x148] sm:$0xf]
  %v3104 = vld [vmem:[%s3 + $0x14c] sm:$0xf]
  %v3105 = vld [vmem:[%s3 + $0x150] sm:$0xf]
  %v3106 = vld [vmem:[%s3 + $0x154] sm:$0xf]
  %v3107 = vxor.u32 %v902, 2147483648
  %v3108 = vxor.u32 %v905, 2147483648
  %v3109 = vmul.f32 %v3107, 1.442695
  %v3110 = vpow.pop %v3109
  %v3111 = vmul.f32 %v3108, 1.442695
  %v3112 = vpow.pop %v3111
  %v3113 = vadd.f32 %v3110, 1.0
  %v3114 = vadd.f32 %v3112, 1.0
  %v3115 = vrcp.pop %v3113
  %v3116 = vmul.f32 1.0, %v3115
  %v3117 = vrcp.pop %v3114
  %v3118 = vmul.f32 1.0, %v3117
  %v3119 = vmul.f32 %v902, %v3116
  %v3120 = vmul.f32 %v905, %v3118
  %v3121 = vpack.c.bf16 %v3120, %v3119
  %vm3122 = vcmp.ge.f32.partialorder %v902, -2.2
  %vm3123 = vcmp.ge.f32.partialorder %v905, -2.2
  %vm3124 = vcmp.lt.f32.partialorder %v902, -1.8
  %vm3125 = vcmp.lt.f32.partialorder %v905, -1.8
  %vm3126 = vmand %vm3122, %vm3124
  %vm3127 = vmand %vm3123, %vm3125
  %v3128 = vsel %vm3126, 1, 0
  %v3129 = vsel %vm3127, 1, 0
  %v3130 = vcvt.s32.f32 %v3128
  %v3131 = vcvt.s32.f32 %v3129
  %vm3132 = vcmp.ge.f32.partialorder %v902, -1.8
  %vm3133 = vcmp.ge.f32.partialorder %v905, -1.8
  %vm3134 = vcmp.lt.f32.partialorder %v902, -1.4
  %vm3135 = vcmp.lt.f32.partialorder %v905, -1.4
  %vm3136 = vmand %vm3132, %vm3134
  %vm3137 = vmand %vm3133, %vm3135
  %v3138 = vsel %vm3136, 1, 0
  %v3139 = vsel %vm3137, 1, 0
  %v3140 = vcvt.s32.f32 %v3138
  %v3141 = vcvt.s32.f32 %v3139
  %vm3142 = vcmp.ge.f32.partialorder %v902, -1.4
  %vm3143 = vcmp.ge.f32.partialorder %v905, -1.4
  %vm3144 = vcmp.lt.f32.partialorder %v902, -1.0
  %vm3145 = vcmp.lt.f32.partialorder %v905, -1.0
  %vm3146 = vmand %vm3142, %vm3144
  %vm3147 = vmand %vm3143, %vm3145
  %v3148 = vsel %vm3146, 1, 0
  %v3149 = vsel %vm3147, 1, 0
  %v3150 = vcvt.s32.f32 %v3148
  %v3151 = vcvt.s32.f32 %v3149
  %vm3152 = vcmp.ge.f32.partialorder %v902, -1.0
  %vm3153 = vcmp.ge.f32.partialorder %v905, -1.0
  %vm3154 = vcmp.lt.f32.partialorder %v902, -0.6
  %vm3155 = vcmp.lt.f32.partialorder %v905, -0.6
  %vm3156 = vmand %vm3152, %vm3154
  %vm3157 = vmand %vm3153, %vm3155
  %v3158 = vsel %vm3156, 1, 0
  %v3159 = vsel %vm3157, 1, 0
  %v3160 = vcvt.s32.f32 %v3158
  %v3161 = vcvt.s32.f32 %v3159
  %vm3162 = vcmp.ge.f32.partialorder %v902, -0.6
  %vm3163 = vcmp.ge.f32.partialorder %v905, -0.6
  %vm3164 = vcmp.lt.f32.partialorder %v902, -0.2
  %vm3165 = vcmp.lt.f32.partialorder %v905, -0.2
  %vm3166 = vmand %vm3162, %vm3164
  %vm3167 = vmand %vm3163, %vm3165
  %v3168 = vsel %vm3166, 1, 0
  %v3169 = vsel %vm3167, 1, 0
  %v3170 = vcvt.s32.f32 %v3168
  %v3171 = vcvt.s32.f32 %v3169
  %vm3172 = vcmp.ge.f32.partialorder %v902, -0.2
  %vm3173 = vcmp.ge.f32.partialorder %v905, -0.2
  %vm3174 = vcmp.lt.f32.partialorder %v902, 0.2
  %vm3175 = vcmp.lt.f32.partialorder %v905, 0.2
  %vm3176 = vmand %vm3172, %vm3174
  %vm3177 = vmand %vm3173, %vm3175
  %v3178 = vsel %vm3176, 1, 0
  %v3179 = vsel %vm3177, 1, 0
  %v3180 = vcvt.s32.f32 %v3178
  %v3181 = vcvt.s32.f32 %v3179
  %vm3182 = vcmp.ge.f32.partialorder %v902, 0.2
  %vm3183 = vcmp.ge.f32.partialorder %v905, 0.2
  %vm3184 = vcmp.lt.f32.partialorder %v902, 0.6
  %vm3185 = vcmp.lt.f32.partialorder %v905, 0.6
  %vm3186 = vmand %vm3182, %vm3184
  %vm3187 = vmand %vm3183, %vm3185
  %v3188 = vsel %vm3186, 1, 0
  %v3189 = vsel %vm3187, 1, 0
  %v3190 = vcvt.s32.f32 %v3188
  %v3191 = vcvt.s32.f32 %v3189
  %vm3192 = vcmp.ge.f32.partialorder %v902, 0.6
  %vm3193 = vcmp.ge.f32.partialorder %v905, 0.6
  %vm3194 = vcmp.lt.f32.partialorder %v902, 1.0
  %vm3195 = vcmp.lt.f32.partialorder %v905, 1.0
  %vm3196 = vmand %vm3192, %vm3194
  %vm3197 = vmand %vm3193, %vm3195
  %v3198 = vsel %vm3196, 1, 0
  %v3199 = vsel %vm3197, 1, 0
  %v3200 = vcvt.s32.f32 %v3198
  %v3201 = vcvt.s32.f32 %v3199
  %vm3202 = vcmp.ge.f32.partialorder %v902, 1.0
  %vm3203 = vcmp.ge.f32.partialorder %v905, 1.0
  %vm3204 = vcmp.lt.f32.partialorder %v902, 1.4
  %vm3205 = vcmp.lt.f32.partialorder %v905, 1.4
  %vm3206 = vmand %vm3202, %vm3204
  %vm3207 = vmand %vm3203, %vm3205
  %v3208 = vsel %vm3206, 1, 0
  %v3209 = vsel %vm3207, 1, 0
  %v3210 = vcvt.s32.f32 %v3208
  %v3211 = vcvt.s32.f32 %v3209
  %vm3212 = vcmp.ge.f32.partialorder %v902, 1.4
  %vm3213 = vcmp.ge.f32.partialorder %v905, 1.4
  %vm3214 = vcmp.lt.f32.partialorder %v902, 1.8
  %vm3215 = vcmp.lt.f32.partialorder %v905, 1.8
  %vm3216 = vmand %vm3212, %vm3214
  %vm3217 = vmand %vm3213, %vm3215
  %v3218 = vsel %vm3216, 1, 0
  %v3219 = vsel %vm3217, 1, 0
  %v3220 = vcvt.s32.f32 %v3218
  %v3221 = vcvt.s32.f32 %v3219
  %vm3222 = vcmp.ge.f32.partialorder %v902, 1.8
  %vm3223 = vcmp.ge.f32.partialorder %v905, 1.8
  %vm3224 = vcmp.lt.f32.partialorder %v902, 2.2
  %vm3225 = vcmp.lt.f32.partialorder %v905, 2.2
  %vm3226 = vmand %vm3222, %vm3224
  %vm3227 = vmand %vm3223, %vm3225
  %v3228 = vsel %vm3226, 1, 0
  %v3229 = vsel %vm3227, 1, 0
  %v3230 = vcvt.s32.f32 %v3228
  %v3231 = vcvt.s32.f32 %v3229
  %v3232 = vsub.f32 %v902, -2.2
  %v3233 = vsub.f32 %v905, -2.2
  %v3234 = vmul.f32 %v3232, 2.5
  %v3235 = vmul.f32 %v3233, 2.5
  %v3236 = vmul.f32 %v3234, %v3130
  %v3237 = vmul.f32 %v3235, %v3131
  %v3238 = vsub.f32 -1.4, %v902
  %v3239 = vsub.f32 -1.4, %v905
  %v3240 = vmul.f32 %v3238, 2.5
  %v3241 = vmul.f32 %v3239, 2.5
  %v3242 = vmul.f32 %v3240, %v3140
  %v3243 = vmul.f32 %v3241, %v3141
  %v3244 = vadd.f32 %v3236, %v3242
  %v3245 = vadd.f32 %v3237, %v3243
  %v3246 = vsub.f32 %v902, -1.8
  %v3247 = vsub.f32 %v905, -1.8
  %v3248 = vmul.f32 %v3246, 2.5
  %v3249 = vmul.f32 %v3247, 2.5
  %v3250 = vmul.f32 %v3248, %v3140
  %v3251 = vmul.f32 %v3249, %v3141
  %v3252 = vsub.f32 -1.0, %v902
  %v3253 = vsub.f32 -1.0, %v905
  %v3254 = vmul.f32 %v3252, 2.5
  %v3255 = vmul.f32 %v3253, 2.5
  %v3256 = vmul.f32 %v3254, %v3150
  %v3257 = vmul.f32 %v3255, %v3151
  %v3258 = vadd.f32 %v3250, %v3256
  %v3259 = vadd.f32 %v3251, %v3257
  %v3260 = vsub.f32 %v902, -1.4
  %v3261 = vsub.f32 %v905, -1.4
  %v3262 = vmul.f32 %v3260, 2.5
  %v3263 = vmul.f32 %v3261, 2.5
  %v3264 = vmul.f32 %v3262, %v3150
  %v3265 = vmul.f32 %v3263, %v3151
  %v3266 = vsub.f32 -0.6, %v902
  %v3267 = vsub.f32 -0.6, %v905
  %v3268 = vmul.f32 %v3266, 2.5
  %v3269 = vmul.f32 %v3267, 2.5
  %v3270 = vmul.f32 %v3268, %v3160
  %v3271 = vmul.f32 %v3269, %v3161
  %v3272 = vadd.f32 %v3264, %v3270
  %v3273 = vadd.f32 %v3265, %v3271
  %v3274 = vsub.f32 %v902, -1.0
  %v3275 = vsub.f32 %v905, -1.0
  %v3276 = vmul.f32 %v3274, 2.5
  %v3277 = vmul.f32 %v3275, 2.5
  %v3278 = vmul.f32 %v3276, %v3160
  %v3279 = vmul.f32 %v3277, %v3161
  %v3280 = vsub.f32 -0.2, %v902
  %v3281 = vsub.f32 -0.2, %v905
  %v3282 = vmul.f32 %v3280, 2.5
  %v3283 = vmul.f32 %v3281, 2.5
  %v3284 = vmul.f32 %v3282, %v3170
  %v3285 = vmul.f32 %v3283, %v3171
  %v3286 = vadd.f32 %v3278, %v3284
  %v3287 = vadd.f32 %v3279, %v3285
  %v3288 = vsub.f32 %v902, -0.6
  %v3289 = vsub.f32 %v905, -0.6
  %v3290 = vmul.f32 %v3288, 2.5
  %v3291 = vmul.f32 %v3289, 2.5
  %v3292 = vmul.f32 %v3290, %v3170
  %v3293 = vmul.f32 %v3291, %v3171
  %v3294 = vsub.f32 0.2, %v902
  %v3295 = vsub.f32 0.2, %v905
  %v3296 = vmul.f32 %v3294, 2.5
  %v3297 = vmul.f32 %v3295, 2.5
  %v3298 = vmul.f32 %v3296, %v3180
  %v3299 = vmul.f32 %v3297, %v3181
  %v3300 = vadd.f32 %v3292, %v3298
  %v3301 = vadd.f32 %v3293, %v3299
  %v3302 = vsub.f32 %v902, -0.2
  %v3303 = vsub.f32 %v905, -0.2
  %v3304 = vmul.f32 %v3302, 2.5
  %v3305 = vmul.f32 %v3303, 2.5
  %v3306 = vmul.f32 %v3304, %v3180
  %v3307 = vmul.f32 %v3305, %v3181
  %v3308 = vsub.f32 0.6, %v902
  %v3309 = vsub.f32 0.6, %v905
  %v3310 = vmul.f32 %v3308, 2.5
  %v3311 = vmul.f32 %v3309, 2.5
  %v3312 = vmul.f32 %v3310, %v3190
  %v3313 = vmul.f32 %v3311, %v3191
  %v3314 = vadd.f32 %v3306, %v3312
  %v3315 = vadd.f32 %v3307, %v3313
  %v3316 = vsub.f32 %v902, 0.2
  %v3317 = vsub.f32 %v905, 0.2
  %v3318 = vmul.f32 %v3316, 2.5
  %v3319 = vmul.f32 %v3317, 2.5
  %v3320 = vmul.f32 %v3318, %v3190
  %v3321 = vmul.f32 %v3319, %v3191
  %v3322 = vsub.f32 1.0, %v902
  %v3323 = vsub.f32 1.0, %v905
  %v3324 = vmul.f32 %v3322, 2.5
  %v3325 = vmul.f32 %v3323, 2.5
  %v3326 = vmul.f32 %v3324, %v3200
  %v3327 = vmul.f32 %v3325, %v3201
  %v3328 = vadd.f32 %v3320, %v3326
  %v3329 = vadd.f32 %v3321, %v3327
  %v3330 = vsub.f32 %v902, 0.6
  %v3331 = vsub.f32 %v905, 0.6
  %v3332 = vmul.f32 %v3330, 2.5
  %v3333 = vmul.f32 %v3331, 2.5
  %v3334 = vmul.f32 %v3332, %v3200
  %v3335 = vmul.f32 %v3333, %v3201
  %v3336 = vsub.f32 1.4, %v902
  %v3337 = vsub.f32 1.4, %v905
  %v3338 = vmul.f32 %v3336, 2.5
  %v3339 = vmul.f32 %v3337, 2.5
  %v3340 = vmul.f32 %v3338, %v3210
  %v3341 = vmul.f32 %v3339, %v3211
  %v3342 = vadd.f32 %v3334, %v3340
  %v3343 = vadd.f32 %v3335, %v3341
  %v3344 = vsub.f32 %v902, 1.0
  %v3345 = vsub.f32 %v905, 1.0
  %v3346 = vmul.f32 %v3344, 2.5
  %v3347 = vmul.f32 %v3345, 2.5
  %v3348 = vmul.f32 %v3346, %v3210
  %v3349 = vmul.f32 %v3347, %v3211
  %v3350 = vsub.f32 1.8, %v902
  %v3351 = vsub.f32 1.8, %v905
  %v3352 = vmul.f32 %v3350, 2.5
  %v3353 = vmul.f32 %v3351, 2.5
  %v3354 = vmul.f32 %v3352, %v3220
  %v3355 = vmul.f32 %v3353, %v3221
  %v3356 = vadd.f32 %v3348, %v3354
  %v3357 = vadd.f32 %v3349, %v3355
  %v3358 = vsub.f32 %v902, 1.4
  %v3359 = vsub.f32 %v905, 1.4
  %v3360 = vmul.f32 %v3358, 2.5
  %v3361 = vmul.f32 %v3359, 2.5
  %v3362 = vmul.f32 %v3360, %v3220
  %v3363 = vmul.f32 %v3361, %v3221
  %v3364 = vsub.f32 2.2, %v902
  %v3365 = vsub.f32 2.2, %v905
  %v3366 = vmul.f32 %v3364, 2.5
  %v3367 = vmul.f32 %v3365, 2.5
  %v3368 = vmul.f32 %v3366, %v3230
  %v3369 = vmul.f32 %v3367, %v3231
  %v3370 = vadd.f32 %v3362, %v3368
  %v3371 = vadd.f32 %v3363, %v3369
  %v3372 = vmul.f32 %v3232, 1.25
  %v3373 = vmul.f32 %v3233, 1.25
  %v3374 = vmul.f32 %v3372, %v3244
  %v3375 = vmul.f32 %v3373, %v3245
  %v3376 = vmul.f32 %v3252, 1.25
  %v3377 = vmul.f32 %v3253, 1.25
  %v3378 = vmul.f32 %v3376, %v3258
  %v3379 = vmul.f32 %v3377, %v3259
  %v3380 = vadd.f32 %v3374, %v3378
  %v3381 = vadd.f32 %v3375, %v3379
  %v3382 = vmul.f32 %v3246, 1.25
  %v3383 = vmul.f32 %v3247, 1.25
  %v3384 = vmul.f32 %v3382, %v3258
  %v3385 = vmul.f32 %v3383, %v3259
  %v3386 = vmul.f32 %v3266, 1.25
  %v3387 = vmul.f32 %v3267, 1.25
  %v3388 = vmul.f32 %v3386, %v3272
  %v3389 = vmul.f32 %v3387, %v3273
  %v3390 = vadd.f32 %v3384, %v3388
  %v3391 = vadd.f32 %v3385, %v3389
  %v3392 = vmul.f32 %v3260, 1.25
  %v3393 = vmul.f32 %v3261, 1.25
  %v3394 = vmul.f32 %v3392, %v3272
  %v3395 = vmul.f32 %v3393, %v3273
  %v3396 = vmul.f32 %v3280, 1.25
  %v3397 = vmul.f32 %v3281, 1.25
  %v3398 = vmul.f32 %v3396, %v3286
  %v3399 = vmul.f32 %v3397, %v3287
  %v3400 = vadd.f32 %v3394, %v3398
  %v3401 = vadd.f32 %v3395, %v3399
  %v3402 = vmul.f32 %v3274, 1.25
  %v3403 = vmul.f32 %v3275, 1.25
  %v3404 = vmul.f32 %v3402, %v3286
  %v3405 = vmul.f32 %v3403, %v3287
  %v3406 = vmul.f32 %v3294, 1.25
  %v3407 = vmul.f32 %v3295, 1.25
  %v3408 = vmul.f32 %v3406, %v3300
  %v3409 = vmul.f32 %v3407, %v3301
  %v3410 = vadd.f32 %v3404, %v3408
  %v3411 = vadd.f32 %v3405, %v3409
  %v3412 = vmul.f32 %v3288, 1.25
  %v3413 = vmul.f32 %v3289, 1.25
  %v3414 = vmul.f32 %v3412, %v3300
  %v3415 = vmul.f32 %v3413, %v3301
  %v3416 = vmul.f32 %v3308, 1.25
  %v3417 = vmul.f32 %v3309, 1.25
  %v3418 = vmul.f32 %v3416, %v3314
  %v3419 = vmul.f32 %v3417, %v3315
  %v3420 = vadd.f32 %v3414, %v3418
  %v3421 = vadd.f32 %v3415, %v3419
  %v3422 = vmul.f32 %v3302, 1.25
  %v3423 = vmul.f32 %v3303, 1.25
  %v3424 = vmul.f32 %v3422, %v3314
  %v3425 = vmul.f32 %v3423, %v3315
  %v3426 = vmul.f32 %v3322, 1.25
  %v3427 = vmul.f32 %v3323, 1.25
  %v3428 = vmul.f32 %v3426, %v3328
  %v3429 = vmul.f32 %v3427, %v3329
  %v3430 = vadd.f32 %v3424, %v3428
  %v3431 = vadd.f32 %v3425, %v3429
  %v3432 = vmul.f32 %v3316, 1.25
  %v3433 = vmul.f32 %v3317, 1.25
  %v3434 = vmul.f32 %v3432, %v3328
  %v3435 = vmul.f32 %v3433, %v3329
  %v3436 = vmul.f32 %v3336, 1.25
  %v3437 = vmul.f32 %v3337, 1.25
  %v3438 = vmul.f32 %v3436, %v3342
  %v3439 = vmul.f32 %v3437, %v3343
  %v3440 = vadd.f32 %v3434, %v3438
  %v3441 = vadd.f32 %v3435, %v3439
  %v3442 = vmul.f32 %v3330, 1.25
  %v3443 = vmul.f32 %v3331, 1.25
  %v3444 = vmul.f32 %v3442, %v3342
  %v3445 = vmul.f32 %v3443, %v3343
  %v3446 = vmul.f32 %v3350, 1.25
  %v3447 = vmul.f32 %v3351, 1.25
  %v3448 = vmul.f32 %v3446, %v3356
  %v3449 = vmul.f32 %v3447, %v3357
  %v3450 = vadd.f32 %v3444, %v3448
  %v3451 = vadd.f32 %v3445, %v3449
  %v3452 = vmul.f32 %v3344, 1.25
  %v3453 = vmul.f32 %v3345, 1.25
  %v3454 = vmul.f32 %v3452, %v3356
  %v3455 = vmul.f32 %v3453, %v3357
  %v3456 = vmul.f32 %v3364, 1.25
  %v3457 = vmul.f32 %v3365, 1.25
  %v3458 = vmul.f32 %v3456, %v3370
  %v3459 = vmul.f32 %v3457, %v3371
  %v3460 = vadd.f32 %v3454, %v3458
  %v3461 = vadd.f32 %v3455, %v3459
  %v3462 = vmul.f32 %v3232, 0.8333333
  %v3463 = vmul.f32 %v3233, 0.8333333
  %v3464 = vmul.f32 %v3462, %v3380
  %v3465 = vmul.f32 %v3463, %v3381
  %v3466 = vmul.f32 %v3266, 0.8333333
  %v3467 = vmul.f32 %v3267, 0.8333333
  %v3468 = vmul.f32 %v3466, %v3390
  %v3469 = vmul.f32 %v3467, %v3391
  %v3470 = vadd.f32 %v3464, %v3468
  %v3471 = vadd.f32 %v3465, %v3469
  %v3472 = vmul.f32 %v3246, 0.8333333
  %v3473 = vmul.f32 %v3247, 0.8333333
  %v3474 = vmul.f32 %v3472, %v3390
  %v3475 = vmul.f32 %v3473, %v3391
  %v3476 = vmul.f32 %v3280, 0.8333333
  %v3477 = vmul.f32 %v3281, 0.8333333
  %v3478 = vmul.f32 %v3476, %v3400
  %v3479 = vmul.f32 %v3477, %v3401
  %v3480 = vadd.f32 %v3474, %v3478
  %v3481 = vadd.f32 %v3475, %v3479
  %v3482 = vmul.f32 %v3260, 0.8333333
  %v3483 = vmul.f32 %v3261, 0.8333333
  %v3484 = vmul.f32 %v3482, %v3400
  %v3485 = vmul.f32 %v3483, %v3401
  %v3486 = vmul.f32 %v3294, 0.8333333
  %v3487 = vmul.f32 %v3295, 0.8333333
  %v3488 = vmul.f32 %v3486, %v3410
  %v3489 = vmul.f32 %v3487, %v3411
  %v3490 = vadd.f32 %v3484, %v3488
  %v3491 = vadd.f32 %v3485, %v3489
  %v3492 = vmul.f32 %v3274, 0.8333333
  %v3493 = vmul.f32 %v3275, 0.8333333
  %v3494 = vmul.f32 %v3492, %v3410
  %v3495 = vmul.f32 %v3493, %v3411
  %v3496 = vmul.f32 %v3308, 0.8333333
  %v3497 = vmul.f32 %v3309, 0.8333333
  %v3498 = vmul.f32 %v3496, %v3420
  %v3499 = vmul.f32 %v3497, %v3421
  %v3500 = vadd.f32 %v3494, %v3498
  %v3501 = vadd.f32 %v3495, %v3499
  %v3502 = vmul.f32 %v3288, 0.8333333
  %v3503 = vmul.f32 %v3289, 0.8333333
  %v3504 = vmul.f32 %v3502, %v3420
  %v3505 = vmul.f32 %v3503, %v3421
  %v3506 = vmul.f32 %v3322, 0.8333333
  %v3507 = vmul.f32 %v3323, 0.8333333
  %v3508 = vmul.f32 %v3506, %v3430
  %v3509 = vmul.f32 %v3507, %v3431
  %v3510 = vadd.f32 %v3504, %v3508
  %v3511 = vadd.f32 %v3505, %v3509
  %v3512 = vmul.f32 %v3302, 0.8333333
  %v3513 = vmul.f32 %v3303, 0.8333333
  %v3514 = vmul.f32 %v3512, %v3430
  %v3515 = vmul.f32 %v3513, %v3431
  %v3516 = vmul.f32 %v3336, 0.8333333
  %v3517 = vmul.f32 %v3337, 0.8333333
  %v3518 = vmul.f32 %v3516, %v3440
  %v3519 = vmul.f32 %v3517, %v3441
  %v3520 = vadd.f32 %v3514, %v3518
  %v3521 = vadd.f32 %v3515, %v3519
  %v3522 = vmul.f32 %v3316, 0.8333333
  %v3523 = vmul.f32 %v3317, 0.8333333
  %v3524 = vmul.f32 %v3522, %v3440
  %v3525 = vmul.f32 %v3523, %v3441
  %v3526 = vmul.f32 %v3350, 0.8333333
  %v3527 = vmul.f32 %v3351, 0.8333333
  %v3528 = vmul.f32 %v3526, %v3450
  %v3529 = vmul.f32 %v3527, %v3451
  %v3530 = vadd.f32 %v3524, %v3528
  %v3531 = vadd.f32 %v3525, %v3529
  %v3532 = vmul.f32 %v3330, 0.8333333
  %v3533 = vmul.f32 %v3331, 0.8333333
  %v3534 = vmul.f32 %v3532, %v3450
  %v3535 = vmul.f32 %v3533, %v3451
  %v3536 = vmul.f32 %v3364, 0.8333333
  %v3537 = vmul.f32 %v3365, 0.8333333
  %v3538 = vmul.f32 %v3536, %v3460
  %v3539 = vmul.f32 %v3537, %v3461
  %v3540 = vadd.f32 %v3534, %v3538
  %v3541 = vadd.f32 %v3535, %v3539
  %3544 = vrot.lane.b32.xlu0 %v3480, 8
  %v3545 = vpop.permute.xlu0 %3544
  %3546 = vrot.lane.b32.xlu0 %v3481, 8
  %v3547 = vpop.permute.xlu0 %3546
  %3552 = vrot.lane.b32.xlu0 %v3490, 16
  %v3553 = vpop.permute.xlu0 %3552
  %3554 = vrot.lane.b32.xlu0 %v3491, 16
  %v3555 = vpop.permute.xlu0 %3554
  %3560 = vrot.lane.b32.xlu0 %v3500, 24
  %v3561 = vpop.permute.xlu0 %3560
  %3562 = vrot.lane.b32.xlu0 %v3501, 24
  %v3563 = vpop.permute.xlu0 %3562
  %3568 = vrot.lane.b32.xlu0 %v3510, 32
  %v3569 = vpop.permute.xlu0 %3568
  %3570 = vrot.lane.b32.xlu0 %v3511, 32
  %v3571 = vpop.permute.xlu0 %3570
  %3576 = vrot.lane.b32.xlu0 %v3520, 40
  %v3577 = vpop.permute.xlu0 %3576
  %3578 = vrot.lane.b32.xlu0 %v3521, 40
  %v3579 = vpop.permute.xlu0 %3578
  %3584 = vrot.lane.b32.xlu0 %v3530, 48
  %v3585 = vpop.permute.xlu0 %3584
  %3586 = vrot.lane.b32.xlu0 %v3531, 48
  %v3587 = vpop.permute.xlu0 %3586
  %3592 = vrot.lane.b32.xlu0 %v3540, 56
  %v3593 = vpop.permute.xlu0 %3592
  %3594 = vrot.lane.b32.xlu0 %v3541, 56
  %v3595 = vpop.permute.xlu0 %3594
  %v3598 = vsel %vm28, %v3470, %v3545
  %v3599 = vsel %vm28, %v3471, %v3547
  %v3600 = vsel %vm89, %v3598, %v3553
  %v3601 = vsel %vm89, %v3599, %v3555
  %v3602 = vsel %vm2294, %v3600, %v3561
  %v3603 = vsel %vm2294, %v3601, %v3563
  %v3604 = vsel %vm750, %v3602, %v3569
  %v3605 = vsel %vm750, %v3603, %v3571
  %v3606 = vsel %vm2299, %v3604, %v3577
  %v3607 = vsel %vm2299, %v3605, %v3579
  %v3608 = vsel %vm753, %v3606, %v3585
  %v3609 = vsel %vm753, %v3607, %v3587
  %v3610 = vsel %vm2304, %v3608, %v3593
  %v3611 = vsel %vm2304, %v3609, %v3595
  %v3612 = vpack.c.bf16 %v3611, %v3610
  %v3621 = vunpack.c.l.b16 %v3099
  %v3622 = vunpack.c.l.b16 %v3100
  %v3623 = vunpack.c.l.b16 %v3101
  %v3624 = vunpack.c.l.b16 %v3102
  %v3625 = vunpack.c.l.b16 %v3103
  %v3626 = vunpack.c.l.b16 %v3104
  %v3627 = vunpack.c.l.b16 %v3105
  %v3628 = vunpack.c.l.b16 %v3106
  %v3629 = vpack.c.b16 %v3622, %v3621
  %v3630 = vpack.c.b16 %v3624, %v3623
  %v3631 = vpack.c.b16 %v3626, %v3625
  %v3632 = vpack.c.b16 %v3628, %v3627
  %v3638 = vsel %vm756, %v3612, 0
  %3640 = vmatprep.subr.bf16.mxu0 0
  %3641 = vmatpush1.bf16.msra.mxu0 0
  %3642 = vmatprep.subr.bf16.mxu0 0
  %3643 = vmatpush1.bf16.msra.mxu0 0
  %3644 = vmatprep.subr.bf16.mxu0 0
  %3645 = vmatpush1.bf16.msra.mxu0 0
  %3646 = vmatprep.subr.bf16.mxu0 0
  %3647 = vmatpush1.bf16.msra.mxu0 0
  %3648 = vmatprep.subr.bf16.mxu0 0
  %3649 = vmatpush1.bf16.msra.mxu0 %v3632
  %3650 = vmatprep.subr.bf16.mxu0 0
  %3651 = vmatpush1.bf16.msra.mxu0 %v3631
  %3652 = vmatprep.subr.bf16.mxu0 0
  %3653 = vmatpush1.bf16.msra.mxu0 %v3630
  %3654 = vmatprep.subr.bf16.mxu0 0
  %3655 = vmatpush1.bf16.msra.mxu0 %v3629
  %3656 = vmatprep.subr.bf16.mxu0 0
  %3657 = vmatpush2.bf16.msra.mxu0 0
  %3658 = vmatprep.subr.bf16.mxu0 0
  %3659 = vmatpush2.bf16.msra.mxu0 0
  %3660 = vmatprep.subr.bf16.mxu0 0
  %3661 = vmatpush2.bf16.msra.mxu0 0
  %3662 = vmatprep.subr.bf16.mxu0 0
  %3663 = vmatpush2.bf16.msra.mxu0 0
  %3664 = vmatprep.subr.bf16.mxu0 0
  %3665 = vmatpush2.bf16.msra.mxu0 0
  %3666 = vmatprep.subr.bf16.mxu0 0
  %3667 = vmatpush2.bf16.msra.mxu0 0
  %3668 = vmatprep.subr.bf16.mxu0 0
  %3669 = vmatpush2.bf16.msra.mxu0 0
  %3670 = vmatprep.subr.bf16.mxu0 0
  %3671 = vmatpush2.bf16.msra.mxu0 0
  %3672 = vmatprep.mubr.bf16.mxu0 0
  %3673 = vmatmul.mubr.bf16.gmra.mxu0 %v3638
  %v3674 = vpop.f32.mrf.mxu0
  %v3675 = vadd.f32 0.0, %v3674
  %v3676 = vpop.f32.mrf.mxu0
  %v3677 = vpop.f32.mrf.mxu0
  %v3678 = vadd.f32 0.0, %v3677
  %v3679 = vpop.f32.mrf.mxu0
  %3680 = vdwg.mxu0
  %v3682 = vsel %vm28, %v3121, 0
  %v3685 = vsel %vm32, %v3098, 0
  %3687 = vmatprep.subr.bf16.mxu0 0
  %3688 = vmatpush1.bf16.msra.mxu0 0
  %3689 = vmatprep.subr.bf16.mxu0 0
  %3690 = vmatpush1.bf16.msra.mxu0 0
  %3691 = vmatprep.subr.bf16.mxu0 0
  %3692 = vmatpush1.bf16.msra.mxu0 0
  %3693 = vmatprep.subr.bf16.mxu0 0
  %3694 = vmatpush1.bf16.msra.mxu0 0
  %3695 = vmatprep.subr.bf16.mxu0 0
  %3696 = vmatpush1.bf16.msra.mxu0 0
  %3697 = vmatprep.subr.bf16.mxu0 0
  %3698 = vmatpush1.bf16.msra.mxu0 0
  %3699 = vmatprep.subr.bf16.mxu0 0
  %3700 = vmatpush1.bf16.msra.mxu0 0
  %3701 = vmatprep.subr.bf16.mxu0 0
  %3702 = vmatpush1.bf16.msra.mxu0 %v3685
  %3703 = vmatprep.subr.bf16.mxu0 0
  %3704 = vmatpush2.bf16.msra.mxu0 0
  %3705 = vmatprep.subr.bf16.mxu0 0
  %3706 = vmatpush2.bf16.msra.mxu0 0
  %3707 = vmatprep.subr.bf16.mxu0 0
  %3708 = vmatpush2.bf16.msra.mxu0 0
  %3709 = vmatprep.subr.bf16.mxu0 0
  %3710 = vmatpush2.bf16.msra.mxu0 0
  %3711 = vmatprep.subr.bf16.mxu0 0
  %3712 = vmatpush2.bf16.msra.mxu0 0
  %3713 = vmatprep.subr.bf16.mxu0 0
  %3714 = vmatpush2.bf16.msra.mxu0 0
  %3715 = vmatprep.subr.bf16.mxu0 0
  %3716 = vmatpush2.bf16.msra.mxu0 0
  %3717 = vmatprep.subr.bf16.mxu0 0
  %3718 = vmatpush2.bf16.msra.mxu0 0
  %3719 = vmatprep.mubr.bf16.mxu0 0
  %3720 = vmatmul.mubr.bf16.gmra.mxu0 %v3682
  %v3721 = vpop.f32.mrf.mxu0
  %v3722 = vadd.f32 %v3675, %v3721
  %v3723 = vpop.f32.mrf.mxu0
  %v3724 = vpop.f32.mrf.mxu0
  %v3725 = vadd.f32 %v3678, %v3724
  %v3726 = vpop.f32.mrf.mxu0
  %3727 = vdwg.mxu0
  %v3728 = vmax.f32 %v3722, 0.0
  %v3729 = vmax.f32 %v3725, 0.0
  %v3730 = vld [vmem:[%s3 + $0x158] sm:$0xf]
  %v3731 = vld [vmem:[%s3 + $0x15c] sm:$0xf]
  %v3732 = vld [vmem:[%s3 + $0x160] sm:$0xf]
  %v3733 = vld [vmem:[%s3 + $0x164] sm:$0xf]
  %v3734 = vld [vmem:[%s3 + $0x168] sm:$0xf]
  %v3735 = vld [vmem:[%s3 + $0x16c] sm:$0xf]
  %v3736 = vld [vmem:[%s3 + $0x170] sm:$0xf]
  %v3737 = vld [vmem:[%s3 + $0x174] sm:$0xf]
  %v3738 = vld [vmem:[%s3 + $0x178] sm:$0xf]
  %v3739 = vld [vmem:[%s3 + $0x17c] sm:$0xf]
  %v3740 = vld [vmem:[%s3 + $0x180] sm:$0xf]
  %v3741 = vld [vmem:[%s3 + $0x184] sm:$0xf]
  %v3742 = vld [vmem:[%s3 + $0x188] sm:$0xf]
  %v3743 = vld [vmem:[%s3 + $0x18c] sm:$0xf]
  %v3744 = vld [vmem:[%s3 + $0x190] sm:$0xf]
  %v3745 = vld [vmem:[%s3 + $0x194] sm:$0xf]
  %v3746 = vld [vmem:[%s3 + $0x198] sm:$0xf]
  %v3747 = vld [vmem:[%s3 + $0x19c] sm:$0xf]
  %v3748 = vxor.u32 %v3728, 2147483648
  %v3749 = vxor.u32 %v3729, 2147483648
  %v3750 = vmul.f32 %v3748, 1.442695
  %v3751 = vpow.pop %v3750
  %v3752 = vmul.f32 %v3749, 1.442695
  %v3753 = vpow.pop %v3752
  %v3754 = vadd.f32 %v3751, 1.0
  %v3755 = vadd.f32 %v3753, 1.0
  %v3756 = vrcp.pop %v3754
  %v3757 = vmul.f32 1.0, %v3756
  %v3758 = vrcp.pop %v3755
  %v3759 = vmul.f32 1.0, %v3758
  %v3760 = vmul.f32 %v3728, %v3757
  %v3761 = vmul.f32 %v3729, %v3759
  %v3762 = vpack.c.bf16 %v3761, %v3760
  %vm3763 = vcmp.ge.f32.partialorder %v3728, -2.2
  %vm3764 = vcmp.ge.f32.partialorder %v3729, -2.2
  %vm3765 = vcmp.lt.f32.partialorder %v3728, -1.8
  %vm3766 = vcmp.lt.f32.partialorder %v3729, -1.8
  %vm3767 = vmand %vm3763, %vm3765
  %vm3768 = vmand %vm3764, %vm3766
  %v3769 = vsel %vm3767, 1, 0
  %v3770 = vsel %vm3768, 1, 0
  %v3771 = vcvt.s32.f32 %v3769
  %v3772 = vcvt.s32.f32 %v3770
  %vm3773 = vcmp.ge.f32.partialorder %v3728, -1.8
  %vm3774 = vcmp.ge.f32.partialorder %v3729, -1.8
  %vm3775 = vcmp.lt.f32.partialorder %v3728, -1.4
  %vm3776 = vcmp.lt.f32.partialorder %v3729, -1.4
  %vm3777 = vmand %vm3773, %vm3775
  %vm3778 = vmand %vm3774, %vm3776
  %v3779 = vsel %vm3777, 1, 0
  %v3780 = vsel %vm3778, 1, 0
  %v3781 = vcvt.s32.f32 %v3779
  %v3782 = vcvt.s32.f32 %v3780
  %vm3783 = vcmp.ge.f32.partialorder %v3728, -1.4
  %vm3784 = vcmp.ge.f32.partialorder %v3729, -1.4
  %vm3785 = vcmp.lt.f32.partialorder %v3728, -1.0
  %vm3786 = vcmp.lt.f32.partialorder %v3729, -1.0
  %vm3787 = vmand %vm3783, %vm3785
  %vm3788 = vmand %vm3784, %vm3786
  %v3789 = vsel %vm3787, 1, 0
  %v3790 = vsel %vm3788, 1, 0
  %v3791 = vcvt.s32.f32 %v3789
  %v3792 = vcvt.s32.f32 %v3790
  %vm3793 = vcmp.ge.f32.partialorder %v3728, -1.0
  %vm3794 = vcmp.ge.f32.partialorder %v3729, -1.0
  %vm3795 = vcmp.lt.f32.partialorder %v3728, -0.6
  %vm3796 = vcmp.lt.f32.partialorder %v3729, -0.6
  %vm3797 = vmand %vm3793, %vm3795
  %vm3798 = vmand %vm3794, %vm3796
  %v3799 = vsel %vm3797, 1, 0
  %v3800 = vsel %vm3798, 1, 0
  %v3801 = vcvt.s32.f32 %v3799
  %v3802 = vcvt.s32.f32 %v3800
  %vm3803 = vcmp.ge.f32.partialorder %v3728, -0.6
  %vm3804 = vcmp.ge.f32.partialorder %v3729, -0.6
  %vm3805 = vcmp.lt.f32.partialorder %v3728, -0.2
  %vm3806 = vcmp.lt.f32.partialorder %v3729, -0.2
  %vm3807 = vmand %vm3803, %vm3805
  %vm3808 = vmand %vm3804, %vm3806
  %v3809 = vsel %vm3807, 1, 0
  %v3810 = vsel %vm3808, 1, 0
  %v3811 = vcvt.s32.f32 %v3809
  %v3812 = vcvt.s32.f32 %v3810
  %vm3813 = vcmp.ge.f32.partialorder %v3728, -0.2
  %vm3814 = vcmp.ge.f32.partialorder %v3729, -0.2
  %vm3815 = vcmp.lt.f32.partialorder %v3728, 0.2
  %vm3816 = vcmp.lt.f32.partialorder %v3729, 0.2
  %vm3817 = vmand %vm3813, %vm3815
  %vm3818 = vmand %vm3814, %vm3816
  %v3819 = vsel %vm3817, 1, 0
  %v3820 = vsel %vm3818, 1, 0
  %v3821 = vcvt.s32.f32 %v3819
  %v3822 = vcvt.s32.f32 %v3820
  %vm3823 = vcmp.ge.f32.partialorder %v3728, 0.2
  %vm3824 = vcmp.ge.f32.partialorder %v3729, 0.2
  %vm3825 = vcmp.lt.f32.partialorder %v3728, 0.6
  %vm3826 = vcmp.lt.f32.partialorder %v3729, 0.6
  %vm3827 = vmand %vm3823, %vm3825
  %vm3828 = vmand %vm3824, %vm3826
  %v3829 = vsel %vm3827, 1, 0
  %v3830 = vsel %vm3828, 1, 0
  %v3831 = vcvt.s32.f32 %v3829
  %v3832 = vcvt.s32.f32 %v3830
  %vm3833 = vcmp.ge.f32.partialorder %v3728, 0.6
  %vm3834 = vcmp.ge.f32.partialorder %v3729, 0.6
  %vm3835 = vcmp.lt.f32.partialorder %v3728, 1.0
  %vm3836 = vcmp.lt.f32.partialorder %v3729, 1.0
  %vm3837 = vmand %vm3833, %vm3835
  %vm3838 = vmand %vm3834, %vm3836
  %v3839 = vsel %vm3837, 1, 0
  %v3840 = vsel %vm3838, 1, 0
  %v3841 = vcvt.s32.f32 %v3839
  %v3842 = vcvt.s32.f32 %v3840
  %vm3843 = vcmp.ge.f32.partialorder %v3728, 1.0
  %vm3844 = vcmp.ge.f32.partialorder %v3729, 1.0
  %vm3845 = vcmp.lt.f32.partialorder %v3728, 1.4
  %vm3846 = vcmp.lt.f32.partialorder %v3729, 1.4
  %vm3847 = vmand %vm3843, %vm3845
  %vm3848 = vmand %vm3844, %vm3846
  %v3849 = vsel %vm3847, 1, 0
  %v3850 = vsel %vm3848, 1, 0
  %v3851 = vcvt.s32.f32 %v3849
  %v3852 = vcvt.s32.f32 %v3850
  %vm3853 = vcmp.ge.f32.partialorder %v3728, 1.4
  %vm3854 = vcmp.ge.f32.partialorder %v3729, 1.4
  %vm3855 = vcmp.lt.f32.partialorder %v3728, 1.8
  %vm3856 = vcmp.lt.f32.partialorder %v3729, 1.8
  %vm3857 = vmand %vm3853, %vm3855
  %vm3858 = vmand %vm3854, %vm3856
  %v3859 = vsel %vm3857, 1, 0
  %v3860 = vsel %vm3858, 1, 0
  %v3861 = vcvt.s32.f32 %v3859
  %v3862 = vcvt.s32.f32 %v3860
  %vm3863 = vcmp.ge.f32.partialorder %v3728, 1.8
  %vm3864 = vcmp.ge.f32.partialorder %v3729, 1.8
  %vm3865 = vcmp.lt.f32.partialorder %v3728, 2.2
  %vm3866 = vcmp.lt.f32.partialorder %v3729, 2.2
  %vm3867 = vmand %vm3863, %vm3865
  %vm3868 = vmand %vm3864, %vm3866
  %v3869 = vsel %vm3867, 1, 0
  %v3870 = vsel %vm3868, 1, 0
  %v3871 = vcvt.s32.f32 %v3869
  %v3872 = vcvt.s32.f32 %v3870
  %v3873 = vsub.f32 %v3728, -2.2
  %v3874 = vsub.f32 %v3729, -2.2
  %v3875 = vmul.f32 %v3873, 2.5
  %v3876 = vmul.f32 %v3874, 2.5
  %v3877 = vmul.f32 %v3875, %v3771
  %v3878 = vmul.f32 %v3876, %v3772
  %v3879 = vsub.f32 -1.4, %v3728
  %v3880 = vsub.f32 -1.4, %v3729
  %v3881 = vmul.f32 %v3879, 2.5
  %v3882 = vmul.f32 %v3880, 2.5
  %v3883 = vmul.f32 %v3881, %v3781
  %v3884 = vmul.f32 %v3882, %v3782
  %v3885 = vadd.f32 %v3877, %v3883
  %v3886 = vadd.f32 %v3878, %v3884
  %v3887 = vsub.f32 %v3728, -1.8
  %v3888 = vsub.f32 %v3729, -1.8
  %v3889 = vmul.f32 %v3887, 2.5
  %v3890 = vmul.f32 %v3888, 2.5
  %v3891 = vmul.f32 %v3889, %v3781
  %v3892 = vmul.f32 %v3890, %v3782
  %v3893 = vsub.f32 -1.0, %v3728
  %v3894 = vsub.f32 -1.0, %v3729
  %v3895 = vmul.f32 %v3893, 2.5
  %v3896 = vmul.f32 %v3894, 2.5
  %v3897 = vmul.f32 %v3895, %v3791
  %v3898 = vmul.f32 %v3896, %v3792
  %v3899 = vadd.f32 %v3891, %v3897
  %v3900 = vadd.f32 %v3892, %v3898
  %v3901 = vsub.f32 %v3728, -1.4
  %v3902 = vsub.f32 %v3729, -1.4
  %v3903 = vmul.f32 %v3901, 2.5
  %v3904 = vmul.f32 %v3902, 2.5
  %v3905 = vmul.f32 %v3903, %v3791
  %v3906 = vmul.f32 %v3904, %v3792
  %v3907 = vsub.f32 -0.6, %v3728
  %v3908 = vsub.f32 -0.6, %v3729
  %v3909 = vmul.f32 %v3907, 2.5
  %v3910 = vmul.f32 %v3908, 2.5
  %v3911 = vmul.f32 %v3909, %v3801
  %v3912 = vmul.f32 %v3910, %v3802
  %v3913 = vadd.f32 %v3905, %v3911
  %v3914 = vadd.f32 %v3906, %v3912
  %v3915 = vsub.f32 %v3728, -1.0
  %v3916 = vsub.f32 %v3729, -1.0
  %v3917 = vmul.f32 %v3915, 2.5
  %v3918 = vmul.f32 %v3916, 2.5
  %v3919 = vmul.f32 %v3917, %v3801
  %v3920 = vmul.f32 %v3918, %v3802
  %v3921 = vsub.f32 -0.2, %v3728
  %v3922 = vsub.f32 -0.2, %v3729
  %v3923 = vmul.f32 %v3921, 2.5
  %v3924 = vmul.f32 %v3922, 2.5
  %v3925 = vmul.f32 %v3923, %v3811
  %v3926 = vmul.f32 %v3924, %v3812
  %v3927 = vadd.f32 %v3919, %v3925
  %v3928 = vadd.f32 %v3920, %v3926
  %v3929 = vsub.f32 %v3728, -0.6
  %v3930 = vsub.f32 %v3729, -0.6
  %v3931 = vmul.f32 %v3929, 2.5
  %v3932 = vmul.f32 %v3930, 2.5
  %v3933 = vmul.f32 %v3931, %v3811
  %v3934 = vmul.f32 %v3932, %v3812
  %v3935 = vsub.f32 0.2, %v3728
  %v3936 = vsub.f32 0.2, %v3729
  %v3937 = vmul.f32 %v3935, 2.5
  %v3938 = vmul.f32 %v3936, 2.5
  %v3939 = vmul.f32 %v3937, %v3821
  %v3940 = vmul.f32 %v3938, %v3822
  %v3941 = vadd.f32 %v3933, %v3939
  %v3942 = vadd.f32 %v3934, %v3940
  %v3943 = vsub.f32 %v3728, -0.2
  %v3944 = vsub.f32 %v3729, -0.2
  %v3945 = vmul.f32 %v3943, 2.5
  %v3946 = vmul.f32 %v3944, 2.5
  %v3947 = vmul.f32 %v3945, %v3821
  %v3948 = vmul.f32 %v3946, %v3822
  %v3949 = vsub.f32 0.6, %v3728
  %v3950 = vsub.f32 0.6, %v3729
  %v3951 = vmul.f32 %v3949, 2.5
  %v3952 = vmul.f32 %v3950, 2.5
  %v3953 = vmul.f32 %v3951, %v3831
  %v3954 = vmul.f32 %v3952, %v3832
  %v3955 = vadd.f32 %v3947, %v3953
  %v3956 = vadd.f32 %v3948, %v3954
  %v3957 = vsub.f32 %v3728, 0.2
  %v3958 = vsub.f32 %v3729, 0.2
  %v3959 = vmul.f32 %v3957, 2.5
  %v3960 = vmul.f32 %v3958, 2.5
  %v3961 = vmul.f32 %v3959, %v3831
  %v3962 = vmul.f32 %v3960, %v3832
  %v3963 = vsub.f32 1.0, %v3728
  %v3964 = vsub.f32 1.0, %v3729
  %v3965 = vmul.f32 %v3963, 2.5
  %v3966 = vmul.f32 %v3964, 2.5
  %v3967 = vmul.f32 %v3965, %v3841
  %v3968 = vmul.f32 %v3966, %v3842
  %v3969 = vadd.f32 %v3961, %v3967
  %v3970 = vadd.f32 %v3962, %v3968
  %v3971 = vsub.f32 %v3728, 0.6
  %v3972 = vsub.f32 %v3729, 0.6
  %v3973 = vmul.f32 %v3971, 2.5
  %v3974 = vmul.f32 %v3972, 2.5
  %v3975 = vmul.f32 %v3973, %v3841
  %v3976 = vmul.f32 %v3974, %v3842
  %v3977 = vsub.f32 1.4, %v3728
  %v3978 = vsub.f32 1.4, %v3729
  %v3979 = vmul.f32 %v3977, 2.5
  %v3980 = vmul.f32 %v3978, 2.5
  %v3981 = vmul.f32 %v3979, %v3851
  %v3982 = vmul.f32 %v3980, %v3852
  %v3983 = vadd.f32 %v3975, %v3981
  %v3984 = vadd.f32 %v3976, %v3982
  %v3985 = vsub.f32 %v3728, 1.0
  %v3986 = vsub.f32 %v3729, 1.0
  %v3987 = vmul.f32 %v3985, 2.5
  %v3988 = vmul.f32 %v3986, 2.5
  %v3989 = vmul.f32 %v3987, %v3851
  %v3990 = vmul.f32 %v3988, %v3852
  %v3991 = vsub.f32 1.8, %v3728
  %v3992 = vsub.f32 1.8, %v3729
  %v3993 = vmul.f32 %v3991, 2.5
  %v3994 = vmul.f32 %v3992, 2.5
  %v3995 = vmul.f32 %v3993, %v3861
  %v3996 = vmul.f32 %v3994, %v3862
  %v3997 = vadd.f32 %v3989, %v3995
  %v3998 = vadd.f32 %v3990, %v3996
  %v3999 = vsub.f32 %v3728, 1.4
  %v4000 = vsub.f32 %v3729, 1.4
  %v4001 = vmul.f32 %v3999, 2.5
  %v4002 = vmul.f32 %v4000, 2.5
  %v4003 = vmul.f32 %v4001, %v3861
  %v4004 = vmul.f32 %v4002, %v3862
  %v4005 = vsub.f32 2.2, %v3728
  %v4006 = vsub.f32 2.2, %v3729
  %v4007 = vmul.f32 %v4005, 2.5
  %v4008 = vmul.f32 %v4006, 2.5
  %v4009 = vmul.f32 %v4007, %v3871
  %v4010 = vmul.f32 %v4008, %v3872
  %v4011 = vadd.f32 %v4003, %v4009
  %v4012 = vadd.f32 %v4004, %v4010
  %v4013 = vmul.f32 %v3873, 1.25
  %v4014 = vmul.f32 %v3874, 1.25
  %v4015 = vmul.f32 %v4013, %v3885
  %v4016 = vmul.f32 %v4014, %v3886
  %v4017 = vmul.f32 %v3893, 1.25
  %v4018 = vmul.f32 %v3894, 1.25
  %v4019 = vmul.f32 %v4017, %v3899
  %v4020 = vmul.f32 %v4018, %v3900
  %v4021 = vadd.f32 %v4015, %v4019
  %v4022 = vadd.f32 %v4016, %v4020
  %v4023 = vmul.f32 %v3887, 1.25
  %v4024 = vmul.f32 %v3888, 1.25
  %v4025 = vmul.f32 %v4023, %v3899
  %v4026 = vmul.f32 %v4024, %v3900
  %v4027 = vmul.f32 %v3907, 1.25
  %v4028 = vmul.f32 %v3908, 1.25
  %v4029 = vmul.f32 %v4027, %v3913
  %v4030 = vmul.f32 %v4028, %v3914
  %v4031 = vadd.f32 %v4025, %v4029
  %v4032 = vadd.f32 %v4026, %v4030
  %v4033 = vmul.f32 %v3901, 1.25
  %v4034 = vmul.f32 %v3902, 1.25
  %v4035 = vmul.f32 %v4033, %v3913
  %v4036 = vmul.f32 %v4034, %v3914
  %v4037 = vmul.f32 %v3921, 1.25
  %v4038 = vmul.f32 %v3922, 1.25
  %v4039 = vmul.f32 %v4037, %v3927
  %v4040 = vmul.f32 %v4038, %v3928
  %v4041 = vadd.f32 %v4035, %v4039
  %v4042 = vadd.f32 %v4036, %v4040
  %v4043 = vmul.f32 %v3915, 1.25
  %v4044 = vmul.f32 %v3916, 1.25
  %v4045 = vmul.f32 %v4043, %v3927
  %v4046 = vmul.f32 %v4044, %v3928
  %v4047 = vmul.f32 %v3935, 1.25
  %v4048 = vmul.f32 %v3936, 1.25
  %v4049 = vmul.f32 %v4047, %v3941
  %v4050 = vmul.f32 %v4048, %v3942
  %v4051 = vadd.f32 %v4045, %v4049
  %v4052 = vadd.f32 %v4046, %v4050
  %v4053 = vmul.f32 %v3929, 1.25
  %v4054 = vmul.f32 %v3930, 1.25
  %v4055 = vmul.f32 %v4053, %v3941
  %v4056 = vmul.f32 %v4054, %v3942
  %v4057 = vmul.f32 %v3949, 1.25
  %v4058 = vmul.f32 %v3950, 1.25
  %v4059 = vmul.f32 %v4057, %v3955
  %v4060 = vmul.f32 %v4058, %v3956
  %v4061 = vadd.f32 %v4055, %v4059
  %v4062 = vadd.f32 %v4056, %v4060
  %v4063 = vmul.f32 %v3943, 1.25
  %v4064 = vmul.f32 %v3944, 1.25
  %v4065 = vmul.f32 %v4063, %v3955
  %v4066 = vmul.f32 %v4064, %v3956
  %v4067 = vmul.f32 %v3963, 1.25
  %v4068 = vmul.f32 %v3964, 1.25
  %v4069 = vmul.f32 %v4067, %v3969
  %v4070 = vmul.f32 %v4068, %v3970
  %v4071 = vadd.f32 %v4065, %v4069
  %v4072 = vadd.f32 %v4066, %v4070
  %v4073 = vmul.f32 %v3957, 1.25
  %v4074 = vmul.f32 %v3958, 1.25
  %v4075 = vmul.f32 %v4073, %v3969
  %v4076 = vmul.f32 %v4074, %v3970
  %v4077 = vmul.f32 %v3977, 1.25
  %v4078 = vmul.f32 %v3978, 1.25
  %v4079 = vmul.f32 %v4077, %v3983
  %v4080 = vmul.f32 %v4078, %v3984
  %v4081 = vadd.f32 %v4075, %v4079
  %v4082 = vadd.f32 %v4076, %v4080
  %v4083 = vmul.f32 %v3971, 1.25
  %v4084 = vmul.f32 %v3972, 1.25
  %v4085 = vmul.f32 %v4083, %v3983
  %v4086 = vmul.f32 %v4084, %v3984
  %v4087 = vmul.f32 %v3991, 1.25
  %v4088 = vmul.f32 %v3992, 1.25
  %v4089 = vmul.f32 %v4087, %v3997
  %v4090 = vmul.f32 %v4088, %v3998
  %v4091 = vadd.f32 %v4085, %v4089
  %v4092 = vadd.f32 %v4086, %v4090
  %v4093 = vmul.f32 %v3985, 1.25
  %v4094 = vmul.f32 %v3986, 1.25
  %v4095 = vmul.f32 %v4093, %v3997
  %v4096 = vmul.f32 %v4094, %v3998
  %v4097 = vmul.f32 %v4005, 1.25
  %v4098 = vmul.f32 %v4006, 1.25
  %v4099 = vmul.f32 %v4097, %v4011
  %v4100 = vmul.f32 %v4098, %v4012
  %v4101 = vadd.f32 %v4095, %v4099
  %v4102 = vadd.f32 %v4096, %v4100
  %v4103 = vmul.f32 %v3873, 0.8333333
  %v4104 = vmul.f32 %v3874, 0.8333333
  %v4105 = vmul.f32 %v4103, %v4021
  %v4106 = vmul.f32 %v4104, %v4022
  %v4107 = vmul.f32 %v3907, 0.8333333
  %v4108 = vmul.f32 %v3908, 0.8333333
  %v4109 = vmul.f32 %v4107, %v4031
  %v4110 = vmul.f32 %v4108, %v4032
  %v4111 = vadd.f32 %v4105, %v4109
  %v4112 = vadd.f32 %v4106, %v4110
  %v4113 = vmul.f32 %v3887, 0.8333333
  %v4114 = vmul.f32 %v3888, 0.8333333
  %v4115 = vmul.f32 %v4113, %v4031
  %v4116 = vmul.f32 %v4114, %v4032
  %v4117 = vmul.f32 %v3921, 0.8333333
  %v4118 = vmul.f32 %v3922, 0.8333333
  %v4119 = vmul.f32 %v4117, %v4041
  %v4120 = vmul.f32 %v4118, %v4042
  %v4121 = vadd.f32 %v4115, %v4119
  %v4122 = vadd.f32 %v4116, %v4120
  %v4123 = vmul.f32 %v3901, 0.8333333
  %v4124 = vmul.f32 %v3902, 0.8333333
  %v4125 = vmul.f32 %v4123, %v4041
  %v4126 = vmul.f32 %v4124, %v4042
  %v4127 = vmul.f32 %v3935, 0.8333333
  %v4128 = vmul.f32 %v3936, 0.8333333
  %v4129 = vmul.f32 %v4127, %v4051
  %v4130 = vmul.f32 %v4128, %v4052
  %v4131 = vadd.f32 %v4125, %v4129
  %v4132 = vadd.f32 %v4126, %v4130
  %v4133 = vmul.f32 %v3915, 0.8333333
  %v4134 = vmul.f32 %v3916, 0.8333333
  %v4135 = vmul.f32 %v4133, %v4051
  %v4136 = vmul.f32 %v4134, %v4052
  %v4137 = vmul.f32 %v3949, 0.8333333
  %v4138 = vmul.f32 %v3950, 0.8333333
  %v4139 = vmul.f32 %v4137, %v4061
  %v4140 = vmul.f32 %v4138, %v4062
  %v4141 = vadd.f32 %v4135, %v4139
  %v4142 = vadd.f32 %v4136, %v4140
  %v4143 = vmul.f32 %v3929, 0.8333333
  %v4144 = vmul.f32 %v3930, 0.8333333
  %v4145 = vmul.f32 %v4143, %v4061
  %v4146 = vmul.f32 %v4144, %v4062
  %v4147 = vmul.f32 %v3963, 0.8333333
  %v4148 = vmul.f32 %v3964, 0.8333333
  %v4149 = vmul.f32 %v4147, %v4071
  %v4150 = vmul.f32 %v4148, %v4072
  %v4151 = vadd.f32 %v4145, %v4149
  %v4152 = vadd.f32 %v4146, %v4150
  %v4153 = vmul.f32 %v3943, 0.8333333
  %v4154 = vmul.f32 %v3944, 0.8333333
  %v4155 = vmul.f32 %v4153, %v4071
  %v4156 = vmul.f32 %v4154, %v4072
  %v4157 = vmul.f32 %v3977, 0.8333333
  %v4158 = vmul.f32 %v3978, 0.8333333
  %v4159 = vmul.f32 %v4157, %v4081
  %v4160 = vmul.f32 %v4158, %v4082
  %v4161 = vadd.f32 %v4155, %v4159
  %v4162 = vadd.f32 %v4156, %v4160
  %v4163 = vmul.f32 %v3957, 0.8333333
  %v4164 = vmul.f32 %v3958, 0.8333333
  %v4165 = vmul.f32 %v4163, %v4081
  %v4166 = vmul.f32 %v4164, %v4082
  %v4167 = vmul.f32 %v3991, 0.8333333
  %v4168 = vmul.f32 %v3992, 0.8333333
  %v4169 = vmul.f32 %v4167, %v4091
  %v4170 = vmul.f32 %v4168, %v4092
  %v4171 = vadd.f32 %v4165, %v4169
  %v4172 = vadd.f32 %v4166, %v4170
  %v4173 = vmul.f32 %v3971, 0.8333333
  %v4174 = vmul.f32 %v3972, 0.8333333
  %v4175 = vmul.f32 %v4173, %v4091
  %v4176 = vmul.f32 %v4174, %v4092
  %v4177 = vmul.f32 %v4005, 0.8333333
  %v4178 = vmul.f32 %v4006, 0.8333333
  %v4179 = vmul.f32 %v4177, %v4101
  %v4180 = vmul.f32 %v4178, %v4102
  %v4181 = vadd.f32 %v4175, %v4179
  %v4182 = vadd.f32 %v4176, %v4180
  %4185 = vrot.lane.b32.xlu0 %v4121, 16
  %v4186 = vpop.permute.xlu0 %4185
  %4187 = vrot.lane.b32.xlu0 %v4122, 16
  %v4188 = vpop.permute.xlu0 %4187
  %4193 = vrot.lane.b32.xlu0 %v4131, 32
  %v4194 = vpop.permute.xlu0 %4193
  %4195 = vrot.lane.b32.xlu0 %v4132, 32
  %v4196 = vpop.permute.xlu0 %4195
  %4201 = vrot.lane.b32.xlu0 %v4141, 48
  %v4202 = vpop.permute.xlu0 %4201
  %4203 = vrot.lane.b32.xlu0 %v4142, 48
  %v4204 = vpop.permute.xlu0 %4203
  %4209 = vrot.lane.b32.xlu0 %v4151, 64
  %v4210 = vpop.permute.xlu0 %4209
  %4211 = vrot.lane.b32.xlu0 %v4152, 64
  %v4212 = vpop.permute.xlu0 %4211
  %4217 = vrot.lane.b32.xlu0 %v4161, 80
  %v4218 = vpop.permute.xlu0 %4217
  %4219 = vrot.lane.b32.xlu0 %v4162, 80
  %v4220 = vpop.permute.xlu0 %4219
  %4225 = vrot.lane.b32.xlu0 %v4171, 96
  %v4226 = vpop.permute.xlu0 %4225
  %4227 = vrot.lane.b32.xlu0 %v4172, 96
  %v4228 = vpop.permute.xlu0 %4227
  %4233 = vrot.lane.b32.xlu0 %v4181, 112
  %v4234 = vpop.permute.xlu0 %4233
  %4235 = vrot.lane.b32.xlu0 %v4182, 112
  %v4236 = vpop.permute.xlu0 %4235
  %v4239 = vsel %vm89, %v4111, %v4186
  %v4240 = vsel %vm89, %v4112, %v4188
  %v4241 = vsel %vm750, %v4239, %v4194
  %v4242 = vsel %vm750, %v4240, %v4196
  %v4243 = vsel %vm753, %v4241, %v4202
  %v4244 = vsel %vm753, %v4242, %v4204
  %v4245 = vsel %vm756, %v4243, %v4210
  %v4246 = vsel %vm756, %v4244, %v4212
  %v4247 = vsel %vm759, %v4245, %v4218
  %v4248 = vsel %vm759, %v4246, %v4220
  %v4249 = vsel %vm762, %v4247, %v4226
  %v4250 = vsel %vm762, %v4248, %v4228
  %v4251 = vsel %vm765, %v4249, %v4234
  %v4252 = vsel %vm765, %v4250, %v4236
  %v4253 = vpack.c.bf16 %v4252, %v4251
  %v4270 = vunpack.c.l.b16 %v3732
  %v4271 = vunpack.c.l.b16 %v3733
  %v4272 = vunpack.c.l.b16 %v3734
  %v4273 = vunpack.c.l.b16 %v3735
  %v4274 = vunpack.c.l.b16 %v3736
  %v4275 = vunpack.c.l.b16 %v3737
  %v4276 = vunpack.c.l.b16 %v3738
  %v4277 = vunpack.c.l.b16 %v3739
  %v4278 = vunpack.c.l.b16 %v3740
  %v4279 = vunpack.c.l.b16 %v3741
  %v4280 = vunpack.c.l.b16 %v3742
  %v4281 = vunpack.c.l.b16 %v3743
  %v4282 = vunpack.c.l.b16 %v3744
  %v4283 = vunpack.c.l.b16 %v3745
  %v4284 = vunpack.c.l.b16 %v3746
  %v4285 = vunpack.c.l.b16 %v3747
  %v4286 = vpack.c.b16 %v4271, %v4270
  %v4287 = vpack.c.b16 %v4273, %v4272
  %v4288 = vpack.c.b16 %v4275, %v4274
  %v4289 = vpack.c.b16 %v4277, %v4276
  %v4290 = vpack.c.b16 %v4279, %v4278
  %v4291 = vpack.c.b16 %v4281, %v4280
  %v4292 = vpack.c.b16 %v4283, %v4282
  %v4293 = vpack.c.b16 %v4285, %v4284
  %4302 = vmatprep.subr.bf16.mxu0 0
  %4303 = vmatpush1.bf16.msra.mxu0 %v4293
  %4304 = vmatprep.subr.bf16.mxu0 0
  %4305 = vmatpush1.bf16.msra.mxu0 %v4292
  %4306 = vmatprep.subr.bf16.mxu0 0
  %4307 = vmatpush1.bf16.msra.mxu0 %v4291
  %4308 = vmatprep.subr.bf16.mxu0 0
  %4309 = vmatpush1.bf16.msra.mxu0 %v4290
  %4310 = vmatprep.subr.bf16.mxu0 0
  %4311 = vmatpush1.bf16.msra.mxu0 %v4289
  %4312 = vmatprep.subr.bf16.mxu0 0
  %4313 = vmatpush1.bf16.msra.mxu0 %v4288
  %4314 = vmatprep.subr.bf16.mxu0 0
  %4315 = vmatpush1.bf16.msra.mxu0 %v4287
  %4316 = vmatprep.subr.bf16.mxu0 0
  %4317 = vmatpush1.bf16.msra.mxu0 %v4286
  %4318 = vmatprep.subr.bf16.mxu0 0
  %4319 = vmatpush2.bf16.msra.mxu0 0
  %4320 = vmatprep.subr.bf16.mxu0 0
  %4321 = vmatpush2.bf16.msra.mxu0 0
  %4322 = vmatprep.subr.bf16.mxu0 0
  %4323 = vmatpush2.bf16.msra.mxu0 0
  %4324 = vmatprep.subr.bf16.mxu0 0
  %4325 = vmatpush2.bf16.msra.mxu0 0
  %4326 = vmatprep.subr.bf16.mxu0 0
  %4327 = vmatpush2.bf16.msra.mxu0 0
  %4328 = vmatprep.subr.bf16.mxu0 0
  %4329 = vmatpush2.bf16.msra.mxu0 0
  %4330 = vmatprep.subr.bf16.mxu0 0
  %4331 = vmatpush2.bf16.msra.mxu0 0
  %4332 = vmatprep.subr.bf16.mxu0 0
  %4333 = vmatpush2.bf16.msra.mxu0 0
  %4334 = vmatprep.mubr.bf16.mxu0 0
  %4335 = vmatmul.mubr.bf16.gmra.mxu0 %v4253
  %v4336 = vpop.f32.mrf.mxu0
  %v4337 = vadd.f32 0.0, %v4336
  %v4338 = vpop.f32.mrf.mxu0
  %v4339 = vpop.f32.mrf.mxu0
  %v4340 = vadd.f32 0.0, %v4339
  %v4341 = vpop.f32.mrf.mxu0
  %4342 = vdwg.mxu0
  %v4345 = vunpack.c.l.b16 %v3730
  %v4346 = vunpack.c.l.b16 %v3731
  %v4347 = vpack.c.b16 %v4346, %v4345
  %v4350 = vsel %vm89, %v3762, 0
  %4352 = vmatprep.subr.bf16.mxu0 0
  %4353 = vmatpush1.bf16.msra.mxu0 0
  %4354 = vmatprep.subr.bf16.mxu0 0
  %4355 = vmatpush1.bf16.msra.mxu0 0
  %4356 = vmatprep.subr.bf16.mxu0 0
  %4357 = vmatpush1.bf16.msra.mxu0 0
  %4358 = vmatprep.subr.bf16.mxu0 0
  %4359 = vmatpush1.bf16.msra.mxu0 0
  %4360 = vmatprep.subr.bf16.mxu0 0
  %4361 = vmatpush1.bf16.msra.mxu0 0
  %4362 = vmatprep.subr.bf16.mxu0 0
  %4363 = vmatpush1.bf16.msra.mxu0 0
  %4364 = vmatprep.subr.bf16.mxu0 0
  %4365 = vmatpush1.bf16.msra.mxu0 0
  %4366 = vmatprep.subr.bf16.mxu0 0
  %4367 = vmatpush1.bf16.msra.mxu0 %v4347
  %4368 = vmatprep.subr.bf16.mxu0 0
  %4369 = vmatpush2.bf16.msra.mxu0 0
  %4370 = vmatprep.subr.bf16.mxu0 0
  %4371 = vmatpush2.bf16.msra.mxu0 0
  %4372 = vmatprep.subr.bf16.mxu0 0
  %4373 = vmatpush2.bf16.msra.mxu0 0
  %4374 = vmatprep.subr.bf16.mxu0 0
  %4375 = vmatpush2.bf16.msra.mxu0 0
  %4376 = vmatprep.subr.bf16.mxu0 0
  %4377 = vmatpush2.bf16.msra.mxu0 0
  %4378 = vmatprep.subr.bf16.mxu0 0
  %4379 = vmatpush2.bf16.msra.mxu0 0
  %4380 = vmatprep.subr.bf16.mxu0 0
  %4381 = vmatpush2.bf16.msra.mxu0 0
  %4382 = vmatprep.subr.bf16.mxu0 0
  %4383 = vmatpush2.bf16.msra.mxu0 0
  %4384 = vmatprep.mubr.bf16.mxu0 0
  %4385 = vmatmul.mubr.bf16.gmra.mxu0 %v4350
  %v4386 = vpop.f32.mrf.mxu0
  %v4387 = vadd.f32 %v4337, %v4386
  %v4388 = vpop.f32.mrf.mxu0
  %v4389 = vpop.f32.mrf.mxu0
  %v4390 = vadd.f32 %v4340, %v4389
  %v4391 = vpop.f32.mrf.mxu0
  %4392 = vdwg.mxu0
  %v4393 = vmax.f32 %v4387, 0.0
  %v4394 = vmax.f32 %v4390, 0.0
  %4395 = vst [vmem:[%s4] sm:$0xff] 0.0
  %4396 = vst [vmem:[%s4 + $0x8] sm:$0xff] 0.0
  %4397 = vst.msk [vmem:[%s4] sm:$0xff] %vm28, %v1664
  %4398 = vst.msk [vmem:[%s4 + $0x8] sm:$0xff] %vm28, %v1667
  %4401 = vrot.lane.b32.xlu0 %v902, 8
  %v4402 = vpop.permute.xlu0 %4401
  %4403 = vrot.lane.b32.xlu0 %v905, 8
  %v4404 = vpop.permute.xlu0 %4403
  %vm4407 = vcmask 130112
  %4408 = vst.msk [vmem:[%s4] sm:$0xff] %vm4407, %v4402
  %4409 = vst.msk [vmem:[%s4 + $0x8] sm:$0xff] %vm4407, %v4404
  %4412 = vrot.lane.b32.xlu0 %v4393, 16
  %v4413 = vpop.permute.xlu0 %4412
  %4414 = vrot.lane.b32.xlu0 %v4394, 16
  %v4415 = vpop.permute.xlu0 %4414
  %vm4418 = vcmask 138368
  %4419 = vst.msk [vmem:[%s4] sm:$0xff] %vm4418, %v4413
  %4420 = vst.msk [vmem:[%s4 + $0x8] sm:$0xff] %vm4418, %v4415
  %4423 = vrot.lane.b32.xlu0 %v3095, 17
  %v4424 = vpop.permute.xlu0 %4423
  %4425 = vrot.lane.b32.xlu0 %v3097, 17
  %v4426 = vpop.permute.xlu0 %4425
  %vm4429 = vcmask 146568
  %4430 = vst.msk [vmem:[%s4] sm:$0xff] %vm4429, %v4424
  %4431 = vst.msk [vmem:[%s4 + $0x8] sm:$0xff] %vm4429, %v4426
  // Predicated region
  $region18: #{tgae_forward.1} parent=0 // pred_check
    _
  $region19: #{tgae_forward.1} parent=0 // pred_check_branch
    %4433 = sbr.rel (0) target = $region21
  $region20: #{tgae_forward.1} parent=0 // pred_region
    _
  $region21: #{tgae_forward.1} parent=0 // pred_fallthru
    _
  // Predicated region
  $region22: #{tgae_forward.1} parent=0 // pred_check
    _
  $region23: #{tgae_forward.1} parent=0 // pred_check_branch
    %4435 = sbr.rel (0) target = $region25
  $region24: #{tgae_forward.1} parent=0 // pred_region
    _
  $region25: #{tgae_forward.1} parent=0 // pred_fallthru
    _

</llo_original>
